<compile_context>
chip_gen: v7x
topology: tpu7x:2x2x1
jax: 0.10.0
libtpu: 0.0.40
codegen_flags: <defaults>
</compile_context>

<pallas_src>
import numpy as np
import jax
import jax.numpy as jnp
from jax.experimental import pallas as pl
from jax.experimental.pallas import tpu as pltpu


# ----------------------------- architecture constants -----------------------------
_H0, _W0, _C0 = 32, 32, 3          # input H, W, C
_KH, _KW = 5, 5                    # conv kernel
_C1, _C2 = 6, 16                   # conv1 / conv2 output channels
_H1o, _W1o = 28, 28                # conv1 output spatial
_H1p, _W1p = 14, 14                # after 2x2 max pool
_H2o, _W2o = 10, 10                # conv2 output spatial
_H2p, _W2p = 5, 5                  # after 2x2 max pool
_F1, _F2, _F3 = 120, 84, 10        # fc sizes
_LANES = 128                       # lane-aligned column-group width
_TB = 8                            # images per grid step (multiple of 8 sublanes)


def _round_up(x, m):
    return (x + m - 1) // m * m


# --------------------------------- fused kernel ------------------------------------

def _lenet_kernel(x_ref, t1_ref, b1_ref, t2_ref, b2_ref,
                  w1_ref, fb1_ref, w2_ref, fb2_ref, w3_ref, fb3_ref, o_ref):
    """x_ref: (TB, 32, 96) bf16 with lane index = w*3 + c.  Everything else resident."""
    x = x_ref[...]

    # ---- conv1 (5x5, 3->6) + bias + relu + 2x2 maxpool, entirely in VMEM ----
    # Banded weights fold kernel-width and the two pool-width positions into the matmul
    # N dim (columns [0:128) = pool dx=0, [128:256) = dx=1); only the 5 kernel-height
    # shifts remain as accumulated matmuls.
    z1 = None
    for ki in range(_KH):
        lhs = x[:, ki:ki + _H1o, :].reshape(_TB * _H1o, _W0 * _C0)
        acc = jnp.dot(lhs, t1_ref[ki], preferred_element_type=jnp.float32)
        z1 = acc if z1 is None else z1 + acc
    z1 = jnp.maximum(z1[:, :_LANES], z1[:, _LANES:])                 # pool over width
    z1 = jnp.max(z1.reshape(_TB * _H1p, 2, _LANES), axis=1)          # pool over height
    a1 = jnp.maximum(z1 + b1_ref[...], 0.0).astype(jnp.bfloat16)     # == pool(relu(conv+b))
    a1 = a1.reshape(_TB, _H1p, _LANES)                               # lane = w*6 + c, rest 0

    # ---- conv2 (5x5, 6->16) + bias + relu + 2x2 maxpool ----
    z2 = None
    for ki in range(_KH):
        lhs = a1[:, ki:ki + _H2o, :].reshape(_TB * _H2o, _LANES)
        acc = jnp.dot(lhs, t2_ref[ki], preferred_element_type=jnp.float32)
        z2 = acc if z2 is None else z2 + acc
    z2 = jnp.maximum(z2[:, :_LANES], z2[:, _LANES:])
    z2 = jnp.max(z2.reshape(_TB * _H2p, 2, _LANES), axis=1)
    a2 = jnp.maximum(z2 + b2_ref[...], 0.0).astype(jnp.bfloat16)
    a2 = a2.reshape(_TB, _H2p, _LANES)                               # lane = w*16 + c, rest 0

    # ---- fc1 -> relu -> fc2 -> relu -> fc3; intermediates never touch HBM ----
    h = None
    for hh in range(_H2p):                       # fc1 contraction split over the 5 rows
        acc = jnp.dot(a2[:, hh, :], w1_ref[hh], preferred_element_type=jnp.float32)
        h = acc if h is None else h + acc
    h = jnp.maximum(h + fb1_ref[...], 0.0).astype(jnp.bfloat16)
    h = jnp.dot(h, w2_ref[...], preferred_element_type=jnp.float32)
    h = jnp.maximum(h + fb2_ref[...], 0.0).astype(jnp.bfloat16)
    h = jnp.dot(h, w3_ref[...], preferred_element_type=jnp.float32) + fb3_ref[...]
    o_ref[...] = h.astype(o_ref.dtype)


# ------------------------------ one-time weight packing -----------------------------

def prepare_params(params):
    """Pack PyTorch-layout params into the lane-friendly bf16 form the kernel consumes.
    Done once, outside the jitted forward (per perf review)."""
    c1 = np.asarray(params["conv1_w"], np.float32)    # (6, 3, 5, 5)   OIHW
    c2 = np.asarray(params["conv2_w"], np.float32)    # (16, 6, 5, 5)
    cb1 = np.asarray(params["conv1_b"], np.float32)
    cb2 = np.asarray(params["conv2_b"], np.float32)
    f1 = np.asarray(params["fc1_w"], np.float32)      # (400, 120); row index = c*25+h*5+w
    f2 = np.asarray(params["fc2_w"], np.float32)      # (120, 84)
    f3 = np.asarray(params["fc3_w"], np.float32)      # (84, 10)

    # conv1 banded weights: T1[ki, w*3+c, dx*128 + jp*6 + o] = c1[o, c, ki, w - 2*jp - dx]
    t1 = np.zeros((_KH, _W0 * _C0, 2 * _LANES), np.float32)
    for ki in range(_KH):
        for dx in range(2):
            for jp in range(_W1p):
                for kj in range(_KW):
                    w = 2 * jp + dx + kj
                    col = dx * _LANES + jp * _C1
                    for c in range(_C0):
                        t1[ki, w * _C0 + c, col:col + _C1] = c1[:, c, ki, kj]

    # conv2 banded weights: T2[ki, w*6+c, dx*128 + jp*16 + o] = c2[o, c, ki, w - 2*jp - dx]
    t2 = np.zeros((_KH, _LANES, 2 * _LANES), np.float32)
    for ki in range(_KH):
        for dx in range(2):
            for jp in range(_W2p):
                for kj in range(_KW):
                    w = 2 * jp + dx + kj
                    col = dx * _LANES + jp * _C2
                    for c in range(_C1):
                        t2[ki, w * _C1 + c, col:col + _C2] = c2[:, c, ki, kj]

    # Bias tiles laid out like the pooled conv activations (lane = w*C + c).
    b1t = np.zeros((1, _LANES), np.float32); b1t[0, :_W1p * _C1] = np.tile(cb1, _W1p)
    b2t = np.zeros((1, _LANES), np.float32); b2t[0, :_W2p * _C2] = np.tile(cb2, _W2p)

    # fc1 split per conv2-output row h, re-ordered from PyTorch's (c,h,w) flatten to the
    # kernel's (w*16 + c) lane layout:  W1s[h, w*16+c, n] = f1[c*25 + h*5 + w, n]
    w1s = np.zeros((_H2p, _LANES, _F1), np.float32)
    f1r = f1.reshape(_C2, _H2p, _W2p, _F1)
    for h in range(_H2p):
        for w in range(_W2p):
            for c in range(_C2):
                w1s[h, w * _C2 + c, :] = f1r[c, h, w, :]

    bf16 = jnp.bfloat16
    return {
        "t1": jnp.asarray(t1, bf16), "b1t": jnp.asarray(b1t, jnp.float32),
        "t2": jnp.asarray(t2, bf16), "b2t": jnp.asarray(b2t, jnp.float32),
        "w1s": jnp.asarray(w1s, bf16),
        "fb1": jnp.asarray(params["fc1_b"], jnp.float32).reshape(1, _F1),
        "w2": jnp.asarray(f2, bf16),
        "fb2": jnp.asarray(params["fc2_b"], jnp.float32).reshape(1, _F2),
        "w3": jnp.asarray(f3, bf16),
        "fb3": jnp.asarray(params["fc3_b"], jnp.float32).reshape(1, _F3),
    }


# ------------------------------------ forward ---------------------------------------

@jax.jit
def net_forward(packed, x):
    """x: (B, 3, 32, 32) NCHW float32 -> logits (B, 10).  One fused Pallas kernel."""
    B = x.shape[0]
    # Single relayout at the API boundary: NCHW -> (B, H, W*C) bf16 (lane = w*3 + c).
    xr = jnp.transpose(x, (0, 2, 3, 1)).reshape(B, _H0, _W0 * _C0).astype(jnp.bfloat16)
    # >= 2 grid steps so the batch axis shards across both v7x TensorCores and the input
    # DMA double-buffers on every generation (padded images are sliced off afterwards).
    Bp = max(2 * _TB, _round_up(B, _TB))
    xr = jnp.pad(xr, ((0, Bp - B), (0, 0), (0, 0)))

    full3 = lambda i: (0, 0, 0)
    full2 = lambda i: (0, 0)
    out = pl.pallas_call(
        _lenet_kernel,
        out_shape=jax.ShapeDtypeStruct((Bp, _F3), jnp.float32),
        grid=(Bp // _TB,),
        in_specs=[
            pl.BlockSpec((_TB, _H0, _W0 * _C0), lambda i: (i, 0, 0)),   # batch-tiled input
            pl.BlockSpec((_KH, _W0 * _C0, 2 * _LANES), full3),          # conv1 banded W (resident)
            pl.BlockSpec((1, _LANES), full2),                           # conv1 bias tile
            pl.BlockSpec((_KH, _LANES, 2 * _LANES), full3),             # conv2 banded W
            pl.BlockSpec((1, _LANES), full2),                           # conv2 bias tile
            pl.BlockSpec((_H2p, _LANES, _F1), full3),                   # fc1 (split per row)
            pl.BlockSpec((1, _F1), full2),
            pl.BlockSpec((_F1, _F2), full2),                            # fc2
            pl.BlockSpec((1, _F2), full2),
            pl.BlockSpec((_F2, _F3), full2),                            # fc3
            pl.BlockSpec((1, _F3), full2),
        ],
        out_specs=pl.BlockSpec((_TB, _F3), lambda i: (i, 0)),
        compiler_params=pltpu.CompilerParams(
            dimension_semantics=("parallel",),
            vmem_limit_bytes=32 * 1024 * 1024,
        ),
    )(xr, packed["t1"], packed["b1t"], packed["t2"], packed["b2t"],
      packed["w1s"], packed["fb1"], packed["w2"], packed["fb2"],
      packed["w3"], packed["fb3"])
    return out[:B]


# --------------------------------- params & reference -------------------------------

def init_params(key):
    ks = jax.random.split(key, 10)

    def u(k, shape, fan_in):
        bound = 1.0 / jnp.sqrt(fan_in)
        return jax.random.uniform(k, shape, jnp.float32, -bound, bound)

    return {
        "conv1_w": u(ks[0], (6, 3, 5, 5), 3 * 5 * 5),
        "conv1_b": u(ks[1], (6,), 3 * 5 * 5),
        "conv2_w": u(ks[2], (16, 6, 5, 5), 6 * 5 * 5),
        "conv2_b": u(ks[3], (16,), 6 * 5 * 5),
        "fc1_w": u(ks[4], (16 * 5 * 5, 120), 16 * 5 * 5),
        "fc1_b": u(ks[5], (120,), 16 * 5 * 5),
        "fc2_w": u(ks[6], (120, 84), 120),
        "fc2_b": u(ks[7], (84,), 120),
        "fc3_w": u(ks[8], (84, 10), 84),
        "fc3_b": u(ks[9], (10,), 84),
    }


def reference_forward(params, x):
    """Pure-XLA f32 reference matching the PyTorch Net forward (sanity check)."""
    dn = ("NCHW", "OIHW", "NCHW")
    y = jax.lax.conv_general_dilated(x, params["conv1_w"], (1, 1), "VALID",
                                     dimension_numbers=dn)
    y = jax.nn.relu(y + params["conv1_b"][None, :, None, None])
    y = jax.lax.reduce_window(y, -jnp.inf, jax.lax.max, (1, 1, 2, 2), (1, 1, 2, 2), "VALID")
    y = jax.lax.conv_general_dilated(y, params["conv2_w"], (1, 1), "VALID",
                                     dimension_numbers=dn)
    y = jax.nn.relu(y + params["conv2_b"][None, :, None, None])
    y = jax.lax.reduce_window(y, -jnp.inf, jax.lax.max, (1, 1, 2, 2), (1, 1, 2, 2), "VALID")
    y = y.reshape(y.shape[0], -1)
    y = jax.nn.relu(y @ params["fc1_w"] + params["fc1_b"])
    y = jax.nn.relu(y @ params["fc2_w"] + params["fc2_b"])
    return y @ params["fc3_w"] + params["fc3_b"]


if __name__ == "__main__":
    key = jax.random.PRNGKey(0)
    pkey, xkey = jax.random.split(key)
    params = init_params(pkey)
    packed = prepare_params(params)          # one-time weight packing (outside jit)
    # CIFAR-sized input is required for the 16*5*5 flatten to be consistent.
    x = jax.random.normal(xkey, (2, 3, 32, 32), jnp.float32)

    logits = net_forward(packed, x)
    jax.block_until_ready(logits)
    assert logits.shape == (2, 10) and logits.dtype == jnp.float32

    ref = reference_forward(params, x)
    err = float(jnp.max(jnp.abs(logits - ref)))
    # bf16 inputs/weights with f32 accumulation: observed error is ~1e-2 scale at most.
    assert err < 5e-2, f"mismatch vs f32 XLA reference: max abs err = {err}"
    print("KERNEL_OK")
</pallas_src>

<mosaic_0001>
module attributes {stable_mosaic.version = 11 : i64} {
  func.func @_lenet_kernel(%arg0: i32, %arg1: memref<8x32x96xbf16, #tpu.memory_space<vmem>>, %arg2: memref<5x96x256xbf16, #tpu.memory_space<vmem>>, %arg3: memref<1x128xf32, #tpu.memory_space<vmem>>, %arg4: memref<5x128x256xbf16, #tpu.memory_space<vmem>>, %arg5: memref<1x128xf32, #tpu.memory_space<vmem>>, %arg6: memref<5x128x120xbf16, #tpu.memory_space<vmem>>, %arg7: memref<1x120xf32, #tpu.memory_space<vmem>>, %arg8: memref<120x84xbf16, #tpu.memory_space<vmem>>, %arg9: memref<1x84xf32, #tpu.memory_space<vmem>>, %arg10: memref<84x10xbf16, #tpu.memory_space<vmem>>, %arg11: memref<1x10xf32, #tpu.memory_space<vmem>>, %arg12: memref<8x10xf32, #tpu.memory_space<vmem>>) attributes {dimension_semantics = [#tpu.dimension_semantics<parallel>], iteration_bounds = array<i64: 2>, scalar_prefetch = 0 : i64, scratch_operands = 0 : i64, tpu.core_type = #tpu.core_type<tc>, window_params = [{transform_indices = @transform_0, window_bounds = array<i64: 8, 32, 96>}, {pipeline_mode = #tpu.pipeline_mode<synchronous>, transform_indices = @transform_1, window_bounds = array<i64: 5, 96, 256>}, {pipeline_mode = #tpu.pipeline_mode<synchronous>, transform_indices = @transform_2, window_bounds = array<i64: 1, 128>}, {pipeline_mode = #tpu.pipeline_mode<synchronous>, transform_indices = @transform_3, window_bounds = array<i64: 5, 128, 256>}, {pipeline_mode = #tpu.pipeline_mode<synchronous>, transform_indices = @transform_4, window_bounds = array<i64: 1, 128>}, {pipeline_mode = #tpu.pipeline_mode<synchronous>, transform_indices = @transform_5, window_bounds = array<i64: 5, 128, 120>}, {pipeline_mode = #tpu.pipeline_mode<synchronous>, transform_indices = @transform_6, window_bounds = array<i64: 1, 120>}, {pipeline_mode = #tpu.pipeline_mode<synchronous>, transform_indices = @transform_7, window_bounds = array<i64: 120, 84>}, {pipeline_mode = #tpu.pipeline_mode<synchronous>, transform_indices = @transform_8, window_bounds = array<i64: 1, 84>}, {pipeline_mode = #tpu.pipeline_mode<synchronous>, transform_indices = @transform_9, window_bounds = array<i64: 84, 10>}, {pipeline_mode = #tpu.pipeline_mode<synchronous>, transform_indices = @transform_10, window_bounds = array<i64: 1, 10>}, {transform_indices = @transform_11, window_bounds = array<i64: 8, 10>}]} {
    %c0 = arith.constant 0 : index
    %c0_0 = arith.constant 0 : index
    %c0_1 = arith.constant 0 : index
    %0 = vector.load %arg1[%c0, %c0_0, %c0_1] : memref<8x32x96xbf16, #tpu.memory_space<vmem>>, vector<8x32x96xbf16>
    %1 = vector.extract_strided_slice %0 {offsets = [0, 0, 0], sizes = [8, 28, 96], strides = [1, 1, 1]} : vector<8x32x96xbf16> to vector<8x28x96xbf16>
    %2 = vector.shape_cast %1 : vector<8x28x96xbf16> to vector<224x96xbf16>
    %c0_2 = arith.constant 0 : index
    %c0_3 = arith.constant 0 : index
    %c0_4 = arith.constant 0 : index
    %3 = vector.load %arg2[%c0_2, %c0_3, %c0_4] : memref<5x96x256xbf16, #tpu.memory_space<vmem>>, vector<1x96x256xbf16>
    %4 = vector.shape_cast %3 : vector<1x96x256xbf16> to vector<96x256xbf16>
    %cst = arith.constant dense<0.000000e+00> : vector<224x256xf32>
    %5 = tpu.matmul %2, %4, %cst {dimension_numbers = #tpu.dot_dimension_numbers<[1], [0], [0], [1], [0, 0, 1, 1], [], []>} : vector<224x96xbf16>, vector<96x256xbf16>, vector<224x256xf32> -> vector<224x256xf32>
    %6 = vector.extract_strided_slice %0 {offsets = [0, 1, 0], sizes = [8, 28, 96], strides = [1, 1, 1]} : vector<8x32x96xbf16> to vector<8x28x96xbf16>
    %7 = vector.shape_cast %6 : vector<8x28x96xbf16> to vector<224x96xbf16>
    %c1 = arith.constant 1 : index
    %c0_5 = arith.constant 0 : index
    %c0_6 = arith.constant 0 : index
    %8 = vector.load %arg2[%c1, %c0_5, %c0_6] : memref<5x96x256xbf16, #tpu.memory_space<vmem>>, vector<1x96x256xbf16>
    %9 = vector.shape_cast %8 : vector<1x96x256xbf16> to vector<96x256xbf16>
    %cst_7 = arith.constant dense<0.000000e+00> : vector<224x256xf32>
    %10 = tpu.matmul %7, %9, %cst_7 {dimension_numbers = #tpu.dot_dimension_numbers<[1], [0], [0], [1], [0, 0, 1, 1], [], []>} : vector<224x96xbf16>, vector<96x256xbf16>, vector<224x256xf32> -> vector<224x256xf32>
    %11 = arith.addf %5, %10 : vector<224x256xf32>
    %12 = vector.extract_strided_slice %0 {offsets = [0, 2, 0], sizes = [8, 28, 96], strides = [1, 1, 1]} : vector<8x32x96xbf16> to vector<8x28x96xbf16>
    %13 = vector.shape_cast %12 : vector<8x28x96xbf16> to vector<224x96xbf16>
    %c2 = arith.constant 2 : index
    %c0_8 = arith.constant 0 : index
    %c0_9 = arith.constant 0 : index
    %14 = vector.load %arg2[%c2, %c0_8, %c0_9] : memref<5x96x256xbf16, #tpu.memory_space<vmem>>, vector<1x96x256xbf16>
    %15 = vector.shape_cast %14 : vector<1x96x256xbf16> to vector<96x256xbf16>
    %cst_10 = arith.constant dense<0.000000e+00> : vector<224x256xf32>
    %16 = tpu.matmul %13, %15, %cst_10 {dimension_numbers = #tpu.dot_dimension_numbers<[1], [0], [0], [1], [0, 0, 1, 1], [], []>} : vector<224x96xbf16>, vector<96x256xbf16>, vector<224x256xf32> -> vector<224x256xf32>
    %17 = arith.addf %11, %16 : vector<224x256xf32>
    %18 = vector.extract_strided_slice %0 {offsets = [0, 3, 0], sizes = [8, 28, 96], strides = [1, 1, 1]} : vector<8x32x96xbf16> to vector<8x28x96xbf16>
    %19 = vector.shape_cast %18 : vector<8x28x96xbf16> to vector<224x96xbf16>
    %c3 = arith.constant 3 : index
    %c0_11 = arith.constant 0 : index
    %c0_12 = arith.constant 0 : index
    %20 = vector.load %arg2[%c3, %c0_11, %c0_12] : memref<5x96x256xbf16, #tpu.memory_space<vmem>>, vector<1x96x256xbf16>
    %21 = vector.shape_cast %20 : vector<1x96x256xbf16> to vector<96x256xbf16>
    %cst_13 = arith.constant dense<0.000000e+00> : vector<224x256xf32>
    %22 = tpu.matmul %19, %21, %cst_13 {dimension_numbers = #tpu.dot_dimension_numbers<[1], [0], [0], [1], [0, 0, 1, 1], [], []>} : vector<224x96xbf16>, vector<96x256xbf16>, vector<224x256xf32> -> vector<224x256xf32>
    %23 = arith.addf %17, %22 : vector<224x256xf32>
    %24 = vector.extract_strided_slice %0 {offsets = [0, 4, 0], sizes = [8, 28, 96], strides = [1, 1, 1]} : vector<8x32x96xbf16> to vector<8x28x96xbf16>
    %25 = vector.shape_cast %24 : vector<8x28x96xbf16> to vector<224x96xbf16>
    %c4 = arith.constant 4 : index
    %c0_14 = arith.constant 0 : index
    %c0_15 = arith.constant 0 : index
    %26 = vector.load %arg2[%c4, %c0_14, %c0_15] : memref<5x96x256xbf16, #tpu.memory_space<vmem>>, vector<1x96x256xbf16>
    %27 = vector.shape_cast %26 : vector<1x96x256xbf16> to vector<96x256xbf16>
    %cst_16 = arith.constant dense<0.000000e+00> : vector<224x256xf32>
    %28 = tpu.matmul %25, %27, %cst_16 {dimension_numbers = #tpu.dot_dimension_numbers<[1], [0], [0], [1], [0, 0, 1, 1], [], []>} : vector<224x96xbf16>, vector<96x256xbf16>, vector<224x256xf32> -> vector<224x256xf32>
    %29 = arith.addf %23, %28 : vector<224x256xf32>
    %30 = vector.extract_strided_slice %29 {offsets = [0, 0], sizes = [224, 128], strides = [1, 1]} : vector<224x256xf32> to vector<224x128xf32>
    %31 = vector.extract_strided_slice %29 {offsets = [0, 128], sizes = [224, 128], strides = [1, 1]} : vector<224x256xf32> to vector<224x128xf32>
    %32 = arith.maximumf %30, %31 : vector<224x128xf32>
    %33 = vector.shape_cast %32 : vector<224x128xf32> to vector<112x2x128xf32>
    %cst_17 = arith.constant dense<0xFF800000> : vector<112x128xf32>
    %34 = vector.multi_reduction <maximumf>, %33, %cst_17 [1] : vector<112x2x128xf32> to vector<112x128xf32>
    %c0_18 = arith.constant 0 : index
    %c0_19 = arith.constant 0 : index
    %35 = vector.load %arg3[%c0_18, %c0_19] : memref<1x128xf32, #tpu.memory_space<vmem>>, vector<1x128xf32>
    %36 = vector.broadcast %35 : vector<1x128xf32> to vector<112x128xf32>
    %37 = arith.addf %34, %36 : vector<112x128xf32>
    %cst_20 = arith.constant 0.000000e+00 : f32
    %38 = vector.broadcast %cst_20 : f32 to vector<112x128xf32>
    %39 = arith.maximumf %37, %38 : vector<112x128xf32>
    %40 = arith.truncf %39 : vector<112x128xf32> to vector<112x128xbf16>
    %41 = vector.shape_cast %40 : vector<112x128xbf16> to vector<8x14x128xbf16>
    %42 = vector.extract_strided_slice %41 {offsets = [0, 0, 0], sizes = [8, 10, 128], strides = [1, 1, 1]} : vector<8x14x128xbf16> to vector<8x10x128xbf16>
    %43 = vector.shape_cast %42 : vector<8x10x128xbf16> to vector<80x128xbf16>
    %c0_21 = arith.constant 0 : index
    %c0_22 = arith.constant 0 : index
    %c0_23 = arith.constant 0 : index
    %44 = vector.load %arg4[%c0_21, %c0_22, %c0_23] : memref<5x128x256xbf16, #tpu.memory_space<vmem>>, vector<1x128x256xbf16>
    %45 = vector.shape_cast %44 : vector<1x128x256xbf16> to vector<128x256xbf16>
    %cst_24 = arith.constant dense<0.000000e+00> : vector<80x256xf32>
    %46 = tpu.matmul %43, %45, %cst_24 {dimension_numbers = #tpu.dot_dimension_numbers<[1], [0], [0], [1], [0, 0, 1, 1], [], []>} : vector<80x128xbf16>, vector<128x256xbf16>, vector<80x256xf32> -> vector<80x256xf32>
    %47 = vector.extract_strided_slice %41 {offsets = [0, 1, 0], sizes = [8, 10, 128], strides = [1, 1, 1]} : vector<8x14x128xbf16> to vector<8x10x128xbf16>
    %48 = vector.shape_cast %47 : vector<8x10x128xbf16> to vector<80x128xbf16>
    %c1_25 = arith.constant 1 : index
    %c0_26 = arith.constant 0 : index
    %c0_27 = arith.constant 0 : index
    %49 = vector.load %arg4[%c1_25, %c0_26, %c0_27] : memref<5x128x256xbf16, #tpu.memory_space<vmem>>, vector<1x128x256xbf16>
    %50 = vector.shape_cast %49 : vector<1x128x256xbf16> to vector<128x256xbf16>
    %cst_28 = arith.constant dense<0.000000e+00> : vector<80x256xf32>
    %51 = tpu.matmul %48, %50, %cst_28 {dimension_numbers = #tpu.dot_dimension_numbers<[1], [0], [0], [1], [0, 0, 1, 1], [], []>} : vector<80x128xbf16>, vector<128x256xbf16>, vector<80x256xf32> -> vector<80x256xf32>
    %52 = arith.addf %46, %51 : vector<80x256xf32>
    %53 = vector.extract_strided_slice %41 {offsets = [0, 2, 0], sizes = [8, 10, 128], strides = [1, 1, 1]} : vector<8x14x128xbf16> to vector<8x10x128xbf16>
    %54 = vector.shape_cast %53 : vector<8x10x128xbf16> to vector<80x128xbf16>
    %c2_29 = arith.constant 2 : index
    %c0_30 = arith.constant 0 : index
    %c0_31 = arith.constant 0 : index
    %55 = vector.load %arg4[%c2_29, %c0_30, %c0_31] : memref<5x128x256xbf16, #tpu.memory_space<vmem>>, vector<1x128x256xbf16>
    %56 = vector.shape_cast %55 : vector<1x128x256xbf16> to vector<128x256xbf16>
    %cst_32 = arith.constant dense<0.000000e+00> : vector<80x256xf32>
    %57 = tpu.matmul %54, %56, %cst_32 {dimension_numbers = #tpu.dot_dimension_numbers<[1], [0], [0], [1], [0, 0, 1, 1], [], []>} : vector<80x128xbf16>, vector<128x256xbf16>, vector<80x256xf32> -> vector<80x256xf32>
    %58 = arith.addf %52, %57 : vector<80x256xf32>
    %59 = vector.extract_strided_slice %41 {offsets = [0, 3, 0], sizes = [8, 10, 128], strides = [1, 1, 1]} : vector<8x14x128xbf16> to vector<8x10x128xbf16>
    %60 = vector.shape_cast %59 : vector<8x10x128xbf16> to vector<80x128xbf16>
    %c3_33 = arith.constant 3 : index
    %c0_34 = arith.constant 0 : index
    %c0_35 = arith.constant 0 : index
    %61 = vector.load %arg4[%c3_33, %c0_34, %c0_35] : memref<5x128x256xbf16, #tpu.memory_space<vmem>>, vector<1x128x256xbf16>
    %62 = vector.shape_cast %61 : vector<1x128x256xbf16> to vector<128x256xbf16>
    %cst_36 = arith.constant dense<0.000000e+00> : vector<80x256xf32>
    %63 = tpu.matmul %60, %62, %cst_36 {dimension_numbers = #tpu.dot_dimension_numbers<[1], [0], [0], [1], [0, 0, 1, 1], [], []>} : vector<80x128xbf16>, vector<128x256xbf16>, vector<80x256xf32> -> vector<80x256xf32>
    %64 = arith.addf %58, %63 : vector<80x256xf32>
    %65 = vector.extract_strided_slice %41 {offsets = [0, 4, 0], sizes = [8, 10, 128], strides = [1, 1, 1]} : vector<8x14x128xbf16> to vector<8x10x128xbf16>
    %66 = vector.shape_cast %65 : vector<8x10x128xbf16> to vector<80x128xbf16>
    %c4_37 = arith.constant 4 : index
    %c0_38 = arith.constant 0 : index
    %c0_39 = arith.constant 0 : index
    %67 = vector.load %arg4[%c4_37, %c0_38, %c0_39] : memref<5x128x256xbf16, #tpu.memory_space<vmem>>, vector<1x128x256xbf16>
    %68 = vector.shape_cast %67 : vector<1x128x256xbf16> to vector<128x256xbf16>
    %cst_40 = arith.constant dense<0.000000e+00> : vector<80x256xf32>
    %69 = tpu.matmul %66, %68, %cst_40 {dimension_numbers = #tpu.dot_dimension_numbers<[1], [0], [0], [1], [0, 0, 1, 1], [], []>} : vector<80x128xbf16>, vector<128x256xbf16>, vector<80x256xf32> -> vector<80x256xf32>
    %70 = arith.addf %64, %69 : vector<80x256xf32>
    %71 = vector.extract_strided_slice %70 {offsets = [0, 0], sizes = [80, 128], strides = [1, 1]} : vector<80x256xf32> to vector<80x128xf32>
    %72 = vector.extract_strided_slice %70 {offsets = [0, 128], sizes = [80, 128], strides = [1, 1]} : vector<80x256xf32> to vector<80x128xf32>
    %73 = arith.maximumf %71, %72 : vector<80x128xf32>
    %74 = vector.shape_cast %73 : vector<80x128xf32> to vector<40x2x128xf32>
    %cst_41 = arith.constant dense<0xFF800000> : vector<40x128xf32>
    %75 = vector.multi_reduction <maximumf>, %74, %cst_41 [1] : vector<40x2x128xf32> to vector<40x128xf32>
    %c0_42 = arith.constant 0 : index
    %c0_43 = arith.constant 0 : index
    %76 = vector.load %arg5[%c0_42, %c0_43] : memref<1x128xf32, #tpu.memory_space<vmem>>, vector<1x128xf32>
    %77 = vector.broadcast %76 : vector<1x128xf32> to vector<40x128xf32>
    %78 = arith.addf %75, %77 : vector<40x128xf32>
    %cst_44 = arith.constant 0.000000e+00 : f32
    %79 = vector.broadcast %cst_44 : f32 to vector<40x128xf32>
    %80 = arith.maximumf %78, %79 : vector<40x128xf32>
    %81 = arith.truncf %80 : vector<40x128xf32> to vector<40x128xbf16>
    %82 = vector.shape_cast %81 : vector<40x128xbf16> to vector<8x5x128xbf16>
    %83 = vector.extract_strided_slice %82 {offsets = [0, 0, 0], sizes = [8, 1, 128], strides = [1, 1, 1]} : vector<8x5x128xbf16> to vector<8x1x128xbf16>
    %84 = vector.shape_cast %83 : vector<8x1x128xbf16> to vector<8x128xbf16>
    %c0_45 = arith.constant 0 : index
    %c0_46 = arith.constant 0 : index
    %c0_47 = arith.constant 0 : index
    %85 = vector.load %arg6[%c0_45, %c0_46, %c0_47] : memref<5x128x120xbf16, #tpu.memory_space<vmem>>, vector<1x128x120xbf16>
    %86 = vector.shape_cast %85 : vector<1x128x120xbf16> to vector<128x120xbf16>
    %cst_48 = arith.constant dense<0.000000e+00> : vector<8x120xf32>
    %87 = tpu.matmul %84, %86, %cst_48 {dimension_numbers = #tpu.dot_dimension_numbers<[1], [0], [0], [1], [0, 0, 1, 1], [], []>} : vector<8x128xbf16>, vector<128x120xbf16>, vector<8x120xf32> -> vector<8x120xf32>
    %88 = vector.extract_strided_slice %82 {offsets = [0, 1, 0], sizes = [8, 1, 128], strides = [1, 1, 1]} : vector<8x5x128xbf16> to vector<8x1x128xbf16>
    %89 = vector.shape_cast %88 : vector<8x1x128xbf16> to vector<8x128xbf16>
    %c1_49 = arith.constant 1 : index
    %c0_50 = arith.constant 0 : index
    %c0_51 = arith.constant 0 : index
    %90 = vector.load %arg6[%c1_49, %c0_50, %c0_51] : memref<5x128x120xbf16, #tpu.memory_space<vmem>>, vector<1x128x120xbf16>
    %91 = vector.shape_cast %90 : vector<1x128x120xbf16> to vector<128x120xbf16>
    %cst_52 = arith.constant dense<0.000000e+00> : vector<8x120xf32>
    %92 = tpu.matmul %89, %91, %cst_52 {dimension_numbers = #tpu.dot_dimension_numbers<[1], [0], [0], [1], [0, 0, 1, 1], [], []>} : vector<8x128xbf16>, vector<128x120xbf16>, vector<8x120xf32> -> vector<8x120xf32>
    %93 = arith.addf %87, %92 : vector<8x120xf32>
    %94 = vector.extract_strided_slice %82 {offsets = [0, 2, 0], sizes = [8, 1, 128], strides = [1, 1, 1]} : vector<8x5x128xbf16> to vector<8x1x128xbf16>
    %95 = vector.shape_cast %94 : vector<8x1x128xbf16> to vector<8x128xbf16>
    %c2_53 = arith.constant 2 : index
    %c0_54 = arith.constant 0 : index
    %c0_55 = arith.constant 0 : index
    %96 = vector.load %arg6[%c2_53, %c0_54, %c0_55] : memref<5x128x120xbf16, #tpu.memory_space<vmem>>, vector<1x128x120xbf16>
    %97 = vector.shape_cast %96 : vector<1x128x120xbf16> to vector<128x120xbf16>
    %cst_56 = arith.constant dense<0.000000e+00> : vector<8x120xf32>
    %98 = tpu.matmul %95, %97, %cst_56 {dimension_numbers = #tpu.dot_dimension_numbers<[1], [0], [0], [1], [0, 0, 1, 1], [], []>} : vector<8x128xbf16>, vector<128x120xbf16>, vector<8x120xf32> -> vector<8x120xf32>
    %99 = arith.addf %93, %98 : vector<8x120xf32>
    %100 = vector.extract_strided_slice %82 {offsets = [0, 3, 0], sizes = [8, 1, 128], strides = [1, 1, 1]} : vector<8x5x128xbf16> to vector<8x1x128xbf16>
    %101 = vector.shape_cast %100 : vector<8x1x128xbf16> to vector<8x128xbf16>
    %c3_57 = arith.constant 3 : index
    %c0_58 = arith.constant 0 : index
    %c0_59 = arith.constant 0 : index
    %102 = vector.load %arg6[%c3_57, %c0_58, %c0_59] : memref<5x128x120xbf16, #tpu.memory_space<vmem>>, vector<1x128x120xbf16>
    %103 = vector.shape_cast %102 : vector<1x128x120xbf16> to vector<128x120xbf16>
    %cst_60 = arith.constant dense<0.000000e+00> : vector<8x120xf32>
    %104 = tpu.matmul %101, %103, %cst_60 {dimension_numbers = #tpu.dot_dimension_numbers<[1], [0], [0], [1], [0, 0, 1, 1], [], []>} : vector<8x128xbf16>, vector<128x120xbf16>, vector<8x120xf32> -> vector<8x120xf32>
    %105 = arith.addf %99, %104 : vector<8x120xf32>
    %106 = vector.extract_strided_slice %82 {offsets = [0, 4, 0], sizes = [8, 1, 128], strides = [1, 1, 1]} : vector<8x5x128xbf16> to vector<8x1x128xbf16>
    %107 = vector.shape_cast %106 : vector<8x1x128xbf16> to vector<8x128xbf16>
    %c4_61 = arith.constant 4 : index
    %c0_62 = arith.constant 0 : index
    %c0_63 = arith.constant 0 : index
    %108 = vector.load %arg6[%c4_61, %c0_62, %c0_63] : memref<5x128x120xbf16, #tpu.memory_space<vmem>>, vector<1x128x120xbf16>
    %109 = vector.shape_cast %108 : vector<1x128x120xbf16> to vector<128x120xbf16>
    %cst_64 = arith.constant dense<0.000000e+00> : vector<8x120xf32>
    %110 = tpu.matmul %107, %109, %cst_64 {dimension_numbers = #tpu.dot_dimension_numbers<[1], [0], [0], [1], [0, 0, 1, 1], [], []>} : vector<8x128xbf16>, vector<128x120xbf16>, vector<8x120xf32> -> vector<8x120xf32>
    %111 = arith.addf %105, %110 : vector<8x120xf32>
    %c0_65 = arith.constant 0 : index
    %c0_66 = arith.constant 0 : index
    %112 = vector.load %arg7[%c0_65, %c0_66] : memref<1x120xf32, #tpu.memory_space<vmem>>, vector<1x120xf32>
    %113 = vector.broadcast %112 : vector<1x120xf32> to vector<8x120xf32>
    %114 = arith.addf %111, %113 : vector<8x120xf32>
    %cst_67 = arith.constant 0.000000e+00 : f32
    %115 = vector.broadcast %cst_67 : f32 to vector<8x120xf32>
    %116 = arith.maximumf %114, %115 : vector<8x120xf32>
    %117 = arith.truncf %116 : vector<8x120xf32> to vector<8x120xbf16>
    %c0_68 = arith.constant 0 : index
    %c0_69 = arith.constant 0 : index
    %118 = vector.load %arg8[%c0_68, %c0_69] : memref<120x84xbf16, #tpu.memory_space<vmem>>, vector<120x84xbf16>
    %cst_70 = arith.constant dense<0.000000e+00> : vector<8x84xf32>
    %119 = tpu.matmul %117, %118, %cst_70 {dimension_numbers = #tpu.dot_dimension_numbers<[1], [0], [0], [1], [0, 0, 1, 1], [], []>} : vector<8x120xbf16>, vector<120x84xbf16>, vector<8x84xf32> -> vector<8x84xf32>
    %c0_71 = arith.constant 0 : index
    %c0_72 = arith.constant 0 : index
    %120 = vector.load %arg9[%c0_71, %c0_72] : memref<1x84xf32, #tpu.memory_space<vmem>>, vector<1x84xf32>
    %121 = vector.broadcast %120 : vector<1x84xf32> to vector<8x84xf32>
    %122 = arith.addf %119, %121 : vector<8x84xf32>
    %cst_73 = arith.constant 0.000000e+00 : f32
    %123 = vector.broadcast %cst_73 : f32 to vector<8x84xf32>
    %124 = arith.maximumf %122, %123 : vector<8x84xf32>
    %125 = arith.truncf %124 : vector<8x84xf32> to vector<8x84xbf16>
    %c0_74 = arith.constant 0 : index
    %c0_75 = arith.constant 0 : index
    %126 = vector.load %arg10[%c0_74, %c0_75] : memref<84x10xbf16, #tpu.memory_space<vmem>>, vector<84x10xbf16>
    %cst_76 = arith.constant dense<0.000000e+00> : vector<8x10xf32>
    %127 = tpu.matmul %125, %126, %cst_76 {dimension_numbers = #tpu.dot_dimension_numbers<[1], [0], [0], [1], [0, 0, 1, 1], [], []>} : vector<8x84xbf16>, vector<84x10xbf16>, vector<8x10xf32> -> vector<8x10xf32>
    %c0_77 = arith.constant 0 : index
    %c0_78 = arith.constant 0 : index
    %128 = vector.load %arg11[%c0_77, %c0_78] : memref<1x10xf32, #tpu.memory_space<vmem>>, vector<1x10xf32>
    %129 = vector.broadcast %128 : vector<1x10xf32> to vector<8x10xf32>
    %130 = arith.addf %127, %129 : vector<8x10xf32>
    %c0_79 = arith.constant 0 : index
    %c0_80 = arith.constant 0 : index
    %131 = vector.load %arg12[%c0_79, %c0_80] : memref<8x10xf32, #tpu.memory_space<vmem>>, vector<8x10xf32>
    tpu.vector_store %arg12[%c0_79, %c0_80], %130 {strides = array<i32>} : memref<8x10xf32, #tpu.memory_space<vmem>>, vector<8x10xf32>,
    return
  }
  func.func @transform_0(%arg0: i32) -> (i32, i32, i32) {
    %c0_i32 = arith.constant 0 : i32
    %c0_i32_0 = arith.constant 0 : i32
    %c0_i32_1 = arith.constant 0 : i32
    return %arg0, %c0_i32, %c0_i32_0 : i32, i32, i32
  }
  func.func @transform_1(%arg0: i32) -> (i32, i32, i32) {
    %c0_i32 = arith.constant 0 : i32
    %c0_i32_0 = arith.constant 0 : i32
    %c0_i32_1 = arith.constant 0 : i32
    %c0_i32_2 = arith.constant 0 : i32
    return %c0_i32, %c0_i32_0, %c0_i32_1 : i32, i32, i32
  }
  func.func @transform_2(%arg0: i32) -> (i32, i32) {
    %c0_i32 = arith.constant 0 : i32
    %c0_i32_0 = arith.constant 0 : i32
    %c0_i32_1 = arith.constant 0 : i32
    return %c0_i32, %c0_i32_0 : i32, i32
  }
  func.func @transform_3(%arg0: i32) -> (i32, i32, i32) {
    %c0_i32 = arith.constant 0 : i32
    %c0_i32_0 = arith.constant 0 : i32
    %c0_i32_1 = arith.constant 0 : i32
    %c0_i32_2 = arith.constant 0 : i32
    return %c0_i32, %c0_i32_0, %c0_i32_1 : i32, i32, i32
  }
  func.func @transform_4(%arg0: i32) -> (i32, i32) {
    %c0_i32 = arith.constant 0 : i32
    %c0_i32_0 = arith.constant 0 : i32
    %c0_i32_1 = arith.constant 0 : i32
    return %c0_i32, %c0_i32_0 : i32, i32
  }
  func.func @transform_5(%arg0: i32) -> (i32, i32, i32) {
    %c0_i32 = arith.constant 0 : i32
    %c0_i32_0 = arith.constant 0 : i32
    %c0_i32_1 = arith.constant 0 : i32
    %c0_i32_2 = arith.constant 0 : i32
    return %c0_i32, %c0_i32_0, %c0_i32_1 : i32, i32, i32
  }
  func.func @transform_6(%arg0: i32) -> (i32, i32) {
    %c0_i32 = arith.constant 0 : i32
    %c0_i32_0 = arith.constant 0 : i32
    %c0_i32_1 = arith.constant 0 : i32
    return %c0_i32, %c0_i32_0 : i32, i32
  }
  func.func @transform_7(%arg0: i32) -> (i32, i32) {
    %c0_i32 = arith.constant 0 : i32
    %c0_i32_0 = arith.constant 0 : i32
    %c0_i32_1 = arith.constant 0 : i32
    return %c0_i32, %c0_i32_0 : i32, i32
  }
  func.func @transform_8(%arg0: i32) -> (i32, i32) {
    %c0_i32 = arith.constant 0 : i32
    %c0_i32_0 = arith.constant 0 : i32
    %c0_i32_1 = arith.constant 0 : i32
    return %c0_i32, %c0_i32_0 : i32, i32
  }
  func.func @transform_9(%arg0: i32) -> (i32, i32) {
    %c0_i32 = arith.constant 0 : i32
    %c0_i32_0 = arith.constant 0 : i32
    %c0_i32_1 = arith.constant 0 : i32
    return %c0_i32, %c0_i32_0 : i32, i32
  }
  func.func @transform_10(%arg0: i32) -> (i32, i32) {
    %c0_i32 = arith.constant 0 : i32
    %c0_i32_0 = arith.constant 0 : i32
    %c0_i32_1 = arith.constant 0 : i32
    return %c0_i32, %c0_i32_0 : i32, i32
  }
  func.func @transform_11(%arg0: i32) -> (i32, i32) {
    %c0_i32 = arith.constant 0 : i32
    %c0_i32_0 = arith.constant 0 : i32
    return %arg0, %c0_i32 : i32, i32
  }
}

</mosaic_0001>

<llo_original>
// kernel: net_forward.1
$region0: #{net_forward.1}
  #allocation0 [shape = 'u32[]', space=smem, size = 0x4, offset = 0x4, fixed_abs, tag = 'smem constant byte address 0x4 - core index']
  #allocation1 [shape = 'u32[144,128]{1,0:T(1,128)}', space=vmem, size = 0x12000, scoped, tag = 'internal scratch']
  %s0 = inlined_call_operand.vmem [shape: bf16[16,32,96], index: 0, kind: input, shape index: {}]
  %s1 = inlined_call_operand.vmem [shape: bf16[5,96,256], index: 1, kind: input, shape index: {}]
  %s2 = inlined_call_operand.vmem [shape: f32[1,128], index: 2, kind: input, shape index: {}]
  %s3 = inlined_call_operand.vmem [shape: bf16[5,128,256], index: 3, kind: input, shape index: {}]
  %s4 = inlined_call_operand.vmem [shape: f32[1,128], index: 4, kind: input, shape index: {}]
  %s5 = inlined_call_operand.vmem [shape: bf16[5,128,120], index: 5, kind: input, shape index: {}]
  %s6 = inlined_call_operand.vmem [shape: f32[1,120], index: 6, kind: input, shape index: {}]
  %s7 = inlined_call_operand.vmem [shape: bf16[120,84], index: 7, kind: input, shape index: {}]
  %s8 = inlined_call_operand.vmem [shape: f32[1,84], index: 8, kind: input, shape index: {}]
  %s9 = inlined_call_operand.vmem [shape: bf16[84,10], index: 9, kind: input, shape index: {}]
  %s10 = inlined_call_operand.vmem [shape: f32[1,10], index: 10, kind: input, shape index: {}]
  %s11 = inlined_call_operand.vmem [shape: f32[16,10], index: 11, kind: output, shape index: {}]
  %s12 = sld [smem:[#allocation0]]
  $region77: #{net_forward.1} parent=0
    _
  %s14 = ssub.s32 1, %s12
  %s15 = scalar_select 0, %s14, %s12
  loop: start=0, step=1, limit=4
  $region2: #{net_forward.1} parent=0 // loop_pre_header
    _
  $region3: #{net_forward.1} parent=0 // loop_header
    %s17 = sphi 0, %s21
    %p18 = scmp.ge.s32.totalorder %s17, 4
    %s27 = sphi 0, %s29
    %s30 = sphi 0, %s27
    %s31 = sphi 0, %s30
    %s47 = sphi 0, %s31
    %s51 = sphi 0, %s51
    %s53 = sphi 0, %s51
    %s54 = sphi 0, %s53
    %s68 = sphi 0, %s54
    %s72 = sphi 0, %s72
    %s74 = sphi 0, %s72
    %s75 = sphi 0, %s74
    %s89 = sphi 0, %s75
    %s93 = sphi 0, %s93
    %s95 = sphi 0, %s93
    %s96 = sphi 0, %s95
    %s110 = sphi 0, %s96
    %s114 = sphi 0, %s114
    %s116 = sphi 0, %s114
    %s117 = sphi 0, %s116
    %s131 = sphi 0, %s117
    %s135 = sphi 0, %s135
    %s137 = sphi 0, %s135
    %s138 = sphi 0, %s137
    %s152 = sphi 0, %s138
    %s156 = sphi 0, %s156
    %s158 = sphi 0, %s156
    %s159 = sphi 0, %s158
    %s173 = sphi 0, %s159
    %s177 = sphi 0, %s177
    %s179 = sphi 0, %s177
    %s180 = sphi 0, %s179
    %s194 = sphi 0, %s180
    %s198 = sphi 0, %s198
    %s200 = sphi 0, %s198
    %s201 = sphi 0, %s200
    %s215 = sphi 0, %s201
    %s219 = sphi 0, %s219
    %s221 = sphi 0, %s219
    %s222 = sphi 0, %s221
    %s236 = sphi 0, %s222
    %s240 = sphi 0, %s240
    %s242 = sphi 0, %s240
    %s243 = sphi 0, %s242
    %s257 = sphi 0, %s243
    %s263 = sphi 0, %s265
    %s266 = sphi 0, %s263
    %s267 = sphi 0, %s266
    %s283 = sphi 0, %s267
  $region4: #{net_forward.1} parent=0 // loop_header_branch
    %20 = sbr.rel (%p18) target = $region8
  $region5: #{net_forward.1} parent=0 // loop_body
    %s22 = ssub.s32 %s17, 1
    %s23 = ssub.s32 %s17, 2
    %s24 = sadd.s32 %s17, 1
    %s25 = ssub.s32 %s17, %s24
    %p26 = scmp.eq.s32.totalorder %s25, 0
    %s28 = sadd.s32 %s27, 1
    %s29 = scalar_select %p26, %s27, %s28
    %p32 = pneg %p26
    %p33 = scmp.eq.s32.totalorder %s17, 1
    %p34 = por %p32, %p33
    %p35 = scmp.ne.s32.totalorder %s27, %s30
    %p36 = scmp.eq.s32.totalorder %s17, 0
    %p37 = por %p35, %p36
    %p38 = scmp.ne.s32.totalorder %s27, %s30
    %p39 = scmp.eq.s32.totalorder %s22, 1
    %p40 = por %p38, %p39
    %p41 = scmp.ne.s32.totalorder %s30, %s31
    %p42 = scmp.eq.s32.totalorder %s22, 0
    %p43 = por %p41, %p42
    %p44 = scmp.ne.s32.totalorder %s30, %s31
    %p45 = scmp.eq.s32.totalorder %s23, 1
    %p46 = por %p44, %p45
    %p48 = scmp.ne.s32.totalorder %s31, %s47
    %p49 = scmp.eq.s32.totalorder %s23, 0
    %p50 = por %p48, %p49
    %s52 = sadd.s32 %s51, 1
    %p55 = scmp.eq.s32.totalorder %s17, 1
    %p56 = scmp.ne.s32.totalorder %s51, %s53
    %p57 = scmp.eq.s32.totalorder %s17, 0
    %p58 = por %p56, %p57
    %p59 = scmp.ne.s32.totalorder %s51, %s53
    %p60 = scmp.eq.s32.totalorder %s22, 1
    %p61 = por %p59, %p60
    %p62 = scmp.ne.s32.totalorder %s53, %s54
    %p63 = scmp.eq.s32.totalorder %s22, 0
    %p64 = por %p62, %p63
    %p65 = scmp.ne.s32.totalorder %s53, %s54
    %p66 = scmp.eq.s32.totalorder %s23, 1
    %p67 = por %p65, %p66
    %p69 = scmp.ne.s32.totalorder %s54, %s68
    %p70 = scmp.eq.s32.totalorder %s23, 0
    %p71 = por %p69, %p70
    %s73 = sadd.s32 %s72, 1
    %p76 = scmp.eq.s32.totalorder %s17, 1
    %p77 = scmp.ne.s32.totalorder %s72, %s74
    %p78 = scmp.eq.s32.totalorder %s17, 0
    %p79 = por %p77, %p78
    %p80 = scmp.ne.s32.totalorder %s72, %s74
    %p81 = scmp.eq.s32.totalorder %s22, 1
    %p82 = por %p80, %p81
    %p83 = scmp.ne.s32.totalorder %s74, %s75
    %p84 = scmp.eq.s32.totalorder %s22, 0
    %p85 = por %p83, %p84
    %p86 = scmp.ne.s32.totalorder %s74, %s75
    %p87 = scmp.eq.s32.totalorder %s23, 1
    %p88 = por %p86, %p87
    %p90 = scmp.ne.s32.totalorder %s75, %s89
    %p91 = scmp.eq.s32.totalorder %s23, 0
    %p92 = por %p90, %p91
    %s94 = sadd.s32 %s93, 1
    %p97 = scmp.eq.s32.totalorder %s17, 1
    %p98 = scmp.ne.s32.totalorder %s93, %s95
    %p99 = scmp.eq.s32.totalorder %s17, 0
    %p100 = por %p98, %p99
    %p101 = scmp.ne.s32.totalorder %s93, %s95
    %p102 = scmp.eq.s32.totalorder %s22, 1
    %p103 = por %p101, %p102
    %p104 = scmp.ne.s32.totalorder %s95, %s96
    %p105 = scmp.eq.s32.totalorder %s22, 0
    %p106 = por %p104, %p105
    %p107 = scmp.ne.s32.totalorder %s95, %s96
    %p108 = scmp.eq.s32.totalorder %s23, 1
    %p109 = por %p107, %p108
    %p111 = scmp.ne.s32.totalorder %s96, %s110
    %p112 = scmp.eq.s32.totalorder %s23, 0
    %p113 = por %p111, %p112
    %s115 = sadd.s32 %s114, 1
    %p118 = scmp.eq.s32.totalorder %s17, 1
    %p119 = scmp.ne.s32.totalorder %s114, %s116
    %p120 = scmp.eq.s32.totalorder %s17, 0
    %p121 = por %p119, %p120
    %p122 = scmp.ne.s32.totalorder %s114, %s116
    %p123 = scmp.eq.s32.totalorder %s22, 1
    %p124 = por %p122, %p123
    %p125 = scmp.ne.s32.totalorder %s116, %s117
    %p126 = scmp.eq.s32.totalorder %s22, 0
    %p127 = por %p125, %p126
    %p128 = scmp.ne.s32.totalorder %s116, %s117
    %p129 = scmp.eq.s32.totalorder %s23, 1
    %p130 = por %p128, %p129
    %p132 = scmp.ne.s32.totalorder %s117, %s131
    %p133 = scmp.eq.s32.totalorder %s23, 0
    %p134 = por %p132, %p133
    %s136 = sadd.s32 %s135, 1
    %p139 = scmp.eq.s32.totalorder %s17, 1
    %p140 = scmp.ne.s32.totalorder %s135, %s137
    %p141 = scmp.eq.s32.totalorder %s17, 0
    %p142 = por %p140, %p141
    %p143 = scmp.ne.s32.totalorder %s135, %s137
    %p144 = scmp.eq.s32.totalorder %s22, 1
    %p145 = por %p143, %p144
    %p146 = scmp.ne.s32.totalorder %s137, %s138
    %p147 = scmp.eq.s32.totalorder %s22, 0
    %p148 = por %p146, %p147
    %p149 = scmp.ne.s32.totalorder %s137, %s138
    %p150 = scmp.eq.s32.totalorder %s23, 1
    %p151 = por %p149, %p150
    %p153 = scmp.ne.s32.totalorder %s138, %s152
    %p154 = scmp.eq.s32.totalorder %s23, 0
    %p155 = por %p153, %p154
    %s157 = sadd.s32 %s156, 1
    %p160 = scmp.eq.s32.totalorder %s17, 1
    %p161 = scmp.ne.s32.totalorder %s156, %s158
    %p162 = scmp.eq.s32.totalorder %s17, 0
    %p163 = por %p161, %p162
    %p164 = scmp.ne.s32.totalorder %s156, %s158
    %p165 = scmp.eq.s32.totalorder %s22, 1
    %p166 = por %p164, %p165
    %p167 = scmp.ne.s32.totalorder %s158, %s159
    %p168 = scmp.eq.s32.totalorder %s22, 0
    %p169 = por %p167, %p168
    %p170 = scmp.ne.s32.totalorder %s158, %s159
    %p171 = scmp.eq.s32.totalorder %s23, 1
    %p172 = por %p170, %p171
    %p174 = scmp.ne.s32.totalorder %s159, %s173
    %p175 = scmp.eq.s32.totalorder %s23, 0
    %p176 = por %p174, %p175
    %s178 = sadd.s32 %s177, 1
    %p181 = scmp.eq.s32.totalorder %s17, 1
    %p182 = scmp.ne.s32.totalorder %s177, %s179
    %p183 = scmp.eq.s32.totalorder %s17, 0
    %p184 = por %p182, %p183
    %p185 = scmp.ne.s32.totalorder %s177, %s179
    %p186 = scmp.eq.s32.totalorder %s22, 1
    %p187 = por %p185, %p186
    %p188 = scmp.ne.s32.totalorder %s179, %s180
    %p189 = scmp.eq.s32.totalorder %s22, 0
    %p190 = por %p188, %p189
    %p191 = scmp.ne.s32.totalorder %s179, %s180
    %p192 = scmp.eq.s32.totalorder %s23, 1
    %p193 = por %p191, %p192
    %p195 = scmp.ne.s32.totalorder %s180, %s194
    %p196 = scmp.eq.s32.totalorder %s23, 0
    %p197 = por %p195, %p196
    %s199 = sadd.s32 %s198, 1
    %p202 = scmp.eq.s32.totalorder %s17, 1
    %p203 = scmp.ne.s32.totalorder %s198, %s200
    %p204 = scmp.eq.s32.totalorder %s17, 0
    %p205 = por %p203, %p204
    %p206 = scmp.ne.s32.totalorder %s198, %s200
    %p207 = scmp.eq.s32.totalorder %s22, 1
    %p208 = por %p206, %p207
    %p209 = scmp.ne.s32.totalorder %s200, %s201
    %p210 = scmp.eq.s32.totalorder %s22, 0
    %p211 = por %p209, %p210
    %p212 = scmp.ne.s32.totalorder %s200, %s201
    %p213 = scmp.eq.s32.totalorder %s23, 1
    %p214 = por %p212, %p213
    %p216 = scmp.ne.s32.totalorder %s201, %s215
    %p217 = scmp.eq.s32.totalorder %s23, 0
    %p218 = por %p216, %p217
    %s220 = sadd.s32 %s219, 1
    %p223 = scmp.eq.s32.totalorder %s17, 1
    %p224 = scmp.ne.s32.totalorder %s219, %s221
    %p225 = scmp.eq.s32.totalorder %s17, 0
    %p226 = por %p224, %p225
    %p227 = scmp.ne.s32.totalorder %s219, %s221
    %p228 = scmp.eq.s32.totalorder %s22, 1
    %p229 = por %p227, %p228
    %p230 = scmp.ne.s32.totalorder %s221, %s222
    %p231 = scmp.eq.s32.totalorder %s22, 0
    %p232 = por %p230, %p231
    %p233 = scmp.ne.s32.totalorder %s221, %s222
    %p234 = scmp.eq.s32.totalorder %s23, 1
    %p235 = por %p233, %p234
    %p237 = scmp.ne.s32.totalorder %s222, %s236
    %p238 = scmp.eq.s32.totalorder %s23, 0
    %p239 = por %p237, %p238
    %s241 = sadd.s32 %s240, 1
    %p244 = scmp.eq.s32.totalorder %s17, 1
    %p245 = scmp.ne.s32.totalorder %s240, %s242
    %p246 = scmp.eq.s32.totalorder %s17, 0
    %p247 = por %p245, %p246
    %p248 = scmp.ne.s32.totalorder %s240, %s242
    %p249 = scmp.eq.s32.totalorder %s22, 1
    %p250 = por %p248, %p249
    %p251 = scmp.ne.s32.totalorder %s242, %s243
    %p252 = scmp.eq.s32.totalorder %s22, 0
    %p253 = por %p251, %p252
    %p254 = scmp.ne.s32.totalorder %s242, %s243
    %p255 = scmp.eq.s32.totalorder %s23, 1
    %p256 = por %p254, %p255
    %p258 = scmp.ne.s32.totalorder %s243, %s257
    %p259 = scmp.eq.s32.totalorder %s23, 0
    %p260 = por %p258, %p259
    %s261 = ssub.s32 %s17, %s24
    %p262 = scmp.eq.s32.totalorder %s261, 0
    %s264 = sadd.s32 %s263, 1
    %s265 = scalar_select %p262, %s263, %s264
    %p268 = pneg %p262
    %p269 = scmp.eq.s32.totalorder %s17, 1
    %p270 = por %p268, %p269
    %p271 = scmp.ne.s32.totalorder %s263, %s266
    %p272 = scmp.eq.s32.totalorder %s17, 0
    %p273 = por %p271, %p272
    %p274 = scmp.ne.s32.totalorder %s263, %s266
    %p275 = scmp.eq.s32.totalorder %s22, 1
    %p276 = por %p274, %p275
    %p277 = scmp.ne.s32.totalorder %s266, %s267
    %p278 = scmp.eq.s32.totalorder %s22, 0
    %p279 = por %p277, %p278
    %p280 = scmp.ne.s32.totalorder %s266, %s267
    %p281 = scmp.eq.s32.totalorder %s23, 1
    %p282 = por %p280, %p281
    %p284 = scmp.ne.s32.totalorder %s267, %s283
    %p285 = scmp.eq.s32.totalorder %s23, 0
    %p286 = por %p284, %p285
    %p287 = scmp.le.s32.totalorder 1, %s17
    %p288 = scmp.lt.s32.totalorder %s17, 3
    %p289 = pnand %p287, %p288
    %p290 = pneg %p289
    // Predicated region
    $region9: #{net_forward.1} parent=5 // pred_check
      _
    $region10: #{net_forward.1} parent=5 // pred_check_branch
      %292 = sbr.rel (%p289) target = $region12
    $region11: #{net_forward.1} parent=5 // pred_region
      %s293 = ssub.s32 %s17, 1
      // Predicated region
      $region13: #{net_forward.1} parent=11 // pred_check
        %p294 = pneg %p64
      $region14: #{net_forward.1} parent=11 // pred_check_branch
        %296 = sbr.rel (%p294) target = $region16
      $region15: #{net_forward.1} parent=11 // pred_region
        _
      $region16: #{net_forward.1} parent=11 // pred_fallthru
        _
      // Predicated region
      $region17: #{net_forward.1} parent=11 // pred_check
        %p297 = pneg %p85
      $region18: #{net_forward.1} parent=11 // pred_check_branch
        %299 = sbr.rel (%p297) target = $region20
      $region19: #{net_forward.1} parent=11 // pred_region
        _
      $region20: #{net_forward.1} parent=11 // pred_fallthru
        _
      // Predicated region
      $region21: #{net_forward.1} parent=11 // pred_check
        %p300 = pneg %p106
      $region22: #{net_forward.1} parent=11 // pred_check_branch
        %302 = sbr.rel (%p300) target = $region24
      $region23: #{net_forward.1} parent=11 // pred_region
        _
      $region24: #{net_forward.1} parent=11 // pred_fallthru
        _
      // Predicated region
      $region25: #{net_forward.1} parent=11 // pred_check
        %p303 = pneg %p127
      $region26: #{net_forward.1} parent=11 // pred_check_branch
        %305 = sbr.rel (%p303) target = $region28
      $region27: #{net_forward.1} parent=11 // pred_region
        _
      $region28: #{net_forward.1} parent=11 // pred_fallthru
        _
      // Predicated region
      $region29: #{net_forward.1} parent=11 // pred_check
        %p306 = pneg %p148
      $region30: #{net_forward.1} parent=11 // pred_check_branch
        %308 = sbr.rel (%p306) target = $region32
      $region31: #{net_forward.1} parent=11 // pred_region
        _
      $region32: #{net_forward.1} parent=11 // pred_fallthru
        _
      // Predicated region
      $region33: #{net_forward.1} parent=11 // pred_check
        %p309 = pneg %p169
      $region34: #{net_forward.1} parent=11 // pred_check_branch
        %311 = sbr.rel (%p309) target = $region36
      $region35: #{net_forward.1} parent=11 // pred_region
        _
      $region36: #{net_forward.1} parent=11 // pred_fallthru
        _
      // Predicated region
      $region37: #{net_forward.1} parent=11 // pred_check
        %p312 = pneg %p190
      $region38: #{net_forward.1} parent=11 // pred_check_branch
        %314 = sbr.rel (%p312) target = $region40
      $region39: #{net_forward.1} parent=11 // pred_region
        _
      $region40: #{net_forward.1} parent=11 // pred_fallthru
        _
      // Predicated region
      $region41: #{net_forward.1} parent=11 // pred_check
        %p315 = pneg %p211
      $region42: #{net_forward.1} parent=11 // pred_check_branch
        %317 = sbr.rel (%p315) target = $region44
      $region43: #{net_forward.1} parent=11 // pred_region
        _
      $region44: #{net_forward.1} parent=11 // pred_fallthru
        _
      // Predicated region
      $region45: #{net_forward.1} parent=11 // pred_check
        %p318 = pneg %p232
      $region46: #{net_forward.1} parent=11 // pred_check_branch
        %320 = sbr.rel (%p318) target = $region48
      $region47: #{net_forward.1} parent=11 // pred_region
        _
      $region48: #{net_forward.1} parent=11 // pred_fallthru
        _
      // Predicated region
      $region49: #{net_forward.1} parent=11 // pred_check
        %p321 = pneg %p253
      $region50: #{net_forward.1} parent=11 // pred_check_branch
        %323 = sbr.rel (%p321) target = $region52
      $region51: #{net_forward.1} parent=11 // pred_region
        _
      $region52: #{net_forward.1} parent=11 // pred_fallthru
        _
    $region12: #{net_forward.1} parent=5 // pred_fallthru
      _
    %p324 = scmp.lt.s32.totalorder %s17, 2
    // Predicated region
    $region53: #{net_forward.1} parent=5 // pred_check
      %p325 = pneg %p324
    $region54: #{net_forward.1} parent=5 // pred_check_branch
      %327 = sbr.rel (%p325) target = $region56
    $region55: #{net_forward.1} parent=5 // pred_region
      // Predicated region
      $region57: #{net_forward.1} parent=55 // pred_check
        %p328 = pneg %p37
      $region58: #{net_forward.1} parent=55 // pred_check_branch
        %330 = sbr.rel (%p328) target = $region60
      $region59: #{net_forward.1} parent=55 // pred_region
        %s331 = smul.u32 8, %s17
        %p332 = scmp.lt.s32.totalorder %s331, 15
        %s333 = scalar_select %p332, %s331, 15
        %s334 = smul.addr %s333, 4
        %s335 = smul.addr %s334, 4
        %s336 = scalar_lea.vmem %s0, %s335
        %s337 = smul.u32 8, %s17
      $region60: #{net_forward.1} parent=55 // pred_fallthru
        _
    $region56: #{net_forward.1} parent=5 // pred_fallthru
      _
    %p338 = scmp.le.s32.totalorder 1, %s17
    %p339 = scmp.lt.s32.totalorder %s17, 3
    %p340 = pnand %p338, %p339
    %p341 = pneg %p340
    // Predicated region
    $region61: #{net_forward.1} parent=5 // pred_check
      _
    $region62: #{net_forward.1} parent=5 // pred_check_branch
      %343 = sbr.rel (%p340) target = $region64
    $region63: #{net_forward.1} parent=5 // pred_region
      %s344 = ssub.s32 %s17, 1
      %s345 = smul.u32 8, %s22
      %p346 = scmp.lt.s32.totalorder %s345, 15
      %s347 = scalar_select %p346, %s345, 15
      %s348 = smul.addr %s347, 4
      %s349 = smul.addr %s348, 4
      %s350 = scalar_lea.vmem %s0, %s349
      %p351 = pneg %p43
      %p352 = pneg %p40
      %p353 = pneg %p64
      %p354 = pneg %p61
      %p355 = pneg %p85
      %p356 = pneg %p82
      %p357 = pneg %p106
      %p358 = pneg %p103
      %p359 = pneg %p127
      %p360 = pneg %p124
      %p361 = pneg %p148
      %p362 = pneg %p145
      %p363 = pneg %p169
      %p364 = pneg %p166
      %p365 = pneg %p190
      %p366 = pneg %p187
      %p367 = pneg %p211
      %p368 = pneg %p208
      %p369 = pneg %p232
      %p370 = pneg %p229
      %p371 = pneg %p253
      %p372 = pneg %p250
      %p373 = pneg %p279
      %p374 = pneg %p276
      %p375 = scmp.lt.s32.totalorder %s22, 1
      %s376 = scalar_select %p375, %s22, 1
      %s377 = smul.addr %s376, 8
      %s378 = scalar_lea.vmem %s11, %s377
      %s379 = smul.u32 8, %s22
      %p380 = scmp.lt.s32.totalorder %s379, 15
      %s381 = scalar_select %p380, %s379, 15
      %s382 = smul.addr %s381, 4
      %s383 = smul.addr %s382, 4
      %s384 = scalar_lea.vmem %s0, %s383
      %s385 = smul.u32 8, %s22
      %p386 = scmp.lt.s32.totalorder %s22, 1
      %s387 = scalar_select %p386, %s22, 1
      %s388 = smul.addr %s387, 8
      %s389 = scalar_lea.vmem %s11, %s388
      %v391 = vld [vmem:[%s384] sm:$0xf]
      %v392 = vld [vmem:[%s384 + $0x4] sm:$0xf]
      %v393 = vld [vmem:[%s384 + $0x8] sm:$0xf]
      %v394 = vld [vmem:[%s384 + $0xc] sm:$0xf]
      %v395 = vld [vmem:[%s384 + $0x10] sm:$0xf]
      %v396 = vld [vmem:[%s384 + $0x14] sm:$0xf]
      %v397 = vld [vmem:[%s384 + $0x18] sm:$0xf]
      %v398 = vld [vmem:[%s384 + $0x1c] sm:$0xf]
      %v399 = vld [vmem:[%s384 + $0x20] sm:$0xf]
      %v400 = vld [vmem:[%s384 + $0x24] sm:$0xf]
      %v401 = vld [vmem:[%s384 + $0x28] sm:$0xf]
      %v402 = vld [vmem:[%s384 + $0x2c] sm:$0xf]
      %v403 = vld [vmem:[%s384 + $0x30] sm:$0xf]
      %v404 = vld [vmem:[%s384 + $0x34] sm:$0xf]
      %v405 = vld [vmem:[%s384 + $0x38] sm:$0xf]
      %v406 = vld [vmem:[%s384 + $0x3c] sm:$0xf]
      %v407 = vld [vmem:[%s384 + $0x40] sm:$0xf]
      %v408 = vld [vmem:[%s384 + $0x44] sm:$0xf]
      %v409 = vld [vmem:[%s384 + $0x48] sm:$0xf]
      %v410 = vld [vmem:[%s384 + $0x4c] sm:$0xf]
      %v411 = vld [vmem:[%s384 + $0x50] sm:$0xf]
      %v412 = vld [vmem:[%s384 + $0x54] sm:$0xf]
      %v413 = vld [vmem:[%s384 + $0x58] sm:$0xf]
      %v414 = vld [vmem:[%s384 + $0x5c] sm:$0xf]
      %v415 = vld [vmem:[%s384 + $0x60] sm:$0xf]
      %v416 = vld [vmem:[%s384 + $0x64] sm:$0xf]
      %v417 = vld [vmem:[%s384 + $0x68] sm:$0xf]
      %v418 = vld [vmem:[%s384 + $0x6c] sm:$0xf]
      %v419 = vld [vmem:[%s384 + $0x70] sm:$0xf]
      %v420 = vld [vmem:[%s384 + $0x74] sm:$0xf]
      %v421 = vld [vmem:[%s384 + $0x78] sm:$0xf]
      %v422 = vld [vmem:[%s384 + $0x7c] sm:$0xf]
      %v456 = vunpack.c.l.s4 1983009808
      %v457 = vunpack.c.0.s8 %v456
      %v458 = vlaneseq
      %v459 = vshrl.u32 %v458, 7
      %v460 = vsub.s32 %v457, %v459
      %v461 = vrot.slane %v391, %v460
      %v462 = vcombine.high %v461, %v461
      %v464 = vunpack.c.l.s4 1983009808
      %v465 = vunpack.c.0.s8 %v464
      %v466 = vlaneseq
      %v467 = vshrl.u32 %v466, 7
      %v468 = vsub.s32 %v465, %v467
      %v469 = vrot.slane %v392, %v468
      %v470 = vcombine.high %v469, %v469
      %v472 = vunpack.c.l.s4 1983009808
      %v473 = vunpack.c.0.s8 %v472
      %v474 = vlaneseq
      %v475 = vshrl.u32 %v474, 7
      %v476 = vsub.s32 %v473, %v475
      %v477 = vrot.slane %v393, %v476
      %v478 = vcombine.high %v477, %v477
      %v480 = vunpack.c.l.s4 1983009808
      %v481 = vunpack.c.0.s8 %v480
      %v482 = vlaneseq
      %v483 = vshrl.u32 %v482, 7
      %v484 = vsub.s32 %v481, %v483
      %v485 = vrot.slane %v394, %v484
      %v487 = vunpack.c.l.s4 1983009808
      %v488 = vunpack.c.0.s8 %v487
      %v489 = vlaneseq
      %v490 = vshrl.u32 %v489, 7
      %v491 = vsub.s32 %v488, %v490
      %v492 = vrot.slane %v395, %v491
      %v493 = vcombine.high %v492, %v492
      %v495 = vunpack.c.l.s4 1983009808
      %v496 = vunpack.c.0.s8 %v495
      %v497 = vlaneseq
      %v498 = vshrl.u32 %v497, 7
      %v499 = vsub.s32 %v496, %v498
      %v500 = vrot.slane %v396, %v499
      %v501 = vcombine.high %v500, %v500
      %v503 = vunpack.c.l.s4 1983009808
      %v504 = vunpack.c.0.s8 %v503
      %v505 = vlaneseq
      %v506 = vshrl.u32 %v505, 7
      %v507 = vsub.s32 %v504, %v506
      %v508 = vrot.slane %v397, %v507
      %v509 = vcombine.high %v508, %v508
      %v511 = vunpack.c.l.s4 1983009808
      %v512 = vunpack.c.0.s8 %v511
      %v513 = vlaneseq
      %v514 = vshrl.u32 %v513, 7
      %v515 = vsub.s32 %v512, %v514
      %v516 = vrot.slane %v398, %v515
      %v518 = vunpack.c.l.s4 1983009808
      %v519 = vunpack.c.0.s8 %v518
      %v520 = vlaneseq
      %v521 = vshrl.u32 %v520, 7
      %v522 = vsub.s32 %v519, %v521
      %v523 = vrot.slane %v399, %v522
      %v524 = vcombine.high %v523, %v523
      %v526 = vunpack.c.l.s4 1983009808
      %v527 = vunpack.c.0.s8 %v526
      %v528 = vlaneseq
      %v529 = vshrl.u32 %v528, 7
      %v530 = vsub.s32 %v527, %v529
      %v531 = vrot.slane %v400, %v530
      %v532 = vcombine.high %v531, %v531
      %v534 = vunpack.c.l.s4 1983009808
      %v535 = vunpack.c.0.s8 %v534
      %v536 = vlaneseq
      %v537 = vshrl.u32 %v536, 7
      %v538 = vsub.s32 %v535, %v537
      %v539 = vrot.slane %v401, %v538
      %v540 = vcombine.high %v539, %v539
      %v542 = vunpack.c.l.s4 1983009808
      %v543 = vunpack.c.0.s8 %v542
      %v544 = vlaneseq
      %v545 = vshrl.u32 %v544, 7
      %v546 = vsub.s32 %v543, %v545
      %v547 = vrot.slane %v402, %v546
      %v549 = vunpack.c.l.s4 1983009808
      %v550 = vunpack.c.0.s8 %v549
      %v551 = vlaneseq
      %v552 = vshrl.u32 %v551, 7
      %v553 = vsub.s32 %v550, %v552
      %v554 = vrot.slane %v403, %v553
      %v555 = vcombine.high %v554, %v554
      %v557 = vunpack.c.l.s4 1983009808
      %v558 = vunpack.c.0.s8 %v557
      %v559 = vlaneseq
      %v560 = vshrl.u32 %v559, 7
      %v561 = vsub.s32 %v558, %v560
      %v562 = vrot.slane %v404, %v561
      %v563 = vcombine.high %v562, %v562
      %v565 = vunpack.c.l.s4 1983009808
      %v566 = vunpack.c.0.s8 %v565
      %v567 = vlaneseq
      %v568 = vshrl.u32 %v567, 7
      %v569 = vsub.s32 %v566, %v568
      %v570 = vrot.slane %v405, %v569
      %v571 = vcombine.high %v570, %v570
      %v573 = vunpack.c.l.s4 1983009808
      %v574 = vunpack.c.0.s8 %v573
      %v575 = vlaneseq
      %v576 = vshrl.u32 %v575, 7
      %v577 = vsub.s32 %v574, %v576
      %v578 = vrot.slane %v406, %v577
      %v580 = vunpack.c.l.s4 1983009808
      %v581 = vunpack.c.0.s8 %v580
      %v582 = vlaneseq
      %v583 = vshrl.u32 %v582, 7
      %v584 = vsub.s32 %v581, %v583
      %v585 = vrot.slane %v407, %v584
      %v586 = vcombine.high %v585, %v585
      %v588 = vunpack.c.l.s4 1983009808
      %v589 = vunpack.c.0.s8 %v588
      %v590 = vlaneseq
      %v591 = vshrl.u32 %v590, 7
      %v592 = vsub.s32 %v589, %v591
      %v593 = vrot.slane %v408, %v592
      %v594 = vcombine.high %v593, %v593
      %v596 = vunpack.c.l.s4 1983009808
      %v597 = vunpack.c.0.s8 %v596
      %v598 = vlaneseq
      %v599 = vshrl.u32 %v598, 7
      %v600 = vsub.s32 %v597, %v599
      %v601 = vrot.slane %v409, %v600
      %v602 = vcombine.high %v601, %v601
      %v604 = vunpack.c.l.s4 1983009808
      %v605 = vunpack.c.0.s8 %v604
      %v606 = vlaneseq
      %v607 = vshrl.u32 %v606, 7
      %v608 = vsub.s32 %v605, %v607
      %v609 = vrot.slane %v410, %v608
      %v611 = vunpack.c.l.s4 1983009808
      %v612 = vunpack.c.0.s8 %v611
      %v613 = vlaneseq
      %v614 = vshrl.u32 %v613, 7
      %v615 = vsub.s32 %v612, %v614
      %v616 = vrot.slane %v411, %v615
      %v617 = vcombine.high %v616, %v616
      %v619 = vunpack.c.l.s4 1983009808
      %v620 = vunpack.c.0.s8 %v619
      %v621 = vlaneseq
      %v622 = vshrl.u32 %v621, 7
      %v623 = vsub.s32 %v620, %v622
      %v624 = vrot.slane %v412, %v623
      %v625 = vcombine.high %v624, %v624
      %v627 = vunpack.c.l.s4 1983009808
      %v628 = vunpack.c.0.s8 %v627
      %v629 = vlaneseq
      %v630 = vshrl.u32 %v629, 7
      %v631 = vsub.s32 %v628, %v630
      %v632 = vrot.slane %v413, %v631
      %v633 = vcombine.high %v632, %v632
      %v635 = vunpack.c.l.s4 1983009808
      %v636 = vunpack.c.0.s8 %v635
      %v637 = vlaneseq
      %v638 = vshrl.u32 %v637, 7
      %v639 = vsub.s32 %v636, %v638
      %v640 = vrot.slane %v414, %v639
      %v642 = vunpack.c.l.s4 1983009808
      %v643 = vunpack.c.0.s8 %v642
      %v644 = vlaneseq
      %v645 = vshrl.u32 %v644, 7
      %v646 = vsub.s32 %v643, %v645
      %v647 = vrot.slane %v415, %v646
      %v648 = vcombine.high %v647, %v647
      %v650 = vunpack.c.l.s4 1983009808
      %v651 = vunpack.c.0.s8 %v650
      %v652 = vlaneseq
      %v653 = vshrl.u32 %v652, 7
      %v654 = vsub.s32 %v651, %v653
      %v655 = vrot.slane %v416, %v654
      %v656 = vcombine.high %v655, %v655
      %v658 = vunpack.c.l.s4 1983009808
      %v659 = vunpack.c.0.s8 %v658
      %v660 = vlaneseq
      %v661 = vshrl.u32 %v660, 7
      %v662 = vsub.s32 %v659, %v661
      %v663 = vrot.slane %v417, %v662
      %v664 = vcombine.high %v663, %v663
      %v666 = vunpack.c.l.s4 1983009808
      %v667 = vunpack.c.0.s8 %v666
      %v668 = vlaneseq
      %v669 = vshrl.u32 %v668, 7
      %v670 = vsub.s32 %v667, %v669
      %v671 = vrot.slane %v418, %v670
      %v673 = vunpack.c.l.s4 1983009808
      %v674 = vunpack.c.0.s8 %v673
      %v675 = vlaneseq
      %v676 = vshrl.u32 %v675, 7
      %v677 = vsub.s32 %v674, %v676
      %v678 = vrot.slane %v419, %v677
      %v679 = vcombine.high %v678, %v678
      %v681 = vunpack.c.l.s4 1983009808
      %v682 = vunpack.c.0.s8 %v681
      %v683 = vlaneseq
      %v684 = vshrl.u32 %v683, 7
      %v685 = vsub.s32 %v682, %v684
      %v686 = vrot.slane %v420, %v685
      %v687 = vcombine.high %v686, %v686
      %v689 = vunpack.c.l.s4 1983009808
      %v690 = vunpack.c.0.s8 %v689
      %v691 = vlaneseq
      %v692 = vshrl.u32 %v691, 7
      %v693 = vsub.s32 %v690, %v692
      %v694 = vrot.slane %v421, %v693
      %v695 = vcombine.high %v694, %v694
      %v697 = vunpack.c.l.s4 1983009808
      %v698 = vunpack.c.0.s8 %v697
      %v699 = vlaneseq
      %v700 = vshrl.u32 %v699, 7
      %v701 = vsub.s32 %v698, %v700
      %v702 = vrot.slane %v422, %v701
      %v703 = vld [vmem:[%s1] sm:$0xff]
      %v704 = vld [vmem:[%s1 + $0x8] sm:$0xff]
      %v705 = vld [vmem:[%s1 + $0x10] sm:$0xff]
      %v706 = vld [vmem:[%s1 + $0x18] sm:$0xff]
      %v707 = vld [vmem:[%s1 + $0x20] sm:$0xff]
      %v708 = vld [vmem:[%s1 + $0x28] sm:$0xff]
      %v709 = vld [vmem:[%s1 + $0x30] sm:$0xff]
      %v710 = vld [vmem:[%s1 + $0x38] sm:$0xff]
      %v711 = vld [vmem:[%s1 + $0x40] sm:$0xff]
      %v712 = vld [vmem:[%s1 + $0x48] sm:$0xff]
      %v713 = vld [vmem:[%s1 + $0x50] sm:$0xff]
      %v714 = vld [vmem:[%s1 + $0x58] sm:$0xff]
      %v715 = vcombine.high %v485, %v485
      %v716 = vcombine.high %v516, %v516
      %v717 = vcombine.high %v547, %v547
      %v718 = vcombine.high %v578, %v578
      %v719 = vcombine.high %v609, %v609
      %v720 = vcombine.high %v640, %v640
      %v721 = vcombine.high %v671, %v671
      %v722 = vcombine.high %v702, %v702
      %vm723 = vsmask.f32 1280
      %vm724 = vsmask.f32 3336
      %vm725 = vmor %vm723, %vm724
      %vm726 = vsmask.f32 5392
      %vm727 = vmor %vm725, %vm726
      %vm728 = vsmask.f32 7448
      %vm729 = vmor %vm727, %vm728
      %v731 = vshrl.u32 %v461, 16
      %v733 = vrot.slane %v731, 6
      %v734 = vshll.u32 %v461, 16
      %v736 = vrot.slane %v734, 7
      %v737 = vor.u32 %v733, %v736
      %v738 = vrot.slane %v737, 2
      %v740 = vshll.u32 %v462, 16
      %v742 = vrot.slane %v740, 7
      %v743 = vsel %vm729, %v738, %v742
      %v744 = vshrl.u32 %v462, 16
      %v746 = vrot.slane %v744, 6
      %v747 = vor.u32 %v746, %v742
      %v748 = vrot.slane %v747, 2
      %v750 = vshll.u32 %v469, 16
      %v752 = vrot.slane %v750, 7
      %v753 = vsel %vm729, %v748, %v752
      %v754 = vshrl.u32 %v469, 16
      %v756 = vrot.slane %v754, 6
      %v757 = vor.u32 %v756, %v752
      %v758 = vrot.slane %v757, 2
      %v760 = vshll.u32 %v470, 16
      %v762 = vrot.slane %v760, 7
      %v763 = vsel %vm729, %v758, %v762
      %v764 = vshrl.u32 %v470, 16
      %v766 = vrot.slane %v764, 6
      %v767 = vor.u32 %v766, %v762
      %v768 = vrot.slane %v767, 2
      %v770 = vshll.u32 %v477, 16
      %v772 = vrot.slane %v770, 7
      %v773 = vsel %vm729, %v768, %v772
      %v774 = vshrl.u32 %v477, 16
      %v776 = vrot.slane %v774, 6
      %v777 = vor.u32 %v776, %v772
      %v778 = vrot.slane %v777, 2
      %v780 = vshll.u32 %v478, 16
      %v782 = vrot.slane %v780, 7
      %v783 = vsel %vm729, %v778, %v782
      %v784 = vshrl.u32 %v478, 16
      %v786 = vrot.slane %v784, 6
      %v787 = vor.u32 %v786, %v782
      %v788 = vrot.slane %v787, 2
      %v790 = vshll.u32 %v485, 16
      %v792 = vrot.slane %v790, 7
      %v793 = vsel %vm729, %v788, %v792
      %v794 = vshrl.u32 %v485, 16
      %v796 = vrot.slane %v794, 6
      %v797 = vor.u32 %v796, %v792
      %v798 = vrot.slane %v797, 2
      %v800 = vshll.u32 %v715, 16
      %v802 = vrot.slane %v800, 7
      %v803 = vsel %vm729, %v798, %v802
      %v805 = vshrl.u32 %v492, 16
      %v807 = vrot.slane %v805, 6
      %v808 = vshll.u32 %v492, 16
      %v810 = vrot.slane %v808, 7
      %v811 = vor.u32 %v807, %v810
      %v812 = vrot.slane %v811, 2
      %v814 = vshll.u32 %v493, 16
      %v816 = vrot.slane %v814, 7
      %v817 = vsel %vm729, %v812, %v816
      %v818 = vshrl.u32 %v493, 16
      %v820 = vrot.slane %v818, 6
      %v821 = vor.u32 %v820, %v816
      %v822 = vrot.slane %v821, 2
      %v824 = vshll.u32 %v500, 16
      %v826 = vrot.slane %v824, 7
      %v827 = vsel %vm729, %v822, %v826
      %v828 = vshrl.u32 %v500, 16
      %v830 = vrot.slane %v828, 6
      %v831 = vor.u32 %v830, %v826
      %v832 = vrot.slane %v831, 2
      %v834 = vshll.u32 %v501, 16
      %v836 = vrot.slane %v834, 7
      %v837 = vsel %vm729, %v832, %v836
      %v838 = vshrl.u32 %v501, 16
      %v840 = vrot.slane %v838, 6
      %v841 = vor.u32 %v840, %v836
      %v842 = vrot.slane %v841, 2
      %v844 = vshll.u32 %v508, 16
      %v846 = vrot.slane %v844, 7
      %v847 = vsel %vm729, %v842, %v846
      %v848 = vshrl.u32 %v508, 16
      %v850 = vrot.slane %v848, 6
      %v851 = vor.u32 %v850, %v846
      %v852 = vrot.slane %v851, 2
      %v854 = vshll.u32 %v509, 16
      %v856 = vrot.slane %v854, 7
      %v857 = vsel %vm729, %v852, %v856
      %v858 = vshrl.u32 %v509, 16
      %v860 = vrot.slane %v858, 6
      %v861 = vor.u32 %v860, %v856
      %v862 = vrot.slane %v861, 2
      %v864 = vshll.u32 %v516, 16
      %v866 = vrot.slane %v864, 7
      %v867 = vsel %vm729, %v862, %v866
      %v868 = vshrl.u32 %v516, 16
      %v870 = vrot.slane %v868, 6
      %v871 = vor.u32 %v870, %v866
      %v872 = vrot.slane %v871, 2
      %v874 = vshll.u32 %v716, 16
      %v876 = vrot.slane %v874, 7
      %v877 = vsel %vm729, %v872, %v876
      %v879 = vshrl.u32 %v523, 16
      %v881 = vrot.slane %v879, 6
      %v882 = vshll.u32 %v523, 16
      %v884 = vrot.slane %v882, 7
      %v885 = vor.u32 %v881, %v884
      %v886 = vrot.slane %v885, 2
      %v888 = vshll.u32 %v524, 16
      %v890 = vrot.slane %v888, 7
      %v891 = vsel %vm729, %v886, %v890
      %v892 = vshrl.u32 %v524, 16
      %v894 = vrot.slane %v892, 6
      %v895 = vor.u32 %v894, %v890
      %v896 = vrot.slane %v895, 2
      %v898 = vshll.u32 %v531, 16
      %v900 = vrot.slane %v898, 7
      %v901 = vsel %vm729, %v896, %v900
      %v902 = vshrl.u32 %v531, 16
      %v904 = vrot.slane %v902, 6
      %v905 = vor.u32 %v904, %v900
      %v906 = vrot.slane %v905, 2
      %v908 = vshll.u32 %v532, 16
      %v910 = vrot.slane %v908, 7
      %v911 = vsel %vm729, %v906, %v910
      %v912 = vshrl.u32 %v532, 16
      %v914 = vrot.slane %v912, 6
      %v915 = vor.u32 %v914, %v910
      %v916 = vrot.slane %v915, 2
      %v918 = vshll.u32 %v539, 16
      %v920 = vrot.slane %v918, 7
      %v921 = vsel %vm729, %v916, %v920
      %v922 = vshrl.u32 %v539, 16
      %v924 = vrot.slane %v922, 6
      %v925 = vor.u32 %v924, %v920
      %v926 = vrot.slane %v925, 2
      %v928 = vshll.u32 %v540, 16
      %v930 = vrot.slane %v928, 7
      %v931 = vsel %vm729, %v926, %v930
      %v932 = vshrl.u32 %v540, 16
      %v934 = vrot.slane %v932, 6
      %v935 = vor.u32 %v934, %v930
      %v936 = vrot.slane %v935, 2
      %v938 = vshll.u32 %v547, 16
      %v940 = vrot.slane %v938, 7
      %v941 = vsel %vm729, %v936, %v940
      %v942 = vshrl.u32 %v547, 16
      %v944 = vrot.slane %v942, 6
      %v945 = vor.u32 %v944, %v940
      %v946 = vrot.slane %v945, 2
      %v948 = vshll.u32 %v717, 16
      %v950 = vrot.slane %v948, 7
      %v951 = vsel %vm729, %v946, %v950
      %v953 = vshrl.u32 %v554, 16
      %v955 = vrot.slane %v953, 6
      %v956 = vshll.u32 %v554, 16
      %v958 = vrot.slane %v956, 7
      %v959 = vor.u32 %v955, %v958
      %v960 = vrot.slane %v959, 2
      %v962 = vshll.u32 %v555, 16
      %v964 = vrot.slane %v962, 7
      %v965 = vsel %vm729, %v960, %v964
      %v966 = vshrl.u32 %v555, 16
      %v968 = vrot.slane %v966, 6
      %v969 = vor.u32 %v968, %v964
      %v970 = vrot.slane %v969, 2
      %v972 = vshll.u32 %v562, 16
      %v974 = vrot.slane %v972, 7
      %v975 = vsel %vm729, %v970, %v974
      %v976 = vshrl.u32 %v562, 16
      %v978 = vrot.slane %v976, 6
      %v979 = vor.u32 %v978, %v974
      %v980 = vrot.slane %v979, 2
      %v982 = vshll.u32 %v563, 16
      %v984 = vrot.slane %v982, 7
      %v985 = vsel %vm729, %v980, %v984
      %v986 = vshrl.u32 %v563, 16
      %v988 = vrot.slane %v986, 6
      %v989 = vor.u32 %v988, %v984
      %v990 = vrot.slane %v989, 2
      %v992 = vshll.u32 %v570, 16
      %v994 = vrot.slane %v992, 7
      %v995 = vsel %vm729, %v990, %v994
      %v996 = vshrl.u32 %v570, 16
      %v998 = vrot.slane %v996, 6
      %v999 = vor.u32 %v998, %v994
      %v1000 = vrot.slane %v999, 2
      %v1002 = vshll.u32 %v571, 16
      %v1004 = vrot.slane %v1002, 7
      %v1005 = vsel %vm729, %v1000, %v1004
      %v1006 = vshrl.u32 %v571, 16
      %v1008 = vrot.slane %v1006, 6
      %v1009 = vor.u32 %v1008, %v1004
      %v1010 = vrot.slane %v1009, 2
      %v1012 = vshll.u32 %v578, 16
      %v1014 = vrot.slane %v1012, 7
      %v1015 = vsel %vm729, %v1010, %v1014
      %v1016 = vshrl.u32 %v578, 16
      %v1018 = vrot.slane %v1016, 6
      %v1019 = vor.u32 %v1018, %v1014
      %v1020 = vrot.slane %v1019, 2
      %v1022 = vshll.u32 %v718, 16
      %v1024 = vrot.slane %v1022, 7
      %v1025 = vsel %vm729, %v1020, %v1024
      %v1027 = vshrl.u32 %v585, 16
      %v1029 = vrot.slane %v1027, 6
      %v1030 = vshll.u32 %v585, 16
      %v1032 = vrot.slane %v1030, 7
      %v1033 = vor.u32 %v1029, %v1032
      %v1034 = vrot.slane %v1033, 2
      %v1036 = vshll.u32 %v586, 16
      %v1038 = vrot.slane %v1036, 7
      %v1039 = vsel %vm729, %v1034, %v1038
      %v1040 = vshrl.u32 %v586, 16
      %v1042 = vrot.slane %v1040, 6
      %v1043 = vor.u32 %v1042, %v1038
      %v1044 = vrot.slane %v1043, 2
      %v1046 = vshll.u32 %v593, 16
      %v1048 = vrot.slane %v1046, 7
      %v1049 = vsel %vm729, %v1044, %v1048
      %v1050 = vshrl.u32 %v593, 16
      %v1052 = vrot.slane %v1050, 6
      %v1053 = vor.u32 %v1052, %v1048
      %v1054 = vrot.slane %v1053, 2
      %v1056 = vshll.u32 %v594, 16
      %v1058 = vrot.slane %v1056, 7
      %v1059 = vsel %vm729, %v1054, %v1058
      %v1060 = vshrl.u32 %v594, 16
      %v1062 = vrot.slane %v1060, 6
      %v1063 = vor.u32 %v1062, %v1058
      %v1064 = vrot.slane %v1063, 2
      %v1066 = vshll.u32 %v601, 16
      %v1068 = vrot.slane %v1066, 7
      %v1069 = vsel %vm729, %v1064, %v1068
      %v1070 = vshrl.u32 %v601, 16
      %v1072 = vrot.slane %v1070, 6
      %v1073 = vor.u32 %v1072, %v1068
      %v1074 = vrot.slane %v1073, 2
      %v1076 = vshll.u32 %v602, 16
      %v1078 = vrot.slane %v1076, 7
      %v1079 = vsel %vm729, %v1074, %v1078
      %v1080 = vshrl.u32 %v602, 16
      %v1082 = vrot.slane %v1080, 6
      %v1083 = vor.u32 %v1082, %v1078
      %v1084 = vrot.slane %v1083, 2
      %v1086 = vshll.u32 %v609, 16
      %v1088 = vrot.slane %v1086, 7
      %v1089 = vsel %vm729, %v1084, %v1088
      %v1090 = vshrl.u32 %v609, 16
      %v1092 = vrot.slane %v1090, 6
      %v1093 = vor.u32 %v1092, %v1088
      %v1094 = vrot.slane %v1093, 2
      %v1096 = vshll.u32 %v719, 16
      %v1098 = vrot.slane %v1096, 7
      %v1099 = vsel %vm729, %v1094, %v1098
      %v1101 = vshrl.u32 %v616, 16
      %v1103 = vrot.slane %v1101, 6
      %v1104 = vshll.u32 %v616, 16
      %v1106 = vrot.slane %v1104, 7
      %v1107 = vor.u32 %v1103, %v1106
      %v1108 = vrot.slane %v1107, 2
      %v1110 = vshll.u32 %v617, 16
      %v1112 = vrot.slane %v1110, 7
      %v1113 = vsel %vm729, %v1108, %v1112
      %v1114 = vshrl.u32 %v617, 16
      %v1116 = vrot.slane %v1114, 6
      %v1117 = vor.u32 %v1116, %v1112
      %v1118 = vrot.slane %v1117, 2
      %v1120 = vshll.u32 %v624, 16
      %v1122 = vrot.slane %v1120, 7
      %v1123 = vsel %vm729, %v1118, %v1122
      %v1124 = vshrl.u32 %v624, 16
      %v1126 = vrot.slane %v1124, 6
      %v1127 = vor.u32 %v1126, %v1122
      %v1128 = vrot.slane %v1127, 2
      %v1130 = vshll.u32 %v625, 16
      %v1132 = vrot.slane %v1130, 7
      %v1133 = vsel %vm729, %v1128, %v1132
      %v1134 = vshrl.u32 %v625, 16
      %v1136 = vrot.slane %v1134, 6
      %v1137 = vor.u32 %v1136, %v1132
      %v1138 = vrot.slane %v1137, 2
      %v1140 = vshll.u32 %v632, 16
      %v1142 = vrot.slane %v1140, 7
      %v1143 = vsel %vm729, %v1138, %v1142
      %v1144 = vshrl.u32 %v632, 16
      %v1146 = vrot.slane %v1144, 6
      %v1147 = vor.u32 %v1146, %v1142
      %v1148 = vrot.slane %v1147, 2
      %v1150 = vshll.u32 %v633, 16
      %v1152 = vrot.slane %v1150, 7
      %v1153 = vsel %vm729, %v1148, %v1152
      %v1154 = vshrl.u32 %v633, 16
      %v1156 = vrot.slane %v1154, 6
      %v1157 = vor.u32 %v1156, %v1152
      %v1158 = vrot.slane %v1157, 2
      %v1160 = vshll.u32 %v640, 16
      %v1162 = vrot.slane %v1160, 7
      %v1163 = vsel %vm729, %v1158, %v1162
      %v1164 = vshrl.u32 %v640, 16
      %v1166 = vrot.slane %v1164, 6
      %v1167 = vor.u32 %v1166, %v1162
      %v1168 = vrot.slane %v1167, 2
      %v1170 = vshll.u32 %v720, 16
      %v1172 = vrot.slane %v1170, 7
      %v1173 = vsel %vm729, %v1168, %v1172
      %v1175 = vshrl.u32 %v647, 16
      %v1177 = vrot.slane %v1175, 6
      %v1178 = vshll.u32 %v647, 16
      %v1180 = vrot.slane %v1178, 7
      %v1181 = vor.u32 %v1177, %v1180
      %v1182 = vrot.slane %v1181, 2
      %v1184 = vshll.u32 %v648, 16
      %v1186 = vrot.slane %v1184, 7
      %v1187 = vsel %vm729, %v1182, %v1186
      %v1188 = vshrl.u32 %v648, 16
      %v1190 = vrot.slane %v1188, 6
      %v1191 = vor.u32 %v1190, %v1186
      %v1192 = vrot.slane %v1191, 2
      %v1194 = vshll.u32 %v655, 16
      %v1196 = vrot.slane %v1194, 7
      %v1197 = vsel %vm729, %v1192, %v1196
      %v1198 = vshrl.u32 %v655, 16
      %v1200 = vrot.slane %v1198, 6
      %v1201 = vor.u32 %v1200, %v1196
      %v1202 = vrot.slane %v1201, 2
      %v1204 = vshll.u32 %v656, 16
      %v1206 = vrot.slane %v1204, 7
      %v1207 = vsel %vm729, %v1202, %v1206
      %v1208 = vshrl.u32 %v656, 16
      %v1210 = vrot.slane %v1208, 6
      %v1211 = vor.u32 %v1210, %v1206
      %v1212 = vrot.slane %v1211, 2
      %v1214 = vshll.u32 %v663, 16
      %v1216 = vrot.slane %v1214, 7
      %v1217 = vsel %vm729, %v1212, %v1216
      %v1218 = vshrl.u32 %v663, 16
      %v1220 = vrot.slane %v1218, 6
      %v1221 = vor.u32 %v1220, %v1216
      %v1222 = vrot.slane %v1221, 2
      %v1224 = vshll.u32 %v664, 16
      %v1226 = vrot.slane %v1224, 7
      %v1227 = vsel %vm729, %v1222, %v1226
      %v1228 = vshrl.u32 %v664, 16
      %v1230 = vrot.slane %v1228, 6
      %v1231 = vor.u32 %v1230, %v1226
      %v1232 = vrot.slane %v1231, 2
      %v1234 = vshll.u32 %v671, 16
      %v1236 = vrot.slane %v1234, 7
      %v1237 = vsel %vm729, %v1232, %v1236
      %v1238 = vshrl.u32 %v671, 16
      %v1240 = vrot.slane %v1238, 6
      %v1241 = vor.u32 %v1240, %v1236
      %v1242 = vrot.slane %v1241, 2
      %v1244 = vshll.u32 %v721, 16
      %v1246 = vrot.slane %v1244, 7
      %v1247 = vsel %vm729, %v1242, %v1246
      %v1249 = vshrl.u32 %v678, 16
      %v1251 = vrot.slane %v1249, 6
      %v1252 = vshll.u32 %v678, 16
      %v1254 = vrot.slane %v1252, 7
      %v1255 = vor.u32 %v1251, %v1254
      %v1256 = vrot.slane %v1255, 2
      %v1258 = vshll.u32 %v679, 16
      %v1260 = vrot.slane %v1258, 7
      %v1261 = vsel %vm729, %v1256, %v1260
      %v1262 = vshrl.u32 %v679, 16
      %v1264 = vrot.slane %v1262, 6
      %v1265 = vor.u32 %v1264, %v1260
      %v1266 = vrot.slane %v1265, 2
      %v1268 = vshll.u32 %v686, 16
      %v1270 = vrot.slane %v1268, 7
      %v1271 = vsel %vm729, %v1266, %v1270
      %v1272 = vshrl.u32 %v686, 16
      %v1274 = vrot.slane %v1272, 6
      %v1275 = vor.u32 %v1274, %v1270
      %v1276 = vrot.slane %v1275, 2
      %v1278 = vshll.u32 %v687, 16
      %v1280 = vrot.slane %v1278, 7
      %v1281 = vsel %vm729, %v1276, %v1280
      %v1282 = vshrl.u32 %v687, 16
      %v1284 = vrot.slane %v1282, 6
      %v1285 = vor.u32 %v1284, %v1280
      %v1286 = vrot.slane %v1285, 2
      %v1288 = vshll.u32 %v694, 16
      %v1290 = vrot.slane %v1288, 7
      %v1291 = vsel %vm729, %v1286, %v1290
      %v1292 = vshrl.u32 %v694, 16
      %v1294 = vrot.slane %v1292, 6
      %v1295 = vor.u32 %v1294, %v1290
      %v1296 = vrot.slane %v1295, 2
      %v1298 = vshll.u32 %v695, 16
      %v1300 = vrot.slane %v1298, 7
      %v1301 = vsel %vm729, %v1296, %v1300
      %v1302 = vshrl.u32 %v695, 16
      %v1304 = vrot.slane %v1302, 6
      %v1305 = vor.u32 %v1304, %v1300
      %v1306 = vrot.slane %v1305, 2
      %v1308 = vshll.u32 %v702, 16
      %v1310 = vrot.slane %v1308, 7
      %v1311 = vsel %vm729, %v1306, %v1310
      %v1312 = vshrl.u32 %v702, 16
      %v1314 = vrot.slane %v1312, 6
      %v1315 = vor.u32 %v1314, %v1310
      %v1316 = vrot.slane %v1315, 2
      %v1318 = vshll.u32 %v722, 16
      %v1320 = vrot.slane %v1318, 7
      %v1321 = vsel %vm729, %v1316, %v1320
      %s1322 = scalar_lea.vmem %s1, 96
      %v1323 = vld [vmem:[%s1322] sm:$0xff]
      %v1324 = vld [vmem:[%s1322 + $0x8] sm:$0xff]
      %v1325 = vld [vmem:[%s1322 + $0x10] sm:$0xff]
      %v1326 = vld [vmem:[%s1322 + $0x18] sm:$0xff]
      %v1327 = vld [vmem:[%s1322 + $0x20] sm:$0xff]
      %v1328 = vld [vmem:[%s1322 + $0x28] sm:$0xff]
      %v1329 = vld [vmem:[%s1322 + $0x30] sm:$0xff]
      %v1330 = vld [vmem:[%s1322 + $0x38] sm:$0xff]
      %v1331 = vld [vmem:[%s1322 + $0x40] sm:$0xff]
      %v1332 = vld [vmem:[%s1322 + $0x48] sm:$0xff]
      %v1333 = vld [vmem:[%s1322 + $0x50] sm:$0xff]
      %v1334 = vld [vmem:[%s1322 + $0x58] sm:$0xff]
      %v1335 = vcombine.low %v743, %v753
      %v1336 = vcombine.low %v763, %v773
      %v1338 = vunpack.c.l.s4 1983009808
      %v1339 = vunpack.c.0.s8 %v1338
      %v1340 = vlaneseq
      %v1341 = vshrl.u32 %v1340, 7
      %v1342 = vsub.s32 %v1339, %v1341
      %v1343 = vrot.slane %v1335, %v1342
      %v1345 = vunpack.c.l.s4 1983009808
      %v1346 = vunpack.c.0.s8 %v1345
      %v1347 = vlaneseq
      %v1348 = vshrl.u32 %v1347, 7
      %v1349 = vsub.s32 %v1346, %v1348
      %v1350 = vrot.slane %v1336, %v1349
      %v1351 = vcombine.low %v1343, %v1350
      %v1352 = vcombine.low %v783, %v793
      %v1353 = vcombine.low %v803, %v817
      %v1355 = vunpack.c.l.s4 1983009808
      %v1356 = vunpack.c.0.s8 %v1355
      %v1357 = vlaneseq
      %v1358 = vshrl.u32 %v1357, 7
      %v1359 = vsub.s32 %v1356, %v1358
      %v1360 = vrot.slane %v1352, %v1359
      %v1362 = vunpack.c.l.s4 1983009808
      %v1363 = vunpack.c.0.s8 %v1362
      %v1364 = vlaneseq
      %v1365 = vshrl.u32 %v1364, 7
      %v1366 = vsub.s32 %v1363, %v1365
      %v1367 = vrot.slane %v1353, %v1366
      %v1368 = vcombine.low %v1360, %v1367
      %v1369 = vcombine.low %v827, %v837
      %v1370 = vcombine.low %v847, %v857
      %v1372 = vunpack.c.l.s4 1983009808
      %v1373 = vunpack.c.0.s8 %v1372
      %v1374 = vlaneseq
      %v1375 = vshrl.u32 %v1374, 7
      %v1376 = vsub.s32 %v1373, %v1375
      %v1377 = vrot.slane %v1369, %v1376
      %v1379 = vunpack.c.l.s4 1983009808
      %v1380 = vunpack.c.0.s8 %v1379
      %v1381 = vlaneseq
      %v1382 = vshrl.u32 %v1381, 7
      %v1383 = vsub.s32 %v1380, %v1382
      %v1384 = vrot.slane %v1370, %v1383
      %v1385 = vcombine.low %v1377, %v1384
      %v1386 = vcombine.low %v867, %v877
      %v1387 = vcombine.low %v891, %v901
      %v1389 = vunpack.c.l.s4 1983009808
      %v1390 = vunpack.c.0.s8 %v1389
      %v1391 = vlaneseq
      %v1392 = vshrl.u32 %v1391, 7
      %v1393 = vsub.s32 %v1390, %v1392
      %v1394 = vrot.slane %v1386, %v1393
      %v1396 = vunpack.c.l.s4 1983009808
      %v1397 = vunpack.c.0.s8 %v1396
      %v1398 = vlaneseq
      %v1399 = vshrl.u32 %v1398, 7
      %v1400 = vsub.s32 %v1397, %v1399
      %v1401 = vrot.slane %v1387, %v1400
      %v1402 = vcombine.low %v1394, %v1401
      %v1403 = vcombine.low %v911, %v921
      %v1404 = vcombine.low %v931, %v941
      %v1406 = vunpack.c.l.s4 1983009808
      %v1407 = vunpack.c.0.s8 %v1406
      %v1408 = vlaneseq
      %v1409 = vshrl.u32 %v1408, 7
      %v1410 = vsub.s32 %v1407, %v1409
      %v1411 = vrot.slane %v1403, %v1410
      %v1413 = vunpack.c.l.s4 1983009808
      %v1414 = vunpack.c.0.s8 %v1413
      %v1415 = vlaneseq
      %v1416 = vshrl.u32 %v1415, 7
      %v1417 = vsub.s32 %v1414, %v1416
      %v1418 = vrot.slane %v1404, %v1417
      %v1419 = vcombine.low %v1411, %v1418
      %v1420 = vcombine.low %v951, %v965
      %v1421 = vcombine.low %v975, %v985
      %v1423 = vunpack.c.l.s4 1983009808
      %v1424 = vunpack.c.0.s8 %v1423
      %v1425 = vlaneseq
      %v1426 = vshrl.u32 %v1425, 7
      %v1427 = vsub.s32 %v1424, %v1426
      %v1428 = vrot.slane %v1420, %v1427
      %v1430 = vunpack.c.l.s4 1983009808
      %v1431 = vunpack.c.0.s8 %v1430
      %v1432 = vlaneseq
      %v1433 = vshrl.u32 %v1432, 7
      %v1434 = vsub.s32 %v1431, %v1433
      %v1435 = vrot.slane %v1421, %v1434
      %v1436 = vcombine.low %v1428, %v1435
      %v1437 = vcombine.low %v995, %v1005
      %v1438 = vcombine.low %v1015, %v1025
      %v1440 = vunpack.c.l.s4 1983009808
      %v1441 = vunpack.c.0.s8 %v1440
      %v1442 = vlaneseq
      %v1443 = vshrl.u32 %v1442, 7
      %v1444 = vsub.s32 %v1441, %v1443
      %v1445 = vrot.slane %v1437, %v1444
      %v1447 = vunpack.c.l.s4 1983009808
      %v1448 = vunpack.c.0.s8 %v1447
      %v1449 = vlaneseq
      %v1450 = vshrl.u32 %v1449, 7
      %v1451 = vsub.s32 %v1448, %v1450
      %v1452 = vrot.slane %v1438, %v1451
      %v1453 = vcombine.low %v1445, %v1452
      %v1454 = vcombine.low %v1039, %v1049
      %v1455 = vcombine.low %v1059, %v1069
      %v1457 = vunpack.c.l.s4 1983009808
      %v1458 = vunpack.c.0.s8 %v1457
      %v1459 = vlaneseq
      %v1460 = vshrl.u32 %v1459, 7
      %v1461 = vsub.s32 %v1458, %v1460
      %v1462 = vrot.slane %v1454, %v1461
      %v1464 = vunpack.c.l.s4 1983009808
      %v1465 = vunpack.c.0.s8 %v1464
      %v1466 = vlaneseq
      %v1467 = vshrl.u32 %v1466, 7
      %v1468 = vsub.s32 %v1465, %v1467
      %v1469 = vrot.slane %v1455, %v1468
      %v1470 = vcombine.low %v1462, %v1469
      %v1471 = vcombine.low %v1079, %v1089
      %v1472 = vcombine.low %v1099, %v1113
      %v1474 = vunpack.c.l.s4 1983009808
      %v1475 = vunpack.c.0.s8 %v1474
      %v1476 = vlaneseq
      %v1477 = vshrl.u32 %v1476, 7
      %v1478 = vsub.s32 %v1475, %v1477
      %v1479 = vrot.slane %v1471, %v1478
      %v1481 = vunpack.c.l.s4 1983009808
      %v1482 = vunpack.c.0.s8 %v1481
      %v1483 = vlaneseq
      %v1484 = vshrl.u32 %v1483, 7
      %v1485 = vsub.s32 %v1482, %v1484
      %v1486 = vrot.slane %v1472, %v1485
      %v1487 = vcombine.low %v1479, %v1486
      %v1488 = vcombine.low %v1123, %v1133
      %v1489 = vcombine.low %v1143, %v1153
      %v1491 = vunpack.c.l.s4 1983009808
      %v1492 = vunpack.c.0.s8 %v1491
      %v1493 = vlaneseq
      %v1494 = vshrl.u32 %v1493, 7
      %v1495 = vsub.s32 %v1492, %v1494
      %v1496 = vrot.slane %v1488, %v1495
      %v1498 = vunpack.c.l.s4 1983009808
      %v1499 = vunpack.c.0.s8 %v1498
      %v1500 = vlaneseq
      %v1501 = vshrl.u32 %v1500, 7
      %v1502 = vsub.s32 %v1499, %v1501
      %v1503 = vrot.slane %v1489, %v1502
      %v1504 = vcombine.low %v1496, %v1503
      %v1505 = vcombine.low %v1163, %v1173
      %v1506 = vcombine.low %v1187, %v1197
      %v1508 = vunpack.c.l.s4 1983009808
      %v1509 = vunpack.c.0.s8 %v1508
      %v1510 = vlaneseq
      %v1511 = vshrl.u32 %v1510, 7
      %v1512 = vsub.s32 %v1509, %v1511
      %v1513 = vrot.slane %v1505, %v1512
      %v1515 = vunpack.c.l.s4 1983009808
      %v1516 = vunpack.c.0.s8 %v1515
      %v1517 = vlaneseq
      %v1518 = vshrl.u32 %v1517, 7
      %v1519 = vsub.s32 %v1516, %v1518
      %v1520 = vrot.slane %v1506, %v1519
      %v1521 = vcombine.low %v1513, %v1520
      %v1522 = vcombine.low %v1207, %v1217
      %v1523 = vcombine.low %v1227, %v1237
      %v1525 = vunpack.c.l.s4 1983009808
      %v1526 = vunpack.c.0.s8 %v1525
      %v1527 = vlaneseq
      %v1528 = vshrl.u32 %v1527, 7
      %v1529 = vsub.s32 %v1526, %v1528
      %v1530 = vrot.slane %v1522, %v1529
      %v1532 = vunpack.c.l.s4 1983009808
      %v1533 = vunpack.c.0.s8 %v1532
      %v1534 = vlaneseq
      %v1535 = vshrl.u32 %v1534, 7
      %v1536 = vsub.s32 %v1533, %v1535
      %v1537 = vrot.slane %v1523, %v1536
      %v1538 = vcombine.low %v1530, %v1537
      %v1539 = vcombine.low %v1247, %v1261
      %v1540 = vcombine.low %v1271, %v1281
      %v1542 = vunpack.c.l.s4 1983009808
      %v1543 = vunpack.c.0.s8 %v1542
      %v1544 = vlaneseq
      %v1545 = vshrl.u32 %v1544, 7
      %v1546 = vsub.s32 %v1543, %v1545
      %v1547 = vrot.slane %v1539, %v1546
      %v1549 = vunpack.c.l.s4 1983009808
      %v1550 = vunpack.c.0.s8 %v1549
      %v1551 = vlaneseq
      %v1552 = vshrl.u32 %v1551, 7
      %v1553 = vsub.s32 %v1550, %v1552
      %v1554 = vrot.slane %v1540, %v1553
      %v1555 = vcombine.low %v1547, %v1554
      %v1556 = vcombine.low %v1291, %v1301
      %v1557 = vcombine.low %v1311, %v1321
      %v1559 = vunpack.c.l.s4 1983009808
      %v1560 = vunpack.c.0.s8 %v1559
      %v1561 = vlaneseq
      %v1562 = vshrl.u32 %v1561, 7
      %v1563 = vsub.s32 %v1560, %v1562
      %v1564 = vrot.slane %v1556, %v1563
      %v1566 = vunpack.c.l.s4 1983009808
      %v1567 = vunpack.c.0.s8 %v1566
      %v1568 = vlaneseq
      %v1569 = vshrl.u32 %v1568, 7
      %v1570 = vsub.s32 %v1567, %v1569
      %v1571 = vrot.slane %v1557, %v1570
      %v1572 = vcombine.low %v1564, %v1571
      %v1585 = vunpack.c.l.b16 %v1323
      %v1586 = vunpack.c.h.b16 %v1323
      %v1587 = vunpack.c.l.b16 %v1324
      %v1588 = vunpack.c.h.b16 %v1324
      %v1589 = vunpack.c.l.b16 %v1325
      %v1590 = vunpack.c.h.b16 %v1325
      %v1591 = vunpack.c.l.b16 %v1326
      %v1592 = vunpack.c.h.b16 %v1326
      %v1593 = vunpack.c.l.b16 %v1327
      %v1594 = vunpack.c.h.b16 %v1327
      %v1595 = vunpack.c.l.b16 %v1328
      %v1596 = vunpack.c.h.b16 %v1328
      %v1597 = vunpack.c.l.b16 %v1329
      %v1598 = vunpack.c.h.b16 %v1329
      %v1599 = vunpack.c.l.b16 %v1330
      %v1600 = vunpack.c.h.b16 %v1330
      %v1601 = vunpack.c.l.b16 %v1331
      %v1602 = vunpack.c.h.b16 %v1331
      %v1603 = vunpack.c.l.b16 %v1332
      %v1604 = vunpack.c.h.b16 %v1332
      %v1605 = vunpack.c.l.b16 %v1333
      %v1606 = vunpack.c.h.b16 %v1333
      %v1607 = vunpack.c.l.b16 %v1334
      %v1608 = vunpack.c.h.b16 %v1334
      %v1609 = vpack.c.b16 %v1587, %v1585
      %v1610 = vpack.c.b16 %v1588, %v1586
      %v1611 = vpack.c.b16 %v1591, %v1589
      %v1612 = vpack.c.b16 %v1592, %v1590
      %v1613 = vpack.c.b16 %v1595, %v1593
      %v1614 = vpack.c.b16 %v1596, %v1594
      %v1615 = vpack.c.b16 %v1599, %v1597
      %v1616 = vpack.c.b16 %v1600, %v1598
      %v1617 = vpack.c.b16 %v1603, %v1601
      %v1618 = vpack.c.b16 %v1604, %v1602
      %v1619 = vpack.c.b16 %v1607, %v1605
      %v1620 = vpack.c.b16 %v1608, %v1606
      %vm1633 = vcmask 785408
      %v1635 = vsel %vm1633, %v1351, 0
      %v1638 = vsel %vm1633, %v1368, 0
      %v1641 = vsel %vm1633, %v1385, 0
      %v1644 = vsel %vm1633, %v1402, 0
      %v1647 = vsel %vm1633, %v1419, 0
      %v1650 = vsel %vm1633, %v1436, 0
      %v1653 = vsel %vm1633, %v1453, 0
      %v1656 = vsel %vm1633, %v1470, 0
      %v1659 = vsel %vm1633, %v1487, 0
      %v1662 = vsel %vm1633, %v1504, 0
      %v1665 = vsel %vm1633, %v1521, 0
      %v1668 = vsel %vm1633, %v1538, 0
      %v1671 = vsel %vm1633, %v1555, 0
      %v1674 = vsel %vm1633, %v1572, 0
      %1676 = vmatprep.subr.bf16.mxu0 %v1610
      %1677 = vmatpush1.bf16.msra.mxu0 %v1609
      %1678 = vmatprep.subr.bf16.mxu0 %v1612
      %1679 = vmatpush1.bf16.msra.mxu0 %v1611
      %1680 = vmatprep.subr.bf16.mxu0 %v1614
      %1681 = vmatpush1.bf16.msra.mxu0 %v1613
      %1682 = vmatprep.subr.bf16.mxu0 %v1616
      %1683 = vmatpush1.bf16.msra.mxu0 %v1615
      %1684 = vmatprep.subr.bf16.mxu0 %v1618
      %1685 = vmatpush1.bf16.msra.mxu0 %v1617
      %1686 = vmatprep.subr.bf16.mxu0 %v1620
      %1687 = vmatpush1.bf16.msra.mxu0 %v1619
      %1688 = vmatprep.subr.bf16.mxu0 0
      %1689 = vmatpush1.bf16.msra.mxu0 0
      %1690 = vmatprep.subr.bf16.mxu0 0
      %1691 = vmatpush1.bf16.msra.mxu0 0
      %1692 = vmatprep.subr.bf16.mxu0 0
      %1693 = vmatpush1.bf16.msra.mxu0 0
      %1694 = vmatprep.subr.bf16.mxu0 0
      %1695 = vmatpush1.bf16.msra.mxu0 0
      %1696 = vmatprep.subr.bf16.mxu0 0
      %1697 = vmatpush1.bf16.msra.mxu0 0
      %1698 = vmatprep.subr.bf16.mxu0 0
      %1699 = vmatpush1.bf16.msra.mxu0 0
      %1700 = vmatprep.subr.bf16.mxu0 0
      %1701 = vmatpush1.bf16.msra.mxu0 0
      %1702 = vmatprep.subr.bf16.mxu0 0
      %1703 = vmatpush1.bf16.msra.mxu0 0
      %1704 = vmatprep.subr.bf16.mxu0 0
      %1705 = vmatpush1.bf16.msra.mxu0 0
      %1706 = vmatprep.subr.bf16.mxu0 0
      %1707 = vmatpush1.bf16.msra.mxu0 0
      %1708 = vmatprep.mubr.bf16.mxu0 0
      %1709 = vmatmul.mubr.bf16.gmra.mrb[0].mxu0 %v1635
      %v1710 = vpop.f32.mrb[0].mxu0
      %v1711 = vadd.f32 0.0, %v1710
      %v1712 = vpop.f32.mrb[0].mxu0
      %v1713 = vadd.f32 0.0, %v1712
      %v1714 = vpop.f32.mrb[0].mxu0
      %v1715 = vadd.f32 0.0, %v1714
      %v1716 = vpop.f32.mrb[0].mxu0
      %v1717 = vadd.f32 0.0, %v1716
      %1718 = vmatprep.mubr.bf16.mxu0 0
      %1719 = vmatmul.mubr.bf16.gmra.mrb[0].mxu0 %v1638
      %v1720 = vpop.f32.mrb[0].mxu0
      %v1721 = vadd.f32 0.0, %v1720
      %v1722 = vpop.f32.mrb[0].mxu0
      %v1723 = vadd.f32 0.0, %v1722
      %v1724 = vpop.f32.mrb[0].mxu0
      %v1725 = vadd.f32 0.0, %v1724
      %v1726 = vpop.f32.mrb[0].mxu0
      %v1727 = vadd.f32 0.0, %v1726
      %1728 = vmatprep.mubr.bf16.mxu0 0
      %1729 = vmatmul.mubr.bf16.gmra.mrb[0].mxu0 %v1641
      %v1730 = vpop.f32.mrb[0].mxu0
      %v1731 = vadd.f32 0.0, %v1730
      %v1732 = vpop.f32.mrb[0].mxu0
      %v1733 = vadd.f32 0.0, %v1732
      %v1734 = vpop.f32.mrb[0].mxu0
      %v1735 = vadd.f32 0.0, %v1734
      %v1736 = vpop.f32.mrb[0].mxu0
      %v1737 = vadd.f32 0.0, %v1736
      %1738 = vmatprep.mubr.bf16.mxu0 0
      %1739 = vmatmul.mubr.bf16.gmra.mrb[0].mxu0 %v1644
      %v1740 = vpop.f32.mrb[0].mxu0
      %v1741 = vadd.f32 0.0, %v1740
      %v1742 = vpop.f32.mrb[0].mxu0
      %v1743 = vadd.f32 0.0, %v1742
      %v1744 = vpop.f32.mrb[0].mxu0
      %v1745 = vadd.f32 0.0, %v1744
      %v1746 = vpop.f32.mrb[0].mxu0
      %v1747 = vadd.f32 0.0, %v1746
      %1748 = vmatprep.mubr.bf16.mxu0 0
      %1749 = vmatmul.mubr.bf16.gmra.mrb[0].mxu0 %v1647
      %v1750 = vpop.f32.mrb[0].mxu0
      %v1751 = vadd.f32 0.0, %v1750
      %v1752 = vpop.f32.mrb[0].mxu0
      %v1753 = vadd.f32 0.0, %v1752
      %v1754 = vpop.f32.mrb[0].mxu0
      %v1755 = vadd.f32 0.0, %v1754
      %v1756 = vpop.f32.mrb[0].mxu0
      %v1757 = vadd.f32 0.0, %v1756
      %1758 = vmatprep.mubr.bf16.mxu0 0
      %1759 = vmatmul.mubr.bf16.gmra.mrb[0].mxu0 %v1650
      %v1760 = vpop.f32.mrb[0].mxu0
      %v1761 = vadd.f32 0.0, %v1760
      %v1762 = vpop.f32.mrb[0].mxu0
      %v1763 = vadd.f32 0.0, %v1762
      %v1764 = vpop.f32.mrb[0].mxu0
      %v1765 = vadd.f32 0.0, %v1764
      %v1766 = vpop.f32.mrb[0].mxu0
      %v1767 = vadd.f32 0.0, %v1766
      %1768 = vmatprep.mubr.bf16.mxu0 0
      %1769 = vmatmul.mubr.bf16.gmra.mrb[0].mxu0 %v1653
      %v1770 = vpop.f32.mrb[0].mxu0
      %v1771 = vadd.f32 0.0, %v1770
      %v1772 = vpop.f32.mrb[0].mxu0
      %v1773 = vadd.f32 0.0, %v1772
      %v1774 = vpop.f32.mrb[0].mxu0
      %v1775 = vadd.f32 0.0, %v1774
      %v1776 = vpop.f32.mrb[0].mxu0
      %v1777 = vadd.f32 0.0, %v1776
      %1778 = vmatprep.mubr.bf16.mxu0 0
      %1779 = vmatmul.mubr.bf16.gmra.mrb[0].mxu0 %v1656
      %v1780 = vpop.f32.mrb[0].mxu0
      %v1781 = vadd.f32 0.0, %v1780
      %v1782 = vpop.f32.mrb[0].mxu0
      %v1783 = vadd.f32 0.0, %v1782
      %v1784 = vpop.f32.mrb[0].mxu0
      %v1785 = vadd.f32 0.0, %v1784
      %v1786 = vpop.f32.mrb[0].mxu0
      %v1787 = vadd.f32 0.0, %v1786
      %1788 = vmatprep.mubr.bf16.mxu0 0
      %1789 = vmatmul.mubr.bf16.gmra.mrb[0].mxu0 %v1659
      %v1790 = vpop.f32.mrb[0].mxu0
      %v1791 = vadd.f32 0.0, %v1790
      %v1792 = vpop.f32.mrb[0].mxu0
      %v1793 = vadd.f32 0.0, %v1792
      %v1794 = vpop.f32.mrb[0].mxu0
      %v1795 = vadd.f32 0.0, %v1794
      %v1796 = vpop.f32.mrb[0].mxu0
      %v1797 = vadd.f32 0.0, %v1796
      %1798 = vmatprep.mubr.bf16.mxu0 0
      %1799 = vmatmul.mubr.bf16.gmra.mrb[0].mxu0 %v1662
      %v1800 = vpop.f32.mrb[0].mxu0
      %v1801 = vadd.f32 0.0, %v1800
      %v1802 = vpop.f32.mrb[0].mxu0
      %v1803 = vadd.f32 0.0, %v1802
      %v1804 = vpop.f32.mrb[0].mxu0
      %v1805 = vadd.f32 0.0, %v1804
      %v1806 = vpop.f32.mrb[0].mxu0
      %v1807 = vadd.f32 0.0, %v1806
      %1808 = vmatprep.mubr.bf16.mxu0 0
      %1809 = vmatmul.mubr.bf16.gmra.mrb[0].mxu0 %v1665
      %v1810 = vpop.f32.mrb[0].mxu0
      %v1811 = vadd.f32 0.0, %v1810
      %v1812 = vpop.f32.mrb[0].mxu0
      %v1813 = vadd.f32 0.0, %v1812
      %v1814 = vpop.f32.mrb[0].mxu0
      %v1815 = vadd.f32 0.0, %v1814
      %v1816 = vpop.f32.mrb[0].mxu0
      %v1817 = vadd.f32 0.0, %v1816
      %1818 = vmatprep.mubr.bf16.mxu0 0
      %1819 = vmatmul.mubr.bf16.gmra.mrb[0].mxu0 %v1668
      %v1820 = vpop.f32.mrb[0].mxu0
      %v1821 = vadd.f32 0.0, %v1820
      %v1822 = vpop.f32.mrb[0].mxu0
      %v1823 = vadd.f32 0.0, %v1822
      %v1824 = vpop.f32.mrb[0].mxu0
      %v1825 = vadd.f32 0.0, %v1824
      %v1826 = vpop.f32.mrb[0].mxu0
      %v1827 = vadd.f32 0.0, %v1826
      %1828 = vmatprep.mubr.bf16.mxu0 0
      %1829 = vmatmul.mubr.bf16.gmra.mrb[0].mxu0 %v1671
      %v1830 = vpop.f32.mrb[0].mxu0
      %v1831 = vadd.f32 0.0, %v1830
      %v1832 = vpop.f32.mrb[0].mxu0
      %v1833 = vadd.f32 0.0, %v1832
      %v1834 = vpop.f32.mrb[0].mxu0
      %v1835 = vadd.f32 0.0, %v1834
      %v1836 = vpop.f32.mrb[0].mxu0
      %v1837 = vadd.f32 0.0, %v1836
      %1838 = vmatprep.mubr.bf16.mxu0 0
      %1839 = vmatmul.mubr.bf16.gmra.mrb[0].mxu0 %v1674
      %v1840 = vpop.f32.mrb[0].mxu0
      %v1841 = vadd.f32 0.0, %v1840
      %v1842 = vpop.f32.mrb[0].mxu0
      %v1843 = vadd.f32 0.0, %v1842
      %v1844 = vpop.f32.mrb[0].mxu0
      %v1845 = vadd.f32 0.0, %v1844
      %v1846 = vpop.f32.mrb[0].mxu0
      %v1847 = vadd.f32 0.0, %v1846
      %1848 = vdwg.mxu0
      %v1849 = vcombine.low %v461, %v462
      %v1850 = vcombine.low %v469, %v470
      %v1852 = vunpack.c.l.s4 1983009808
      %v1853 = vunpack.c.0.s8 %v1852
      %v1854 = vlaneseq
      %v1855 = vshrl.u32 %v1854, 7
      %v1856 = vsub.s32 %v1853, %v1855
      %v1857 = vrot.slane %v1849, %v1856
      %v1859 = vunpack.c.l.s4 1983009808
      %v1860 = vunpack.c.0.s8 %v1859
      %v1861 = vlaneseq
      %v1862 = vshrl.u32 %v1861, 7
      %v1863 = vsub.s32 %v1860, %v1862
      %v1864 = vrot.slane %v1850, %v1863
      %v1865 = vcombine.low %v1857, %v1864
      %v1866 = vcombine.low %v477, %v478
      %v1867 = vcombine.low %v485, %v492
      %v1869 = vunpack.c.l.s4 1983009808
      %v1870 = vunpack.c.0.s8 %v1869
      %v1871 = vlaneseq
      %v1872 = vshrl.u32 %v1871, 7
      %v1873 = vsub.s32 %v1870, %v1872
      %v1874 = vrot.slane %v1866, %v1873
      %v1876 = vunpack.c.l.s4 1983009808
      %v1877 = vunpack.c.0.s8 %v1876
      %v1878 = vlaneseq
      %v1879 = vshrl.u32 %v1878, 7
      %v1880 = vsub.s32 %v1877, %v1879
      %v1881 = vrot.slane %v1867, %v1880
      %v1882 = vcombine.low %v1874, %v1881
      %v1883 = vcombine.low %v493, %v500
      %v1884 = vcombine.low %v501, %v508
      %v1886 = vunpack.c.l.s4 1983009808
      %v1887 = vunpack.c.0.s8 %v1886
      %v1888 = vlaneseq
      %v1889 = vshrl.u32 %v1888, 7
      %v1890 = vsub.s32 %v1887, %v1889
      %v1891 = vrot.slane %v1883, %v1890
      %v1893 = vunpack.c.l.s4 1983009808
      %v1894 = vunpack.c.0.s8 %v1893
      %v1895 = vlaneseq
      %v1896 = vshrl.u32 %v1895, 7
      %v1897 = vsub.s32 %v1894, %v1896
      %v1898 = vrot.slane %v1884, %v1897
      %v1899 = vcombine.low %v1891, %v1898
      %v1900 = vcombine.low %v509, %v516
      %v1901 = vcombine.low %v523, %v524
      %v1903 = vunpack.c.l.s4 1983009808
      %v1904 = vunpack.c.0.s8 %v1903
      %v1905 = vlaneseq
      %v1906 = vshrl.u32 %v1905, 7
      %v1907 = vsub.s32 %v1904, %v1906
      %v1908 = vrot.slane %v1900, %v1907
      %v1910 = vunpack.c.l.s4 1983009808
      %v1911 = vunpack.c.0.s8 %v1910
      %v1912 = vlaneseq
      %v1913 = vshrl.u32 %v1912, 7
      %v1914 = vsub.s32 %v1911, %v1913
      %v1915 = vrot.slane %v1901, %v1914
      %v1916 = vcombine.low %v1908, %v1915
      %v1917 = vcombine.low %v531, %v532
      %v1918 = vcombine.low %v539, %v540
      %v1920 = vunpack.c.l.s4 1983009808
      %v1921 = vunpack.c.0.s8 %v1920
      %v1922 = vlaneseq
      %v1923 = vshrl.u32 %v1922, 7
      %v1924 = vsub.s32 %v1921, %v1923
      %v1925 = vrot.slane %v1917, %v1924
      %v1927 = vunpack.c.l.s4 1983009808
      %v1928 = vunpack.c.0.s8 %v1927
      %v1929 = vlaneseq
      %v1930 = vshrl.u32 %v1929, 7
      %v1931 = vsub.s32 %v1928, %v1930
      %v1932 = vrot.slane %v1918, %v1931
      %v1933 = vcombine.low %v1925, %v1932
      %v1934 = vcombine.low %v547, %v554
      %v1935 = vcombine.low %v555, %v562
      %v1937 = vunpack.c.l.s4 1983009808
      %v1938 = vunpack.c.0.s8 %v1937
      %v1939 = vlaneseq
      %v1940 = vshrl.u32 %v1939, 7
      %v1941 = vsub.s32 %v1938, %v1940
      %v1942 = vrot.slane %v1934, %v1941
      %v1944 = vunpack.c.l.s4 1983009808
      %v1945 = vunpack.c.0.s8 %v1944
      %v1946 = vlaneseq
      %v1947 = vshrl.u32 %v1946, 7
      %v1948 = vsub.s32 %v1945, %v1947
      %v1949 = vrot.slane %v1935, %v1948
      %v1950 = vcombine.low %v1942, %v1949
      %v1951 = vcombine.low %v563, %v570
      %v1952 = vcombine.low %v571, %v578
      %v1954 = vunpack.c.l.s4 1983009808
      %v1955 = vunpack.c.0.s8 %v1954
      %v1956 = vlaneseq
      %v1957 = vshrl.u32 %v1956, 7
      %v1958 = vsub.s32 %v1955, %v1957
      %v1959 = vrot.slane %v1951, %v1958
      %v1961 = vunpack.c.l.s4 1983009808
      %v1962 = vunpack.c.0.s8 %v1961
      %v1963 = vlaneseq
      %v1964 = vshrl.u32 %v1963, 7
      %v1965 = vsub.s32 %v1962, %v1964
      %v1966 = vrot.slane %v1952, %v1965
      %v1967 = vcombine.low %v1959, %v1966
      %v1968 = vcombine.low %v585, %v586
      %v1969 = vcombine.low %v593, %v594
      %v1971 = vunpack.c.l.s4 1983009808
      %v1972 = vunpack.c.0.s8 %v1971
      %v1973 = vlaneseq
      %v1974 = vshrl.u32 %v1973, 7
      %v1975 = vsub.s32 %v1972, %v1974
      %v1976 = vrot.slane %v1968, %v1975
      %v1978 = vunpack.c.l.s4 1983009808
      %v1979 = vunpack.c.0.s8 %v1978
      %v1980 = vlaneseq
      %v1981 = vshrl.u32 %v1980, 7
      %v1982 = vsub.s32 %v1979, %v1981
      %v1983 = vrot.slane %v1969, %v1982
      %v1984 = vcombine.low %v1976, %v1983
      %v1985 = vcombine.low %v601, %v602
      %v1986 = vcombine.low %v609, %v616
      %v1988 = vunpack.c.l.s4 1983009808
      %v1989 = vunpack.c.0.s8 %v1988
      %v1990 = vlaneseq
      %v1991 = vshrl.u32 %v1990, 7
      %v1992 = vsub.s32 %v1989, %v1991
      %v1993 = vrot.slane %v1985, %v1992
      %v1995 = vunpack.c.l.s4 1983009808
      %v1996 = vunpack.c.0.s8 %v1995
      %v1997 = vlaneseq
      %v1998 = vshrl.u32 %v1997, 7
      %v1999 = vsub.s32 %v1996, %v1998
      %v2000 = vrot.slane %v1986, %v1999
      %v2001 = vcombine.low %v1993, %v2000
      %v2002 = vcombine.low %v617, %v624
      %v2003 = vcombine.low %v625, %v632
      %v2005 = vunpack.c.l.s4 1983009808
      %v2006 = vunpack.c.0.s8 %v2005
      %v2007 = vlaneseq
      %v2008 = vshrl.u32 %v2007, 7
      %v2009 = vsub.s32 %v2006, %v2008
      %v2010 = vrot.slane %v2002, %v2009
      %v2012 = vunpack.c.l.s4 1983009808
      %v2013 = vunpack.c.0.s8 %v2012
      %v2014 = vlaneseq
      %v2015 = vshrl.u32 %v2014, 7
      %v2016 = vsub.s32 %v2013, %v2015
      %v2017 = vrot.slane %v2003, %v2016
      %v2018 = vcombine.low %v2010, %v2017
      %v2019 = vcombine.low %v633, %v640
      %v2020 = vcombine.low %v647, %v648
      %v2022 = vunpack.c.l.s4 1983009808
      %v2023 = vunpack.c.0.s8 %v2022
      %v2024 = vlaneseq
      %v2025 = vshrl.u32 %v2024, 7
      %v2026 = vsub.s32 %v2023, %v2025
      %v2027 = vrot.slane %v2019, %v2026
      %v2029 = vunpack.c.l.s4 1983009808
      %v2030 = vunpack.c.0.s8 %v2029
      %v2031 = vlaneseq
      %v2032 = vshrl.u32 %v2031, 7
      %v2033 = vsub.s32 %v2030, %v2032
      %v2034 = vrot.slane %v2020, %v2033
      %v2035 = vcombine.low %v2027, %v2034
      %v2036 = vcombine.low %v655, %v656
      %v2037 = vcombine.low %v663, %v664
      %v2039 = vunpack.c.l.s4 1983009808
      %v2040 = vunpack.c.0.s8 %v2039
      %v2041 = vlaneseq
      %v2042 = vshrl.u32 %v2041, 7
      %v2043 = vsub.s32 %v2040, %v2042
      %v2044 = vrot.slane %v2036, %v2043
      %v2046 = vunpack.c.l.s4 1983009808
      %v2047 = vunpack.c.0.s8 %v2046
      %v2048 = vlaneseq
      %v2049 = vshrl.u32 %v2048, 7
      %v2050 = vsub.s32 %v2047, %v2049
      %v2051 = vrot.slane %v2037, %v2050
      %v2052 = vcombine.low %v2044, %v2051
      %v2053 = vcombine.low %v671, %v678
      %v2054 = vcombine.low %v679, %v686
      %v2056 = vunpack.c.l.s4 1983009808
      %v2057 = vunpack.c.0.s8 %v2056
      %v2058 = vlaneseq
      %v2059 = vshrl.u32 %v2058, 7
      %v2060 = vsub.s32 %v2057, %v2059
      %v2061 = vrot.slane %v2053, %v2060
      %v2063 = vunpack.c.l.s4 1983009808
      %v2064 = vunpack.c.0.s8 %v2063
      %v2065 = vlaneseq
      %v2066 = vshrl.u32 %v2065, 7
      %v2067 = vsub.s32 %v2064, %v2066
      %v2068 = vrot.slane %v2054, %v2067
      %v2069 = vcombine.low %v2061, %v2068
      %v2070 = vcombine.low %v687, %v694
      %v2071 = vcombine.low %v695, %v702
      %v2073 = vunpack.c.l.s4 1983009808
      %v2074 = vunpack.c.0.s8 %v2073
      %v2075 = vlaneseq
      %v2076 = vshrl.u32 %v2075, 7
      %v2077 = vsub.s32 %v2074, %v2076
      %v2078 = vrot.slane %v2070, %v2077
      %v2080 = vunpack.c.l.s4 1983009808
      %v2081 = vunpack.c.0.s8 %v2080
      %v2082 = vlaneseq
      %v2083 = vshrl.u32 %v2082, 7
      %v2084 = vsub.s32 %v2081, %v2083
      %v2085 = vrot.slane %v2071, %v2084
      %v2086 = vcombine.low %v2078, %v2085
      %v2099 = vunpack.c.l.b16 %v703
      %v2100 = vunpack.c.h.b16 %v703
      %v2101 = vunpack.c.l.b16 %v704
      %v2102 = vunpack.c.h.b16 %v704
      %v2103 = vunpack.c.l.b16 %v705
      %v2104 = vunpack.c.h.b16 %v705
      %v2105 = vunpack.c.l.b16 %v706
      %v2106 = vunpack.c.h.b16 %v706
      %v2107 = vunpack.c.l.b16 %v707
      %v2108 = vunpack.c.h.b16 %v707
      %v2109 = vunpack.c.l.b16 %v708
      %v2110 = vunpack.c.h.b16 %v708
      %v2111 = vunpack.c.l.b16 %v709
      %v2112 = vunpack.c.h.b16 %v709
      %v2113 = vunpack.c.l.b16 %v710
      %v2114 = vunpack.c.h.b16 %v710
      %v2115 = vunpack.c.l.b16 %v711
      %v2116 = vunpack.c.h.b16 %v711
      %v2117 = vunpack.c.l.b16 %v712
      %v2118 = vunpack.c.h.b16 %v712
      %v2119 = vunpack.c.l.b16 %v713
      %v2120 = vunpack.c.h.b16 %v713
      %v2121 = vunpack.c.l.b16 %v714
      %v2122 = vunpack.c.h.b16 %v714
      %v2123 = vpack.c.b16 %v2101, %v2099
      %v2124 = vpack.c.b16 %v2102, %v2100
      %v2125 = vpack.c.b16 %v2105, %v2103
      %v2126 = vpack.c.b16 %v2106, %v2104
      %v2127 = vpack.c.b16 %v2109, %v2107
      %v2128 = vpack.c.b16 %v2110, %v2108
      %v2129 = vpack.c.b16 %v2113, %v2111
      %v2130 = vpack.c.b16 %v2114, %v2112
      %v2131 = vpack.c.b16 %v2117, %v2115
      %v2132 = vpack.c.b16 %v2118, %v2116
      %v2133 = vpack.c.b16 %v2121, %v2119
      %v2134 = vpack.c.b16 %v2122, %v2120
      %v2148 = vsel %vm1633, %v1865, 0
      %v2151 = vsel %vm1633, %v1882, 0
      %v2154 = vsel %vm1633, %v1899, 0
      %v2157 = vsel %vm1633, %v1916, 0
      %v2160 = vsel %vm1633, %v1933, 0
      %v2163 = vsel %vm1633, %v1950, 0
      %v2166 = vsel %vm1633, %v1967, 0
      %v2169 = vsel %vm1633, %v1984, 0
      %v2172 = vsel %vm1633, %v2001, 0
      %v2175 = vsel %vm1633, %v2018, 0
      %v2178 = vsel %vm1633, %v2035, 0
      %v2181 = vsel %vm1633, %v2052, 0
      %v2184 = vsel %vm1633, %v2069, 0
      %v2187 = vsel %vm1633, %v2086, 0
      %2189 = vmatprep.subr.bf16.mxu0 %v2124
      %2190 = vmatpush1.bf16.msra.mxu0 %v2123
      %2191 = vmatprep.subr.bf16.mxu0 %v2126
      %2192 = vmatpush1.bf16.msra.mxu0 %v2125
      %2193 = vmatprep.subr.bf16.mxu0 %v2128
      %2194 = vmatpush1.bf16.msra.mxu0 %v2127
      %2195 = vmatprep.subr.bf16.mxu0 %v2130
      %2196 = vmatpush1.bf16.msra.mxu0 %v2129
      %2197 = vmatprep.subr.bf16.mxu0 %v2132
      %2198 = vmatpush1.bf16.msra.mxu0 %v2131
      %2199 = vmatprep.subr.bf16.mxu0 %v2134
      %2200 = vmatpush1.bf16.msra.mxu0 %v2133
      %2201 = vmatprep.subr.bf16.mxu0 0
      %2202 = vmatpush1.bf16.msra.mxu0 0
      %2203 = vmatprep.subr.bf16.mxu0 0
      %2204 = vmatpush1.bf16.msra.mxu0 0
      %2205 = vmatprep.subr.bf16.mxu0 0
      %2206 = vmatpush1.bf16.msra.mxu0 0
      %2207 = vmatprep.subr.bf16.mxu0 0
      %2208 = vmatpush1.bf16.msra.mxu0 0
      %2209 = vmatprep.subr.bf16.mxu0 0
      %2210 = vmatpush1.bf16.msra.mxu0 0
      %2211 = vmatprep.subr.bf16.mxu0 0
      %2212 = vmatpush1.bf16.msra.mxu0 0
      %2213 = vmatprep.subr.bf16.mxu0 0
      %2214 = vmatpush1.bf16.msra.mxu0 0
      %2215 = vmatprep.subr.bf16.mxu0 0
      %2216 = vmatpush1.bf16.msra.mxu0 0
      %2217 = vmatprep.subr.bf16.mxu0 0
      %2218 = vmatpush1.bf16.msra.mxu0 0
      %2219 = vmatprep.subr.bf16.mxu0 0
      %2220 = vmatpush1.bf16.msra.mxu0 0
      %2221 = vmatprep.mubr.bf16.mxu0 0
      %2222 = vmatmul.mubr.bf16.gmra.mrb[0].mxu0 %v2148
      %v2223 = vpop.f32.mrb[0].mxu0
      %v2224 = vadd.f32 %v1711, %v2223
      %v2225 = vpop.f32.mrb[0].mxu0
      %v2226 = vadd.f32 %v1713, %v2225
      %v2227 = vpop.f32.mrb[0].mxu0
      %v2228 = vadd.f32 %v1715, %v2227
      %v2229 = vpop.f32.mrb[0].mxu0
      %v2230 = vadd.f32 %v1717, %v2229
      %2231 = vmatprep.mubr.bf16.mxu0 0
      %2232 = vmatmul.mubr.bf16.gmra.mrb[0].mxu0 %v2151
      %v2233 = vpop.f32.mrb[0].mxu0
      %v2234 = vadd.f32 %v1721, %v2233
      %v2235 = vpop.f32.mrb[0].mxu0
      %v2236 = vadd.f32 %v1723, %v2235
      %v2237 = vpop.f32.mrb[0].mxu0
      %v2238 = vadd.f32 %v1725, %v2237
      %v2239 = vpop.f32.mrb[0].mxu0
      %v2240 = vadd.f32 %v1727, %v2239
      %2241 = vmatprep.mubr.bf16.mxu0 0
      %2242 = vmatmul.mubr.bf16.gmra.mrb[0].mxu0 %v2154
      %v2243 = vpop.f32.mrb[0].mxu0
      %v2244 = vadd.f32 %v1731, %v2243
      %v2245 = vpop.f32.mrb[0].mxu0
      %v2246 = vadd.f32 %v1733, %v2245
      %v2247 = vpop.f32.mrb[0].mxu0
      %v2248 = vadd.f32 %v1735, %v2247
      %v2249 = vpop.f32.mrb[0].mxu0
      %v2250 = vadd.f32 %v1737, %v2249
      %2251 = vmatprep.mubr.bf16.mxu0 0
      %2252 = vmatmul.mubr.bf16.gmra.mrb[0].mxu0 %v2157
      %v2253 = vpop.f32.mrb[0].mxu0
      %v2254 = vadd.f32 %v1741, %v2253
      %v2255 = vpop.f32.mrb[0].mxu0
      %v2256 = vadd.f32 %v1743, %v2255
      %v2257 = vpop.f32.mrb[0].mxu0
      %v2258 = vadd.f32 %v1745, %v2257
      %v2259 = vpop.f32.mrb[0].mxu0
      %v2260 = vadd.f32 %v1747, %v2259
      %2261 = vmatprep.mubr.bf16.mxu0 0
      %2262 = vmatmul.mubr.bf16.gmra.mrb[0].mxu0 %v2160
      %v2263 = vpop.f32.mrb[0].mxu0
      %v2264 = vadd.f32 %v1751, %v2263
      %v2265 = vpop.f32.mrb[0].mxu0
      %v2266 = vadd.f32 %v1753, %v2265
      %v2267 = vpop.f32.mrb[0].mxu0
      %v2268 = vadd.f32 %v1755, %v2267
      %v2269 = vpop.f32.mrb[0].mxu0
      %v2270 = vadd.f32 %v1757, %v2269
      %2271 = vmatprep.mubr.bf16.mxu0 0
      %2272 = vmatmul.mubr.bf16.gmra.mrb[0].mxu0 %v2163
      %v2273 = vpop.f32.mrb[0].mxu0
      %v2274 = vadd.f32 %v1761, %v2273
      %v2275 = vpop.f32.mrb[0].mxu0
      %v2276 = vadd.f32 %v1763, %v2275
      %v2277 = vpop.f32.mrb[0].mxu0
      %v2278 = vadd.f32 %v1765, %v2277
      %v2279 = vpop.f32.mrb[0].mxu0
      %v2280 = vadd.f32 %v1767, %v2279
      %2281 = vmatprep.mubr.bf16.mxu0 0
      %2282 = vmatmul.mubr.bf16.gmra.mrb[0].mxu0 %v2166
      %v2283 = vpop.f32.mrb[0].mxu0
      %v2284 = vadd.f32 %v1771, %v2283
      %v2285 = vpop.f32.mrb[0].mxu0
      %v2286 = vadd.f32 %v1773, %v2285
      %v2287 = vpop.f32.mrb[0].mxu0
      %v2288 = vadd.f32 %v1775, %v2287
      %v2289 = vpop.f32.mrb[0].mxu0
      %v2290 = vadd.f32 %v1777, %v2289
      %2291 = vmatprep.mubr.bf16.mxu0 0
      %2292 = vmatmul.mubr.bf16.gmra.mrb[0].mxu0 %v2169
      %v2293 = vpop.f32.mrb[0].mxu0
      %v2294 = vadd.f32 %v1781, %v2293
      %v2295 = vpop.f32.mrb[0].mxu0
      %v2296 = vadd.f32 %v1783, %v2295
      %v2297 = vpop.f32.mrb[0].mxu0
      %v2298 = vadd.f32 %v1785, %v2297
      %v2299 = vpop.f32.mrb[0].mxu0
      %v2300 = vadd.f32 %v1787, %v2299
      %2301 = vmatprep.mubr.bf16.mxu0 0
      %2302 = vmatmul.mubr.bf16.gmra.mrb[0].mxu0 %v2172
      %v2303 = vpop.f32.mrb[0].mxu0
      %v2304 = vadd.f32 %v1791, %v2303
      %v2305 = vpop.f32.mrb[0].mxu0
      %v2306 = vadd.f32 %v1793, %v2305
      %v2307 = vpop.f32.mrb[0].mxu0
      %v2308 = vadd.f32 %v1795, %v2307
      %v2309 = vpop.f32.mrb[0].mxu0
      %v2310 = vadd.f32 %v1797, %v2309
      %2311 = vmatprep.mubr.bf16.mxu0 0
      %2312 = vmatmul.mubr.bf16.gmra.mrb[0].mxu0 %v2175
      %v2313 = vpop.f32.mrb[0].mxu0
      %v2314 = vadd.f32 %v1801, %v2313
      %v2315 = vpop.f32.mrb[0].mxu0
      %v2316 = vadd.f32 %v1803, %v2315
      %v2317 = vpop.f32.mrb[0].mxu0
      %v2318 = vadd.f32 %v1805, %v2317
      %v2319 = vpop.f32.mrb[0].mxu0
      %v2320 = vadd.f32 %v1807, %v2319
      %2321 = vmatprep.mubr.bf16.mxu0 0
      %2322 = vmatmul.mubr.bf16.gmra.mrb[0].mxu0 %v2178
      %v2323 = vpop.f32.mrb[0].mxu0
      %v2324 = vadd.f32 %v1811, %v2323
      %v2325 = vpop.f32.mrb[0].mxu0
      %v2326 = vadd.f32 %v1813, %v2325
      %v2327 = vpop.f32.mrb[0].mxu0
      %v2328 = vadd.f32 %v1815, %v2327
      %v2329 = vpop.f32.mrb[0].mxu0
      %v2330 = vadd.f32 %v1817, %v2329
      %2331 = vmatprep.mubr.bf16.mxu0 0
      %2332 = vmatmul.mubr.bf16.gmra.mrb[0].mxu0 %v2181
      %v2333 = vpop.f32.mrb[0].mxu0
      %v2334 = vadd.f32 %v1821, %v2333
      %v2335 = vpop.f32.mrb[0].mxu0
      %v2336 = vadd.f32 %v1823, %v2335
      %v2337 = vpop.f32.mrb[0].mxu0
      %v2338 = vadd.f32 %v1825, %v2337
      %v2339 = vpop.f32.mrb[0].mxu0
      %v2340 = vadd.f32 %v1827, %v2339
      %2341 = vmatprep.mubr.bf16.mxu0 0
      %2342 = vmatmul.mubr.bf16.gmra.mrb[0].mxu0 %v2184
      %v2343 = vpop.f32.mrb[0].mxu0
      %v2344 = vadd.f32 %v1831, %v2343
      %v2345 = vpop.f32.mrb[0].mxu0
      %v2346 = vadd.f32 %v1833, %v2345
      %v2347 = vpop.f32.mrb[0].mxu0
      %v2348 = vadd.f32 %v1835, %v2347
      %v2349 = vpop.f32.mrb[0].mxu0
      %v2350 = vadd.f32 %v1837, %v2349
      %2351 = vmatprep.mubr.bf16.mxu0 0
      %2352 = vmatmul.mubr.bf16.gmra.mrb[0].mxu0 %v2187
      %v2353 = vpop.f32.mrb[0].mxu0
      %v2354 = vadd.f32 %v1841, %v2353
      %v2355 = vpop.f32.mrb[0].mxu0
      %v2356 = vadd.f32 %v1843, %v2355
      %v2357 = vpop.f32.mrb[0].mxu0
      %v2358 = vadd.f32 %v1845, %v2357
      %v2359 = vpop.f32.mrb[0].mxu0
      %v2360 = vadd.f32 %v1847, %v2359
      %2361 = vdwg.mxu0
      %vm2362 = vcmask 1040384
      %vm2363 = vcmask 1042434
      %vm2364 = vmor %vm2362, %vm2363
      %vm2365 = vcmask 1044484
      %vm2366 = vmor %vm2364, %vm2365
      %vm2367 = vcmask 1046534
      %vm2368 = vmor %vm2366, %vm2367
      %v2369 = vrot.slane %v461, 7
      %v2370 = vrot.slane %v2369, 2
      %v2371 = vrot.slane %v462, 7
      %v2372 = vsel %vm2368, %v2370, %v2371
      %v2373 = vrot.slane %v2371, 2
      %v2374 = vrot.slane %v469, 7
      %v2375 = vsel %vm2368, %v2373, %v2374
      %v2376 = vrot.slane %v2374, 2
      %v2377 = vrot.slane %v470, 7
      %v2378 = vsel %vm2368, %v2376, %v2377
      %v2379 = vrot.slane %v2377, 2
      %v2380 = vrot.slane %v477, 7
      %v2381 = vsel %vm2368, %v2379, %v2380
      %v2382 = vrot.slane %v2380, 2
      %v2383 = vrot.slane %v478, 7
      %v2384 = vsel %vm2368, %v2382, %v2383
      %v2385 = vrot.slane %v2383, 2
      %v2386 = vrot.slane %v485, 7
      %v2387 = vsel %vm2368, %v2385, %v2386
      %v2388 = vrot.slane %v2386, 2
      %v2389 = vrot.slane %v715, 7
      %v2390 = vsel %vm2368, %v2388, %v2389
      %v2391 = vrot.slane %v492, 7
      %v2392 = vrot.slane %v2391, 2
      %v2393 = vrot.slane %v493, 7
      %v2394 = vsel %vm2368, %v2392, %v2393
      %v2395 = vrot.slane %v2393, 2
      %v2396 = vrot.slane %v500, 7
      %v2397 = vsel %vm2368, %v2395, %v2396
      %v2398 = vrot.slane %v2396, 2
      %v2399 = vrot.slane %v501, 7
      %v2400 = vsel %vm2368, %v2398, %v2399
      %v2401 = vrot.slane %v2399, 2
      %v2402 = vrot.slane %v508, 7
      %v2403 = vsel %vm2368, %v2401, %v2402
      %v2404 = vrot.slane %v2402, 2
      %v2405 = vrot.slane %v509, 7
      %v2406 = vsel %vm2368, %v2404, %v2405
      %v2407 = vrot.slane %v2405, 2
      %v2408 = vrot.slane %v516, 7
      %v2409 = vsel %vm2368, %v2407, %v2408
      %v2410 = vrot.slane %v2408, 2
      %v2411 = vrot.slane %v716, 7
      %v2412 = vsel %vm2368, %v2410, %v2411
      %v2413 = vrot.slane %v523, 7
      %v2414 = vrot.slane %v2413, 2
      %v2415 = vrot.slane %v524, 7
      %v2416 = vsel %vm2368, %v2414, %v2415
      %v2417 = vrot.slane %v2415, 2
      %v2418 = vrot.slane %v531, 7
      %v2419 = vsel %vm2368, %v2417, %v2418
      %v2420 = vrot.slane %v2418, 2
      %v2421 = vrot.slane %v532, 7
      %v2422 = vsel %vm2368, %v2420, %v2421
      %v2423 = vrot.slane %v2421, 2
      %v2424 = vrot.slane %v539, 7
      %v2425 = vsel %vm2368, %v2423, %v2424
      %v2426 = vrot.slane %v2424, 2
      %v2427 = vrot.slane %v540, 7
      %v2428 = vsel %vm2368, %v2426, %v2427
      %v2429 = vrot.slane %v2427, 2
      %v2430 = vrot.slane %v547, 7
      %v2431 = vsel %vm2368, %v2429, %v2430
      %v2432 = vrot.slane %v2430, 2
      %v2433 = vrot.slane %v717, 7
      %v2434 = vsel %vm2368, %v2432, %v2433
      %v2435 = vrot.slane %v554, 7
      %v2436 = vrot.slane %v2435, 2
      %v2437 = vrot.slane %v555, 7
      %v2438 = vsel %vm2368, %v2436, %v2437
      %v2439 = vrot.slane %v2437, 2
      %v2440 = vrot.slane %v562, 7
      %v2441 = vsel %vm2368, %v2439, %v2440
      %v2442 = vrot.slane %v2440, 2
      %v2443 = vrot.slane %v563, 7
      %v2444 = vsel %vm2368, %v2442, %v2443
      %v2445 = vrot.slane %v2443, 2
      %v2446 = vrot.slane %v570, 7
      %v2447 = vsel %vm2368, %v2445, %v2446
      %v2448 = vrot.slane %v2446, 2
      %v2449 = vrot.slane %v571, 7
      %v2450 = vsel %vm2368, %v2448, %v2449
      %v2451 = vrot.slane %v2449, 2
      %v2452 = vrot.slane %v578, 7
      %v2453 = vsel %vm2368, %v2451, %v2452
      %v2454 = vrot.slane %v2452, 2
      %v2455 = vrot.slane %v718, 7
      %v2456 = vsel %vm2368, %v2454, %v2455
      %v2457 = vrot.slane %v585, 7
      %v2458 = vrot.slane %v2457, 2
      %v2459 = vrot.slane %v586, 7
      %v2460 = vsel %vm2368, %v2458, %v2459
      %v2461 = vrot.slane %v2459, 2
      %v2462 = vrot.slane %v593, 7
      %v2463 = vsel %vm2368, %v2461, %v2462
      %v2464 = vrot.slane %v2462, 2
      %v2465 = vrot.slane %v594, 7
      %v2466 = vsel %vm2368, %v2464, %v2465
      %v2467 = vrot.slane %v2465, 2
      %v2468 = vrot.slane %v601, 7
      %v2469 = vsel %vm2368, %v2467, %v2468
      %v2470 = vrot.slane %v2468, 2
      %v2471 = vrot.slane %v602, 7
      %v2472 = vsel %vm2368, %v2470, %v2471
      %v2473 = vrot.slane %v2471, 2
      %v2474 = vrot.slane %v609, 7
      %v2475 = vsel %vm2368, %v2473, %v2474
      %v2476 = vrot.slane %v2474, 2
      %v2477 = vrot.slane %v719, 7
      %v2478 = vsel %vm2368, %v2476, %v2477
      %v2479 = vrot.slane %v616, 7
      %v2480 = vrot.slane %v2479, 2
      %v2481 = vrot.slane %v617, 7
      %v2482 = vsel %vm2368, %v2480, %v2481
      %v2483 = vrot.slane %v2481, 2
      %v2484 = vrot.slane %v624, 7
      %v2485 = vsel %vm2368, %v2483, %v2484
      %v2486 = vrot.slane %v2484, 2
      %v2487 = vrot.slane %v625, 7
      %v2488 = vsel %vm2368, %v2486, %v2487
      %v2489 = vrot.slane %v2487, 2
      %v2490 = vrot.slane %v632, 7
      %v2491 = vsel %vm2368, %v2489, %v2490
      %v2492 = vrot.slane %v2490, 2
      %v2493 = vrot.slane %v633, 7
      %v2494 = vsel %vm2368, %v2492, %v2493
      %v2495 = vrot.slane %v2493, 2
      %v2496 = vrot.slane %v640, 7
      %v2497 = vsel %vm2368, %v2495, %v2496
      %v2498 = vrot.slane %v2496, 2
      %v2499 = vrot.slane %v720, 7
      %v2500 = vsel %vm2368, %v2498, %v2499
      %v2501 = vrot.slane %v647, 7
      %v2502 = vrot.slane %v2501, 2
      %v2503 = vrot.slane %v648, 7
      %v2504 = vsel %vm2368, %v2502, %v2503
      %v2505 = vrot.slane %v2503, 2
      %v2506 = vrot.slane %v655, 7
      %v2507 = vsel %vm2368, %v2505, %v2506
      %v2508 = vrot.slane %v2506, 2
      %v2509 = vrot.slane %v656, 7
      %v2510 = vsel %vm2368, %v2508, %v2509
      %v2511 = vrot.slane %v2509, 2
      %v2512 = vrot.slane %v663, 7
      %v2513 = vsel %vm2368, %v2511, %v2512
      %v2514 = vrot.slane %v2512, 2
      %v2515 = vrot.slane %v664, 7
      %v2516 = vsel %vm2368, %v2514, %v2515
      %v2517 = vrot.slane %v2515, 2
      %v2518 = vrot.slane %v671, 7
      %v2519 = vsel %vm2368, %v2517, %v2518
      %v2520 = vrot.slane %v2518, 2
      %v2521 = vrot.slane %v721, 7
      %v2522 = vsel %vm2368, %v2520, %v2521
      %v2523 = vrot.slane %v678, 7
      %v2524 = vrot.slane %v2523, 2
      %v2525 = vrot.slane %v679, 7
      %v2526 = vsel %vm2368, %v2524, %v2525
      %v2527 = vrot.slane %v2525, 2
      %v2528 = vrot.slane %v686, 7
      %v2529 = vsel %vm2368, %v2527, %v2528
      %v2530 = vrot.slane %v2528, 2
      %v2531 = vrot.slane %v687, 7
      %v2532 = vsel %vm2368, %v2530, %v2531
      %v2533 = vrot.slane %v2531, 2
      %v2534 = vrot.slane %v694, 7
      %v2535 = vsel %vm2368, %v2533, %v2534
      %v2536 = vrot.slane %v2534, 2
      %v2537 = vrot.slane %v695, 7
      %v2538 = vsel %vm2368, %v2536, %v2537
      %v2539 = vrot.slane %v2537, 2
      %v2540 = vrot.slane %v702, 7
      %v2541 = vsel %vm2368, %v2539, %v2540
      %v2542 = vrot.slane %v2540, 2
      %v2543 = vrot.slane %v722, 7
      %v2544 = vsel %vm2368, %v2542, %v2543
      %s2545 = scalar_lea.vmem %s1, 192
      %v2546 = vld [vmem:[%s2545] sm:$0xff]
      %v2547 = vld [vmem:[%s2545 + $0x8] sm:$0xff]
      %v2548 = vld [vmem:[%s2545 + $0x10] sm:$0xff]
      %v2549 = vld [vmem:[%s2545 + $0x18] sm:$0xff]
      %v2550 = vld [vmem:[%s2545 + $0x20] sm:$0xff]
      %v2551 = vld [vmem:[%s2545 + $0x28] sm:$0xff]
      %v2552 = vld [vmem:[%s2545 + $0x30] sm:$0xff]
      %v2553 = vld [vmem:[%s2545 + $0x38] sm:$0xff]
      %v2554 = vld [vmem:[%s2545 + $0x40] sm:$0xff]
      %v2555 = vld [vmem:[%s2545 + $0x48] sm:$0xff]
      %v2556 = vld [vmem:[%s2545 + $0x50] sm:$0xff]
      %v2557 = vld [vmem:[%s2545 + $0x58] sm:$0xff]
      %v2558 = vcombine.low %v2372, %v2375
      %v2559 = vcombine.low %v2378, %v2381
      %v2561 = vunpack.c.l.s4 1983009808
      %v2562 = vunpack.c.0.s8 %v2561
      %v2563 = vlaneseq
      %v2564 = vshrl.u32 %v2563, 7
      %v2565 = vsub.s32 %v2562, %v2564
      %v2566 = vrot.slane %v2558, %v2565
      %v2568 = vunpack.c.l.s4 1983009808
      %v2569 = vunpack.c.0.s8 %v2568
      %v2570 = vlaneseq
      %v2571 = vshrl.u32 %v2570, 7
      %v2572 = vsub.s32 %v2569, %v2571
      %v2573 = vrot.slane %v2559, %v2572
      %v2574 = vcombine.low %v2566, %v2573
      %v2575 = vcombine.low %v2384, %v2387
      %v2576 = vcombine.low %v2390, %v2394
      %v2578 = vunpack.c.l.s4 1983009808
      %v2579 = vunpack.c.0.s8 %v2578
      %v2580 = vlaneseq
      %v2581 = vshrl.u32 %v2580, 7
      %v2582 = vsub.s32 %v2579, %v2581
      %v2583 = vrot.slane %v2575, %v2582
      %v2585 = vunpack.c.l.s4 1983009808
      %v2586 = vunpack.c.0.s8 %v2585
      %v2587 = vlaneseq
      %v2588 = vshrl.u32 %v2587, 7
      %v2589 = vsub.s32 %v2586, %v2588
      %v2590 = vrot.slane %v2576, %v2589
      %v2591 = vcombine.low %v2583, %v2590
      %v2592 = vcombine.low %v2397, %v2400
      %v2593 = vcombine.low %v2403, %v2406
      %v2595 = vunpack.c.l.s4 1983009808
      %v2596 = vunpack.c.0.s8 %v2595
      %v2597 = vlaneseq
      %v2598 = vshrl.u32 %v2597, 7
      %v2599 = vsub.s32 %v2596, %v2598
      %v2600 = vrot.slane %v2592, %v2599
      %v2602 = vunpack.c.l.s4 1983009808
      %v2603 = vunpack.c.0.s8 %v2602
      %v2604 = vlaneseq
      %v2605 = vshrl.u32 %v2604, 7
      %v2606 = vsub.s32 %v2603, %v2605
      %v2607 = vrot.slane %v2593, %v2606
      %v2608 = vcombine.low %v2600, %v2607
      %v2609 = vcombine.low %v2409, %v2412
      %v2610 = vcombine.low %v2416, %v2419
      %v2612 = vunpack.c.l.s4 1983009808
      %v2613 = vunpack.c.0.s8 %v2612
      %v2614 = vlaneseq
      %v2615 = vshrl.u32 %v2614, 7
      %v2616 = vsub.s32 %v2613, %v2615
      %v2617 = vrot.slane %v2609, %v2616
      %v2619 = vunpack.c.l.s4 1983009808
      %v2620 = vunpack.c.0.s8 %v2619
      %v2621 = vlaneseq
      %v2622 = vshrl.u32 %v2621, 7
      %v2623 = vsub.s32 %v2620, %v2622
      %v2624 = vrot.slane %v2610, %v2623
      %v2625 = vcombine.low %v2617, %v2624
      %v2626 = vcombine.low %v2422, %v2425
      %v2627 = vcombine.low %v2428, %v2431
      %v2629 = vunpack.c.l.s4 1983009808
      %v2630 = vunpack.c.0.s8 %v2629
      %v2631 = vlaneseq
      %v2632 = vshrl.u32 %v2631, 7
      %v2633 = vsub.s32 %v2630, %v2632
      %v2634 = vrot.slane %v2626, %v2633
      %v2636 = vunpack.c.l.s4 1983009808
      %v2637 = vunpack.c.0.s8 %v2636
      %v2638 = vlaneseq
      %v2639 = vshrl.u32 %v2638, 7
      %v2640 = vsub.s32 %v2637, %v2639
      %v2641 = vrot.slane %v2627, %v2640
      %v2642 = vcombine.low %v2634, %v2641
      %v2643 = vcombine.low %v2434, %v2438
      %v2644 = vcombine.low %v2441, %v2444
      %v2646 = vunpack.c.l.s4 1983009808
      %v2647 = vunpack.c.0.s8 %v2646
      %v2648 = vlaneseq
      %v2649 = vshrl.u32 %v2648, 7
      %v2650 = vsub.s32 %v2647, %v2649
      %v2651 = vrot.slane %v2643, %v2650
      %v2653 = vunpack.c.l.s4 1983009808
      %v2654 = vunpack.c.0.s8 %v2653
      %v2655 = vlaneseq
      %v2656 = vshrl.u32 %v2655, 7
      %v2657 = vsub.s32 %v2654, %v2656
      %v2658 = vrot.slane %v2644, %v2657
      %v2659 = vcombine.low %v2651, %v2658
      %v2660 = vcombine.low %v2447, %v2450
      %v2661 = vcombine.low %v2453, %v2456
      %v2663 = vunpack.c.l.s4 1983009808
      %v2664 = vunpack.c.0.s8 %v2663
      %v2665 = vlaneseq
      %v2666 = vshrl.u32 %v2665, 7
      %v2667 = vsub.s32 %v2664, %v2666
      %v2668 = vrot.slane %v2660, %v2667
      %v2670 = vunpack.c.l.s4 1983009808
      %v2671 = vunpack.c.0.s8 %v2670
      %v2672 = vlaneseq
      %v2673 = vshrl.u32 %v2672, 7
      %v2674 = vsub.s32 %v2671, %v2673
      %v2675 = vrot.slane %v2661, %v2674
      %v2676 = vcombine.low %v2668, %v2675
      %v2677 = vcombine.low %v2460, %v2463
      %v2678 = vcombine.low %v2466, %v2469
      %v2680 = vunpack.c.l.s4 1983009808
      %v2681 = vunpack.c.0.s8 %v2680
      %v2682 = vlaneseq
      %v2683 = vshrl.u32 %v2682, 7
      %v2684 = vsub.s32 %v2681, %v2683
      %v2685 = vrot.slane %v2677, %v2684
      %v2687 = vunpack.c.l.s4 1983009808
      %v2688 = vunpack.c.0.s8 %v2687
      %v2689 = vlaneseq
      %v2690 = vshrl.u32 %v2689, 7
      %v2691 = vsub.s32 %v2688, %v2690
      %v2692 = vrot.slane %v2678, %v2691
      %v2693 = vcombine.low %v2685, %v2692
      %v2694 = vcombine.low %v2472, %v2475
      %v2695 = vcombine.low %v2478, %v2482
      %v2697 = vunpack.c.l.s4 1983009808
      %v2698 = vunpack.c.0.s8 %v2697
      %v2699 = vlaneseq
      %v2700 = vshrl.u32 %v2699, 7
      %v2701 = vsub.s32 %v2698, %v2700
      %v2702 = vrot.slane %v2694, %v2701
      %v2704 = vunpack.c.l.s4 1983009808
      %v2705 = vunpack.c.0.s8 %v2704
      %v2706 = vlaneseq
      %v2707 = vshrl.u32 %v2706, 7
      %v2708 = vsub.s32 %v2705, %v2707
      %v2709 = vrot.slane %v2695, %v2708
      %v2710 = vcombine.low %v2702, %v2709
      %v2711 = vcombine.low %v2485, %v2488
      %v2712 = vcombine.low %v2491, %v2494
      %v2714 = vunpack.c.l.s4 1983009808
      %v2715 = vunpack.c.0.s8 %v2714
      %v2716 = vlaneseq
      %v2717 = vshrl.u32 %v2716, 7
      %v2718 = vsub.s32 %v2715, %v2717
      %v2719 = vrot.slane %v2711, %v2718
      %v2721 = vunpack.c.l.s4 1983009808
      %v2722 = vunpack.c.0.s8 %v2721
      %v2723 = vlaneseq
      %v2724 = vshrl.u32 %v2723, 7
      %v2725 = vsub.s32 %v2722, %v2724
      %v2726 = vrot.slane %v2712, %v2725
      %v2727 = vcombine.low %v2719, %v2726
      %v2728 = vcombine.low %v2497, %v2500
      %v2729 = vcombine.low %v2504, %v2507
      %v2731 = vunpack.c.l.s4 1983009808
      %v2732 = vunpack.c.0.s8 %v2731
      %v2733 = vlaneseq
      %v2734 = vshrl.u32 %v2733, 7
      %v2735 = vsub.s32 %v2732, %v2734
      %v2736 = vrot.slane %v2728, %v2735
      %v2738 = vunpack.c.l.s4 1983009808
      %v2739 = vunpack.c.0.s8 %v2738
      %v2740 = vlaneseq
      %v2741 = vshrl.u32 %v2740, 7
      %v2742 = vsub.s32 %v2739, %v2741
      %v2743 = vrot.slane %v2729, %v2742
      %v2744 = vcombine.low %v2736, %v2743
      %v2745 = vcombine.low %v2510, %v2513
      %v2746 = vcombine.low %v2516, %v2519
      %v2748 = vunpack.c.l.s4 1983009808
      %v2749 = vunpack.c.0.s8 %v2748
      %v2750 = vlaneseq
      %v2751 = vshrl.u32 %v2750, 7
      %v2752 = vsub.s32 %v2749, %v2751
      %v2753 = vrot.slane %v2745, %v2752
      %v2755 = vunpack.c.l.s4 1983009808
      %v2756 = vunpack.c.0.s8 %v2755
      %v2757 = vlaneseq
      %v2758 = vshrl.u32 %v2757, 7
      %v2759 = vsub.s32 %v2756, %v2758
      %v2760 = vrot.slane %v2746, %v2759
      %v2761 = vcombine.low %v2753, %v2760
      %v2762 = vcombine.low %v2522, %v2526
      %v2763 = vcombine.low %v2529, %v2532
      %v2765 = vunpack.c.l.s4 1983009808
      %v2766 = vunpack.c.0.s8 %v2765
      %v2767 = vlaneseq
      %v2768 = vshrl.u32 %v2767, 7
      %v2769 = vsub.s32 %v2766, %v2768
      %v2770 = vrot.slane %v2762, %v2769
      %v2772 = vunpack.c.l.s4 1983009808
      %v2773 = vunpack.c.0.s8 %v2772
      %v2774 = vlaneseq
      %v2775 = vshrl.u32 %v2774, 7
      %v2776 = vsub.s32 %v2773, %v2775
      %v2777 = vrot.slane %v2763, %v2776
      %v2778 = vcombine.low %v2770, %v2777
      %v2779 = vcombine.low %v2535, %v2538
      %v2780 = vcombine.low %v2541, %v2544
      %v2782 = vunpack.c.l.s4 1983009808
      %v2783 = vunpack.c.0.s8 %v2782
      %v2784 = vlaneseq
      %v2785 = vshrl.u32 %v2784, 7
      %v2786 = vsub.s32 %v2783, %v2785
      %v2787 = vrot.slane %v2779, %v2786
      %v2789 = vunpack.c.l.s4 1983009808
      %v2790 = vunpack.c.0.s8 %v2789
      %v2791 = vlaneseq
      %v2792 = vshrl.u32 %v2791, 7
      %v2793 = vsub.s32 %v2790, %v2792
      %v2794 = vrot.slane %v2780, %v2793
      %v2795 = vcombine.low %v2787, %v2794
      %v2808 = vunpack.c.l.b16 %v2546
      %v2809 = vunpack.c.h.b16 %v2546
      %v2810 = vunpack.c.l.b16 %v2547
      %v2811 = vunpack.c.h.b16 %v2547
      %v2812 = vunpack.c.l.b16 %v2548
      %v2813 = vunpack.c.h.b16 %v2548
      %v2814 = vunpack.c.l.b16 %v2549
      %v2815 = vunpack.c.h.b16 %v2549
      %v2816 = vunpack.c.l.b16 %v2550
      %v2817 = vunpack.c.h.b16 %v2550
      %v2818 = vunpack.c.l.b16 %v2551
      %v2819 = vunpack.c.h.b16 %v2551
      %v2820 = vunpack.c.l.b16 %v2552
      %v2821 = vunpack.c.h.b16 %v2552
      %v2822 = vunpack.c.l.b16 %v2553
      %v2823 = vunpack.c.h.b16 %v2553
      %v2824 = vunpack.c.l.b16 %v2554
      %v2825 = vunpack.c.h.b16 %v2554
      %v2826 = vunpack.c.l.b16 %v2555
      %v2827 = vunpack.c.h.b16 %v2555
      %v2828 = vunpack.c.l.b16 %v2556
      %v2829 = vunpack.c.h.b16 %v2556
      %v2830 = vunpack.c.l.b16 %v2557
      %v2831 = vunpack.c.h.b16 %v2557
      %v2832 = vpack.c.b16 %v2810, %v2808
      %v2833 = vpack.c.b16 %v2811, %v2809
      %v2834 = vpack.c.b16 %v2814, %v2812
      %v2835 = vpack.c.b16 %v2815, %v2813
      %v2836 = vpack.c.b16 %v2818, %v2816
      %v2837 = vpack.c.b16 %v2819, %v2817
      %v2838 = vpack.c.b16 %v2822, %v2820
      %v2839 = vpack.c.b16 %v2823, %v2821
      %v2840 = vpack.c.b16 %v2826, %v2824
      %v2841 = vpack.c.b16 %v2827, %v2825
      %v2842 = vpack.c.b16 %v2830, %v2828
      %v2843 = vpack.c.b16 %v2831, %v2829
      %v2857 = vsel %vm1633, %v2574, 0
      %v2860 = vsel %vm1633, %v2591, 0
      %v2863 = vsel %vm1633, %v2608, 0
      %v2866 = vsel %vm1633, %v2625, 0
      %v2869 = vsel %vm1633, %v2642, 0
      %v2872 = vsel %vm1633, %v2659, 0
      %v2875 = vsel %vm1633, %v2676, 0
      %v2878 = vsel %vm1633, %v2693, 0
      %v2881 = vsel %vm1633, %v2710, 0
      %v2884 = vsel %vm1633, %v2727, 0
      %v2887 = vsel %vm1633, %v2744, 0
      %v2890 = vsel %vm1633, %v2761, 0
      %v2893 = vsel %vm1633, %v2778, 0
      %v2896 = vsel %vm1633, %v2795, 0
      %2898 = vmatprep.subr.bf16.mxu0 %v2833
      %2899 = vmatpush1.bf16.msra.mxu0 %v2832
      %2900 = vmatprep.subr.bf16.mxu0 %v2835
      %2901 = vmatpush1.bf16.msra.mxu0 %v2834
      %2902 = vmatprep.subr.bf16.mxu0 %v2837
      %2903 = vmatpush1.bf16.msra.mxu0 %v2836
      %2904 = vmatprep.subr.bf16.mxu0 %v2839
      %2905 = vmatpush1.bf16.msra.mxu0 %v2838
      %2906 = vmatprep.subr.bf16.mxu0 %v2841
      %2907 = vmatpush1.bf16.msra.mxu0 %v2840
      %2908 = vmatprep.subr.bf16.mxu0 %v2843
      %2909 = vmatpush1.bf16.msra.mxu0 %v2842
      %2910 = vmatprep.subr.bf16.mxu0 0
      %2911 = vmatpush1.bf16.msra.mxu0 0
      %2912 = vmatprep.subr.bf16.mxu0 0
      %2913 = vmatpush1.bf16.msra.mxu0 0
      %2914 = vmatprep.subr.bf16.mxu0 0
      %2915 = vmatpush1.bf16.msra.mxu0 0
      %2916 = vmatprep.subr.bf16.mxu0 0
      %2917 = vmatpush1.bf16.msra.mxu0 0
      %2918 = vmatprep.subr.bf16.mxu0 0
      %2919 = vmatpush1.bf16.msra.mxu0 0
      %2920 = vmatprep.subr.bf16.mxu0 0
      %2921 = vmatpush1.bf16.msra.mxu0 0
      %2922 = vmatprep.subr.bf16.mxu0 0
      %2923 = vmatpush1.bf16.msra.mxu0 0
      %2924 = vmatprep.subr.bf16.mxu0 0
      %2925 = vmatpush1.bf16.msra.mxu0 0
      %2926 = vmatprep.subr.bf16.mxu0 0
      %2927 = vmatpush1.bf16.msra.mxu0 0
      %2928 = vmatprep.subr.bf16.mxu0 0
      %2929 = vmatpush1.bf16.msra.mxu0 0
      %2930 = vmatprep.mubr.bf16.mxu0 0
      %2931 = vmatmul.mubr.bf16.gmra.mrb[0].mxu0 %v2857
      %v2932 = vpop.f32.mrb[0].mxu0
      %v2933 = vadd.f32 0.0, %v2932
      %v2934 = vpop.f32.mrb[0].mxu0
      %v2935 = vadd.f32 0.0, %v2934
      %v2936 = vpop.f32.mrb[0].mxu0
      %v2937 = vadd.f32 0.0, %v2936
      %v2938 = vpop.f32.mrb[0].mxu0
      %v2939 = vadd.f32 0.0, %v2938
      %2940 = vmatprep.mubr.bf16.mxu0 0
      %2941 = vmatmul.mubr.bf16.gmra.mrb[0].mxu0 %v2860
      %v2942 = vpop.f32.mrb[0].mxu0
      %v2943 = vadd.f32 0.0, %v2942
      %v2944 = vpop.f32.mrb[0].mxu0
      %v2945 = vadd.f32 0.0, %v2944
      %v2946 = vpop.f32.mrb[0].mxu0
      %v2947 = vadd.f32 0.0, %v2946
      %v2948 = vpop.f32.mrb[0].mxu0
      %v2949 = vadd.f32 0.0, %v2948
      %2950 = vmatprep.mubr.bf16.mxu0 0
      %2951 = vmatmul.mubr.bf16.gmra.mrb[0].mxu0 %v2863
      %v2952 = vpop.f32.mrb[0].mxu0
      %v2953 = vadd.f32 0.0, %v2952
      %v2954 = vpop.f32.mrb[0].mxu0
      %v2955 = vadd.f32 0.0, %v2954
      %v2956 = vpop.f32.mrb[0].mxu0
      %v2957 = vadd.f32 0.0, %v2956
      %v2958 = vpop.f32.mrb[0].mxu0
      %v2959 = vadd.f32 0.0, %v2958
      %2960 = vmatprep.mubr.bf16.mxu0 0
      %2961 = vmatmul.mubr.bf16.gmra.mrb[0].mxu0 %v2866
      %v2962 = vpop.f32.mrb[0].mxu0
      %v2963 = vadd.f32 0.0, %v2962
      %v2964 = vpop.f32.mrb[0].mxu0
      %v2965 = vadd.f32 0.0, %v2964
      %v2966 = vpop.f32.mrb[0].mxu0
      %v2967 = vadd.f32 0.0, %v2966
      %v2968 = vpop.f32.mrb[0].mxu0
      %v2969 = vadd.f32 0.0, %v2968
      %2970 = vmatprep.mubr.bf16.mxu0 0
      %2971 = vmatmul.mubr.bf16.gmra.mrb[0].mxu0 %v2869
      %v2972 = vpop.f32.mrb[0].mxu0
      %v2973 = vadd.f32 0.0, %v2972
      %v2974 = vpop.f32.mrb[0].mxu0
      %v2975 = vadd.f32 0.0, %v2974
      %v2976 = vpop.f32.mrb[0].mxu0
      %v2977 = vadd.f32 0.0, %v2976
      %v2978 = vpop.f32.mrb[0].mxu0
      %v2979 = vadd.f32 0.0, %v2978
      %2980 = vmatprep.mubr.bf16.mxu0 0
      %2981 = vmatmul.mubr.bf16.gmra.mrb[0].mxu0 %v2872
      %v2982 = vpop.f32.mrb[0].mxu0
      %v2983 = vadd.f32 0.0, %v2982
      %v2984 = vpop.f32.mrb[0].mxu0
      %v2985 = vadd.f32 0.0, %v2984
      %v2986 = vpop.f32.mrb[0].mxu0
      %v2987 = vadd.f32 0.0, %v2986
      %v2988 = vpop.f32.mrb[0].mxu0
      %v2989 = vadd.f32 0.0, %v2988
      %2990 = vmatprep.mubr.bf16.mxu0 0
      %2991 = vmatmul.mubr.bf16.gmra.mrb[0].mxu0 %v2875
      %v2992 = vpop.f32.mrb[0].mxu0
      %v2993 = vadd.f32 0.0, %v2992
      %v2994 = vpop.f32.mrb[0].mxu0
      %v2995 = vadd.f32 0.0, %v2994
      %v2996 = vpop.f32.mrb[0].mxu0
      %v2997 = vadd.f32 0.0, %v2996
      %v2998 = vpop.f32.mrb[0].mxu0
      %v2999 = vadd.f32 0.0, %v2998
      %3000 = vmatprep.mubr.bf16.mxu0 0
      %3001 = vmatmul.mubr.bf16.gmra.mrb[0].mxu0 %v2878
      %v3002 = vpop.f32.mrb[0].mxu0
      %v3003 = vadd.f32 0.0, %v3002
      %v3004 = vpop.f32.mrb[0].mxu0
      %v3005 = vadd.f32 0.0, %v3004
      %v3006 = vpop.f32.mrb[0].mxu0
      %v3007 = vadd.f32 0.0, %v3006
      %v3008 = vpop.f32.mrb[0].mxu0
      %v3009 = vadd.f32 0.0, %v3008
      %3010 = vmatprep.mubr.bf16.mxu0 0
      %3011 = vmatmul.mubr.bf16.gmra.mrb[0].mxu0 %v2881
      %v3012 = vpop.f32.mrb[0].mxu0
      %v3013 = vadd.f32 0.0, %v3012
      %v3014 = vpop.f32.mrb[0].mxu0
      %v3015 = vadd.f32 0.0, %v3014
      %v3016 = vpop.f32.mrb[0].mxu0
      %v3017 = vadd.f32 0.0, %v3016
      %v3018 = vpop.f32.mrb[0].mxu0
      %v3019 = vadd.f32 0.0, %v3018
      %3020 = vmatprep.mubr.bf16.mxu0 0
      %3021 = vmatmul.mubr.bf16.gmra.mrb[0].mxu0 %v2884
      %v3022 = vpop.f32.mrb[0].mxu0
      %v3023 = vadd.f32 0.0, %v3022
      %v3024 = vpop.f32.mrb[0].mxu0
      %v3025 = vadd.f32 0.0, %v3024
      %v3026 = vpop.f32.mrb[0].mxu0
      %v3027 = vadd.f32 0.0, %v3026
      %v3028 = vpop.f32.mrb[0].mxu0
      %v3029 = vadd.f32 0.0, %v3028
      %3030 = vmatprep.mubr.bf16.mxu0 0
      %3031 = vmatmul.mubr.bf16.gmra.mrb[0].mxu0 %v2887
      %v3032 = vpop.f32.mrb[0].mxu0
      %v3033 = vadd.f32 0.0, %v3032
      %v3034 = vpop.f32.mrb[0].mxu0
      %v3035 = vadd.f32 0.0, %v3034
      %v3036 = vpop.f32.mrb[0].mxu0
      %v3037 = vadd.f32 0.0, %v3036
      %v3038 = vpop.f32.mrb[0].mxu0
      %v3039 = vadd.f32 0.0, %v3038
      %3040 = vmatprep.mubr.bf16.mxu0 0
      %3041 = vmatmul.mubr.bf16.gmra.mrb[0].mxu0 %v2890
      %v3042 = vpop.f32.mrb[0].mxu0
      %v3043 = vadd.f32 0.0, %v3042
      %v3044 = vpop.f32.mrb[0].mxu0
      %v3045 = vadd.f32 0.0, %v3044
      %v3046 = vpop.f32.mrb[0].mxu0
      %v3047 = vadd.f32 0.0, %v3046
      %v3048 = vpop.f32.mrb[0].mxu0
      %v3049 = vadd.f32 0.0, %v3048
      %3050 = vmatprep.mubr.bf16.mxu0 0
      %3051 = vmatmul.mubr.bf16.gmra.mrb[0].mxu0 %v2893
      %v3052 = vpop.f32.mrb[0].mxu0
      %v3053 = vadd.f32 0.0, %v3052
      %v3054 = vpop.f32.mrb[0].mxu0
      %v3055 = vadd.f32 0.0, %v3054
      %v3056 = vpop.f32.mrb[0].mxu0
      %v3057 = vadd.f32 0.0, %v3056
      %v3058 = vpop.f32.mrb[0].mxu0
      %v3059 = vadd.f32 0.0, %v3058
      %3060 = vmatprep.mubr.bf16.mxu0 0
      %3061 = vmatmul.mubr.bf16.gmra.mrb[0].mxu0 %v2896
      %v3062 = vpop.f32.mrb[0].mxu0
      %v3063 = vadd.f32 0.0, %v3062
      %v3064 = vpop.f32.mrb[0].mxu0
      %v3065 = vadd.f32 0.0, %v3064
      %v3066 = vpop.f32.mrb[0].mxu0
      %v3067 = vadd.f32 0.0, %v3066
      %v3068 = vpop.f32.mrb[0].mxu0
      %v3069 = vadd.f32 0.0, %v3068
      %3070 = vdwg.mxu0
      %v3071 = vadd.f32 %v2224, %v2933
      %v3072 = vadd.f32 %v2226, %v2935
      %v3073 = vadd.f32 %v2228, %v2937
      %v3074 = vadd.f32 %v2230, %v2939
      %v3075 = vadd.f32 %v2234, %v2943
      %v3076 = vadd.f32 %v2236, %v2945
      %v3077 = vadd.f32 %v2238, %v2947
      %v3078 = vadd.f32 %v2240, %v2949
      %v3079 = vadd.f32 %v2244, %v2953
      %v3080 = vadd.f32 %v2246, %v2955
      %v3081 = vadd.f32 %v2248, %v2957
      %v3082 = vadd.f32 %v2250, %v2959
      %v3083 = vadd.f32 %v2254, %v2963
      %v3084 = vadd.f32 %v2256, %v2965
      %v3085 = vadd.f32 %v2258, %v2967
      %v3086 = vadd.f32 %v2260, %v2969
      %v3087 = vadd.f32 %v2264, %v2973
      %v3088 = vadd.f32 %v2266, %v2975
      %v3089 = vadd.f32 %v2268, %v2977
      %v3090 = vadd.f32 %v2270, %v2979
      %v3091 = vadd.f32 %v2274, %v2983
      %v3092 = vadd.f32 %v2276, %v2985
      %v3093 = vadd.f32 %v2278, %v2987
      %v3094 = vadd.f32 %v2280, %v2989
      %v3095 = vadd.f32 %v2284, %v2993
      %v3096 = vadd.f32 %v2286, %v2995
      %v3097 = vadd.f32 %v2288, %v2997
      %v3098 = vadd.f32 %v2290, %v2999
      %v3099 = vadd.f32 %v2294, %v3003
      %v3100 = vadd.f32 %v2296, %v3005
      %v3101 = vadd.f32 %v2298, %v3007
      %v3102 = vadd.f32 %v2300, %v3009
      %v3103 = vadd.f32 %v2304, %v3013
      %v3104 = vadd.f32 %v2306, %v3015
      %v3105 = vadd.f32 %v2308, %v3017
      %v3106 = vadd.f32 %v2310, %v3019
      %v3107 = vadd.f32 %v2314, %v3023
      %v3108 = vadd.f32 %v2316, %v3025
      %v3109 = vadd.f32 %v2318, %v3027
      %v3110 = vadd.f32 %v2320, %v3029
      %v3111 = vadd.f32 %v2324, %v3033
      %v3112 = vadd.f32 %v2326, %v3035
      %v3113 = vadd.f32 %v2328, %v3037
      %v3114 = vadd.f32 %v2330, %v3039
      %v3115 = vadd.f32 %v2334, %v3043
      %v3116 = vadd.f32 %v2336, %v3045
      %v3117 = vadd.f32 %v2338, %v3047
      %v3118 = vadd.f32 %v2340, %v3049
      %v3119 = vadd.f32 %v2344, %v3053
      %v3120 = vadd.f32 %v2346, %v3055
      %v3121 = vadd.f32 %v2348, %v3057
      %v3122 = vadd.f32 %v2350, %v3059
      %v3123 = vadd.f32 %v2354, %v3063
      %v3124 = vadd.f32 %v2356, %v3065
      %v3125 = vadd.f32 %v2358, %v3067
      %v3126 = vadd.f32 %v2360, %v3069
      %vm3127 = vsmask.f32 256
      %vm3128 = vsmask.f32 2312
      %vm3129 = vmor %vm3127, %vm3128
      %vm3130 = vsmask.f32 4368
      %vm3131 = vmor %vm3129, %vm3130
      %vm3132 = vsmask.f32 6424
      %vm3133 = vmor %vm3131, %vm3132
      %v3134 = vrot.slane %v731, 7
      %v3135 = vrot.slane %v3134, 2
      %v3136 = vrot.slane %v744, 7
      %v3137 = vor.u32 %v3136, %v740
      %v3138 = vsel %vm3133, %v3135, %v3137
      %v3139 = vrot.slane %v3136, 2
      %v3140 = vrot.slane %v754, 7
      %v3141 = vor.u32 %v3140, %v750
      %v3142 = vsel %vm3133, %v3139, %v3141
      %v3143 = vrot.slane %v3140, 2
      %v3144 = vrot.slane %v764, 7
      %v3145 = vor.u32 %v3144, %v760
      %v3146 = vsel %vm3133, %v3143, %v3145
      %v3147 = vrot.slane %v3144, 2
      %v3148 = vrot.slane %v774, 7
      %v3149 = vor.u32 %v3148, %v770
      %v3150 = vsel %vm3133, %v3147, %v3149
      %v3151 = vrot.slane %v3148, 2
      %v3152 = vrot.slane %v784, 7
      %v3153 = vor.u32 %v3152, %v780
      %v3154 = vsel %vm3133, %v3151, %v3153
      %v3155 = vrot.slane %v3152, 2
      %v3156 = vrot.slane %v794, 7
      %v3157 = vor.u32 %v3156, %v790
      %v3158 = vsel %vm3133, %v3155, %v3157
      %v3159 = vrot.slane %v3156, 2
      %v3160 = vshrl.u32 %v715, 16
      %v3162 = vrot.slane %v3160, 7
      %v3163 = vor.u32 %v3162, %v800
      %v3164 = vsel %vm3133, %v3159, %v3163
      %v3165 = vrot.slane %v805, 7
      %v3166 = vrot.slane %v3165, 2
      %v3167 = vrot.slane %v818, 7
      %v3168 = vor.u32 %v3167, %v814
      %v3169 = vsel %vm3133, %v3166, %v3168
      %v3170 = vrot.slane %v3167, 2
      %v3171 = vrot.slane %v828, 7
      %v3172 = vor.u32 %v3171, %v824
      %v3173 = vsel %vm3133, %v3170, %v3172
      %v3174 = vrot.slane %v3171, 2
      %v3175 = vrot.slane %v838, 7
      %v3176 = vor.u32 %v3175, %v834
      %v3177 = vsel %vm3133, %v3174, %v3176
      %v3178 = vrot.slane %v3175, 2
      %v3179 = vrot.slane %v848, 7
      %v3180 = vor.u32 %v3179, %v844
      %v3181 = vsel %vm3133, %v3178, %v3180
      %v3182 = vrot.slane %v3179, 2
      %v3183 = vrot.slane %v858, 7
      %v3184 = vor.u32 %v3183, %v854
      %v3185 = vsel %vm3133, %v3182, %v3184
      %v3186 = vrot.slane %v3183, 2
      %v3187 = vrot.slane %v868, 7
      %v3188 = vor.u32 %v3187, %v864
      %v3189 = vsel %vm3133, %v3186, %v3188
      %v3190 = vrot.slane %v3187, 2
      %v3191 = vshrl.u32 %v716, 16
      %v3193 = vrot.slane %v3191, 7
      %v3194 = vor.u32 %v3193, %v874
      %v3195 = vsel %vm3133, %v3190, %v3194
      %v3196 = vrot.slane %v879, 7
      %v3197 = vrot.slane %v3196, 2
      %v3198 = vrot.slane %v892, 7
      %v3199 = vor.u32 %v3198, %v888
      %v3200 = vsel %vm3133, %v3197, %v3199
      %v3201 = vrot.slane %v3198, 2
      %v3202 = vrot.slane %v902, 7
      %v3203 = vor.u32 %v3202, %v898
      %v3204 = vsel %vm3133, %v3201, %v3203
      %v3205 = vrot.slane %v3202, 2
      %v3206 = vrot.slane %v912, 7
      %v3207 = vor.u32 %v3206, %v908
      %v3208 = vsel %vm3133, %v3205, %v3207
      %v3209 = vrot.slane %v3206, 2
      %v3210 = vrot.slane %v922, 7
      %v3211 = vor.u32 %v3210, %v918
      %v3212 = vsel %vm3133, %v3209, %v3211
      %v3213 = vrot.slane %v3210, 2
      %v3214 = vrot.slane %v932, 7
      %v3215 = vor.u32 %v3214, %v928
      %v3216 = vsel %vm3133, %v3213, %v3215
      %v3217 = vrot.slane %v3214, 2
      %v3218 = vrot.slane %v942, 7
      %v3219 = vor.u32 %v3218, %v938
      %v3220 = vsel %vm3133, %v3217, %v3219
      %v3221 = vrot.slane %v3218, 2
      %v3222 = vshrl.u32 %v717, 16
      %v3224 = vrot.slane %v3222, 7
      %v3225 = vor.u32 %v3224, %v948
      %v3226 = vsel %vm3133, %v3221, %v3225
      %v3227 = vrot.slane %v953, 7
      %v3228 = vrot.slane %v3227, 2
      %v3229 = vrot.slane %v966, 7
      %v3230 = vor.u32 %v3229, %v962
      %v3231 = vsel %vm3133, %v3228, %v3230
      %v3232 = vrot.slane %v3229, 2
      %v3233 = vrot.slane %v976, 7
      %v3234 = vor.u32 %v3233, %v972
      %v3235 = vsel %vm3133, %v3232, %v3234
      %v3236 = vrot.slane %v3233, 2
      %v3237 = vrot.slane %v986, 7
      %v3238 = vor.u32 %v3237, %v982
      %v3239 = vsel %vm3133, %v3236, %v3238
      %v3240 = vrot.slane %v3237, 2
      %v3241 = vrot.slane %v996, 7
      %v3242 = vor.u32 %v3241, %v992
      %v3243 = vsel %vm3133, %v3240, %v3242
      %v3244 = vrot.slane %v3241, 2
      %v3245 = vrot.slane %v1006, 7
      %v3246 = vor.u32 %v3245, %v1002
      %v3247 = vsel %vm3133, %v3244, %v3246
      %v3248 = vrot.slane %v3245, 2
      %v3249 = vrot.slane %v1016, 7
      %v3250 = vor.u32 %v3249, %v1012
      %v3251 = vsel %vm3133, %v3248, %v3250
      %v3252 = vrot.slane %v3249, 2
      %v3253 = vshrl.u32 %v718, 16
      %v3255 = vrot.slane %v3253, 7
      %v3256 = vor.u32 %v3255, %v1022
      %v3257 = vsel %vm3133, %v3252, %v3256
      %v3258 = vrot.slane %v1027, 7
      %v3259 = vrot.slane %v3258, 2
      %v3260 = vrot.slane %v1040, 7
      %v3261 = vor.u32 %v3260, %v1036
      %v3262 = vsel %vm3133, %v3259, %v3261
      %v3263 = vrot.slane %v3260, 2
      %v3264 = vrot.slane %v1050, 7
      %v3265 = vor.u32 %v3264, %v1046
      %v3266 = vsel %vm3133, %v3263, %v3265
      %v3267 = vrot.slane %v3264, 2
      %v3268 = vrot.slane %v1060, 7
      %v3269 = vor.u32 %v3268, %v1056
      %v3270 = vsel %vm3133, %v3267, %v3269
      %v3271 = vrot.slane %v3268, 2
      %v3272 = vrot.slane %v1070, 7
      %v3273 = vor.u32 %v3272, %v1066
      %v3274 = vsel %vm3133, %v3271, %v3273
      %v3275 = vrot.slane %v3272, 2
      %v3276 = vrot.slane %v1080, 7
      %v3277 = vor.u32 %v3276, %v1076
      %v3278 = vsel %vm3133, %v3275, %v3277
      %v3279 = vrot.slane %v3276, 2
      %v3280 = vrot.slane %v1090, 7
      %v3281 = vor.u32 %v3280, %v1086
      %v3282 = vsel %vm3133, %v3279, %v3281
      %v3283 = vrot.slane %v3280, 2
      %v3284 = vshrl.u32 %v719, 16
      %v3286 = vrot.slane %v3284, 7
      %v3287 = vor.u32 %v3286, %v1096
      %v3288 = vsel %vm3133, %v3283, %v3287
      %v3289 = vrot.slane %v1101, 7
      %v3290 = vrot.slane %v3289, 2
      %v3291 = vrot.slane %v1114, 7
      %v3292 = vor.u32 %v3291, %v1110
      %v3293 = vsel %vm3133, %v3290, %v3292
      %v3294 = vrot.slane %v3291, 2
      %v3295 = vrot.slane %v1124, 7
      %v3296 = vor.u32 %v3295, %v1120
      %v3297 = vsel %vm3133, %v3294, %v3296
      %v3298 = vrot.slane %v3295, 2
      %v3299 = vrot.slane %v1134, 7
      %v3300 = vor.u32 %v3299, %v1130
      %v3301 = vsel %vm3133, %v3298, %v3300
      %v3302 = vrot.slane %v3299, 2
      %v3303 = vrot.slane %v1144, 7
      %v3304 = vor.u32 %v3303, %v1140
      %v3305 = vsel %vm3133, %v3302, %v3304
      %v3306 = vrot.slane %v3303, 2
      %v3307 = vrot.slane %v1154, 7
      %v3308 = vor.u32 %v3307, %v1150
      %v3309 = vsel %vm3133, %v3306, %v3308
      %v3310 = vrot.slane %v3307, 2
      %v3311 = vrot.slane %v1164, 7
      %v3312 = vor.u32 %v3311, %v1160
      %v3313 = vsel %vm3133, %v3310, %v3312
      %v3314 = vrot.slane %v3311, 2
      %v3315 = vshrl.u32 %v720, 16
      %v3317 = vrot.slane %v3315, 7
      %v3318 = vor.u32 %v3317, %v1170
      %v3319 = vsel %vm3133, %v3314, %v3318
      %v3320 = vrot.slane %v1175, 7
      %v3321 = vrot.slane %v3320, 2
      %v3322 = vrot.slane %v1188, 7
      %v3323 = vor.u32 %v3322, %v1184
      %v3324 = vsel %vm3133, %v3321, %v3323
      %v3325 = vrot.slane %v3322, 2
      %v3326 = vrot.slane %v1198, 7
      %v3327 = vor.u32 %v3326, %v1194
      %v3328 = vsel %vm3133, %v3325, %v3327
      %v3329 = vrot.slane %v3326, 2
      %v3330 = vrot.slane %v1208, 7
      %v3331 = vor.u32 %v3330, %v1204
      %v3332 = vsel %vm3133, %v3329, %v3331
      %v3333 = vrot.slane %v3330, 2
      %v3334 = vrot.slane %v1218, 7
      %v3335 = vor.u32 %v3334, %v1214
      %v3336 = vsel %vm3133, %v3333, %v3335
      %v3337 = vrot.slane %v3334, 2
      %v3338 = vrot.slane %v1228, 7
      %v3339 = vor.u32 %v3338, %v1224
      %v3340 = vsel %vm3133, %v3337, %v3339
      %v3341 = vrot.slane %v3338, 2
      %v3342 = vrot.slane %v1238, 7
      %v3343 = vor.u32 %v3342, %v1234
      %v3344 = vsel %vm3133, %v3341, %v3343
      %v3345 = vrot.slane %v3342, 2
      %v3346 = vshrl.u32 %v721, 16
      %v3348 = vrot.slane %v3346, 7
      %v3349 = vor.u32 %v3348, %v1244
      %v3350 = vsel %vm3133, %v3345, %v3349
      %v3351 = vrot.slane %v1249, 7
      %v3352 = vrot.slane %v3351, 2
      %v3353 = vrot.slane %v1262, 7
      %v3354 = vor.u32 %v3353, %v1258
      %v3355 = vsel %vm3133, %v3352, %v3354
      %v3356 = vrot.slane %v3353, 2
      %v3357 = vrot.slane %v1272, 7
      %v3358 = vor.u32 %v3357, %v1268
      %v3359 = vsel %vm3133, %v3356, %v3358
      %v3360 = vrot.slane %v3357, 2
      %v3361 = vrot.slane %v1282, 7
      %v3362 = vor.u32 %v3361, %v1278
      %v3363 = vsel %vm3133, %v3360, %v3362
      %v3364 = vrot.slane %v3361, 2
      %v3365 = vrot.slane %v1292, 7
      %v3366 = vor.u32 %v3365, %v1288
      %v3367 = vsel %vm3133, %v3364, %v3366
      %v3368 = vrot.slane %v3365, 2
      %v3369 = vrot.slane %v1302, 7
      %v3370 = vor.u32 %v3369, %v1298
      %v3371 = vsel %vm3133, %v3368, %v3370
      %v3372 = vrot.slane %v3369, 2
      %v3373 = vrot.slane %v1312, 7
      %v3374 = vor.u32 %v3373, %v1308
      %v3375 = vsel %vm3133, %v3372, %v3374
      %v3376 = vrot.slane %v3373, 2
      %v3377 = vshrl.u32 %v722, 16
      %v3379 = vrot.slane %v3377, 7
      %v3380 = vor.u32 %v3379, %v1318
      %v3381 = vsel %vm3133, %v3376, %v3380
      %s3382 = scalar_lea.vmem %s1, 288
      %v3383 = vld [vmem:[%s3382] sm:$0xff]
      %v3384 = vld [vmem:[%s3382 + $0x8] sm:$0xff]
      %v3385 = vld [vmem:[%s3382 + $0x10] sm:$0xff]
      %v3386 = vld [vmem:[%s3382 + $0x18] sm:$0xff]
      %v3387 = vld [vmem:[%s3382 + $0x20] sm:$0xff]
      %v3388 = vld [vmem:[%s3382 + $0x28] sm:$0xff]
      %v3389 = vld [vmem:[%s3382 + $0x30] sm:$0xff]
      %v3390 = vld [vmem:[%s3382 + $0x38] sm:$0xff]
      %v3391 = vld [vmem:[%s3382 + $0x40] sm:$0xff]
      %v3392 = vld [vmem:[%s3382 + $0x48] sm:$0xff]
      %v3393 = vld [vmem:[%s3382 + $0x50] sm:$0xff]
      %v3394 = vld [vmem:[%s3382 + $0x58] sm:$0xff]
      %v3395 = vcombine.low %v3138, %v3142
      %v3396 = vcombine.low %v3146, %v3150
      %v3398 = vunpack.c.l.s4 1983009808
      %v3399 = vunpack.c.0.s8 %v3398
      %v3400 = vlaneseq
      %v3401 = vshrl.u32 %v3400, 7
      %v3402 = vsub.s32 %v3399, %v3401
      %v3403 = vrot.slane %v3395, %v3402
      %v3405 = vunpack.c.l.s4 1983009808
      %v3406 = vunpack.c.0.s8 %v3405
      %v3407 = vlaneseq
      %v3408 = vshrl.u32 %v3407, 7
      %v3409 = vsub.s32 %v3406, %v3408
      %v3410 = vrot.slane %v3396, %v3409
      %v3411 = vcombine.low %v3403, %v3410
      %v3412 = vcombine.low %v3154, %v3158
      %v3413 = vcombine.low %v3164, %v3169
      %v3415 = vunpack.c.l.s4 1983009808
      %v3416 = vunpack.c.0.s8 %v3415
      %v3417 = vlaneseq
      %v3418 = vshrl.u32 %v3417, 7
      %v3419 = vsub.s32 %v3416, %v3418
      %v3420 = vrot.slane %v3412, %v3419
      %v3422 = vunpack.c.l.s4 1983009808
      %v3423 = vunpack.c.0.s8 %v3422
      %v3424 = vlaneseq
      %v3425 = vshrl.u32 %v3424, 7
      %v3426 = vsub.s32 %v3423, %v3425
      %v3427 = vrot.slane %v3413, %v3426
      %v3428 = vcombine.low %v3420, %v3427
      %v3429 = vcombine.low %v3173, %v3177
      %v3430 = vcombine.low %v3181, %v3185
      %v3432 = vunpack.c.l.s4 1983009808
      %v3433 = vunpack.c.0.s8 %v3432
      %v3434 = vlaneseq
      %v3435 = vshrl.u32 %v3434, 7
      %v3436 = vsub.s32 %v3433, %v3435
      %v3437 = vrot.slane %v3429, %v3436
      %v3439 = vunpack.c.l.s4 1983009808
      %v3440 = vunpack.c.0.s8 %v3439
      %v3441 = vlaneseq
      %v3442 = vshrl.u32 %v3441, 7
      %v3443 = vsub.s32 %v3440, %v3442
      %v3444 = vrot.slane %v3430, %v3443
      %v3445 = vcombine.low %v3437, %v3444
      %v3446 = vcombine.low %v3189, %v3195
      %v3447 = vcombine.low %v3200, %v3204
      %v3449 = vunpack.c.l.s4 1983009808
      %v3450 = vunpack.c.0.s8 %v3449
      %v3451 = vlaneseq
      %v3452 = vshrl.u32 %v3451, 7
      %v3453 = vsub.s32 %v3450, %v3452
      %v3454 = vrot.slane %v3446, %v3453
      %v3456 = vunpack.c.l.s4 1983009808
      %v3457 = vunpack.c.0.s8 %v3456
      %v3458 = vlaneseq
      %v3459 = vshrl.u32 %v3458, 7
      %v3460 = vsub.s32 %v3457, %v3459
      %v3461 = vrot.slane %v3447, %v3460
      %v3462 = vcombine.low %v3454, %v3461
      %v3463 = vcombine.low %v3208, %v3212
      %v3464 = vcombine.low %v3216, %v3220
      %v3466 = vunpack.c.l.s4 1983009808
      %v3467 = vunpack.c.0.s8 %v3466
      %v3468 = vlaneseq
      %v3469 = vshrl.u32 %v3468, 7
      %v3470 = vsub.s32 %v3467, %v3469
      %v3471 = vrot.slane %v3463, %v3470
      %v3473 = vunpack.c.l.s4 1983009808
      %v3474 = vunpack.c.0.s8 %v3473
      %v3475 = vlaneseq
      %v3476 = vshrl.u32 %v3475, 7
      %v3477 = vsub.s32 %v3474, %v3476
      %v3478 = vrot.slane %v3464, %v3477
      %v3479 = vcombine.low %v3471, %v3478
      %v3480 = vcombine.low %v3226, %v3231
      %v3481 = vcombine.low %v3235, %v3239
      %v3483 = vunpack.c.l.s4 1983009808
      %v3484 = vunpack.c.0.s8 %v3483
      %v3485 = vlaneseq
      %v3486 = vshrl.u32 %v3485, 7
      %v3487 = vsub.s32 %v3484, %v3486
      %v3488 = vrot.slane %v3480, %v3487
      %v3490 = vunpack.c.l.s4 1983009808
      %v3491 = vunpack.c.0.s8 %v3490
      %v3492 = vlaneseq
      %v3493 = vshrl.u32 %v3492, 7
      %v3494 = vsub.s32 %v3491, %v3493
      %v3495 = vrot.slane %v3481, %v3494
      %v3496 = vcombine.low %v3488, %v3495
      %v3497 = vcombine.low %v3243, %v3247
      %v3498 = vcombine.low %v3251, %v3257
      %v3500 = vunpack.c.l.s4 1983009808
      %v3501 = vunpack.c.0.s8 %v3500
      %v3502 = vlaneseq
      %v3503 = vshrl.u32 %v3502, 7
      %v3504 = vsub.s32 %v3501, %v3503
      %v3505 = vrot.slane %v3497, %v3504
      %v3507 = vunpack.c.l.s4 1983009808
      %v3508 = vunpack.c.0.s8 %v3507
      %v3509 = vlaneseq
      %v3510 = vshrl.u32 %v3509, 7
      %v3511 = vsub.s32 %v3508, %v3510
      %v3512 = vrot.slane %v3498, %v3511
      %v3513 = vcombine.low %v3505, %v3512
      %v3514 = vcombine.low %v3262, %v3266
      %v3515 = vcombine.low %v3270, %v3274
      %v3517 = vunpack.c.l.s4 1983009808
      %v3518 = vunpack.c.0.s8 %v3517
      %v3519 = vlaneseq
      %v3520 = vshrl.u32 %v3519, 7
      %v3521 = vsub.s32 %v3518, %v3520
      %v3522 = vrot.slane %v3514, %v3521
      %v3524 = vunpack.c.l.s4 1983009808
      %v3525 = vunpack.c.0.s8 %v3524
      %v3526 = vlaneseq
      %v3527 = vshrl.u32 %v3526, 7
      %v3528 = vsub.s32 %v3525, %v3527
      %v3529 = vrot.slane %v3515, %v3528
      %v3530 = vcombine.low %v3522, %v3529
      %v3531 = vcombine.low %v3278, %v3282
      %v3532 = vcombine.low %v3288, %v3293
      %v3534 = vunpack.c.l.s4 1983009808
      %v3535 = vunpack.c.0.s8 %v3534
      %v3536 = vlaneseq
      %v3537 = vshrl.u32 %v3536, 7
      %v3538 = vsub.s32 %v3535, %v3537
      %v3539 = vrot.slane %v3531, %v3538
      %v3541 = vunpack.c.l.s4 1983009808
      %v3542 = vunpack.c.0.s8 %v3541
      %v3543 = vlaneseq
      %v3544 = vshrl.u32 %v3543, 7
      %v3545 = vsub.s32 %v3542, %v3544
      %v3546 = vrot.slane %v3532, %v3545
      %v3547 = vcombine.low %v3539, %v3546
      %v3548 = vcombine.low %v3297, %v3301
      %v3549 = vcombine.low %v3305, %v3309
      %v3551 = vunpack.c.l.s4 1983009808
      %v3552 = vunpack.c.0.s8 %v3551
      %v3553 = vlaneseq
      %v3554 = vshrl.u32 %v3553, 7
      %v3555 = vsub.s32 %v3552, %v3554
      %v3556 = vrot.slane %v3548, %v3555
      %v3558 = vunpack.c.l.s4 1983009808
      %v3559 = vunpack.c.0.s8 %v3558
      %v3560 = vlaneseq
      %v3561 = vshrl.u32 %v3560, 7
      %v3562 = vsub.s32 %v3559, %v3561
      %v3563 = vrot.slane %v3549, %v3562
      %v3564 = vcombine.low %v3556, %v3563
      %v3565 = vcombine.low %v3313, %v3319
      %v3566 = vcombine.low %v3324, %v3328
      %v3568 = vunpack.c.l.s4 1983009808
      %v3569 = vunpack.c.0.s8 %v3568
      %v3570 = vlaneseq
      %v3571 = vshrl.u32 %v3570, 7
      %v3572 = vsub.s32 %v3569, %v3571
      %v3573 = vrot.slane %v3565, %v3572
      %v3575 = vunpack.c.l.s4 1983009808
      %v3576 = vunpack.c.0.s8 %v3575
      %v3577 = vlaneseq
      %v3578 = vshrl.u32 %v3577, 7
      %v3579 = vsub.s32 %v3576, %v3578
      %v3580 = vrot.slane %v3566, %v3579
      %v3581 = vcombine.low %v3573, %v3580
      %v3582 = vcombine.low %v3332, %v3336
      %v3583 = vcombine.low %v3340, %v3344
      %v3585 = vunpack.c.l.s4 1983009808
      %v3586 = vunpack.c.0.s8 %v3585
      %v3587 = vlaneseq
      %v3588 = vshrl.u32 %v3587, 7
      %v3589 = vsub.s32 %v3586, %v3588
      %v3590 = vrot.slane %v3582, %v3589
      %v3592 = vunpack.c.l.s4 1983009808
      %v3593 = vunpack.c.0.s8 %v3592
      %v3594 = vlaneseq
      %v3595 = vshrl.u32 %v3594, 7
      %v3596 = vsub.s32 %v3593, %v3595
      %v3597 = vrot.slane %v3583, %v3596
      %v3598 = vcombine.low %v3590, %v3597
      %v3599 = vcombine.low %v3350, %v3355
      %v3600 = vcombine.low %v3359, %v3363
      %v3602 = vunpack.c.l.s4 1983009808
      %v3603 = vunpack.c.0.s8 %v3602
      %v3604 = vlaneseq
      %v3605 = vshrl.u32 %v3604, 7
      %v3606 = vsub.s32 %v3603, %v3605
      %v3607 = vrot.slane %v3599, %v3606
      %v3609 = vunpack.c.l.s4 1983009808
      %v3610 = vunpack.c.0.s8 %v3609
      %v3611 = vlaneseq
      %v3612 = vshrl.u32 %v3611, 7
      %v3613 = vsub.s32 %v3610, %v3612
      %v3614 = vrot.slane %v3600, %v3613
      %v3615 = vcombine.low %v3607, %v3614
      %v3616 = vcombine.low %v3367, %v3371
      %v3617 = vcombine.low %v3375, %v3381
      %v3619 = vunpack.c.l.s4 1983009808
      %v3620 = vunpack.c.0.s8 %v3619
      %v3621 = vlaneseq
      %v3622 = vshrl.u32 %v3621, 7
      %v3623 = vsub.s32 %v3620, %v3622
      %v3624 = vrot.slane %v3616, %v3623
      %v3626 = vunpack.c.l.s4 1983009808
      %v3627 = vunpack.c.0.s8 %v3626
      %v3628 = vlaneseq
      %v3629 = vshrl.u32 %v3628, 7
      %v3630 = vsub.s32 %v3627, %v3629
      %v3631 = vrot.slane %v3617, %v3630
      %v3632 = vcombine.low %v3624, %v3631
      %v3645 = vunpack.c.l.b16 %v3383
      %v3646 = vunpack.c.h.b16 %v3383
      %v3647 = vunpack.c.l.b16 %v3384
      %v3648 = vunpack.c.h.b16 %v3384
      %v3649 = vunpack.c.l.b16 %v3385
      %v3650 = vunpack.c.h.b16 %v3385
      %v3651 = vunpack.c.l.b16 %v3386
      %v3652 = vunpack.c.h.b16 %v3386
      %v3653 = vunpack.c.l.b16 %v3387
      %v3654 = vunpack.c.h.b16 %v3387
      %v3655 = vunpack.c.l.b16 %v3388
      %v3656 = vunpack.c.h.b16 %v3388
      %v3657 = vunpack.c.l.b16 %v3389
      %v3658 = vunpack.c.h.b16 %v3389
      %v3659 = vunpack.c.l.b16 %v3390
      %v3660 = vunpack.c.h.b16 %v3390
      %v3661 = vunpack.c.l.b16 %v3391
      %v3662 = vunpack.c.h.b16 %v3391
      %v3663 = vunpack.c.l.b16 %v3392
      %v3664 = vunpack.c.h.b16 %v3392
      %v3665 = vunpack.c.l.b16 %v3393
      %v3666 = vunpack.c.h.b16 %v3393
      %v3667 = vunpack.c.l.b16 %v3394
      %v3668 = vunpack.c.h.b16 %v3394
      %v3669 = vpack.c.b16 %v3647, %v3645
      %v3670 = vpack.c.b16 %v3648, %v3646
      %v3671 = vpack.c.b16 %v3651, %v3649
      %v3672 = vpack.c.b16 %v3652, %v3650
      %v3673 = vpack.c.b16 %v3655, %v3653
      %v3674 = vpack.c.b16 %v3656, %v3654
      %v3675 = vpack.c.b16 %v3659, %v3657
      %v3676 = vpack.c.b16 %v3660, %v3658
      %v3677 = vpack.c.b16 %v3663, %v3661
      %v3678 = vpack.c.b16 %v3664, %v3662
      %v3679 = vpack.c.b16 %v3667, %v3665
      %v3680 = vpack.c.b16 %v3668, %v3666
      %v3694 = vsel %vm1633, %v3411, 0
      %v3697 = vsel %vm1633, %v3428, 0
      %v3700 = vsel %vm1633, %v3445, 0
      %v3703 = vsel %vm1633, %v3462, 0
      %v3706 = vsel %vm1633, %v3479, 0
      %v3709 = vsel %vm1633, %v3496, 0
      %v3712 = vsel %vm1633, %v3513, 0
      %v3715 = vsel %vm1633, %v3530, 0
      %v3718 = vsel %vm1633, %v3547, 0
      %v3721 = vsel %vm1633, %v3564, 0
      %v3724 = vsel %vm1633, %v3581, 0
      %v3727 = vsel %vm1633, %v3598, 0
      %v3730 = vsel %vm1633, %v3615, 0
      %v3733 = vsel %vm1633, %v3632, 0
      %3735 = vmatprep.subr.bf16.mxu0 %v3670
      %3736 = vmatpush1.bf16.msra.mxu0 %v3669
      %3737 = vmatprep.subr.bf16.mxu0 %v3672
      %3738 = vmatpush1.bf16.msra.mxu0 %v3671
      %3739 = vmatprep.subr.bf16.mxu0 %v3674
      %3740 = vmatpush1.bf16.msra.mxu0 %v3673
      %3741 = vmatprep.subr.bf16.mxu0 %v3676
      %3742 = vmatpush1.bf16.msra.mxu0 %v3675
      %3743 = vmatprep.subr.bf16.mxu0 %v3678
      %3744 = vmatpush1.bf16.msra.mxu0 %v3677
      %3745 = vmatprep.subr.bf16.mxu0 %v3680
      %3746 = vmatpush1.bf16.msra.mxu0 %v3679
      %3747 = vmatprep.subr.bf16.mxu0 0
      %3748 = vmatpush1.bf16.msra.mxu0 0
      %3749 = vmatprep.subr.bf16.mxu0 0
      %3750 = vmatpush1.bf16.msra.mxu0 0
      %3751 = vmatprep.subr.bf16.mxu0 0
      %3752 = vmatpush1.bf16.msra.mxu0 0
      %3753 = vmatprep.subr.bf16.mxu0 0
      %3754 = vmatpush1.bf16.msra.mxu0 0
      %3755 = vmatprep.subr.bf16.mxu0 0
      %3756 = vmatpush1.bf16.msra.mxu0 0
      %3757 = vmatprep.subr.bf16.mxu0 0
      %3758 = vmatpush1.bf16.msra.mxu0 0
      %3759 = vmatprep.subr.bf16.mxu0 0
      %3760 = vmatpush1.bf16.msra.mxu0 0
      %3761 = vmatprep.subr.bf16.mxu0 0
      %3762 = vmatpush1.bf16.msra.mxu0 0
      %3763 = vmatprep.subr.bf16.mxu0 0
      %3764 = vmatpush1.bf16.msra.mxu0 0
      %3765 = vmatprep.subr.bf16.mxu0 0
      %3766 = vmatpush1.bf16.msra.mxu0 0
      %3767 = vmatprep.mubr.bf16.mxu0 0
      %3768 = vmatmul.mubr.bf16.gmra.mrb[0].mxu0 %v3694
      %v3769 = vpop.f32.mrb[0].mxu0
      %v3770 = vadd.f32 0.0, %v3769
      %v3771 = vpop.f32.mrb[0].mxu0
      %v3772 = vadd.f32 0.0, %v3771
      %v3773 = vpop.f32.mrb[0].mxu0
      %v3774 = vadd.f32 0.0, %v3773
      %v3775 = vpop.f32.mrb[0].mxu0
      %v3776 = vadd.f32 0.0, %v3775
      %3777 = vmatprep.mubr.bf16.mxu0 0
      %3778 = vmatmul.mubr.bf16.gmra.mrb[0].mxu0 %v3697
      %v3779 = vpop.f32.mrb[0].mxu0
      %v3780 = vadd.f32 0.0, %v3779
      %v3781 = vpop.f32.mrb[0].mxu0
      %v3782 = vadd.f32 0.0, %v3781
      %v3783 = vpop.f32.mrb[0].mxu0
      %v3784 = vadd.f32 0.0, %v3783
      %v3785 = vpop.f32.mrb[0].mxu0
      %v3786 = vadd.f32 0.0, %v3785
      %3787 = vmatprep.mubr.bf16.mxu0 0
      %3788 = vmatmul.mubr.bf16.gmra.mrb[0].mxu0 %v3700
      %v3789 = vpop.f32.mrb[0].mxu0
      %v3790 = vadd.f32 0.0, %v3789
      %v3791 = vpop.f32.mrb[0].mxu0
      %v3792 = vadd.f32 0.0, %v3791
      %v3793 = vpop.f32.mrb[0].mxu0
      %v3794 = vadd.f32 0.0, %v3793
      %v3795 = vpop.f32.mrb[0].mxu0
      %v3796 = vadd.f32 0.0, %v3795
      %3797 = vmatprep.mubr.bf16.mxu0 0
      %3798 = vmatmul.mubr.bf16.gmra.mrb[0].mxu0 %v3703
      %v3799 = vpop.f32.mrb[0].mxu0
      %v3800 = vadd.f32 0.0, %v3799
      %v3801 = vpop.f32.mrb[0].mxu0
      %v3802 = vadd.f32 0.0, %v3801
      %v3803 = vpop.f32.mrb[0].mxu0
      %v3804 = vadd.f32 0.0, %v3803
      %v3805 = vpop.f32.mrb[0].mxu0
      %v3806 = vadd.f32 0.0, %v3805
      %3807 = vmatprep.mubr.bf16.mxu0 0
      %3808 = vmatmul.mubr.bf16.gmra.mrb[0].mxu0 %v3706
      %v3809 = vpop.f32.mrb[0].mxu0
      %v3810 = vadd.f32 0.0, %v3809
      %v3811 = vpop.f32.mrb[0].mxu0
      %v3812 = vadd.f32 0.0, %v3811
      %v3813 = vpop.f32.mrb[0].mxu0
      %v3814 = vadd.f32 0.0, %v3813
      %v3815 = vpop.f32.mrb[0].mxu0
      %v3816 = vadd.f32 0.0, %v3815
      %3817 = vmatprep.mubr.bf16.mxu0 0
      %3818 = vmatmul.mubr.bf16.gmra.mrb[0].mxu0 %v3709
      %v3819 = vpop.f32.mrb[0].mxu0
      %v3820 = vadd.f32 0.0, %v3819
      %v3821 = vpop.f32.mrb[0].mxu0
      %v3822 = vadd.f32 0.0, %v3821
      %v3823 = vpop.f32.mrb[0].mxu0
      %v3824 = vadd.f32 0.0, %v3823
      %v3825 = vpop.f32.mrb[0].mxu0
      %v3826 = vadd.f32 0.0, %v3825
      %3827 = vmatprep.mubr.bf16.mxu0 0
      %3828 = vmatmul.mubr.bf16.gmra.mrb[0].mxu0 %v3712
      %v3829 = vpop.f32.mrb[0].mxu0
      %v3830 = vadd.f32 0.0, %v3829
      %v3831 = vpop.f32.mrb[0].mxu0
      %v3832 = vadd.f32 0.0, %v3831
      %v3833 = vpop.f32.mrb[0].mxu0
      %v3834 = vadd.f32 0.0, %v3833
      %v3835 = vpop.f32.mrb[0].mxu0
      %v3836 = vadd.f32 0.0, %v3835
      %3837 = vmatprep.mubr.bf16.mxu0 0
      %3838 = vmatmul.mubr.bf16.gmra.mrb[0].mxu0 %v3715
      %v3839 = vpop.f32.mrb[0].mxu0
      %v3840 = vadd.f32 0.0, %v3839
      %v3841 = vpop.f32.mrb[0].mxu0
      %v3842 = vadd.f32 0.0, %v3841
      %v3843 = vpop.f32.mrb[0].mxu0
      %v3844 = vadd.f32 0.0, %v3843
      %v3845 = vpop.f32.mrb[0].mxu0
      %v3846 = vadd.f32 0.0, %v3845
      %3847 = vmatprep.mubr.bf16.mxu0 0
      %3848 = vmatmul.mubr.bf16.gmra.mrb[0].mxu0 %v3718
      %v3849 = vpop.f32.mrb[0].mxu0
      %v3850 = vadd.f32 0.0, %v3849
      %v3851 = vpop.f32.mrb[0].mxu0
      %v3852 = vadd.f32 0.0, %v3851
      %v3853 = vpop.f32.mrb[0].mxu0
      %v3854 = vadd.f32 0.0, %v3853
      %v3855 = vpop.f32.mrb[0].mxu0
      %v3856 = vadd.f32 0.0, %v3855
      %3857 = vmatprep.mubr.bf16.mxu0 0
      %3858 = vmatmul.mubr.bf16.gmra.mrb[0].mxu0 %v3721
      %v3859 = vpop.f32.mrb[0].mxu0
      %v3860 = vadd.f32 0.0, %v3859
      %v3861 = vpop.f32.mrb[0].mxu0
      %v3862 = vadd.f32 0.0, %v3861
      %v3863 = vpop.f32.mrb[0].mxu0
      %v3864 = vadd.f32 0.0, %v3863
      %v3865 = vpop.f32.mrb[0].mxu0
      %v3866 = vadd.f32 0.0, %v3865
      %3867 = vmatprep.mubr.bf16.mxu0 0
      %3868 = vmatmul.mubr.bf16.gmra.mrb[0].mxu0 %v3724
      %v3869 = vpop.f32.mrb[0].mxu0
      %v3870 = vadd.f32 0.0, %v3869
      %v3871 = vpop.f32.mrb[0].mxu0
      %v3872 = vadd.f32 0.0, %v3871
      %v3873 = vpop.f32.mrb[0].mxu0
      %v3874 = vadd.f32 0.0, %v3873
      %v3875 = vpop.f32.mrb[0].mxu0
      %v3876 = vadd.f32 0.0, %v3875
      %3877 = vmatprep.mubr.bf16.mxu0 0
      %3878 = vmatmul.mubr.bf16.gmra.mrb[0].mxu0 %v3727
      %v3879 = vpop.f32.mrb[0].mxu0
      %v3880 = vadd.f32 0.0, %v3879
      %v3881 = vpop.f32.mrb[0].mxu0
      %v3882 = vadd.f32 0.0, %v3881
      %v3883 = vpop.f32.mrb[0].mxu0
      %v3884 = vadd.f32 0.0, %v3883
      %v3885 = vpop.f32.mrb[0].mxu0
      %v3886 = vadd.f32 0.0, %v3885
      %3887 = vmatprep.mubr.bf16.mxu0 0
      %3888 = vmatmul.mubr.bf16.gmra.mrb[0].mxu0 %v3730
      %v3889 = vpop.f32.mrb[0].mxu0
      %v3890 = vadd.f32 0.0, %v3889
      %v3891 = vpop.f32.mrb[0].mxu0
      %v3892 = vadd.f32 0.0, %v3891
      %v3893 = vpop.f32.mrb[0].mxu0
      %v3894 = vadd.f32 0.0, %v3893
      %v3895 = vpop.f32.mrb[0].mxu0
      %v3896 = vadd.f32 0.0, %v3895
      %3897 = vmatprep.mubr.bf16.mxu0 0
      %3898 = vmatmul.mubr.bf16.gmra.mrb[0].mxu0 %v3733
      %v3899 = vpop.f32.mrb[0].mxu0
      %v3900 = vadd.f32 0.0, %v3899
      %v3901 = vpop.f32.mrb[0].mxu0
      %v3902 = vadd.f32 0.0, %v3901
      %v3903 = vpop.f32.mrb[0].mxu0
      %v3904 = vadd.f32 0.0, %v3903
      %v3905 = vpop.f32.mrb[0].mxu0
      %v3906 = vadd.f32 0.0, %v3905
      %3907 = vdwg.mxu0
      %v3908 = vadd.f32 %v3071, %v3770
      %v3909 = vadd.f32 %v3072, %v3772
      %v3910 = vadd.f32 %v3073, %v3774
      %v3911 = vadd.f32 %v3074, %v3776
      %v3912 = vadd.f32 %v3075, %v3780
      %v3913 = vadd.f32 %v3076, %v3782
      %v3914 = vadd.f32 %v3077, %v3784
      %v3915 = vadd.f32 %v3078, %v3786
      %v3916 = vadd.f32 %v3079, %v3790
      %v3917 = vadd.f32 %v3080, %v3792
      %v3918 = vadd.f32 %v3081, %v3794
      %v3919 = vadd.f32 %v3082, %v3796
      %v3920 = vadd.f32 %v3083, %v3800
      %v3921 = vadd.f32 %v3084, %v3802
      %v3922 = vadd.f32 %v3085, %v3804
      %v3923 = vadd.f32 %v3086, %v3806
      %v3924 = vadd.f32 %v3087, %v3810
      %v3925 = vadd.f32 %v3088, %v3812
      %v3926 = vadd.f32 %v3089, %v3814
      %v3927 = vadd.f32 %v3090, %v3816
      %v3928 = vadd.f32 %v3091, %v3820
      %v3929 = vadd.f32 %v3092, %v3822
      %v3930 = vadd.f32 %v3093, %v3824
      %v3931 = vadd.f32 %v3094, %v3826
      %v3932 = vadd.f32 %v3095, %v3830
      %v3933 = vadd.f32 %v3096, %v3832
      %v3934 = vadd.f32 %v3097, %v3834
      %v3935 = vadd.f32 %v3098, %v3836
      %v3936 = vadd.f32 %v3099, %v3840
      %v3937 = vadd.f32 %v3100, %v3842
      %v3938 = vadd.f32 %v3101, %v3844
      %v3939 = vadd.f32 %v3102, %v3846
      %v3940 = vadd.f32 %v3103, %v3850
      %v3941 = vadd.f32 %v3104, %v3852
      %v3942 = vadd.f32 %v3105, %v3854
      %v3943 = vadd.f32 %v3106, %v3856
      %v3944 = vadd.f32 %v3107, %v3860
      %v3945 = vadd.f32 %v3108, %v3862
      %v3946 = vadd.f32 %v3109, %v3864
      %v3947 = vadd.f32 %v3110, %v3866
      %v3948 = vadd.f32 %v3111, %v3870
      %v3949 = vadd.f32 %v3112, %v3872
      %v3950 = vadd.f32 %v3113, %v3874
      %v3951 = vadd.f32 %v3114, %v3876
      %v3952 = vadd.f32 %v3115, %v3880
      %v3953 = vadd.f32 %v3116, %v3882
      %v3954 = vadd.f32 %v3117, %v3884
      %v3955 = vadd.f32 %v3118, %v3886
      %v3956 = vadd.f32 %v3119, %v3890
      %v3957 = vadd.f32 %v3120, %v3892
      %v3958 = vadd.f32 %v3121, %v3894
      %v3959 = vadd.f32 %v3122, %v3896
      %v3960 = vadd.f32 %v3123, %v3900
      %v3961 = vadd.f32 %v3124, %v3902
      %v3962 = vadd.f32 %v3125, %v3904
      %v3963 = vadd.f32 %v3126, %v3906
      %s3964 = scalar_lea.vmem %s1, 384
      %v3965 = vld [vmem:[%s3964] sm:$0xff]
      %v3966 = vld [vmem:[%s3964 + $0x8] sm:$0xff]
      %v3967 = vld [vmem:[%s3964 + $0x10] sm:$0xff]
      %v3968 = vld [vmem:[%s3964 + $0x18] sm:$0xff]
      %v3969 = vld [vmem:[%s3964 + $0x20] sm:$0xff]
      %v3970 = vld [vmem:[%s3964 + $0x28] sm:$0xff]
      %v3971 = vld [vmem:[%s3964 + $0x30] sm:$0xff]
      %v3972 = vld [vmem:[%s3964 + $0x38] sm:$0xff]
      %v3973 = vld [vmem:[%s3964 + $0x40] sm:$0xff]
      %v3974 = vld [vmem:[%s3964 + $0x48] sm:$0xff]
      %v3975 = vld [vmem:[%s3964 + $0x50] sm:$0xff]
      %v3976 = vld [vmem:[%s3964 + $0x58] sm:$0xff]
      %v3977 = vcombine.low %v462, %v469
      %v3978 = vcombine.low %v470, %v477
      %v3980 = vunpack.c.l.s4 1983009808
      %v3981 = vunpack.c.0.s8 %v3980
      %v3982 = vlaneseq
      %v3983 = vshrl.u32 %v3982, 7
      %v3984 = vsub.s32 %v3981, %v3983
      %v3985 = vrot.slane %v3977, %v3984
      %v3987 = vunpack.c.l.s4 1983009808
      %v3988 = vunpack.c.0.s8 %v3987
      %v3989 = vlaneseq
      %v3990 = vshrl.u32 %v3989, 7
      %v3991 = vsub.s32 %v3988, %v3990
      %v3992 = vrot.slane %v3978, %v3991
      %v3993 = vcombine.low %v3985, %v3992
      %v3994 = vcombine.low %v478, %v485
      %v3995 = vcombine.low %v715, %v493
      %v3997 = vunpack.c.l.s4 1983009808
      %v3998 = vunpack.c.0.s8 %v3997
      %v3999 = vlaneseq
      %v4000 = vshrl.u32 %v3999, 7
      %v4001 = vsub.s32 %v3998, %v4000
      %v4002 = vrot.slane %v3994, %v4001
      %v4004 = vunpack.c.l.s4 1983009808
      %v4005 = vunpack.c.0.s8 %v4004
      %v4006 = vlaneseq
      %v4007 = vshrl.u32 %v4006, 7
      %v4008 = vsub.s32 %v4005, %v4007
      %v4009 = vrot.slane %v3995, %v4008
      %v4010 = vcombine.low %v4002, %v4009
      %v4011 = vcombine.low %v500, %v501
      %v4012 = vcombine.low %v508, %v509
      %v4014 = vunpack.c.l.s4 1983009808
      %v4015 = vunpack.c.0.s8 %v4014
      %v4016 = vlaneseq
      %v4017 = vshrl.u32 %v4016, 7
      %v4018 = vsub.s32 %v4015, %v4017
      %v4019 = vrot.slane %v4011, %v4018
      %v4021 = vunpack.c.l.s4 1983009808
      %v4022 = vunpack.c.0.s8 %v4021
      %v4023 = vlaneseq
      %v4024 = vshrl.u32 %v4023, 7
      %v4025 = vsub.s32 %v4022, %v4024
      %v4026 = vrot.slane %v4012, %v4025
      %v4027 = vcombine.low %v4019, %v4026
      %v4028 = vcombine.low %v516, %v716
      %v4029 = vcombine.low %v524, %v531
      %v4031 = vunpack.c.l.s4 1983009808
      %v4032 = vunpack.c.0.s8 %v4031
      %v4033 = vlaneseq
      %v4034 = vshrl.u32 %v4033, 7
      %v4035 = vsub.s32 %v4032, %v4034
      %v4036 = vrot.slane %v4028, %v4035
      %v4038 = vunpack.c.l.s4 1983009808
      %v4039 = vunpack.c.0.s8 %v4038
      %v4040 = vlaneseq
      %v4041 = vshrl.u32 %v4040, 7
      %v4042 = vsub.s32 %v4039, %v4041
      %v4043 = vrot.slane %v4029, %v4042
      %v4044 = vcombine.low %v4036, %v4043
      %v4045 = vcombine.low %v532, %v539
      %v4046 = vcombine.low %v540, %v547
      %v4048 = vunpack.c.l.s4 1983009808
      %v4049 = vunpack.c.0.s8 %v4048
      %v4050 = vlaneseq
      %v4051 = vshrl.u32 %v4050, 7
      %v4052 = vsub.s32 %v4049, %v4051
      %v4053 = vrot.slane %v4045, %v4052
      %v4055 = vunpack.c.l.s4 1983009808
      %v4056 = vunpack.c.0.s8 %v4055
      %v4057 = vlaneseq
      %v4058 = vshrl.u32 %v4057, 7
      %v4059 = vsub.s32 %v4056, %v4058
      %v4060 = vrot.slane %v4046, %v4059
      %v4061 = vcombine.low %v4053, %v4060
      %v4062 = vcombine.low %v717, %v555
      %v4063 = vcombine.low %v562, %v563
      %v4065 = vunpack.c.l.s4 1983009808
      %v4066 = vunpack.c.0.s8 %v4065
      %v4067 = vlaneseq
      %v4068 = vshrl.u32 %v4067, 7
      %v4069 = vsub.s32 %v4066, %v4068
      %v4070 = vrot.slane %v4062, %v4069
      %v4072 = vunpack.c.l.s4 1983009808
      %v4073 = vunpack.c.0.s8 %v4072
      %v4074 = vlaneseq
      %v4075 = vshrl.u32 %v4074, 7
      %v4076 = vsub.s32 %v4073, %v4075
      %v4077 = vrot.slane %v4063, %v4076
      %v4078 = vcombine.low %v4070, %v4077
      %v4079 = vcombine.low %v570, %v571
      %v4080 = vcombine.low %v578, %v718
      %v4082 = vunpack.c.l.s4 1983009808
      %v4083 = vunpack.c.0.s8 %v4082
      %v4084 = vlaneseq
      %v4085 = vshrl.u32 %v4084, 7
      %v4086 = vsub.s32 %v4083, %v4085
      %v4087 = vrot.slane %v4079, %v4086
      %v4089 = vunpack.c.l.s4 1983009808
      %v4090 = vunpack.c.0.s8 %v4089
      %v4091 = vlaneseq
      %v4092 = vshrl.u32 %v4091, 7
      %v4093 = vsub.s32 %v4090, %v4092
      %v4094 = vrot.slane %v4080, %v4093
      %v4095 = vcombine.low %v4087, %v4094
      %v4096 = vcombine.low %v586, %v593
      %v4097 = vcombine.low %v594, %v601
      %v4099 = vunpack.c.l.s4 1983009808
      %v4100 = vunpack.c.0.s8 %v4099
      %v4101 = vlaneseq
      %v4102 = vshrl.u32 %v4101, 7
      %v4103 = vsub.s32 %v4100, %v4102
      %v4104 = vrot.slane %v4096, %v4103
      %v4106 = vunpack.c.l.s4 1983009808
      %v4107 = vunpack.c.0.s8 %v4106
      %v4108 = vlaneseq
      %v4109 = vshrl.u32 %v4108, 7
      %v4110 = vsub.s32 %v4107, %v4109
      %v4111 = vrot.slane %v4097, %v4110
      %v4112 = vcombine.low %v4104, %v4111
      %v4113 = vcombine.low %v602, %v609
      %v4114 = vcombine.low %v719, %v617
      %v4116 = vunpack.c.l.s4 1983009808
      %v4117 = vunpack.c.0.s8 %v4116
      %v4118 = vlaneseq
      %v4119 = vshrl.u32 %v4118, 7
      %v4120 = vsub.s32 %v4117, %v4119
      %v4121 = vrot.slane %v4113, %v4120
      %v4123 = vunpack.c.l.s4 1983009808
      %v4124 = vunpack.c.0.s8 %v4123
      %v4125 = vlaneseq
      %v4126 = vshrl.u32 %v4125, 7
      %v4127 = vsub.s32 %v4124, %v4126
      %v4128 = vrot.slane %v4114, %v4127
      %v4129 = vcombine.low %v4121, %v4128
      %v4130 = vcombine.low %v624, %v625
      %v4131 = vcombine.low %v632, %v633
      %v4133 = vunpack.c.l.s4 1983009808
      %v4134 = vunpack.c.0.s8 %v4133
      %v4135 = vlaneseq
      %v4136 = vshrl.u32 %v4135, 7
      %v4137 = vsub.s32 %v4134, %v4136
      %v4138 = vrot.slane %v4130, %v4137
      %v4140 = vunpack.c.l.s4 1983009808
      %v4141 = vunpack.c.0.s8 %v4140
      %v4142 = vlaneseq
      %v4143 = vshrl.u32 %v4142, 7
      %v4144 = vsub.s32 %v4141, %v4143
      %v4145 = vrot.slane %v4131, %v4144
      %v4146 = vcombine.low %v4138, %v4145
      %v4147 = vcombine.low %v640, %v720
      %v4148 = vcombine.low %v648, %v655
      %v4150 = vunpack.c.l.s4 1983009808
      %v4151 = vunpack.c.0.s8 %v4150
      %v4152 = vlaneseq
      %v4153 = vshrl.u32 %v4152, 7
      %v4154 = vsub.s32 %v4151, %v4153
      %v4155 = vrot.slane %v4147, %v4154
      %v4157 = vunpack.c.l.s4 1983009808
      %v4158 = vunpack.c.0.s8 %v4157
      %v4159 = vlaneseq
      %v4160 = vshrl.u32 %v4159, 7
      %v4161 = vsub.s32 %v4158, %v4160
      %v4162 = vrot.slane %v4148, %v4161
      %v4163 = vcombine.low %v4155, %v4162
      %v4164 = vcombine.low %v656, %v663
      %v4165 = vcombine.low %v664, %v671
      %v4167 = vunpack.c.l.s4 1983009808
      %v4168 = vunpack.c.0.s8 %v4167
      %v4169 = vlaneseq
      %v4170 = vshrl.u32 %v4169, 7
      %v4171 = vsub.s32 %v4168, %v4170
      %v4172 = vrot.slane %v4164, %v4171
      %v4174 = vunpack.c.l.s4 1983009808
      %v4175 = vunpack.c.0.s8 %v4174
      %v4176 = vlaneseq
      %v4177 = vshrl.u32 %v4176, 7
      %v4178 = vsub.s32 %v4175, %v4177
      %v4179 = vrot.slane %v4165, %v4178
      %v4180 = vcombine.low %v4172, %v4179
      %v4181 = vcombine.low %v721, %v679
      %v4182 = vcombine.low %v686, %v687
      %v4184 = vunpack.c.l.s4 1983009808
      %v4185 = vunpack.c.0.s8 %v4184
      %v4186 = vlaneseq
      %v4187 = vshrl.u32 %v4186, 7
      %v4188 = vsub.s32 %v4185, %v4187
      %v4189 = vrot.slane %v4181, %v4188
      %v4191 = vunpack.c.l.s4 1983009808
      %v4192 = vunpack.c.0.s8 %v4191
      %v4193 = vlaneseq
      %v4194 = vshrl.u32 %v4193, 7
      %v4195 = vsub.s32 %v4192, %v4194
      %v4196 = vrot.slane %v4182, %v4195
      %v4197 = vcombine.low %v4189, %v4196
      %v4198 = vcombine.low %v694, %v695
      %v4199 = vcombine.low %v702, %v722
      %v4201 = vunpack.c.l.s4 1983009808
      %v4202 = vunpack.c.0.s8 %v4201
      %v4203 = vlaneseq
      %v4204 = vshrl.u32 %v4203, 7
      %v4205 = vsub.s32 %v4202, %v4204
      %v4206 = vrot.slane %v4198, %v4205
      %v4208 = vunpack.c.l.s4 1983009808
      %v4209 = vunpack.c.0.s8 %v4208
      %v4210 = vlaneseq
      %v4211 = vshrl.u32 %v4210, 7
      %v4212 = vsub.s32 %v4209, %v4211
      %v4213 = vrot.slane %v4199, %v4212
      %v4214 = vcombine.low %v4206, %v4213
      %v4227 = vunpack.c.l.b16 %v3965
      %v4228 = vunpack.c.h.b16 %v3965
      %v4229 = vunpack.c.l.b16 %v3966
      %v4230 = vunpack.c.h.b16 %v3966
      %v4231 = vunpack.c.l.b16 %v3967
      %v4232 = vunpack.c.h.b16 %v3967
      %v4233 = vunpack.c.l.b16 %v3968
      %v4234 = vunpack.c.h.b16 %v3968
      %v4235 = vunpack.c.l.b16 %v3969
      %v4236 = vunpack.c.h.b16 %v3969
      %v4237 = vunpack.c.l.b16 %v3970
      %v4238 = vunpack.c.h.b16 %v3970
      %v4239 = vunpack.c.l.b16 %v3971
      %v4240 = vunpack.c.h.b16 %v3971
      %v4241 = vunpack.c.l.b16 %v3972
      %v4242 = vunpack.c.h.b16 %v3972
      %v4243 = vunpack.c.l.b16 %v3973
      %v4244 = vunpack.c.h.b16 %v3973
      %v4245 = vunpack.c.l.b16 %v3974
      %v4246 = vunpack.c.h.b16 %v3974
      %v4247 = vunpack.c.l.b16 %v3975
      %v4248 = vunpack.c.h.b16 %v3975
      %v4249 = vunpack.c.l.b16 %v3976
      %v4250 = vunpack.c.h.b16 %v3976
      %v4251 = vpack.c.b16 %v4229, %v4227
      %v4252 = vpack.c.b16 %v4230, %v4228
      %v4253 = vpack.c.b16 %v4233, %v4231
      %v4254 = vpack.c.b16 %v4234, %v4232
      %v4255 = vpack.c.b16 %v4237, %v4235
      %v4256 = vpack.c.b16 %v4238, %v4236
      %v4257 = vpack.c.b16 %v4241, %v4239
      %v4258 = vpack.c.b16 %v4242, %v4240
      %v4259 = vpack.c.b16 %v4245, %v4243
      %v4260 = vpack.c.b16 %v4246, %v4244
      %v4261 = vpack.c.b16 %v4249, %v4247
      %v4262 = vpack.c.b16 %v4250, %v4248
      %v4276 = vsel %vm1633, %v3993, 0
      %v4279 = vsel %vm1633, %v4010, 0
      %v4282 = vsel %vm1633, %v4027, 0
      %v4285 = vsel %vm1633, %v4044, 0
      %v4288 = vsel %vm1633, %v4061, 0
      %v4291 = vsel %vm1633, %v4078, 0
      %v4294 = vsel %vm1633, %v4095, 0
      %v4297 = vsel %vm1633, %v4112, 0
      %v4300 = vsel %vm1633, %v4129, 0
      %v4303 = vsel %vm1633, %v4146, 0
      %v4306 = vsel %vm1633, %v4163, 0
      %v4309 = vsel %vm1633, %v4180, 0
      %v4312 = vsel %vm1633, %v4197, 0
      %v4315 = vsel %vm1633, %v4214, 0
      %4317 = vmatprep.subr.bf16.mxu0 %v4252
      %4318 = vmatpush1.bf16.msra.mxu0 %v4251
      %4319 = vmatprep.subr.bf16.mxu0 %v4254
      %4320 = vmatpush1.bf16.msra.mxu0 %v4253
      %4321 = vmatprep.subr.bf16.mxu0 %v4256
      %4322 = vmatpush1.bf16.msra.mxu0 %v4255
      %4323 = vmatprep.subr.bf16.mxu0 %v4258
      %4324 = vmatpush1.bf16.msra.mxu0 %v4257
      %4325 = vmatprep.subr.bf16.mxu0 %v4260
      %4326 = vmatpush1.bf16.msra.mxu0 %v4259
      %4327 = vmatprep.subr.bf16.mxu0 %v4262
      %4328 = vmatpush1.bf16.msra.mxu0 %v4261
      %4329 = vmatprep.subr.bf16.mxu0 0
      %4330 = vmatpush1.bf16.msra.mxu0 0
      %4331 = vmatprep.subr.bf16.mxu0 0
      %4332 = vmatpush1.bf16.msra.mxu0 0
      %4333 = vmatprep.subr.bf16.mxu0 0
      %4334 = vmatpush1.bf16.msra.mxu0 0
      %4335 = vmatprep.subr.bf16.mxu0 0
      %4336 = vmatpush1.bf16.msra.mxu0 0
      %4337 = vmatprep.subr.bf16.mxu0 0
      %4338 = vmatpush1.bf16.msra.mxu0 0
      %4339 = vmatprep.subr.bf16.mxu0 0
      %4340 = vmatpush1.bf16.msra.mxu0 0
      %4341 = vmatprep.subr.bf16.mxu0 0
      %4342 = vmatpush1.bf16.msra.mxu0 0
      %4343 = vmatprep.subr.bf16.mxu0 0
      %4344 = vmatpush1.bf16.msra.mxu0 0
      %4345 = vmatprep.subr.bf16.mxu0 0
      %4346 = vmatpush1.bf16.msra.mxu0 0
      %4347 = vmatprep.subr.bf16.mxu0 0
      %4348 = vmatpush1.bf16.msra.mxu0 0
      %4349 = vmatprep.mubr.bf16.mxu0 0
      %4350 = vmatmul.mubr.bf16.gmra.mrb[0].mxu0 %v4276
      %v4351 = vpop.f32.mrb[0].mxu0
      %v4352 = vadd.f32 0.0, %v4351
      %v4353 = vpop.f32.mrb[0].mxu0
      %v4354 = vadd.f32 0.0, %v4353
      %v4355 = vpop.f32.mrb[0].mxu0
      %v4356 = vadd.f32 0.0, %v4355
      %v4357 = vpop.f32.mrb[0].mxu0
      %v4358 = vadd.f32 0.0, %v4357
      %4359 = vmatprep.mubr.bf16.mxu0 0
      %4360 = vmatmul.mubr.bf16.gmra.mrb[0].mxu0 %v4279
      %v4361 = vpop.f32.mrb[0].mxu0
      %v4362 = vadd.f32 0.0, %v4361
      %v4363 = vpop.f32.mrb[0].mxu0
      %v4364 = vadd.f32 0.0, %v4363
      %v4365 = vpop.f32.mrb[0].mxu0
      %v4366 = vadd.f32 0.0, %v4365
      %v4367 = vpop.f32.mrb[0].mxu0
      %v4368 = vadd.f32 0.0, %v4367
      %4369 = vmatprep.mubr.bf16.mxu0 0
      %4370 = vmatmul.mubr.bf16.gmra.mrb[0].mxu0 %v4282
      %v4371 = vpop.f32.mrb[0].mxu0
      %v4372 = vadd.f32 0.0, %v4371
      %v4373 = vpop.f32.mrb[0].mxu0
      %v4374 = vadd.f32 0.0, %v4373
      %v4375 = vpop.f32.mrb[0].mxu0
      %v4376 = vadd.f32 0.0, %v4375
      %v4377 = vpop.f32.mrb[0].mxu0
      %v4378 = vadd.f32 0.0, %v4377
      %4379 = vmatprep.mubr.bf16.mxu0 0
      %4380 = vmatmul.mubr.bf16.gmra.mrb[0].mxu0 %v4285
      %v4381 = vpop.f32.mrb[0].mxu0
      %v4382 = vadd.f32 0.0, %v4381
      %v4383 = vpop.f32.mrb[0].mxu0
      %v4384 = vadd.f32 0.0, %v4383
      %v4385 = vpop.f32.mrb[0].mxu0
      %v4386 = vadd.f32 0.0, %v4385
      %v4387 = vpop.f32.mrb[0].mxu0
      %v4388 = vadd.f32 0.0, %v4387
      %4389 = vmatprep.mubr.bf16.mxu0 0
      %4390 = vmatmul.mubr.bf16.gmra.mrb[0].mxu0 %v4288
      %v4391 = vpop.f32.mrb[0].mxu0
      %v4392 = vadd.f32 0.0, %v4391
      %v4393 = vpop.f32.mrb[0].mxu0
      %v4394 = vadd.f32 0.0, %v4393
      %v4395 = vpop.f32.mrb[0].mxu0
      %v4396 = vadd.f32 0.0, %v4395
      %v4397 = vpop.f32.mrb[0].mxu0
      %v4398 = vadd.f32 0.0, %v4397
      %4399 = vmatprep.mubr.bf16.mxu0 0
      %4400 = vmatmul.mubr.bf16.gmra.mrb[0].mxu0 %v4291
      %v4401 = vpop.f32.mrb[0].mxu0
      %v4402 = vadd.f32 0.0, %v4401
      %v4403 = vpop.f32.mrb[0].mxu0
      %v4404 = vadd.f32 0.0, %v4403
      %v4405 = vpop.f32.mrb[0].mxu0
      %v4406 = vadd.f32 0.0, %v4405
      %v4407 = vpop.f32.mrb[0].mxu0
      %v4408 = vadd.f32 0.0, %v4407
      %4409 = vmatprep.mubr.bf16.mxu0 0
      %4410 = vmatmul.mubr.bf16.gmra.mrb[0].mxu0 %v4294
      %v4411 = vpop.f32.mrb[0].mxu0
      %v4412 = vadd.f32 0.0, %v4411
      %v4413 = vpop.f32.mrb[0].mxu0
      %v4414 = vadd.f32 0.0, %v4413
      %v4415 = vpop.f32.mrb[0].mxu0
      %v4416 = vadd.f32 0.0, %v4415
      %v4417 = vpop.f32.mrb[0].mxu0
      %v4418 = vadd.f32 0.0, %v4417
      %4419 = vmatprep.mubr.bf16.mxu0 0
      %4420 = vmatmul.mubr.bf16.gmra.mrb[0].mxu0 %v4297
      %v4421 = vpop.f32.mrb[0].mxu0
      %v4422 = vadd.f32 0.0, %v4421
      %v4423 = vpop.f32.mrb[0].mxu0
      %v4424 = vadd.f32 0.0, %v4423
      %v4425 = vpop.f32.mrb[0].mxu0
      %v4426 = vadd.f32 0.0, %v4425
      %v4427 = vpop.f32.mrb[0].mxu0
      %v4428 = vadd.f32 0.0, %v4427
      %4429 = vmatprep.mubr.bf16.mxu0 0
      %4430 = vmatmul.mubr.bf16.gmra.mrb[0].mxu0 %v4300
      %v4431 = vpop.f32.mrb[0].mxu0
      %v4432 = vadd.f32 0.0, %v4431
      %v4433 = vpop.f32.mrb[0].mxu0
      %v4434 = vadd.f32 0.0, %v4433
      %v4435 = vpop.f32.mrb[0].mxu0
      %v4436 = vadd.f32 0.0, %v4435
      %v4437 = vpop.f32.mrb[0].mxu0
      %v4438 = vadd.f32 0.0, %v4437
      %4439 = vmatprep.mubr.bf16.mxu0 0
      %4440 = vmatmul.mubr.bf16.gmra.mrb[0].mxu0 %v4303
      %v4441 = vpop.f32.mrb[0].mxu0
      %v4442 = vadd.f32 0.0, %v4441
      %v4443 = vpop.f32.mrb[0].mxu0
      %v4444 = vadd.f32 0.0, %v4443
      %v4445 = vpop.f32.mrb[0].mxu0
      %v4446 = vadd.f32 0.0, %v4445
      %v4447 = vpop.f32.mrb[0].mxu0
      %v4448 = vadd.f32 0.0, %v4447
      %4449 = vmatprep.mubr.bf16.mxu0 0
      %4450 = vmatmul.mubr.bf16.gmra.mrb[0].mxu0 %v4306
      %v4451 = vpop.f32.mrb[0].mxu0
      %v4452 = vadd.f32 0.0, %v4451
      %v4453 = vpop.f32.mrb[0].mxu0
      %v4454 = vadd.f32 0.0, %v4453
      %v4455 = vpop.f32.mrb[0].mxu0
      %v4456 = vadd.f32 0.0, %v4455
      %v4457 = vpop.f32.mrb[0].mxu0
      %v4458 = vadd.f32 0.0, %v4457
      %4459 = vmatprep.mubr.bf16.mxu0 0
      %4460 = vmatmul.mubr.bf16.gmra.mrb[0].mxu0 %v4309
      %v4461 = vpop.f32.mrb[0].mxu0
      %v4462 = vadd.f32 0.0, %v4461
      %v4463 = vpop.f32.mrb[0].mxu0
      %v4464 = vadd.f32 0.0, %v4463
      %v4465 = vpop.f32.mrb[0].mxu0
      %v4466 = vadd.f32 0.0, %v4465
      %v4467 = vpop.f32.mrb[0].mxu0
      %v4468 = vadd.f32 0.0, %v4467
      %4469 = vmatprep.mubr.bf16.mxu0 0
      %4470 = vmatmul.mubr.bf16.gmra.mrb[0].mxu0 %v4312
      %v4471 = vpop.f32.mrb[0].mxu0
      %v4472 = vadd.f32 0.0, %v4471
      %v4473 = vpop.f32.mrb[0].mxu0
      %v4474 = vadd.f32 0.0, %v4473
      %v4475 = vpop.f32.mrb[0].mxu0
      %v4476 = vadd.f32 0.0, %v4475
      %v4477 = vpop.f32.mrb[0].mxu0
      %v4478 = vadd.f32 0.0, %v4477
      %4479 = vmatprep.mubr.bf16.mxu0 0
      %4480 = vmatmul.mubr.bf16.gmra.mrb[0].mxu0 %v4315
      %v4481 = vpop.f32.mrb[0].mxu0
      %v4482 = vadd.f32 0.0, %v4481
      %v4483 = vpop.f32.mrb[0].mxu0
      %v4484 = vadd.f32 0.0, %v4483
      %v4485 = vpop.f32.mrb[0].mxu0
      %v4486 = vadd.f32 0.0, %v4485
      %v4487 = vpop.f32.mrb[0].mxu0
      %v4488 = vadd.f32 0.0, %v4487
      %4489 = vdwg.mxu0
      %v4490 = vadd.f32 %v3908, %v4352
      %v4491 = vadd.f32 %v3909, %v4354
      %v4492 = vadd.f32 %v3910, %v4356
      %v4493 = vadd.f32 %v3911, %v4358
      %v4494 = vadd.f32 %v3912, %v4362
      %v4495 = vadd.f32 %v3913, %v4364
      %v4496 = vadd.f32 %v3914, %v4366
      %v4497 = vadd.f32 %v3915, %v4368
      %v4498 = vadd.f32 %v3916, %v4372
      %v4499 = vadd.f32 %v3917, %v4374
      %v4500 = vadd.f32 %v3918, %v4376
      %v4501 = vadd.f32 %v3919, %v4378
      %v4502 = vadd.f32 %v3920, %v4382
      %v4503 = vadd.f32 %v3921, %v4384
      %v4504 = vadd.f32 %v3922, %v4386
      %v4505 = vadd.f32 %v3923, %v4388
      %v4506 = vadd.f32 %v3924, %v4392
      %v4507 = vadd.f32 %v3925, %v4394
      %v4508 = vadd.f32 %v3926, %v4396
      %v4509 = vadd.f32 %v3927, %v4398
      %v4510 = vadd.f32 %v3928, %v4402
      %v4511 = vadd.f32 %v3929, %v4404
      %v4512 = vadd.f32 %v3930, %v4406
      %v4513 = vadd.f32 %v3931, %v4408
      %v4514 = vadd.f32 %v3932, %v4412
      %v4515 = vadd.f32 %v3933, %v4414
      %v4516 = vadd.f32 %v3934, %v4416
      %v4517 = vadd.f32 %v3935, %v4418
      %v4518 = vadd.f32 %v3936, %v4422
      %v4519 = vadd.f32 %v3937, %v4424
      %v4520 = vadd.f32 %v3938, %v4426
      %v4521 = vadd.f32 %v3939, %v4428
      %v4522 = vadd.f32 %v3940, %v4432
      %v4523 = vadd.f32 %v3941, %v4434
      %v4524 = vadd.f32 %v3942, %v4436
      %v4525 = vadd.f32 %v3943, %v4438
      %v4526 = vadd.f32 %v3944, %v4442
      %v4527 = vadd.f32 %v3945, %v4444
      %v4528 = vadd.f32 %v3946, %v4446
      %v4529 = vadd.f32 %v3947, %v4448
      %v4530 = vadd.f32 %v3948, %v4452
      %v4531 = vadd.f32 %v3949, %v4454
      %v4532 = vadd.f32 %v3950, %v4456
      %v4533 = vadd.f32 %v3951, %v4458
      %v4534 = vadd.f32 %v3952, %v4462
      %v4535 = vadd.f32 %v3953, %v4464
      %v4536 = vadd.f32 %v3954, %v4466
      %v4537 = vadd.f32 %v3955, %v4468
      %v4538 = vadd.f32 %v3956, %v4472
      %v4539 = vadd.f32 %v3957, %v4474
      %v4540 = vadd.f32 %v3958, %v4476
      %v4541 = vadd.f32 %v3959, %v4478
      %v4542 = vadd.f32 %v3960, %v4482
      %v4543 = vadd.f32 %v3961, %v4484
      %v4544 = vadd.f32 %v3962, %v4486
      %v4545 = vadd.f32 %v3963, %v4488
      %v4546 = vmax.f32 %v4490, %v4491
      %v4547 = vmax.f32 %v4492, %v4493
      %v4548 = vmax.f32 %v4494, %v4495
      %v4549 = vmax.f32 %v4496, %v4497
      %v4550 = vmax.f32 %v4498, %v4499
      %v4551 = vmax.f32 %v4500, %v4501
      %v4552 = vmax.f32 %v4502, %v4503
      %v4553 = vmax.f32 %v4504, %v4505
      %v4554 = vmax.f32 %v4506, %v4507
      %v4555 = vmax.f32 %v4508, %v4509
      %v4556 = vmax.f32 %v4510, %v4511
      %v4557 = vmax.f32 %v4512, %v4513
      %v4558 = vmax.f32 %v4514, %v4515
      %v4559 = vmax.f32 %v4516, %v4517
      %v4560 = vmax.f32 %v4518, %v4519
      %v4561 = vmax.f32 %v4520, %v4521
      %v4562 = vmax.f32 %v4522, %v4523
      %v4563 = vmax.f32 %v4524, %v4525
      %v4564 = vmax.f32 %v4526, %v4527
      %v4565 = vmax.f32 %v4528, %v4529
      %v4566 = vmax.f32 %v4530, %v4531
      %v4567 = vmax.f32 %v4532, %v4533
      %v4568 = vmax.f32 %v4534, %v4535
      %v4569 = vmax.f32 %v4536, %v4537
      %v4570 = vmax.f32 %v4538, %v4539
      %v4571 = vmax.f32 %v4540, %v4541
      %v4572 = vmax.f32 %v4542, %v4543
      %v4573 = vmax.f32 %v4544, %v4545
      %v4602 = vcombine.high %v4546, %v4546
      %v4604 = vunpack.c.l.s4 1983009808
      %v4605 = vunpack.c.0.s8 %v4604
      %v4606 = vlaneseq
      %v4607 = vshrl.u32 %v4606, 7
      %v4608 = vsub.s32 %v4605, %v4607
      %v4609 = vrot.slane %v4546, %v4608
      %v4611 = vunpack.c.l.s4 1983009808
      %v4612 = vunpack.c.0.s8 %v4611
      %v4613 = vlaneseq
      %v4614 = vshrl.u32 %v4613, 7
      %v4615 = vsub.s32 %v4612, %v4614
      %v4616 = vrot.slane %v4602, %v4615
      %v4617 = vcombine.high %v4609, %v4609
      %v4618 = vcombine.high %v4616, %v4616
      %v4619 = vcombine.high %v4547, %v4547
      %v4621 = vunpack.c.l.s4 1983009808
      %v4622 = vunpack.c.0.s8 %v4621
      %v4623 = vlaneseq
      %v4624 = vshrl.u32 %v4623, 7
      %v4625 = vsub.s32 %v4622, %v4624
      %v4626 = vrot.slane %v4547, %v4625
      %v4628 = vunpack.c.l.s4 1983009808
      %v4629 = vunpack.c.0.s8 %v4628
      %v4630 = vlaneseq
      %v4631 = vshrl.u32 %v4630, 7
      %v4632 = vsub.s32 %v4629, %v4631
      %v4633 = vrot.slane %v4619, %v4632
      %v4634 = vcombine.high %v4626, %v4626
      %v4635 = vcombine.high %v4633, %v4633
      %v4636 = vcombine.high %v4548, %v4548
      %v4638 = vunpack.c.l.s4 1983009808
      %v4639 = vunpack.c.0.s8 %v4638
      %v4640 = vlaneseq
      %v4641 = vshrl.u32 %v4640, 7
      %v4642 = vsub.s32 %v4639, %v4641
      %v4643 = vrot.slane %v4548, %v4642
      %v4645 = vunpack.c.l.s4 1983009808
      %v4646 = vunpack.c.0.s8 %v4645
      %v4647 = vlaneseq
      %v4648 = vshrl.u32 %v4647, 7
      %v4649 = vsub.s32 %v4646, %v4648
      %v4650 = vrot.slane %v4636, %v4649
      %v4651 = vcombine.high %v4643, %v4643
      %v4652 = vcombine.high %v4650, %v4650
      %v4653 = vcombine.high %v4549, %v4549
      %v4655 = vunpack.c.l.s4 1983009808
      %v4656 = vunpack.c.0.s8 %v4655
      %v4657 = vlaneseq
      %v4658 = vshrl.u32 %v4657, 7
      %v4659 = vsub.s32 %v4656, %v4658
      %v4660 = vrot.slane %v4549, %v4659
      %v4662 = vunpack.c.l.s4 1983009808
      %v4663 = vunpack.c.0.s8 %v4662
      %v4664 = vlaneseq
      %v4665 = vshrl.u32 %v4664, 7
      %v4666 = vsub.s32 %v4663, %v4665
      %v4667 = vrot.slane %v4653, %v4666
      %v4668 = vcombine.high %v4660, %v4660
      %v4669 = vcombine.high %v4667, %v4667
      %v4670 = vcombine.high %v4550, %v4550
      %v4672 = vunpack.c.l.s4 1983009808
      %v4673 = vunpack.c.0.s8 %v4672
      %v4674 = vlaneseq
      %v4675 = vshrl.u32 %v4674, 7
      %v4676 = vsub.s32 %v4673, %v4675
      %v4677 = vrot.slane %v4550, %v4676
      %v4679 = vunpack.c.l.s4 1983009808
      %v4680 = vunpack.c.0.s8 %v4679
      %v4681 = vlaneseq
      %v4682 = vshrl.u32 %v4681, 7
      %v4683 = vsub.s32 %v4680, %v4682
      %v4684 = vrot.slane %v4670, %v4683
      %v4685 = vcombine.high %v4677, %v4677
      %v4686 = vcombine.high %v4684, %v4684
      %v4687 = vcombine.high %v4551, %v4551
      %v4689 = vunpack.c.l.s4 1983009808
      %v4690 = vunpack.c.0.s8 %v4689
      %v4691 = vlaneseq
      %v4692 = vshrl.u32 %v4691, 7
      %v4693 = vsub.s32 %v4690, %v4692
      %v4694 = vrot.slane %v4551, %v4693
      %v4696 = vunpack.c.l.s4 1983009808
      %v4697 = vunpack.c.0.s8 %v4696
      %v4698 = vlaneseq
      %v4699 = vshrl.u32 %v4698, 7
      %v4700 = vsub.s32 %v4697, %v4699
      %v4701 = vrot.slane %v4687, %v4700
      %v4702 = vcombine.high %v4694, %v4694
      %v4703 = vcombine.high %v4701, %v4701
      %v4704 = vcombine.high %v4552, %v4552
      %v4706 = vunpack.c.l.s4 1983009808
      %v4707 = vunpack.c.0.s8 %v4706
      %v4708 = vlaneseq
      %v4709 = vshrl.u32 %v4708, 7
      %v4710 = vsub.s32 %v4707, %v4709
      %v4711 = vrot.slane %v4552, %v4710
      %v4713 = vunpack.c.l.s4 1983009808
      %v4714 = vunpack.c.0.s8 %v4713
      %v4715 = vlaneseq
      %v4716 = vshrl.u32 %v4715, 7
      %v4717 = vsub.s32 %v4714, %v4716
      %v4718 = vrot.slane %v4704, %v4717
      %v4719 = vcombine.high %v4711, %v4711
      %v4720 = vcombine.high %v4718, %v4718
      %v4721 = vcombine.high %v4553, %v4553
      %v4723 = vunpack.c.l.s4 1983009808
      %v4724 = vunpack.c.0.s8 %v4723
      %v4725 = vlaneseq
      %v4726 = vshrl.u32 %v4725, 7
      %v4727 = vsub.s32 %v4724, %v4726
      %v4728 = vrot.slane %v4553, %v4727
      %v4730 = vunpack.c.l.s4 1983009808
      %v4731 = vunpack.c.0.s8 %v4730
      %v4732 = vlaneseq
      %v4733 = vshrl.u32 %v4732, 7
      %v4734 = vsub.s32 %v4731, %v4733
      %v4735 = vrot.slane %v4721, %v4734
      %v4736 = vcombine.high %v4728, %v4728
      %v4737 = vcombine.high %v4735, %v4735
      %v4738 = vcombine.high %v4554, %v4554
      %v4740 = vunpack.c.l.s4 1983009808
      %v4741 = vunpack.c.0.s8 %v4740
      %v4742 = vlaneseq
      %v4743 = vshrl.u32 %v4742, 7
      %v4744 = vsub.s32 %v4741, %v4743
      %v4745 = vrot.slane %v4554, %v4744
      %v4747 = vunpack.c.l.s4 1983009808
      %v4748 = vunpack.c.0.s8 %v4747
      %v4749 = vlaneseq
      %v4750 = vshrl.u32 %v4749, 7
      %v4751 = vsub.s32 %v4748, %v4750
      %v4752 = vrot.slane %v4738, %v4751
      %v4753 = vcombine.high %v4745, %v4745
      %v4754 = vcombine.high %v4752, %v4752
      %v4755 = vcombine.high %v4555, %v4555
      %v4757 = vunpack.c.l.s4 1983009808
      %v4758 = vunpack.c.0.s8 %v4757
      %v4759 = vlaneseq
      %v4760 = vshrl.u32 %v4759, 7
      %v4761 = vsub.s32 %v4758, %v4760
      %v4762 = vrot.slane %v4555, %v4761
      %v4764 = vunpack.c.l.s4 1983009808
      %v4765 = vunpack.c.0.s8 %v4764
      %v4766 = vlaneseq
      %v4767 = vshrl.u32 %v4766, 7
      %v4768 = vsub.s32 %v4765, %v4767
      %v4769 = vrot.slane %v4755, %v4768
      %v4770 = vcombine.high %v4762, %v4762
      %v4771 = vcombine.high %v4769, %v4769
      %v4772 = vcombine.high %v4556, %v4556
      %v4774 = vunpack.c.l.s4 1983009808
      %v4775 = vunpack.c.0.s8 %v4774
      %v4776 = vlaneseq
      %v4777 = vshrl.u32 %v4776, 7
      %v4778 = vsub.s32 %v4775, %v4777
      %v4779 = vrot.slane %v4556, %v4778
      %v4781 = vunpack.c.l.s4 1983009808
      %v4782 = vunpack.c.0.s8 %v4781
      %v4783 = vlaneseq
      %v4784 = vshrl.u32 %v4783, 7
      %v4785 = vsub.s32 %v4782, %v4784
      %v4786 = vrot.slane %v4772, %v4785
      %v4787 = vcombine.high %v4779, %v4779
      %v4788 = vcombine.high %v4786, %v4786
      %v4789 = vcombine.high %v4557, %v4557
      %v4791 = vunpack.c.l.s4 1983009808
      %v4792 = vunpack.c.0.s8 %v4791
      %v4793 = vlaneseq
      %v4794 = vshrl.u32 %v4793, 7
      %v4795 = vsub.s32 %v4792, %v4794
      %v4796 = vrot.slane %v4557, %v4795
      %v4798 = vunpack.c.l.s4 1983009808
      %v4799 = vunpack.c.0.s8 %v4798
      %v4800 = vlaneseq
      %v4801 = vshrl.u32 %v4800, 7
      %v4802 = vsub.s32 %v4799, %v4801
      %v4803 = vrot.slane %v4789, %v4802
      %v4804 = vcombine.high %v4796, %v4796
      %v4805 = vcombine.high %v4803, %v4803
      %v4806 = vcombine.high %v4558, %v4558
      %v4808 = vunpack.c.l.s4 1983009808
      %v4809 = vunpack.c.0.s8 %v4808
      %v4810 = vlaneseq
      %v4811 = vshrl.u32 %v4810, 7
      %v4812 = vsub.s32 %v4809, %v4811
      %v4813 = vrot.slane %v4558, %v4812
      %v4815 = vunpack.c.l.s4 1983009808
      %v4816 = vunpack.c.0.s8 %v4815
      %v4817 = vlaneseq
      %v4818 = vshrl.u32 %v4817, 7
      %v4819 = vsub.s32 %v4816, %v4818
      %v4820 = vrot.slane %v4806, %v4819
      %v4821 = vcombine.high %v4813, %v4813
      %v4822 = vcombine.high %v4820, %v4820
      %v4823 = vcombine.high %v4559, %v4559
      %v4825 = vunpack.c.l.s4 1983009808
      %v4826 = vunpack.c.0.s8 %v4825
      %v4827 = vlaneseq
      %v4828 = vshrl.u32 %v4827, 7
      %v4829 = vsub.s32 %v4826, %v4828
      %v4830 = vrot.slane %v4559, %v4829
      %v4832 = vunpack.c.l.s4 1983009808
      %v4833 = vunpack.c.0.s8 %v4832
      %v4834 = vlaneseq
      %v4835 = vshrl.u32 %v4834, 7
      %v4836 = vsub.s32 %v4833, %v4835
      %v4837 = vrot.slane %v4823, %v4836
      %v4838 = vcombine.high %v4830, %v4830
      %v4839 = vcombine.high %v4837, %v4837
      %v4840 = vcombine.high %v4560, %v4560
      %v4842 = vunpack.c.l.s4 1983009808
      %v4843 = vunpack.c.0.s8 %v4842
      %v4844 = vlaneseq
      %v4845 = vshrl.u32 %v4844, 7
      %v4846 = vsub.s32 %v4843, %v4845
      %v4847 = vrot.slane %v4560, %v4846
      %v4849 = vunpack.c.l.s4 1983009808
      %v4850 = vunpack.c.0.s8 %v4849
      %v4851 = vlaneseq
      %v4852 = vshrl.u32 %v4851, 7
      %v4853 = vsub.s32 %v4850, %v4852
      %v4854 = vrot.slane %v4840, %v4853
      %v4855 = vcombine.high %v4847, %v4847
      %v4856 = vcombine.high %v4854, %v4854
      %v4857 = vcombine.high %v4561, %v4561
      %v4859 = vunpack.c.l.s4 1983009808
      %v4860 = vunpack.c.0.s8 %v4859
      %v4861 = vlaneseq
      %v4862 = vshrl.u32 %v4861, 7
      %v4863 = vsub.s32 %v4860, %v4862
      %v4864 = vrot.slane %v4561, %v4863
      %v4866 = vunpack.c.l.s4 1983009808
      %v4867 = vunpack.c.0.s8 %v4866
      %v4868 = vlaneseq
      %v4869 = vshrl.u32 %v4868, 7
      %v4870 = vsub.s32 %v4867, %v4869
      %v4871 = vrot.slane %v4857, %v4870
      %v4872 = vcombine.high %v4864, %v4864
      %v4873 = vcombine.high %v4871, %v4871
      %v4874 = vcombine.high %v4562, %v4562
      %v4876 = vunpack.c.l.s4 1983009808
      %v4877 = vunpack.c.0.s8 %v4876
      %v4878 = vlaneseq
      %v4879 = vshrl.u32 %v4878, 7
      %v4880 = vsub.s32 %v4877, %v4879
      %v4881 = vrot.slane %v4562, %v4880
      %v4883 = vunpack.c.l.s4 1983009808
      %v4884 = vunpack.c.0.s8 %v4883
      %v4885 = vlaneseq
      %v4886 = vshrl.u32 %v4885, 7
      %v4887 = vsub.s32 %v4884, %v4886
      %v4888 = vrot.slane %v4874, %v4887
      %v4889 = vcombine.high %v4881, %v4881
      %v4890 = vcombine.high %v4888, %v4888
      %v4891 = vcombine.high %v4563, %v4563
      %v4893 = vunpack.c.l.s4 1983009808
      %v4894 = vunpack.c.0.s8 %v4893
      %v4895 = vlaneseq
      %v4896 = vshrl.u32 %v4895, 7
      %v4897 = vsub.s32 %v4894, %v4896
      %v4898 = vrot.slane %v4563, %v4897
      %v4900 = vunpack.c.l.s4 1983009808
      %v4901 = vunpack.c.0.s8 %v4900
      %v4902 = vlaneseq
      %v4903 = vshrl.u32 %v4902, 7
      %v4904 = vsub.s32 %v4901, %v4903
      %v4905 = vrot.slane %v4891, %v4904
      %v4906 = vcombine.high %v4898, %v4898
      %v4907 = vcombine.high %v4905, %v4905
      %v4908 = vcombine.high %v4564, %v4564
      %v4910 = vunpack.c.l.s4 1983009808
      %v4911 = vunpack.c.0.s8 %v4910
      %v4912 = vlaneseq
      %v4913 = vshrl.u32 %v4912, 7
      %v4914 = vsub.s32 %v4911, %v4913
      %v4915 = vrot.slane %v4564, %v4914
      %v4917 = vunpack.c.l.s4 1983009808
      %v4918 = vunpack.c.0.s8 %v4917
      %v4919 = vlaneseq
      %v4920 = vshrl.u32 %v4919, 7
      %v4921 = vsub.s32 %v4918, %v4920
      %v4922 = vrot.slane %v4908, %v4921
      %v4923 = vcombine.high %v4915, %v4915
      %v4924 = vcombine.high %v4922, %v4922
      %v4925 = vcombine.high %v4565, %v4565
      %v4927 = vunpack.c.l.s4 1983009808
      %v4928 = vunpack.c.0.s8 %v4927
      %v4929 = vlaneseq
      %v4930 = vshrl.u32 %v4929, 7
      %v4931 = vsub.s32 %v4928, %v4930
      %v4932 = vrot.slane %v4565, %v4931
      %v4934 = vunpack.c.l.s4 1983009808
      %v4935 = vunpack.c.0.s8 %v4934
      %v4936 = vlaneseq
      %v4937 = vshrl.u32 %v4936, 7
      %v4938 = vsub.s32 %v4935, %v4937
      %v4939 = vrot.slane %v4925, %v4938
      %v4940 = vcombine.high %v4932, %v4932
      %v4941 = vcombine.high %v4939, %v4939
      %v4942 = vcombine.high %v4566, %v4566
      %v4944 = vunpack.c.l.s4 1983009808
      %v4945 = vunpack.c.0.s8 %v4944
      %v4946 = vlaneseq
      %v4947 = vshrl.u32 %v4946, 7
      %v4948 = vsub.s32 %v4945, %v4947
      %v4949 = vrot.slane %v4566, %v4948
      %v4951 = vunpack.c.l.s4 1983009808
      %v4952 = vunpack.c.0.s8 %v4951
      %v4953 = vlaneseq
      %v4954 = vshrl.u32 %v4953, 7
      %v4955 = vsub.s32 %v4952, %v4954
      %v4956 = vrot.slane %v4942, %v4955
      %v4957 = vcombine.high %v4949, %v4949
      %v4958 = vcombine.high %v4956, %v4956
      %v4959 = vcombine.high %v4567, %v4567
      %v4961 = vunpack.c.l.s4 1983009808
      %v4962 = vunpack.c.0.s8 %v4961
      %v4963 = vlaneseq
      %v4964 = vshrl.u32 %v4963, 7
      %v4965 = vsub.s32 %v4962, %v4964
      %v4966 = vrot.slane %v4567, %v4965
      %v4968 = vunpack.c.l.s4 1983009808
      %v4969 = vunpack.c.0.s8 %v4968
      %v4970 = vlaneseq
      %v4971 = vshrl.u32 %v4970, 7
      %v4972 = vsub.s32 %v4969, %v4971
      %v4973 = vrot.slane %v4959, %v4972
      %v4974 = vcombine.high %v4966, %v4966
      %v4975 = vcombine.high %v4973, %v4973
      %v4976 = vcombine.high %v4568, %v4568
      %v4978 = vunpack.c.l.s4 1983009808
      %v4979 = vunpack.c.0.s8 %v4978
      %v4980 = vlaneseq
      %v4981 = vshrl.u32 %v4980, 7
      %v4982 = vsub.s32 %v4979, %v4981
      %v4983 = vrot.slane %v4568, %v4982
      %v4985 = vunpack.c.l.s4 1983009808
      %v4986 = vunpack.c.0.s8 %v4985
      %v4987 = vlaneseq
      %v4988 = vshrl.u32 %v4987, 7
      %v4989 = vsub.s32 %v4986, %v4988
      %v4990 = vrot.slane %v4976, %v4989
      %v4991 = vcombine.high %v4983, %v4983
      %v4992 = vcombine.high %v4990, %v4990
      %v4993 = vcombine.high %v4569, %v4569
      %v4995 = vunpack.c.l.s4 1983009808
      %v4996 = vunpack.c.0.s8 %v4995
      %v4997 = vlaneseq
      %v4998 = vshrl.u32 %v4997, 7
      %v4999 = vsub.s32 %v4996, %v4998
      %v5000 = vrot.slane %v4569, %v4999
      %v5002 = vunpack.c.l.s4 1983009808
      %v5003 = vunpack.c.0.s8 %v5002
      %v5004 = vlaneseq
      %v5005 = vshrl.u32 %v5004, 7
      %v5006 = vsub.s32 %v5003, %v5005
      %v5007 = vrot.slane %v4993, %v5006
      %v5008 = vcombine.high %v5000, %v5000
      %v5009 = vcombine.high %v5007, %v5007
      %v5010 = vcombine.high %v4570, %v4570
      %v5012 = vunpack.c.l.s4 1983009808
      %v5013 = vunpack.c.0.s8 %v5012
      %v5014 = vlaneseq
      %v5015 = vshrl.u32 %v5014, 7
      %v5016 = vsub.s32 %v5013, %v5015
      %v5017 = vrot.slane %v4570, %v5016
      %v5019 = vunpack.c.l.s4 1983009808
      %v5020 = vunpack.c.0.s8 %v5019
      %v5021 = vlaneseq
      %v5022 = vshrl.u32 %v5021, 7
      %v5023 = vsub.s32 %v5020, %v5022
      %v5024 = vrot.slane %v5010, %v5023
      %v5025 = vcombine.high %v5017, %v5017
      %v5026 = vcombine.high %v5024, %v5024
      %v5027 = vcombine.high %v4571, %v4571
      %v5029 = vunpack.c.l.s4 1983009808
      %v5030 = vunpack.c.0.s8 %v5029
      %v5031 = vlaneseq
      %v5032 = vshrl.u32 %v5031, 7
      %v5033 = vsub.s32 %v5030, %v5032
      %v5034 = vrot.slane %v4571, %v5033
      %v5036 = vunpack.c.l.s4 1983009808
      %v5037 = vunpack.c.0.s8 %v5036
      %v5038 = vlaneseq
      %v5039 = vshrl.u32 %v5038, 7
      %v5040 = vsub.s32 %v5037, %v5039
      %v5041 = vrot.slane %v5027, %v5040
      %v5042 = vcombine.high %v5034, %v5034
      %v5043 = vcombine.high %v5041, %v5041
      %v5044 = vcombine.high %v4572, %v4572
      %v5046 = vunpack.c.l.s4 1983009808
      %v5047 = vunpack.c.0.s8 %v5046
      %v5048 = vlaneseq
      %v5049 = vshrl.u32 %v5048, 7
      %v5050 = vsub.s32 %v5047, %v5049
      %v5051 = vrot.slane %v4572, %v5050
      %v5053 = vunpack.c.l.s4 1983009808
      %v5054 = vunpack.c.0.s8 %v5053
      %v5055 = vlaneseq
      %v5056 = vshrl.u32 %v5055, 7
      %v5057 = vsub.s32 %v5054, %v5056
      %v5058 = vrot.slane %v5044, %v5057
      %v5059 = vcombine.high %v5051, %v5051
      %v5060 = vcombine.high %v5058, %v5058
      %v5061 = vcombine.high %v4573, %v4573
      %v5063 = vunpack.c.l.s4 1983009808
      %v5064 = vunpack.c.0.s8 %v5063
      %v5065 = vlaneseq
      %v5066 = vshrl.u32 %v5065, 7
      %v5067 = vsub.s32 %v5064, %v5066
      %v5068 = vrot.slane %v4573, %v5067
      %v5070 = vunpack.c.l.s4 1983009808
      %v5071 = vunpack.c.0.s8 %v5070
      %v5072 = vlaneseq
      %v5073 = vshrl.u32 %v5072, 7
      %v5074 = vsub.s32 %v5071, %v5073
      %v5075 = vrot.slane %v5061, %v5074
      %v5076 = vcombine.high %v5068, %v5068
      %v5077 = vcombine.high %v5075, %v5075
      %vm5190 = vcmask 1041408
      %v5191 = vsel %vm5190, %v4609, -inf
      %v5192 = vrot.slane %v5191, 4
      %v5193 = vmax.f32 %v5191, %v5192
      %v5194 = vrot.slane %v5193, 2
      %v5195 = vmax.f32 %v5193, %v5194
      %v5196 = vrot.slane %v5195, 1
      %v5197 = vmax.f32 %v5195, %v5196
      %v5198 = vsel %vm5190, %v4617, -inf
      %v5199 = vrot.slane %v5198, 4
      %v5200 = vmax.f32 %v5198, %v5199
      %v5201 = vrot.slane %v5200, 2
      %v5202 = vmax.f32 %v5200, %v5201
      %v5203 = vrot.slane %v5202, 1
      %v5204 = vmax.f32 %v5202, %v5203
      %v5205 = vsel %vm5190, %v4616, -inf
      %v5206 = vrot.slane %v5205, 4
      %v5207 = vmax.f32 %v5205, %v5206
      %v5208 = vrot.slane %v5207, 2
      %v5209 = vmax.f32 %v5207, %v5208
      %v5210 = vrot.slane %v5209, 1
      %v5211 = vmax.f32 %v5209, %v5210
      %v5212 = vsel %vm5190, %v4618, -inf
      %v5213 = vrot.slane %v5212, 4
      %v5214 = vmax.f32 %v5212, %v5213
      %v5215 = vrot.slane %v5214, 2
      %v5216 = vmax.f32 %v5214, %v5215
      %v5217 = vrot.slane %v5216, 1
      %v5218 = vmax.f32 %v5216, %v5217
      %v5219 = vsel %vm5190, %v4626, -inf
      %v5220 = vrot.slane %v5219, 4
      %v5221 = vmax.f32 %v5219, %v5220
      %v5222 = vrot.slane %v5221, 2
      %v5223 = vmax.f32 %v5221, %v5222
      %v5224 = vrot.slane %v5223, 1
      %v5225 = vmax.f32 %v5223, %v5224
      %v5226 = vsel %vm5190, %v4634, -inf
      %v5227 = vrot.slane %v5226, 4
      %v5228 = vmax.f32 %v5226, %v5227
      %v5229 = vrot.slane %v5228, 2
      %v5230 = vmax.f32 %v5228, %v5229
      %v5231 = vrot.slane %v5230, 1
      %v5232 = vmax.f32 %v5230, %v5231
      %v5233 = vsel %vm5190, %v4633, -inf
      %v5234 = vrot.slane %v5233, 4
      %v5235 = vmax.f32 %v5233, %v5234
      %v5236 = vrot.slane %v5235, 2
      %v5237 = vmax.f32 %v5235, %v5236
      %v5238 = vrot.slane %v5237, 1
      %v5239 = vmax.f32 %v5237, %v5238
      %v5240 = vsel %vm5190, %v4635, -inf
      %v5241 = vrot.slane %v5240, 4
      %v5242 = vmax.f32 %v5240, %v5241
      %v5243 = vrot.slane %v5242, 2
      %v5244 = vmax.f32 %v5242, %v5243
      %v5245 = vrot.slane %v5244, 1
      %v5246 = vmax.f32 %v5244, %v5245
      %v5247 = vsel %vm5190, %v4643, -inf
      %v5248 = vrot.slane %v5247, 4
      %v5249 = vmax.f32 %v5247, %v5248
      %v5250 = vrot.slane %v5249, 2
      %v5251 = vmax.f32 %v5249, %v5250
      %v5252 = vrot.slane %v5251, 1
      %v5253 = vmax.f32 %v5251, %v5252
      %v5254 = vsel %vm5190, %v4651, -inf
      %v5255 = vrot.slane %v5254, 4
      %v5256 = vmax.f32 %v5254, %v5255
      %v5257 = vrot.slane %v5256, 2
      %v5258 = vmax.f32 %v5256, %v5257
      %v5259 = vrot.slane %v5258, 1
      %v5260 = vmax.f32 %v5258, %v5259
      %v5261 = vsel %vm5190, %v4650, -inf
      %v5262 = vrot.slane %v5261, 4
      %v5263 = vmax.f32 %v5261, %v5262
      %v5264 = vrot.slane %v5263, 2
      %v5265 = vmax.f32 %v5263, %v5264
      %v5266 = vrot.slane %v5265, 1
      %v5267 = vmax.f32 %v5265, %v5266
      %v5268 = vsel %vm5190, %v4652, -inf
      %v5269 = vrot.slane %v5268, 4
      %v5270 = vmax.f32 %v5268, %v5269
      %v5271 = vrot.slane %v5270, 2
      %v5272 = vmax.f32 %v5270, %v5271
      %v5273 = vrot.slane %v5272, 1
      %v5274 = vmax.f32 %v5272, %v5273
      %v5275 = vsel %vm5190, %v4660, -inf
      %v5276 = vrot.slane %v5275, 4
      %v5277 = vmax.f32 %v5275, %v5276
      %v5278 = vrot.slane %v5277, 2
      %v5279 = vmax.f32 %v5277, %v5278
      %v5280 = vrot.slane %v5279, 1
      %v5281 = vmax.f32 %v5279, %v5280
      %v5282 = vsel %vm5190, %v4668, -inf
      %v5283 = vrot.slane %v5282, 4
      %v5284 = vmax.f32 %v5282, %v5283
      %v5285 = vrot.slane %v5284, 2
      %v5286 = vmax.f32 %v5284, %v5285
      %v5287 = vrot.slane %v5286, 1
      %v5288 = vmax.f32 %v5286, %v5287
      %v5289 = vsel %vm5190, %v4667, -inf
      %v5290 = vrot.slane %v5289, 4
      %v5291 = vmax.f32 %v5289, %v5290
      %v5292 = vrot.slane %v5291, 2
      %v5293 = vmax.f32 %v5291, %v5292
      %v5294 = vrot.slane %v5293, 1
      %v5295 = vmax.f32 %v5293, %v5294
      %v5296 = vsel %vm5190, %v4669, -inf
      %v5297 = vrot.slane %v5296, 4
      %v5298 = vmax.f32 %v5296, %v5297
      %v5299 = vrot.slane %v5298, 2
      %v5300 = vmax.f32 %v5298, %v5299
      %v5301 = vrot.slane %v5300, 1
      %v5302 = vmax.f32 %v5300, %v5301
      %v5303 = vsel %vm5190, %v4677, -inf
      %v5304 = vrot.slane %v5303, 4
      %v5305 = vmax.f32 %v5303, %v5304
      %v5306 = vrot.slane %v5305, 2
      %v5307 = vmax.f32 %v5305, %v5306
      %v5308 = vrot.slane %v5307, 1
      %v5309 = vmax.f32 %v5307, %v5308
      %v5310 = vsel %vm5190, %v4685, -inf
      %v5311 = vrot.slane %v5310, 4
      %v5312 = vmax.f32 %v5310, %v5311
      %v5313 = vrot.slane %v5312, 2
      %v5314 = vmax.f32 %v5312, %v5313
      %v5315 = vrot.slane %v5314, 1
      %v5316 = vmax.f32 %v5314, %v5315
      %v5317 = vsel %vm5190, %v4684, -inf
      %v5318 = vrot.slane %v5317, 4
      %v5319 = vmax.f32 %v5317, %v5318
      %v5320 = vrot.slane %v5319, 2
      %v5321 = vmax.f32 %v5319, %v5320
      %v5322 = vrot.slane %v5321, 1
      %v5323 = vmax.f32 %v5321, %v5322
      %v5324 = vsel %vm5190, %v4686, -inf
      %v5325 = vrot.slane %v5324, 4
      %v5326 = vmax.f32 %v5324, %v5325
      %v5327 = vrot.slane %v5326, 2
      %v5328 = vmax.f32 %v5326, %v5327
      %v5329 = vrot.slane %v5328, 1
      %v5330 = vmax.f32 %v5328, %v5329
      %v5331 = vsel %vm5190, %v4694, -inf
      %v5332 = vrot.slane %v5331, 4
      %v5333 = vmax.f32 %v5331, %v5332
      %v5334 = vrot.slane %v5333, 2
      %v5335 = vmax.f32 %v5333, %v5334
      %v5336 = vrot.slane %v5335, 1
      %v5337 = vmax.f32 %v5335, %v5336
      %v5338 = vsel %vm5190, %v4702, -inf
      %v5339 = vrot.slane %v5338, 4
      %v5340 = vmax.f32 %v5338, %v5339
      %v5341 = vrot.slane %v5340, 2
      %v5342 = vmax.f32 %v5340, %v5341
      %v5343 = vrot.slane %v5342, 1
      %v5344 = vmax.f32 %v5342, %v5343
      %v5345 = vsel %vm5190, %v4701, -inf
      %v5346 = vrot.slane %v5345, 4
      %v5347 = vmax.f32 %v5345, %v5346
      %v5348 = vrot.slane %v5347, 2
      %v5349 = vmax.f32 %v5347, %v5348
      %v5350 = vrot.slane %v5349, 1
      %v5351 = vmax.f32 %v5349, %v5350
      %v5352 = vsel %vm5190, %v4703, -inf
      %v5353 = vrot.slane %v5352, 4
      %v5354 = vmax.f32 %v5352, %v5353
      %v5355 = vrot.slane %v5354, 2
      %v5356 = vmax.f32 %v5354, %v5355
      %v5357 = vrot.slane %v5356, 1
      %v5358 = vmax.f32 %v5356, %v5357
      %v5359 = vsel %vm5190, %v4711, -inf
      %v5360 = vrot.slane %v5359, 4
      %v5361 = vmax.f32 %v5359, %v5360
      %v5362 = vrot.slane %v5361, 2
      %v5363 = vmax.f32 %v5361, %v5362
      %v5364 = vrot.slane %v5363, 1
      %v5365 = vmax.f32 %v5363, %v5364
      %v5366 = vsel %vm5190, %v4719, -inf
      %v5367 = vrot.slane %v5366, 4
      %v5368 = vmax.f32 %v5366, %v5367
      %v5369 = vrot.slane %v5368, 2
      %v5370 = vmax.f32 %v5368, %v5369
      %v5371 = vrot.slane %v5370, 1
      %v5372 = vmax.f32 %v5370, %v5371
      %v5373 = vsel %vm5190, %v4718, -inf
      %v5374 = vrot.slane %v5373, 4
      %v5375 = vmax.f32 %v5373, %v5374
      %v5376 = vrot.slane %v5375, 2
      %v5377 = vmax.f32 %v5375, %v5376
      %v5378 = vrot.slane %v5377, 1
      %v5379 = vmax.f32 %v5377, %v5378
      %v5380 = vsel %vm5190, %v4720, -inf
      %v5381 = vrot.slane %v5380, 4
      %v5382 = vmax.f32 %v5380, %v5381
      %v5383 = vrot.slane %v5382, 2
      %v5384 = vmax.f32 %v5382, %v5383
      %v5385 = vrot.slane %v5384, 1
      %v5386 = vmax.f32 %v5384, %v5385
      %v5387 = vsel %vm5190, %v4728, -inf
      %v5388 = vrot.slane %v5387, 4
      %v5389 = vmax.f32 %v5387, %v5388
      %v5390 = vrot.slane %v5389, 2
      %v5391 = vmax.f32 %v5389, %v5390
      %v5392 = vrot.slane %v5391, 1
      %v5393 = vmax.f32 %v5391, %v5392
      %v5394 = vsel %vm5190, %v4736, -inf
      %v5395 = vrot.slane %v5394, 4
      %v5396 = vmax.f32 %v5394, %v5395
      %v5397 = vrot.slane %v5396, 2
      %v5398 = vmax.f32 %v5396, %v5397
      %v5399 = vrot.slane %v5398, 1
      %v5400 = vmax.f32 %v5398, %v5399
      %v5401 = vsel %vm5190, %v4735, -inf
      %v5402 = vrot.slane %v5401, 4
      %v5403 = vmax.f32 %v5401, %v5402
      %v5404 = vrot.slane %v5403, 2
      %v5405 = vmax.f32 %v5403, %v5404
      %v5406 = vrot.slane %v5405, 1
      %v5407 = vmax.f32 %v5405, %v5406
      %v5408 = vsel %vm5190, %v4737, -inf
      %v5409 = vrot.slane %v5408, 4
      %v5410 = vmax.f32 %v5408, %v5409
      %v5411 = vrot.slane %v5410, 2
      %v5412 = vmax.f32 %v5410, %v5411
      %v5413 = vrot.slane %v5412, 1
      %v5414 = vmax.f32 %v5412, %v5413
      %v5415 = vsel %vm5190, %v4745, -inf
      %v5416 = vrot.slane %v5415, 4
      %v5417 = vmax.f32 %v5415, %v5416
      %v5418 = vrot.slane %v5417, 2
      %v5419 = vmax.f32 %v5417, %v5418
      %v5420 = vrot.slane %v5419, 1
      %v5421 = vmax.f32 %v5419, %v5420
      %v5422 = vsel %vm5190, %v4753, -inf
      %v5423 = vrot.slane %v5422, 4
      %v5424 = vmax.f32 %v5422, %v5423
      %v5425 = vrot.slane %v5424, 2
      %v5426 = vmax.f32 %v5424, %v5425
      %v5427 = vrot.slane %v5426, 1
      %v5428 = vmax.f32 %v5426, %v5427
      %v5429 = vsel %vm5190, %v4752, -inf
      %v5430 = vrot.slane %v5429, 4
      %v5431 = vmax.f32 %v5429, %v5430
      %v5432 = vrot.slane %v5431, 2
      %v5433 = vmax.f32 %v5431, %v5432
      %v5434 = vrot.slane %v5433, 1
      %v5435 = vmax.f32 %v5433, %v5434
      %v5436 = vsel %vm5190, %v4754, -inf
      %v5437 = vrot.slane %v5436, 4
      %v5438 = vmax.f32 %v5436, %v5437
      %v5439 = vrot.slane %v5438, 2
      %v5440 = vmax.f32 %v5438, %v5439
      %v5441 = vrot.slane %v5440, 1
      %v5442 = vmax.f32 %v5440, %v5441
      %v5443 = vsel %vm5190, %v4762, -inf
      %v5444 = vrot.slane %v5443, 4
      %v5445 = vmax.f32 %v5443, %v5444
      %v5446 = vrot.slane %v5445, 2
      %v5447 = vmax.f32 %v5445, %v5446
      %v5448 = vrot.slane %v5447, 1
      %v5449 = vmax.f32 %v5447, %v5448
      %v5450 = vsel %vm5190, %v4770, -inf
      %v5451 = vrot.slane %v5450, 4
      %v5452 = vmax.f32 %v5450, %v5451
      %v5453 = vrot.slane %v5452, 2
      %v5454 = vmax.f32 %v5452, %v5453
      %v5455 = vrot.slane %v5454, 1
      %v5456 = vmax.f32 %v5454, %v5455
      %v5457 = vsel %vm5190, %v4769, -inf
      %v5458 = vrot.slane %v5457, 4
      %v5459 = vmax.f32 %v5457, %v5458
      %v5460 = vrot.slane %v5459, 2
      %v5461 = vmax.f32 %v5459, %v5460
      %v5462 = vrot.slane %v5461, 1
      %v5463 = vmax.f32 %v5461, %v5462
      %v5464 = vsel %vm5190, %v4771, -inf
      %v5465 = vrot.slane %v5464, 4
      %v5466 = vmax.f32 %v5464, %v5465
      %v5467 = vrot.slane %v5466, 2
      %v5468 = vmax.f32 %v5466, %v5467
      %v5469 = vrot.slane %v5468, 1
      %v5470 = vmax.f32 %v5468, %v5469
      %v5471 = vsel %vm5190, %v4779, -inf
      %v5472 = vrot.slane %v5471, 4
      %v5473 = vmax.f32 %v5471, %v5472
      %v5474 = vrot.slane %v5473, 2
      %v5475 = vmax.f32 %v5473, %v5474
      %v5476 = vrot.slane %v5475, 1
      %v5477 = vmax.f32 %v5475, %v5476
      %v5478 = vsel %vm5190, %v4787, -inf
      %v5479 = vrot.slane %v5478, 4
      %v5480 = vmax.f32 %v5478, %v5479
      %v5481 = vrot.slane %v5480, 2
      %v5482 = vmax.f32 %v5480, %v5481
      %v5483 = vrot.slane %v5482, 1
      %v5484 = vmax.f32 %v5482, %v5483
      %v5485 = vsel %vm5190, %v4786, -inf
      %v5486 = vrot.slane %v5485, 4
      %v5487 = vmax.f32 %v5485, %v5486
      %v5488 = vrot.slane %v5487, 2
      %v5489 = vmax.f32 %v5487, %v5488
      %v5490 = vrot.slane %v5489, 1
      %v5491 = vmax.f32 %v5489, %v5490
      %v5492 = vsel %vm5190, %v4788, -inf
      %v5493 = vrot.slane %v5492, 4
      %v5494 = vmax.f32 %v5492, %v5493
      %v5495 = vrot.slane %v5494, 2
      %v5496 = vmax.f32 %v5494, %v5495
      %v5497 = vrot.slane %v5496, 1
      %v5498 = vmax.f32 %v5496, %v5497
      %v5499 = vsel %vm5190, %v4796, -inf
      %v5500 = vrot.slane %v5499, 4
      %v5501 = vmax.f32 %v5499, %v5500
      %v5502 = vrot.slane %v5501, 2
      %v5503 = vmax.f32 %v5501, %v5502
      %v5504 = vrot.slane %v5503, 1
      %v5505 = vmax.f32 %v5503, %v5504
      %v5506 = vsel %vm5190, %v4804, -inf
      %v5507 = vrot.slane %v5506, 4
      %v5508 = vmax.f32 %v5506, %v5507
      %v5509 = vrot.slane %v5508, 2
      %v5510 = vmax.f32 %v5508, %v5509
      %v5511 = vrot.slane %v5510, 1
      %v5512 = vmax.f32 %v5510, %v5511
      %v5513 = vsel %vm5190, %v4803, -inf
      %v5514 = vrot.slane %v5513, 4
      %v5515 = vmax.f32 %v5513, %v5514
      %v5516 = vrot.slane %v5515, 2
      %v5517 = vmax.f32 %v5515, %v5516
      %v5518 = vrot.slane %v5517, 1
      %v5519 = vmax.f32 %v5517, %v5518
      %v5520 = vsel %vm5190, %v4805, -inf
      %v5521 = vrot.slane %v5520, 4
      %v5522 = vmax.f32 %v5520, %v5521
      %v5523 = vrot.slane %v5522, 2
      %v5524 = vmax.f32 %v5522, %v5523
      %v5525 = vrot.slane %v5524, 1
      %v5526 = vmax.f32 %v5524, %v5525
      %v5527 = vsel %vm5190, %v4813, -inf
      %v5528 = vrot.slane %v5527, 4
      %v5529 = vmax.f32 %v5527, %v5528
      %v5530 = vrot.slane %v5529, 2
      %v5531 = vmax.f32 %v5529, %v5530
      %v5532 = vrot.slane %v5531, 1
      %v5533 = vmax.f32 %v5531, %v5532
      %v5534 = vsel %vm5190, %v4821, -inf
      %v5535 = vrot.slane %v5534, 4
      %v5536 = vmax.f32 %v5534, %v5535
      %v5537 = vrot.slane %v5536, 2
      %v5538 = vmax.f32 %v5536, %v5537
      %v5539 = vrot.slane %v5538, 1
      %v5540 = vmax.f32 %v5538, %v5539
      %v5541 = vsel %vm5190, %v4820, -inf
      %v5542 = vrot.slane %v5541, 4
      %v5543 = vmax.f32 %v5541, %v5542
      %v5544 = vrot.slane %v5543, 2
      %v5545 = vmax.f32 %v5543, %v5544
      %v5546 = vrot.slane %v5545, 1
      %v5547 = vmax.f32 %v5545, %v5546
      %v5548 = vsel %vm5190, %v4822, -inf
      %v5549 = vrot.slane %v5548, 4
      %v5550 = vmax.f32 %v5548, %v5549
      %v5551 = vrot.slane %v5550, 2
      %v5552 = vmax.f32 %v5550, %v5551
      %v5553 = vrot.slane %v5552, 1
      %v5554 = vmax.f32 %v5552, %v5553
      %v5555 = vsel %vm5190, %v4830, -inf
      %v5556 = vrot.slane %v5555, 4
      %v5557 = vmax.f32 %v5555, %v5556
      %v5558 = vrot.slane %v5557, 2
      %v5559 = vmax.f32 %v5557, %v5558
      %v5560 = vrot.slane %v5559, 1
      %v5561 = vmax.f32 %v5559, %v5560
      %v5562 = vsel %vm5190, %v4838, -inf
      %v5563 = vrot.slane %v5562, 4
      %v5564 = vmax.f32 %v5562, %v5563
      %v5565 = vrot.slane %v5564, 2
      %v5566 = vmax.f32 %v5564, %v5565
      %v5567 = vrot.slane %v5566, 1
      %v5568 = vmax.f32 %v5566, %v5567
      %v5569 = vsel %vm5190, %v4837, -inf
      %v5570 = vrot.slane %v5569, 4
      %v5571 = vmax.f32 %v5569, %v5570
      %v5572 = vrot.slane %v5571, 2
      %v5573 = vmax.f32 %v5571, %v5572
      %v5574 = vrot.slane %v5573, 1
      %v5575 = vmax.f32 %v5573, %v5574
      %v5576 = vsel %vm5190, %v4839, -inf
      %v5577 = vrot.slane %v5576, 4
      %v5578 = vmax.f32 %v5576, %v5577
      %v5579 = vrot.slane %v5578, 2
      %v5580 = vmax.f32 %v5578, %v5579
      %v5581 = vrot.slane %v5580, 1
      %v5582 = vmax.f32 %v5580, %v5581
      %v5583 = vsel %vm5190, %v4847, -inf
      %v5584 = vrot.slane %v5583, 4
      %v5585 = vmax.f32 %v5583, %v5584
      %v5586 = vrot.slane %v5585, 2
      %v5587 = vmax.f32 %v5585, %v5586
      %v5588 = vrot.slane %v5587, 1
      %v5589 = vmax.f32 %v5587, %v5588
      %v5590 = vsel %vm5190, %v4855, -inf
      %v5591 = vrot.slane %v5590, 4
      %v5592 = vmax.f32 %v5590, %v5591
      %v5593 = vrot.slane %v5592, 2
      %v5594 = vmax.f32 %v5592, %v5593
      %v5595 = vrot.slane %v5594, 1
      %v5596 = vmax.f32 %v5594, %v5595
      %v5597 = vsel %vm5190, %v4854, -inf
      %v5598 = vrot.slane %v5597, 4
      %v5599 = vmax.f32 %v5597, %v5598
      %v5600 = vrot.slane %v5599, 2
      %v5601 = vmax.f32 %v5599, %v5600
      %v5602 = vrot.slane %v5601, 1
      %v5603 = vmax.f32 %v5601, %v5602
      %v5604 = vsel %vm5190, %v4856, -inf
      %v5605 = vrot.slane %v5604, 4
      %v5606 = vmax.f32 %v5604, %v5605
      %v5607 = vrot.slane %v5606, 2
      %v5608 = vmax.f32 %v5606, %v5607
      %v5609 = vrot.slane %v5608, 1
      %v5610 = vmax.f32 %v5608, %v5609
      %v5611 = vsel %vm5190, %v4864, -inf
      %v5612 = vrot.slane %v5611, 4
      %v5613 = vmax.f32 %v5611, %v5612
      %v5614 = vrot.slane %v5613, 2
      %v5615 = vmax.f32 %v5613, %v5614
      %v5616 = vrot.slane %v5615, 1
      %v5617 = vmax.f32 %v5615, %v5616
      %v5618 = vsel %vm5190, %v4872, -inf
      %v5619 = vrot.slane %v5618, 4
      %v5620 = vmax.f32 %v5618, %v5619
      %v5621 = vrot.slane %v5620, 2
      %v5622 = vmax.f32 %v5620, %v5621
      %v5623 = vrot.slane %v5622, 1
      %v5624 = vmax.f32 %v5622, %v5623
      %v5625 = vsel %vm5190, %v4871, -inf
      %v5626 = vrot.slane %v5625, 4
      %v5627 = vmax.f32 %v5625, %v5626
      %v5628 = vrot.slane %v5627, 2
      %v5629 = vmax.f32 %v5627, %v5628
      %v5630 = vrot.slane %v5629, 1
      %v5631 = vmax.f32 %v5629, %v5630
      %v5632 = vsel %vm5190, %v4873, -inf
      %v5633 = vrot.slane %v5632, 4
      %v5634 = vmax.f32 %v5632, %v5633
      %v5635 = vrot.slane %v5634, 2
      %v5636 = vmax.f32 %v5634, %v5635
      %v5637 = vrot.slane %v5636, 1
      %v5638 = vmax.f32 %v5636, %v5637
      %v5639 = vsel %vm5190, %v4881, -inf
      %v5640 = vrot.slane %v5639, 4
      %v5641 = vmax.f32 %v5639, %v5640
      %v5642 = vrot.slane %v5641, 2
      %v5643 = vmax.f32 %v5641, %v5642
      %v5644 = vrot.slane %v5643, 1
      %v5645 = vmax.f32 %v5643, %v5644
      %v5646 = vsel %vm5190, %v4889, -inf
      %v5647 = vrot.slane %v5646, 4
      %v5648 = vmax.f32 %v5646, %v5647
      %v5649 = vrot.slane %v5648, 2
      %v5650 = vmax.f32 %v5648, %v5649
      %v5651 = vrot.slane %v5650, 1
      %v5652 = vmax.f32 %v5650, %v5651
      %v5653 = vsel %vm5190, %v4888, -inf
      %v5654 = vrot.slane %v5653, 4
      %v5655 = vmax.f32 %v5653, %v5654
      %v5656 = vrot.slane %v5655, 2
      %v5657 = vmax.f32 %v5655, %v5656
      %v5658 = vrot.slane %v5657, 1
      %v5659 = vmax.f32 %v5657, %v5658
      %v5660 = vsel %vm5190, %v4890, -inf
      %v5661 = vrot.slane %v5660, 4
      %v5662 = vmax.f32 %v5660, %v5661
      %v5663 = vrot.slane %v5662, 2
      %v5664 = vmax.f32 %v5662, %v5663
      %v5665 = vrot.slane %v5664, 1
      %v5666 = vmax.f32 %v5664, %v5665
      %v5667 = vsel %vm5190, %v4898, -inf
      %v5668 = vrot.slane %v5667, 4
      %v5669 = vmax.f32 %v5667, %v5668
      %v5670 = vrot.slane %v5669, 2
      %v5671 = vmax.f32 %v5669, %v5670
      %v5672 = vrot.slane %v5671, 1
      %v5673 = vmax.f32 %v5671, %v5672
      %v5674 = vsel %vm5190, %v4906, -inf
      %v5675 = vrot.slane %v5674, 4
      %v5676 = vmax.f32 %v5674, %v5675
      %v5677 = vrot.slane %v5676, 2
      %v5678 = vmax.f32 %v5676, %v5677
      %v5679 = vrot.slane %v5678, 1
      %v5680 = vmax.f32 %v5678, %v5679
      %v5681 = vsel %vm5190, %v4905, -inf
      %v5682 = vrot.slane %v5681, 4
      %v5683 = vmax.f32 %v5681, %v5682
      %v5684 = vrot.slane %v5683, 2
      %v5685 = vmax.f32 %v5683, %v5684
      %v5686 = vrot.slane %v5685, 1
      %v5687 = vmax.f32 %v5685, %v5686
      %v5688 = vsel %vm5190, %v4907, -inf
      %v5689 = vrot.slane %v5688, 4
      %v5690 = vmax.f32 %v5688, %v5689
      %v5691 = vrot.slane %v5690, 2
      %v5692 = vmax.f32 %v5690, %v5691
      %v5693 = vrot.slane %v5692, 1
      %v5694 = vmax.f32 %v5692, %v5693
      %v5695 = vsel %vm5190, %v4915, -inf
      %v5696 = vrot.slane %v5695, 4
      %v5697 = vmax.f32 %v5695, %v5696
      %v5698 = vrot.slane %v5697, 2
      %v5699 = vmax.f32 %v5697, %v5698
      %v5700 = vrot.slane %v5699, 1
      %v5701 = vmax.f32 %v5699, %v5700
      %v5702 = vsel %vm5190, %v4923, -inf
      %v5703 = vrot.slane %v5702, 4
      %v5704 = vmax.f32 %v5702, %v5703
      %v5705 = vrot.slane %v5704, 2
      %v5706 = vmax.f32 %v5704, %v5705
      %v5707 = vrot.slane %v5706, 1
      %v5708 = vmax.f32 %v5706, %v5707
      %v5709 = vsel %vm5190, %v4922, -inf
      %v5710 = vrot.slane %v5709, 4
      %v5711 = vmax.f32 %v5709, %v5710
      %v5712 = vrot.slane %v5711, 2
      %v5713 = vmax.f32 %v5711, %v5712
      %v5714 = vrot.slane %v5713, 1
      %v5715 = vmax.f32 %v5713, %v5714
      %v5716 = vsel %vm5190, %v4924, -inf
      %v5717 = vrot.slane %v5716, 4
      %v5718 = vmax.f32 %v5716, %v5717
      %v5719 = vrot.slane %v5718, 2
      %v5720 = vmax.f32 %v5718, %v5719
      %v5721 = vrot.slane %v5720, 1
      %v5722 = vmax.f32 %v5720, %v5721
      %v5723 = vsel %vm5190, %v4932, -inf
      %v5724 = vrot.slane %v5723, 4
      %v5725 = vmax.f32 %v5723, %v5724
      %v5726 = vrot.slane %v5725, 2
      %v5727 = vmax.f32 %v5725, %v5726
      %v5728 = vrot.slane %v5727, 1
      %v5729 = vmax.f32 %v5727, %v5728
      %v5730 = vsel %vm5190, %v4940, -inf
      %v5731 = vrot.slane %v5730, 4
      %v5732 = vmax.f32 %v5730, %v5731
      %v5733 = vrot.slane %v5732, 2
      %v5734 = vmax.f32 %v5732, %v5733
      %v5735 = vrot.slane %v5734, 1
      %v5736 = vmax.f32 %v5734, %v5735
      %v5737 = vsel %vm5190, %v4939, -inf
      %v5738 = vrot.slane %v5737, 4
      %v5739 = vmax.f32 %v5737, %v5738
      %v5740 = vrot.slane %v5739, 2
      %v5741 = vmax.f32 %v5739, %v5740
      %v5742 = vrot.slane %v5741, 1
      %v5743 = vmax.f32 %v5741, %v5742
      %v5744 = vsel %vm5190, %v4941, -inf
      %v5745 = vrot.slane %v5744, 4
      %v5746 = vmax.f32 %v5744, %v5745
      %v5747 = vrot.slane %v5746, 2
      %v5748 = vmax.f32 %v5746, %v5747
      %v5749 = vrot.slane %v5748, 1
      %v5750 = vmax.f32 %v5748, %v5749
      %v5751 = vsel %vm5190, %v4949, -inf
      %v5752 = vrot.slane %v5751, 4
      %v5753 = vmax.f32 %v5751, %v5752
      %v5754 = vrot.slane %v5753, 2
      %v5755 = vmax.f32 %v5753, %v5754
      %v5756 = vrot.slane %v5755, 1
      %v5757 = vmax.f32 %v5755, %v5756
      %v5758 = vsel %vm5190, %v4957, -inf
      %v5759 = vrot.slane %v5758, 4
      %v5760 = vmax.f32 %v5758, %v5759
      %v5761 = vrot.slane %v5760, 2
      %v5762 = vmax.f32 %v5760, %v5761
      %v5763 = vrot.slane %v5762, 1
      %v5764 = vmax.f32 %v5762, %v5763
      %v5765 = vsel %vm5190, %v4956, -inf
      %v5766 = vrot.slane %v5765, 4
      %v5767 = vmax.f32 %v5765, %v5766
      %v5768 = vrot.slane %v5767, 2
      %v5769 = vmax.f32 %v5767, %v5768
      %v5770 = vrot.slane %v5769, 1
      %v5771 = vmax.f32 %v5769, %v5770
      %v5772 = vsel %vm5190, %v4958, -inf
      %v5773 = vrot.slane %v5772, 4
      %v5774 = vmax.f32 %v5772, %v5773
      %v5775 = vrot.slane %v5774, 2
      %v5776 = vmax.f32 %v5774, %v5775
      %v5777 = vrot.slane %v5776, 1
      %v5778 = vmax.f32 %v5776, %v5777
      %v5779 = vsel %vm5190, %v4966, -inf
      %v5780 = vrot.slane %v5779, 4
      %v5781 = vmax.f32 %v5779, %v5780
      %v5782 = vrot.slane %v5781, 2
      %v5783 = vmax.f32 %v5781, %v5782
      %v5784 = vrot.slane %v5783, 1
      %v5785 = vmax.f32 %v5783, %v5784
      %v5786 = vsel %vm5190, %v4974, -inf
      %v5787 = vrot.slane %v5786, 4
      %v5788 = vmax.f32 %v5786, %v5787
      %v5789 = vrot.slane %v5788, 2
      %v5790 = vmax.f32 %v5788, %v5789
      %v5791 = vrot.slane %v5790, 1
      %v5792 = vmax.f32 %v5790, %v5791
      %v5793 = vsel %vm5190, %v4973, -inf
      %v5794 = vrot.slane %v5793, 4
      %v5795 = vmax.f32 %v5793, %v5794
      %v5796 = vrot.slane %v5795, 2
      %v5797 = vmax.f32 %v5795, %v5796
      %v5798 = vrot.slane %v5797, 1
      %v5799 = vmax.f32 %v5797, %v5798
      %v5800 = vsel %vm5190, %v4975, -inf
      %v5801 = vrot.slane %v5800, 4
      %v5802 = vmax.f32 %v5800, %v5801
      %v5803 = vrot.slane %v5802, 2
      %v5804 = vmax.f32 %v5802, %v5803
      %v5805 = vrot.slane %v5804, 1
      %v5806 = vmax.f32 %v5804, %v5805
      %v5807 = vsel %vm5190, %v4983, -inf
      %v5808 = vrot.slane %v5807, 4
      %v5809 = vmax.f32 %v5807, %v5808
      %v5810 = vrot.slane %v5809, 2
      %v5811 = vmax.f32 %v5809, %v5810
      %v5812 = vrot.slane %v5811, 1
      %v5813 = vmax.f32 %v5811, %v5812
      %v5814 = vsel %vm5190, %v4991, -inf
      %v5815 = vrot.slane %v5814, 4
      %v5816 = vmax.f32 %v5814, %v5815
      %v5817 = vrot.slane %v5816, 2
      %v5818 = vmax.f32 %v5816, %v5817
      %v5819 = vrot.slane %v5818, 1
      %v5820 = vmax.f32 %v5818, %v5819
      %v5821 = vsel %vm5190, %v4990, -inf
      %v5822 = vrot.slane %v5821, 4
      %v5823 = vmax.f32 %v5821, %v5822
      %v5824 = vrot.slane %v5823, 2
      %v5825 = vmax.f32 %v5823, %v5824
      %v5826 = vrot.slane %v5825, 1
      %v5827 = vmax.f32 %v5825, %v5826
      %v5828 = vsel %vm5190, %v4992, -inf
      %v5829 = vrot.slane %v5828, 4
      %v5830 = vmax.f32 %v5828, %v5829
      %v5831 = vrot.slane %v5830, 2
      %v5832 = vmax.f32 %v5830, %v5831
      %v5833 = vrot.slane %v5832, 1
      %v5834 = vmax.f32 %v5832, %v5833
      %v5835 = vsel %vm5190, %v5000, -inf
      %v5836 = vrot.slane %v5835, 4
      %v5837 = vmax.f32 %v5835, %v5836
      %v5838 = vrot.slane %v5837, 2
      %v5839 = vmax.f32 %v5837, %v5838
      %v5840 = vrot.slane %v5839, 1
      %v5841 = vmax.f32 %v5839, %v5840
      %v5842 = vsel %vm5190, %v5008, -inf
      %v5843 = vrot.slane %v5842, 4
      %v5844 = vmax.f32 %v5842, %v5843
      %v5845 = vrot.slane %v5844, 2
      %v5846 = vmax.f32 %v5844, %v5845
      %v5847 = vrot.slane %v5846, 1
      %v5848 = vmax.f32 %v5846, %v5847
      %v5849 = vsel %vm5190, %v5007, -inf
      %v5850 = vrot.slane %v5849, 4
      %v5851 = vmax.f32 %v5849, %v5850
      %v5852 = vrot.slane %v5851, 2
      %v5853 = vmax.f32 %v5851, %v5852
      %v5854 = vrot.slane %v5853, 1
      %v5855 = vmax.f32 %v5853, %v5854
      %v5856 = vsel %vm5190, %v5009, -inf
      %v5857 = vrot.slane %v5856, 4
      %v5858 = vmax.f32 %v5856, %v5857
      %v5859 = vrot.slane %v5858, 2
      %v5860 = vmax.f32 %v5858, %v5859
      %v5861 = vrot.slane %v5860, 1
      %v5862 = vmax.f32 %v5860, %v5861
      %v5863 = vsel %vm5190, %v5017, -inf
      %v5864 = vrot.slane %v5863, 4
      %v5865 = vmax.f32 %v5863, %v5864
      %v5866 = vrot.slane %v5865, 2
      %v5867 = vmax.f32 %v5865, %v5866
      %v5868 = vrot.slane %v5867, 1
      %v5869 = vmax.f32 %v5867, %v5868
      %v5870 = vsel %vm5190, %v5025, -inf
      %v5871 = vrot.slane %v5870, 4
      %v5872 = vmax.f32 %v5870, %v5871
      %v5873 = vrot.slane %v5872, 2
      %v5874 = vmax.f32 %v5872, %v5873
      %v5875 = vrot.slane %v5874, 1
      %v5876 = vmax.f32 %v5874, %v5875
      %v5877 = vsel %vm5190, %v5024, -inf
      %v5878 = vrot.slane %v5877, 4
      %v5879 = vmax.f32 %v5877, %v5878
      %v5880 = vrot.slane %v5879, 2
      %v5881 = vmax.f32 %v5879, %v5880
      %v5882 = vrot.slane %v5881, 1
      %v5883 = vmax.f32 %v5881, %v5882
      %v5884 = vsel %vm5190, %v5026, -inf
      %v5885 = vrot.slane %v5884, 4
      %v5886 = vmax.f32 %v5884, %v5885
      %v5887 = vrot.slane %v5886, 2
      %v5888 = vmax.f32 %v5886, %v5887
      %v5889 = vrot.slane %v5888, 1
      %v5890 = vmax.f32 %v5888, %v5889
      %v5891 = vsel %vm5190, %v5034, -inf
      %v5892 = vrot.slane %v5891, 4
      %v5893 = vmax.f32 %v5891, %v5892
      %v5894 = vrot.slane %v5893, 2
      %v5895 = vmax.f32 %v5893, %v5894
      %v5896 = vrot.slane %v5895, 1
      %v5897 = vmax.f32 %v5895, %v5896
      %v5898 = vsel %vm5190, %v5042, -inf
      %v5899 = vrot.slane %v5898, 4
      %v5900 = vmax.f32 %v5898, %v5899
      %v5901 = vrot.slane %v5900, 2
      %v5902 = vmax.f32 %v5900, %v5901
      %v5903 = vrot.slane %v5902, 1
      %v5904 = vmax.f32 %v5902, %v5903
      %v5905 = vsel %vm5190, %v5041, -inf
      %v5906 = vrot.slane %v5905, 4
      %v5907 = vmax.f32 %v5905, %v5906
      %v5908 = vrot.slane %v5907, 2
      %v5909 = vmax.f32 %v5907, %v5908
      %v5910 = vrot.slane %v5909, 1
      %v5911 = vmax.f32 %v5909, %v5910
      %v5912 = vsel %vm5190, %v5043, -inf
      %v5913 = vrot.slane %v5912, 4
      %v5914 = vmax.f32 %v5912, %v5913
      %v5915 = vrot.slane %v5914, 2
      %v5916 = vmax.f32 %v5914, %v5915
      %v5917 = vrot.slane %v5916, 1
      %v5918 = vmax.f32 %v5916, %v5917
      %v5919 = vsel %vm5190, %v5051, -inf
      %v5920 = vrot.slane %v5919, 4
      %v5921 = vmax.f32 %v5919, %v5920
      %v5922 = vrot.slane %v5921, 2
      %v5923 = vmax.f32 %v5921, %v5922
      %v5924 = vrot.slane %v5923, 1
      %v5925 = vmax.f32 %v5923, %v5924
      %v5926 = vsel %vm5190, %v5059, -inf
      %v5927 = vrot.slane %v5926, 4
      %v5928 = vmax.f32 %v5926, %v5927
      %v5929 = vrot.slane %v5928, 2
      %v5930 = vmax.f32 %v5928, %v5929
      %v5931 = vrot.slane %v5930, 1
      %v5932 = vmax.f32 %v5930, %v5931
      %v5933 = vsel %vm5190, %v5058, -inf
      %v5934 = vrot.slane %v5933, 4
      %v5935 = vmax.f32 %v5933, %v5934
      %v5936 = vrot.slane %v5935, 2
      %v5937 = vmax.f32 %v5935, %v5936
      %v5938 = vrot.slane %v5937, 1
      %v5939 = vmax.f32 %v5937, %v5938
      %v5940 = vsel %vm5190, %v5060, -inf
      %v5941 = vrot.slane %v5940, 4
      %v5942 = vmax.f32 %v5940, %v5941
      %v5943 = vrot.slane %v5942, 2
      %v5944 = vmax.f32 %v5942, %v5943
      %v5945 = vrot.slane %v5944, 1
      %v5946 = vmax.f32 %v5944, %v5945
      %v5947 = vsel %vm5190, %v5068, -inf
      %v5948 = vrot.slane %v5947, 4
      %v5949 = vmax.f32 %v5947, %v5948
      %v5950 = vrot.slane %v5949, 2
      %v5951 = vmax.f32 %v5949, %v5950
      %v5952 = vrot.slane %v5951, 1
      %v5953 = vmax.f32 %v5951, %v5952
      %v5954 = vsel %vm5190, %v5076, -inf
      %v5955 = vrot.slane %v5954, 4
      %v5956 = vmax.f32 %v5954, %v5955
      %v5957 = vrot.slane %v5956, 2
      %v5958 = vmax.f32 %v5956, %v5957
      %v5959 = vrot.slane %v5958, 1
      %v5960 = vmax.f32 %v5958, %v5959
      %v5961 = vsel %vm5190, %v5075, -inf
      %v5962 = vrot.slane %v5961, 4
      %v5963 = vmax.f32 %v5961, %v5962
      %v5964 = vrot.slane %v5963, 2
      %v5965 = vmax.f32 %v5963, %v5964
      %v5966 = vrot.slane %v5965, 1
      %v5967 = vmax.f32 %v5965, %v5966
      %v5968 = vsel %vm5190, %v5077, -inf
      %v5969 = vrot.slane %v5968, 4
      %v5970 = vmax.f32 %v5968, %v5969
      %v5971 = vrot.slane %v5970, 2
      %v5972 = vmax.f32 %v5970, %v5971
      %v5973 = vrot.slane %v5972, 1
      %v5974 = vmax.f32 %v5972, %v5973
      %v5975 = vld [vmem:[%s2] sm:$0x1]
      %v5977 = vlaneseq
      %v5978 = vshrl.u32 %v5977, 7
      %v5979 = vsub.s32 0, %v5978
      %v5980 = vrot.slane %v5975, %v5979
      %v5982 = vadd.f32 %v5197, %v5980
      %v5983 = vadd.f32 %v5204, %v5980
      %v5984 = vadd.f32 %v5211, %v5980
      %v5985 = vadd.f32 %v5218, %v5980
      %v5986 = vadd.f32 %v5225, %v5980
      %v5987 = vadd.f32 %v5232, %v5980
      %v5988 = vadd.f32 %v5239, %v5980
      %v5989 = vadd.f32 %v5246, %v5980
      %v5990 = vadd.f32 %v5253, %v5980
      %v5991 = vadd.f32 %v5260, %v5980
      %v5992 = vadd.f32 %v5267, %v5980
      %v5993 = vadd.f32 %v5274, %v5980
      %v5994 = vadd.f32 %v5281, %v5980
      %v5995 = vadd.f32 %v5288, %v5980
      %v5996 = vadd.f32 %v5295, %v5980
      %v5997 = vadd.f32 %v5302, %v5980
      %v5998 = vadd.f32 %v5309, %v5980
      %v5999 = vadd.f32 %v5316, %v5980
      %v6000 = vadd.f32 %v5323, %v5980
      %v6001 = vadd.f32 %v5330, %v5980
      %v6002 = vadd.f32 %v5337, %v5980
      %v6003 = vadd.f32 %v5344, %v5980
      %v6004 = vadd.f32 %v5351, %v5980
      %v6005 = vadd.f32 %v5358, %v5980
      %v6006 = vadd.f32 %v5365, %v5980
      %v6007 = vadd.f32 %v5372, %v5980
      %v6008 = vadd.f32 %v5379, %v5980
      %v6009 = vadd.f32 %v5386, %v5980
      %v6010 = vadd.f32 %v5393, %v5980
      %v6011 = vadd.f32 %v5400, %v5980
      %v6012 = vadd.f32 %v5407, %v5980
      %v6013 = vadd.f32 %v5414, %v5980
      %v6014 = vadd.f32 %v5421, %v5980
      %v6015 = vadd.f32 %v5428, %v5980
      %v6016 = vadd.f32 %v5435, %v5980
      %v6017 = vadd.f32 %v5442, %v5980
      %v6018 = vadd.f32 %v5449, %v5980
      %v6019 = vadd.f32 %v5456, %v5980
      %v6020 = vadd.f32 %v5463, %v5980
      %v6021 = vadd.f32 %v5470, %v5980
      %v6022 = vadd.f32 %v5477, %v5980
      %v6023 = vadd.f32 %v5484, %v5980
      %v6024 = vadd.f32 %v5491, %v5980
      %v6025 = vadd.f32 %v5498, %v5980
      %v6026 = vadd.f32 %v5505, %v5980
      %v6027 = vadd.f32 %v5512, %v5980
      %v6028 = vadd.f32 %v5519, %v5980
      %v6029 = vadd.f32 %v5526, %v5980
      %v6030 = vadd.f32 %v5533, %v5980
      %v6031 = vadd.f32 %v5540, %v5980
      %v6032 = vadd.f32 %v5547, %v5980
      %v6033 = vadd.f32 %v5554, %v5980
      %v6034 = vadd.f32 %v5561, %v5980
      %v6035 = vadd.f32 %v5568, %v5980
      %v6036 = vadd.f32 %v5575, %v5980
      %v6037 = vadd.f32 %v5582, %v5980
      %v6038 = vadd.f32 %v5589, %v5980
      %v6039 = vadd.f32 %v5596, %v5980
      %v6040 = vadd.f32 %v5603, %v5980
      %v6041 = vadd.f32 %v5610, %v5980
      %v6042 = vadd.f32 %v5617, %v5980
      %v6043 = vadd.f32 %v5624, %v5980
      %v6044 = vadd.f32 %v5631, %v5980
      %v6045 = vadd.f32 %v5638, %v5980
      %v6046 = vadd.f32 %v5645, %v5980
      %v6047 = vadd.f32 %v5652, %v5980
      %v6048 = vadd.f32 %v5659, %v5980
      %v6049 = vadd.f32 %v5666, %v5980
      %v6050 = vadd.f32 %v5673, %v5980
      %v6051 = vadd.f32 %v5680, %v5980
      %v6052 = vadd.f32 %v5687, %v5980
      %v6053 = vadd.f32 %v5694, %v5980
      %v6054 = vadd.f32 %v5701, %v5980
      %v6055 = vadd.f32 %v5708, %v5980
      %v6056 = vadd.f32 %v5715, %v5980
      %v6057 = vadd.f32 %v5722, %v5980
      %v6058 = vadd.f32 %v5729, %v5980
      %v6059 = vadd.f32 %v5736, %v5980
      %v6060 = vadd.f32 %v5743, %v5980
      %v6061 = vadd.f32 %v5750, %v5980
      %v6062 = vadd.f32 %v5757, %v5980
      %v6063 = vadd.f32 %v5764, %v5980
      %v6064 = vadd.f32 %v5771, %v5980
      %v6065 = vadd.f32 %v5778, %v5980
      %v6066 = vadd.f32 %v5785, %v5980
      %v6067 = vadd.f32 %v5792, %v5980
      %v6068 = vadd.f32 %v5799, %v5980
      %v6069 = vadd.f32 %v5806, %v5980
      %v6070 = vadd.f32 %v5813, %v5980
      %v6071 = vadd.f32 %v5820, %v5980
      %v6072 = vadd.f32 %v5827, %v5980
      %v6073 = vadd.f32 %v5834, %v5980
      %v6074 = vadd.f32 %v5841, %v5980
      %v6075 = vadd.f32 %v5848, %v5980
      %v6076 = vadd.f32 %v5855, %v5980
      %v6077 = vadd.f32 %v5862, %v5980
      %v6078 = vadd.f32 %v5869, %v5980
      %v6079 = vadd.f32 %v5876, %v5980
      %v6080 = vadd.f32 %v5883, %v5980
      %v6081 = vadd.f32 %v5890, %v5980
      %v6082 = vadd.f32 %v5897, %v5980
      %v6083 = vadd.f32 %v5904, %v5980
      %v6084 = vadd.f32 %v5911, %v5980
      %v6085 = vadd.f32 %v5918, %v5980
      %v6086 = vadd.f32 %v5925, %v5980
      %v6087 = vadd.f32 %v5932, %v5980
      %v6088 = vadd.f32 %v5939, %v5980
      %v6089 = vadd.f32 %v5946, %v5980
      %v6090 = vadd.f32 %v5953, %v5980
      %v6091 = vadd.f32 %v5960, %v5980
      %v6092 = vadd.f32 %v5967, %v5980
      %v6093 = vadd.f32 %v5974, %v5980
      %v6094 = vmax.f32 %v5982, 0.0
      %v6095 = vmax.f32 %v5983, 0.0
      %v6096 = vmax.f32 %v5984, 0.0
      %v6097 = vmax.f32 %v5985, 0.0
      %v6098 = vmax.f32 %v5986, 0.0
      %v6099 = vmax.f32 %v5987, 0.0
      %v6100 = vmax.f32 %v5988, 0.0
      %v6101 = vmax.f32 %v5989, 0.0
      %v6102 = vmax.f32 %v5990, 0.0
      %v6103 = vmax.f32 %v5991, 0.0
      %v6104 = vmax.f32 %v5992, 0.0
      %v6105 = vmax.f32 %v5993, 0.0
      %v6106 = vmax.f32 %v5994, 0.0
      %v6107 = vmax.f32 %v5995, 0.0
      %v6108 = vmax.f32 %v5996, 0.0
      %v6109 = vmax.f32 %v5997, 0.0
      %v6110 = vmax.f32 %v5998, 0.0
      %v6111 = vmax.f32 %v5999, 0.0
      %v6112 = vmax.f32 %v6000, 0.0
      %v6113 = vmax.f32 %v6001, 0.0
      %v6114 = vmax.f32 %v6002, 0.0
      %v6115 = vmax.f32 %v6003, 0.0
      %v6116 = vmax.f32 %v6004, 0.0
      %v6117 = vmax.f32 %v6005, 0.0
      %v6118 = vmax.f32 %v6006, 0.0
      %v6119 = vmax.f32 %v6007, 0.0
      %v6120 = vmax.f32 %v6008, 0.0
      %v6121 = vmax.f32 %v6009, 0.0
      %v6122 = vmax.f32 %v6010, 0.0
      %v6123 = vmax.f32 %v6011, 0.0
      %v6124 = vmax.f32 %v6012, 0.0
      %v6125 = vmax.f32 %v6013, 0.0
      %v6126 = vmax.f32 %v6014, 0.0
      %v6127 = vmax.f32 %v6015, 0.0
      %v6128 = vmax.f32 %v6016, 0.0
      %v6129 = vmax.f32 %v6017, 0.0
      %v6130 = vmax.f32 %v6018, 0.0
      %v6131 = vmax.f32 %v6019, 0.0
      %v6132 = vmax.f32 %v6020, 0.0
      %v6133 = vmax.f32 %v6021, 0.0
      %v6134 = vmax.f32 %v6022, 0.0
      %v6135 = vmax.f32 %v6023, 0.0
      %v6136 = vmax.f32 %v6024, 0.0
      %v6137 = vmax.f32 %v6025, 0.0
      %v6138 = vmax.f32 %v6026, 0.0
      %v6139 = vmax.f32 %v6027, 0.0
      %v6140 = vmax.f32 %v6028, 0.0
      %v6141 = vmax.f32 %v6029, 0.0
      %v6142 = vmax.f32 %v6030, 0.0
      %v6143 = vmax.f32 %v6031, 0.0
      %v6144 = vmax.f32 %v6032, 0.0
      %v6145 = vmax.f32 %v6033, 0.0
      %v6146 = vmax.f32 %v6034, 0.0
      %v6147 = vmax.f32 %v6035, 0.0
      %v6148 = vmax.f32 %v6036, 0.0
      %v6149 = vmax.f32 %v6037, 0.0
      %v6150 = vmax.f32 %v6038, 0.0
      %v6151 = vmax.f32 %v6039, 0.0
      %v6152 = vmax.f32 %v6040, 0.0
      %v6153 = vmax.f32 %v6041, 0.0
      %v6154 = vmax.f32 %v6042, 0.0
      %v6155 = vmax.f32 %v6043, 0.0
      %v6156 = vmax.f32 %v6044, 0.0
      %v6157 = vmax.f32 %v6045, 0.0
      %v6158 = vmax.f32 %v6046, 0.0
      %v6159 = vmax.f32 %v6047, 0.0
      %v6160 = vmax.f32 %v6048, 0.0
      %v6161 = vmax.f32 %v6049, 0.0
      %v6162 = vmax.f32 %v6050, 0.0
      %v6163 = vmax.f32 %v6051, 0.0
      %v6164 = vmax.f32 %v6052, 0.0
      %v6165 = vmax.f32 %v6053, 0.0
      %v6166 = vmax.f32 %v6054, 0.0
      %v6167 = vmax.f32 %v6055, 0.0
      %v6168 = vmax.f32 %v6056, 0.0
      %v6169 = vmax.f32 %v6057, 0.0
      %v6170 = vmax.f32 %v6058, 0.0
      %v6171 = vmax.f32 %v6059, 0.0
      %v6172 = vmax.f32 %v6060, 0.0
      %v6173 = vmax.f32 %v6061, 0.0
      %v6174 = vmax.f32 %v6062, 0.0
      %v6175 = vmax.f32 %v6063, 0.0
      %v6176 = vmax.f32 %v6064, 0.0
      %v6177 = vmax.f32 %v6065, 0.0
      %v6178 = vmax.f32 %v6066, 0.0
      %v6179 = vmax.f32 %v6067, 0.0
      %v6180 = vmax.f32 %v6068, 0.0
      %v6181 = vmax.f32 %v6069, 0.0
      %v6182 = vmax.f32 %v6070, 0.0
      %v6183 = vmax.f32 %v6071, 0.0
      %v6184 = vmax.f32 %v6072, 0.0
      %v6185 = vmax.f32 %v6073, 0.0
      %v6186 = vmax.f32 %v6074, 0.0
      %v6187 = vmax.f32 %v6075, 0.0
      %v6188 = vmax.f32 %v6076, 0.0
      %v6189 = vmax.f32 %v6077, 0.0
      %v6190 = vmax.f32 %v6078, 0.0
      %v6191 = vmax.f32 %v6079, 0.0
      %v6192 = vmax.f32 %v6080, 0.0
      %v6193 = vmax.f32 %v6081, 0.0
      %v6194 = vmax.f32 %v6082, 0.0
      %v6195 = vmax.f32 %v6083, 0.0
      %v6196 = vmax.f32 %v6084, 0.0
      %v6197 = vmax.f32 %v6085, 0.0
      %v6198 = vmax.f32 %v6086, 0.0
      %v6199 = vmax.f32 %v6087, 0.0
      %v6200 = vmax.f32 %v6088, 0.0
      %v6201 = vmax.f32 %v6089, 0.0
      %v6202 = vmax.f32 %v6090, 0.0
      %v6203 = vmax.f32 %v6091, 0.0
      %v6204 = vmax.f32 %v6092, 0.0
      %v6205 = vmax.f32 %v6093, 0.0
      %v6206 = vpack.c.bf16 %v6094, %v6094
      %v6207 = vpack.c.bf16 %v6095, %v6095
      %v6208 = vpack.c.bf16 %v6096, %v6096
      %v6209 = vpack.c.bf16 %v6097, %v6097
      %v6210 = vpack.c.bf16 %v6098, %v6098
      %v6211 = vpack.c.bf16 %v6099, %v6099
      %v6212 = vpack.c.bf16 %v6100, %v6100
      %v6213 = vpack.c.bf16 %v6101, %v6101
      %v6214 = vpack.c.bf16 %v6102, %v6102
      %v6215 = vpack.c.bf16 %v6103, %v6103
      %v6216 = vpack.c.bf16 %v6104, %v6104
      %v6217 = vpack.c.bf16 %v6105, %v6105
      %v6218 = vpack.c.bf16 %v6106, %v6106
      %v6219 = vpack.c.bf16 %v6107, %v6107
      %v6220 = vpack.c.bf16 %v6108, %v6108
      %v6221 = vpack.c.bf16 %v6109, %v6109
      %v6222 = vpack.c.bf16 %v6110, %v6110
      %v6223 = vpack.c.bf16 %v6111, %v6111
      %v6224 = vpack.c.bf16 %v6112, %v6112
      %v6225 = vpack.c.bf16 %v6113, %v6113
      %v6226 = vpack.c.bf16 %v6114, %v6114
      %v6227 = vpack.c.bf16 %v6115, %v6115
      %v6228 = vpack.c.bf16 %v6116, %v6116
      %v6229 = vpack.c.bf16 %v6117, %v6117
      %v6230 = vpack.c.bf16 %v6118, %v6118
      %v6231 = vpack.c.bf16 %v6119, %v6119
      %v6232 = vpack.c.bf16 %v6120, %v6120
      %v6233 = vpack.c.bf16 %v6121, %v6121
      %v6234 = vpack.c.bf16 %v6122, %v6122
      %v6235 = vpack.c.bf16 %v6123, %v6123
      %v6236 = vpack.c.bf16 %v6124, %v6124
      %v6237 = vpack.c.bf16 %v6125, %v6125
      %v6238 = vpack.c.bf16 %v6126, %v6126
      %v6239 = vpack.c.bf16 %v6127, %v6127
      %v6240 = vpack.c.bf16 %v6128, %v6128
      %v6241 = vpack.c.bf16 %v6129, %v6129
      %v6242 = vpack.c.bf16 %v6130, %v6130
      %v6243 = vpack.c.bf16 %v6131, %v6131
      %v6244 = vpack.c.bf16 %v6132, %v6132
      %v6245 = vpack.c.bf16 %v6133, %v6133
      %v6246 = vpack.c.bf16 %v6134, %v6134
      %v6247 = vpack.c.bf16 %v6135, %v6135
      %v6248 = vpack.c.bf16 %v6136, %v6136
      %v6249 = vpack.c.bf16 %v6137, %v6137
      %v6250 = vpack.c.bf16 %v6138, %v6138
      %v6251 = vpack.c.bf16 %v6139, %v6139
      %v6252 = vpack.c.bf16 %v6140, %v6140
      %v6253 = vpack.c.bf16 %v6141, %v6141
      %v6254 = vpack.c.bf16 %v6142, %v6142
      %v6255 = vpack.c.bf16 %v6143, %v6143
      %v6256 = vpack.c.bf16 %v6144, %v6144
      %v6257 = vpack.c.bf16 %v6145, %v6145
      %v6258 = vpack.c.bf16 %v6146, %v6146
      %v6259 = vpack.c.bf16 %v6147, %v6147
      %v6260 = vpack.c.bf16 %v6148, %v6148
      %v6261 = vpack.c.bf16 %v6149, %v6149
      %v6262 = vpack.c.bf16 %v6150, %v6150
      %v6263 = vpack.c.bf16 %v6151, %v6151
      %v6264 = vpack.c.bf16 %v6152, %v6152
      %v6265 = vpack.c.bf16 %v6153, %v6153
      %v6266 = vpack.c.bf16 %v6154, %v6154
      %v6267 = vpack.c.bf16 %v6155, %v6155
      %v6268 = vpack.c.bf16 %v6156, %v6156
      %v6269 = vpack.c.bf16 %v6157, %v6157
      %v6270 = vpack.c.bf16 %v6158, %v6158
      %v6271 = vpack.c.bf16 %v6159, %v6159
      %v6272 = vpack.c.bf16 %v6160, %v6160
      %v6273 = vpack.c.bf16 %v6161, %v6161
      %v6274 = vpack.c.bf16 %v6162, %v6162
      %v6275 = vpack.c.bf16 %v6163, %v6163
      %v6276 = vpack.c.bf16 %v6164, %v6164
      %v6277 = vpack.c.bf16 %v6165, %v6165
      %v6278 = vpack.c.bf16 %v6166, %v6166
      %v6279 = vpack.c.bf16 %v6167, %v6167
      %v6280 = vpack.c.bf16 %v6168, %v6168
      %v6281 = vpack.c.bf16 %v6169, %v6169
      %v6282 = vpack.c.bf16 %v6170, %v6170
      %v6283 = vpack.c.bf16 %v6171, %v6171
      %v6284 = vpack.c.bf16 %v6172, %v6172
      %v6285 = vpack.c.bf16 %v6173, %v6173
      %v6286 = vpack.c.bf16 %v6174, %v6174
      %v6287 = vpack.c.bf16 %v6175, %v6175
      %v6288 = vpack.c.bf16 %v6176, %v6176
      %v6289 = vpack.c.bf16 %v6177, %v6177
      %v6290 = vpack.c.bf16 %v6178, %v6178
      %v6291 = vpack.c.bf16 %v6179, %v6179
      %v6292 = vpack.c.bf16 %v6180, %v6180
      %v6293 = vpack.c.bf16 %v6181, %v6181
      %v6294 = vpack.c.bf16 %v6182, %v6182
      %v6295 = vpack.c.bf16 %v6183, %v6183
      %v6296 = vpack.c.bf16 %v6184, %v6184
      %v6297 = vpack.c.bf16 %v6185, %v6185
      %v6298 = vpack.c.bf16 %v6186, %v6186
      %v6299 = vpack.c.bf16 %v6187, %v6187
      %v6300 = vpack.c.bf16 %v6188, %v6188
      %v6301 = vpack.c.bf16 %v6189, %v6189
      %v6302 = vpack.c.bf16 %v6190, %v6190
      %v6303 = vpack.c.bf16 %v6191, %v6191
      %v6304 = vpack.c.bf16 %v6192, %v6192
      %v6305 = vpack.c.bf16 %v6193, %v6193
      %v6306 = vpack.c.bf16 %v6194, %v6194
      %v6307 = vpack.c.bf16 %v6195, %v6195
      %v6308 = vpack.c.bf16 %v6196, %v6196
      %v6309 = vpack.c.bf16 %v6197, %v6197
      %v6310 = vpack.c.bf16 %v6198, %v6198
      %v6311 = vpack.c.bf16 %v6199, %v6199
      %v6312 = vpack.c.bf16 %v6200, %v6200
      %v6313 = vpack.c.bf16 %v6201, %v6201
      %v6314 = vpack.c.bf16 %v6202, %v6202
      %v6315 = vpack.c.bf16 %v6203, %v6203
      %v6316 = vpack.c.bf16 %v6204, %v6204
      %v6317 = vpack.c.bf16 %v6205, %v6205
      %v6318 = vld [vmem:[%s3] sm:$0xff]
      %v6319 = vld [vmem:[%s3 + $0x8] sm:$0xff]
      %v6320 = vld [vmem:[%s3 + $0x10] sm:$0xff]
      %v6321 = vld [vmem:[%s3 + $0x18] sm:$0xff]
      %v6322 = vld [vmem:[%s3 + $0x20] sm:$0xff]
      %v6323 = vld [vmem:[%s3 + $0x28] sm:$0xff]
      %v6324 = vld [vmem:[%s3 + $0x30] sm:$0xff]
      %v6325 = vld [vmem:[%s3 + $0x38] sm:$0xff]
      %v6326 = vld [vmem:[%s3 + $0x40] sm:$0xff]
      %v6327 = vld [vmem:[%s3 + $0x48] sm:$0xff]
      %v6328 = vld [vmem:[%s3 + $0x50] sm:$0xff]
      %v6329 = vld [vmem:[%s3 + $0x58] sm:$0xff]
      %v6330 = vld [vmem:[%s3 + $0x60] sm:$0xff]
      %v6331 = vld [vmem:[%s3 + $0x68] sm:$0xff]
      %v6332 = vld [vmem:[%s3 + $0x70] sm:$0xff]
      %v6333 = vld [vmem:[%s3 + $0x78] sm:$0xff]
      %s6334 = scalar_lea.vmem %s3, 128
      %v6335 = vld [vmem:[%s6334] sm:$0xff]
      %v6336 = vld [vmem:[%s6334 + $0x8] sm:$0xff]
      %v6337 = vld [vmem:[%s6334 + $0x10] sm:$0xff]
      %v6338 = vld [vmem:[%s6334 + $0x18] sm:$0xff]
      %v6339 = vld [vmem:[%s6334 + $0x20] sm:$0xff]
      %v6340 = vld [vmem:[%s6334 + $0x28] sm:$0xff]
      %v6341 = vld [vmem:[%s6334 + $0x30] sm:$0xff]
      %v6342 = vld [vmem:[%s6334 + $0x38] sm:$0xff]
      %v6343 = vld [vmem:[%s6334 + $0x40] sm:$0xff]
      %v6344 = vld [vmem:[%s6334 + $0x48] sm:$0xff]
      %v6345 = vld [vmem:[%s6334 + $0x50] sm:$0xff]
      %v6346 = vld [vmem:[%s6334 + $0x58] sm:$0xff]
      %v6347 = vld [vmem:[%s6334 + $0x60] sm:$0xff]
      %v6348 = vld [vmem:[%s6334 + $0x68] sm:$0xff]
      %v6349 = vld [vmem:[%s6334 + $0x70] sm:$0xff]
      %v6350 = vld [vmem:[%s6334 + $0x78] sm:$0xff]
      %v6431 = vunpack.c.l.b16 %v6207
      %v6432 = vunpack.c.l.b16 %v6208
      %v6433 = vunpack.c.l.b16 %v6209
      %v6434 = vunpack.c.l.b16 %v6210
      %v6435 = vunpack.c.l.b16 %v6211
      %v6436 = vunpack.c.l.b16 %v6212
      %v6437 = vunpack.c.l.b16 %v6213
      %v6438 = vunpack.c.l.b16 %v6214
      %v6439 = vunpack.c.l.b16 %v6215
      %v6440 = vunpack.c.l.b16 %v6216
      %v6441 = vunpack.c.l.b16 %v6221
      %v6442 = vunpack.c.l.b16 %v6222
      %v6443 = vunpack.c.l.b16 %v6223
      %v6444 = vunpack.c.l.b16 %v6224
      %v6445 = vunpack.c.l.b16 %v6225
      %v6446 = vunpack.c.l.b16 %v6226
      %v6447 = vunpack.c.l.b16 %v6227
      %v6448 = vunpack.c.l.b16 %v6228
      %v6449 = vunpack.c.l.b16 %v6229
      %v6450 = vunpack.c.l.b16 %v6230
      %v6451 = vunpack.c.l.b16 %v6235
      %v6452 = vunpack.c.l.b16 %v6236
      %v6453 = vunpack.c.l.b16 %v6237
      %v6454 = vunpack.c.l.b16 %v6238
      %v6455 = vunpack.c.l.b16 %v6239
      %v6456 = vunpack.c.l.b16 %v6240
      %v6457 = vunpack.c.l.b16 %v6241
      %v6458 = vunpack.c.l.b16 %v6242
      %v6459 = vunpack.c.l.b16 %v6243
      %v6460 = vunpack.c.l.b16 %v6244
      %v6461 = vunpack.c.l.b16 %v6249
      %v6462 = vunpack.c.l.b16 %v6250
      %v6463 = vunpack.c.l.b16 %v6251
      %v6464 = vunpack.c.l.b16 %v6252
      %v6465 = vunpack.c.l.b16 %v6253
      %v6466 = vunpack.c.l.b16 %v6254
      %v6467 = vunpack.c.l.b16 %v6255
      %v6468 = vunpack.c.l.b16 %v6256
      %v6469 = vunpack.c.l.b16 %v6257
      %v6470 = vunpack.c.l.b16 %v6258
      %v6471 = vunpack.c.l.b16 %v6263
      %v6472 = vunpack.c.l.b16 %v6264
      %v6473 = vunpack.c.l.b16 %v6265
      %v6474 = vunpack.c.l.b16 %v6266
      %v6475 = vunpack.c.l.b16 %v6267
      %v6476 = vunpack.c.l.b16 %v6268
      %v6477 = vunpack.c.l.b16 %v6269
      %v6478 = vunpack.c.l.b16 %v6270
      %v6479 = vunpack.c.l.b16 %v6271
      %v6480 = vunpack.c.l.b16 %v6272
      %v6481 = vunpack.c.l.b16 %v6277
      %v6482 = vunpack.c.l.b16 %v6278
      %v6483 = vunpack.c.l.b16 %v6279
      %v6484 = vunpack.c.l.b16 %v6280
      %v6485 = vunpack.c.l.b16 %v6281
      %v6486 = vunpack.c.l.b16 %v6282
      %v6487 = vunpack.c.l.b16 %v6283
      %v6488 = vunpack.c.l.b16 %v6284
      %v6489 = vunpack.c.l.b16 %v6285
      %v6490 = vunpack.c.l.b16 %v6286
      %v6491 = vunpack.c.l.b16 %v6291
      %v6492 = vunpack.c.l.b16 %v6292
      %v6493 = vunpack.c.l.b16 %v6293
      %v6494 = vunpack.c.l.b16 %v6294
      %v6495 = vunpack.c.l.b16 %v6295
      %v6496 = vunpack.c.l.b16 %v6296
      %v6497 = vunpack.c.l.b16 %v6297
      %v6498 = vunpack.c.l.b16 %v6298
      %v6499 = vunpack.c.l.b16 %v6299
      %v6500 = vunpack.c.l.b16 %v6300
      %v6501 = vunpack.c.l.b16 %v6305
      %v6502 = vunpack.c.l.b16 %v6306
      %v6503 = vunpack.c.l.b16 %v6307
      %v6504 = vunpack.c.l.b16 %v6308
      %v6505 = vunpack.c.l.b16 %v6309
      %v6506 = vunpack.c.l.b16 %v6310
      %v6507 = vunpack.c.l.b16 %v6311
      %v6508 = vunpack.c.l.b16 %v6312
      %v6509 = vunpack.c.l.b16 %v6313
      %v6510 = vunpack.c.l.b16 %v6314
      %v6511 = vrot.slane %v6432, 7
      %vm6512 = vcmask 1041409
      %v6513 = vsel %vm6512, %v6511, %v6431
      %v6514 = vrot.slane %v6433, 6
      %vm6515 = vcmask 1042434
      %v6516 = vsel %vm6515, %v6514, %v6513
      %v6517 = vrot.slane %v6434, 5
      %vm6518 = vcmask 1043459
      %v6519 = vsel %vm6518, %v6517, %v6516
      %v6520 = vrot.slane %v6435, 4
      %vm6521 = vcmask 1044484
      %v6522 = vsel %vm6521, %v6520, %v6519
      %v6523 = vrot.slane %v6436, 3
      %vm6524 = vcmask 1045509
      %v6525 = vsel %vm6524, %v6523, %v6522
      %v6526 = vrot.slane %v6437, 2
      %vm6527 = vcmask 1046534
      %v6528 = vsel %vm6527, %v6526, %v6525
      %v6529 = vrot.slane %v6438, 1
      %vm6530 = vcmask 1047559
      %v6531 = vsel %vm6530, %v6529, %v6528
      %v6532 = vrot.slane %v6440, 7
      %v6533 = vsel %vm6512, %v6532, %v6439
      %v6534 = vrot.slane %v6441, 6
      %v6535 = vsel %vm6515, %v6534, %v6533
      %v6536 = vrot.slane %v6442, 5
      %v6537 = vsel %vm6518, %v6536, %v6535
      %v6538 = vrot.slane %v6443, 4
      %v6539 = vsel %vm6521, %v6538, %v6537
      %v6540 = vrot.slane %v6444, 3
      %v6541 = vsel %vm6524, %v6540, %v6539
      %v6542 = vrot.slane %v6445, 2
      %v6543 = vsel %vm6527, %v6542, %v6541
      %v6544 = vrot.slane %v6446, 1
      %v6545 = vsel %vm6530, %v6544, %v6543
      %v6546 = vrot.slane %v6448, 7
      %v6547 = vsel %vm6512, %v6546, %v6447
      %v6548 = vrot.slane %v6449, 6
      %v6549 = vsel %vm6515, %v6548, %v6547
      %v6550 = vrot.slane %v6450, 5
      %v6551 = vsel %vm6518, %v6550, %v6549
      %v6552 = vrot.slane %v6451, 4
      %v6553 = vsel %vm6521, %v6552, %v6551
      %v6554 = vrot.slane %v6452, 3
      %v6555 = vsel %vm6524, %v6554, %v6553
      %v6556 = vrot.slane %v6453, 2
      %v6557 = vsel %vm6527, %v6556, %v6555
      %v6558 = vrot.slane %v6454, 1
      %v6559 = vsel %vm6530, %v6558, %v6557
      %v6560 = vrot.slane %v6456, 7
      %v6561 = vsel %vm6512, %v6560, %v6455
      %v6562 = vrot.slane %v6457, 6
      %v6563 = vsel %vm6515, %v6562, %v6561
      %v6564 = vrot.slane %v6458, 5
      %v6565 = vsel %vm6518, %v6564, %v6563
      %v6566 = vrot.slane %v6459, 4
      %v6567 = vsel %vm6521, %v6566, %v6565
      %v6568 = vrot.slane %v6460, 3
      %v6569 = vsel %vm6524, %v6568, %v6567
      %v6570 = vrot.slane %v6461, 2
      %v6571 = vsel %vm6527, %v6570, %v6569
      %v6572 = vrot.slane %v6462, 1
      %v6573 = vsel %vm6530, %v6572, %v6571
      %v6574 = vrot.slane %v6464, 7
      %v6575 = vsel %vm6512, %v6574, %v6463
      %v6576 = vrot.slane %v6465, 6
      %v6577 = vsel %vm6515, %v6576, %v6575
      %v6578 = vrot.slane %v6466, 5
      %v6579 = vsel %vm6518, %v6578, %v6577
      %v6580 = vrot.slane %v6467, 4
      %v6581 = vsel %vm6521, %v6580, %v6579
      %v6582 = vrot.slane %v6468, 3
      %v6583 = vsel %vm6524, %v6582, %v6581
      %v6584 = vrot.slane %v6469, 2
      %v6585 = vsel %vm6527, %v6584, %v6583
      %v6586 = vrot.slane %v6470, 1
      %v6587 = vsel %vm6530, %v6586, %v6585
      %v6588 = vrot.slane %v6472, 7
      %v6589 = vsel %vm6512, %v6588, %v6471
      %v6590 = vrot.slane %v6473, 6
      %v6591 = vsel %vm6515, %v6590, %v6589
      %v6592 = vrot.slane %v6474, 5
      %v6593 = vsel %vm6518, %v6592, %v6591
      %v6594 = vrot.slane %v6475, 4
      %v6595 = vsel %vm6521, %v6594, %v6593
      %v6596 = vrot.slane %v6476, 3
      %v6597 = vsel %vm6524, %v6596, %v6595
      %v6598 = vrot.slane %v6477, 2
      %v6599 = vsel %vm6527, %v6598, %v6597
      %v6600 = vrot.slane %v6478, 1
      %v6601 = vsel %vm6530, %v6600, %v6599
      %v6602 = vrot.slane %v6480, 7
      %v6603 = vsel %vm6512, %v6602, %v6479
      %v6604 = vrot.slane %v6481, 6
      %v6605 = vsel %vm6515, %v6604, %v6603
      %v6606 = vrot.slane %v6482, 5
      %v6607 = vsel %vm6518, %v6606, %v6605
      %v6608 = vrot.slane %v6483, 4
      %v6609 = vsel %vm6521, %v6608, %v6607
      %v6610 = vrot.slane %v6484, 3
      %v6611 = vsel %vm6524, %v6610, %v6609
      %v6612 = vrot.slane %v6485, 2
      %v6613 = vsel %vm6527, %v6612, %v6611
      %v6614 = vrot.slane %v6486, 1
      %v6615 = vsel %vm6530, %v6614, %v6613
      %v6616 = vrot.slane %v6488, 7
      %v6617 = vsel %vm6512, %v6616, %v6487
      %v6618 = vrot.slane %v6489, 6
      %v6619 = vsel %vm6515, %v6618, %v6617
      %v6620 = vrot.slane %v6490, 5
      %v6621 = vsel %vm6518, %v6620, %v6619
      %v6622 = vrot.slane %v6491, 4
      %v6623 = vsel %vm6521, %v6622, %v6621
      %v6624 = vrot.slane %v6492, 3
      %v6625 = vsel %vm6524, %v6624, %v6623
      %v6626 = vrot.slane %v6493, 2
      %v6627 = vsel %vm6527, %v6626, %v6625
      %v6628 = vrot.slane %v6494, 1
      %v6629 = vsel %vm6530, %v6628, %v6627
      %v6630 = vrot.slane %v6496, 7
      %v6631 = vsel %vm6512, %v6630, %v6495
      %v6632 = vrot.slane %v6497, 6
      %v6633 = vsel %vm6515, %v6632, %v6631
      %v6634 = vrot.slane %v6498, 5
      %v6635 = vsel %vm6518, %v6634, %v6633
      %v6636 = vrot.slane %v6499, 4
      %v6637 = vsel %vm6521, %v6636, %v6635
      %v6638 = vrot.slane %v6500, 3
      %v6639 = vsel %vm6524, %v6638, %v6637
      %v6640 = vrot.slane %v6501, 2
      %v6641 = vsel %vm6527, %v6640, %v6639
      %v6642 = vrot.slane %v6502, 1
      %v6643 = vsel %vm6530, %v6642, %v6641
      %v6644 = vrot.slane %v6504, 7
      %v6645 = vsel %vm6512, %v6644, %v6503
      %v6646 = vrot.slane %v6505, 6
      %v6647 = vsel %vm6515, %v6646, %v6645
      %v6648 = vrot.slane %v6506, 5
      %v6649 = vsel %vm6518, %v6648, %v6647
      %v6650 = vrot.slane %v6507, 4
      %v6651 = vsel %vm6521, %v6650, %v6649
      %v6652 = vrot.slane %v6508, 3
      %v6653 = vsel %vm6524, %v6652, %v6651
      %v6654 = vrot.slane %v6509, 2
      %v6655 = vsel %vm6527, %v6654, %v6653
      %v6656 = vrot.slane %v6510, 1
      %v6657 = vsel %vm6530, %v6656, %v6655
      %v6658 = vpack.c.b16 %v6545, %v6531
      %v6659 = vpack.c.b16 %v6573, %v6559
      %v6660 = vpack.c.b16 %v6601, %v6587
      %v6661 = vpack.c.b16 %v6629, %v6615
      %v6662 = vpack.c.b16 %v6657, %v6643
      %v6684 = vunpack.c.l.b16 %v6335
      %v6685 = vunpack.c.h.b16 %v6335
      %v6686 = vunpack.c.l.b16 %v6336
      %v6687 = vunpack.c.h.b16 %v6336
      %v6688 = vunpack.c.l.b16 %v6337
      %v6689 = vunpack.c.h.b16 %v6337
      %v6690 = vunpack.c.l.b16 %v6338
      %v6691 = vunpack.c.h.b16 %v6338
      %v6692 = vunpack.c.l.b16 %v6339
      %v6693 = vunpack.c.h.b16 %v6339
      %v6694 = vunpack.c.l.b16 %v6340
      %v6695 = vunpack.c.h.b16 %v6340
      %v6696 = vunpack.c.l.b16 %v6341
      %v6697 = vunpack.c.h.b16 %v6341
      %v6698 = vunpack.c.l.b16 %v6342
      %v6699 = vunpack.c.h.b16 %v6342
      %v6700 = vunpack.c.l.b16 %v6343
      %v6701 = vunpack.c.h.b16 %v6343
      %v6702 = vunpack.c.l.b16 %v6344
      %v6703 = vunpack.c.h.b16 %v6344
      %v6704 = vunpack.c.l.b16 %v6345
      %v6705 = vunpack.c.h.b16 %v6345
      %v6706 = vunpack.c.l.b16 %v6346
      %v6707 = vunpack.c.h.b16 %v6346
      %v6708 = vunpack.c.l.b16 %v6347
      %v6709 = vunpack.c.h.b16 %v6347
      %v6710 = vunpack.c.l.b16 %v6348
      %v6711 = vunpack.c.h.b16 %v6348
      %v6712 = vunpack.c.l.b16 %v6349
      %v6713 = vunpack.c.h.b16 %v6349
      %v6714 = vunpack.c.l.b16 %v6350
      %v6715 = vunpack.c.h.b16 %v6350
      %v6716 = vpack.c.b16 %v6686, %v6684
      %v6717 = vpack.c.b16 %v6687, %v6685
      %v6718 = vpack.c.b16 %v6690, %v6688
      %v6719 = vpack.c.b16 %v6691, %v6689
      %v6720 = vpack.c.b16 %v6694, %v6692
      %v6721 = vpack.c.b16 %v6695, %v6693
      %v6722 = vpack.c.b16 %v6698, %v6696
      %v6723 = vpack.c.b16 %v6699, %v6697
      %v6724 = vpack.c.b16 %v6702, %v6700
      %v6725 = vpack.c.b16 %v6703, %v6701
      %v6726 = vpack.c.b16 %v6706, %v6704
      %v6727 = vpack.c.b16 %v6707, %v6705
      %v6728 = vpack.c.b16 %v6710, %v6708
      %v6729 = vpack.c.b16 %v6711, %v6709
      %v6730 = vpack.c.b16 %v6714, %v6712
      %v6731 = vpack.c.b16 %v6715, %v6713
      %6748 = vmatprep.subr.bf16.mxu0 %v6717
      %6749 = vmatpush1.bf16.msra.mxu0 %v6716
      %6750 = vmatprep.subr.bf16.mxu0 %v6719
      %6751 = vmatpush1.bf16.msra.mxu0 %v6718
      %6752 = vmatprep.subr.bf16.mxu0 %v6721
      %6753 = vmatpush1.bf16.msra.mxu0 %v6720
      %6754 = vmatprep.subr.bf16.mxu0 %v6723
      %6755 = vmatpush1.bf16.msra.mxu0 %v6722
      %6756 = vmatprep.subr.bf16.mxu0 %v6725
      %6757 = vmatpush1.bf16.msra.mxu0 %v6724
      %6758 = vmatprep.subr.bf16.mxu0 %v6727
      %6759 = vmatpush1.bf16.msra.mxu0 %v6726
      %6760 = vmatprep.subr.bf16.mxu0 %v6729
      %6761 = vmatpush1.bf16.msra.mxu0 %v6728
      %6762 = vmatprep.subr.bf16.mxu0 %v6731
      %6763 = vmatpush1.bf16.msra.mxu0 %v6730
      %6764 = vmatprep.subr.bf16.mxu0 0
      %6765 = vmatpush1.bf16.msra.mxu0 0
      %6766 = vmatprep.subr.bf16.mxu0 0
      %6767 = vmatpush1.bf16.msra.mxu0 0
      %6768 = vmatprep.subr.bf16.mxu0 0
      %6769 = vmatpush1.bf16.msra.mxu0 0
      %6770 = vmatprep.subr.bf16.mxu0 0
      %6771 = vmatpush1.bf16.msra.mxu0 0
      %6772 = vmatprep.subr.bf16.mxu0 0
      %6773 = vmatpush1.bf16.msra.mxu0 0
      %6774 = vmatprep.subr.bf16.mxu0 0
      %6775 = vmatpush1.bf16.msra.mxu0 0
      %6776 = vmatprep.subr.bf16.mxu0 0
      %6777 = vmatpush1.bf16.msra.mxu0 0
      %6778 = vmatprep.subr.bf16.mxu0 0
      %6779 = vmatpush1.bf16.msra.mxu0 0
      %6780 = vmatprep.mubr.bf16.mxu0 0
      %6781 = vmatmul.mubr.bf16.gmra.mrb[0].mxu0 %v6658
      %v6782 = vpop.f32.mrb[0].mxu0
      %v6783 = vadd.f32 0.0, %v6782
      %v6784 = vpop.f32.mrb[0].mxu0
      %v6785 = vadd.f32 0.0, %v6784
      %v6786 = vpop.f32.mrb[0].mxu0
      %v6787 = vadd.f32 0.0, %v6786
      %v6788 = vpop.f32.mrb[0].mxu0
      %v6789 = vadd.f32 0.0, %v6788
      %6790 = vmatprep.mubr.bf16.mxu0 0
      %6791 = vmatmul.mubr.bf16.gmra.mrb[0].mxu0 %v6659
      %v6792 = vpop.f32.mrb[0].mxu0
      %v6793 = vadd.f32 0.0, %v6792
      %v6794 = vpop.f32.mrb[0].mxu0
      %v6795 = vadd.f32 0.0, %v6794
      %v6796 = vpop.f32.mrb[0].mxu0
      %v6797 = vadd.f32 0.0, %v6796
      %v6798 = vpop.f32.mrb[0].mxu0
      %v6799 = vadd.f32 0.0, %v6798
      %6800 = vmatprep.mubr.bf16.mxu0 0
      %6801 = vmatmul.mubr.bf16.gmra.mrb[0].mxu0 %v6660
      %v6802 = vpop.f32.mrb[0].mxu0
      %v6803 = vadd.f32 0.0, %v6802
      %v6804 = vpop.f32.mrb[0].mxu0
      %v6805 = vadd.f32 0.0, %v6804
      %v6806 = vpop.f32.mrb[0].mxu0
      %v6807 = vadd.f32 0.0, %v6806
      %v6808 = vpop.f32.mrb[0].mxu0
      %v6809 = vadd.f32 0.0, %v6808
      %6810 = vmatprep.mubr.bf16.mxu0 0
      %6811 = vmatmul.mubr.bf16.gmra.mrb[0].mxu0 %v6661
      %v6812 = vpop.f32.mrb[0].mxu0
      %v6813 = vadd.f32 0.0, %v6812
      %v6814 = vpop.f32.mrb[0].mxu0
      %v6815 = vadd.f32 0.0, %v6814
      %v6816 = vpop.f32.mrb[0].mxu0
      %v6817 = vadd.f32 0.0, %v6816
      %v6818 = vpop.f32.mrb[0].mxu0
      %v6819 = vadd.f32 0.0, %v6818
      %6820 = vmatprep.mubr.bf16.mxu0 0
      %6821 = vmatmul.mubr.bf16.gmra.mrb[0].mxu0 %v6662
      %v6822 = vpop.f32.mrb[0].mxu0
      %v6823 = vadd.f32 0.0, %v6822
      %v6824 = vpop.f32.mrb[0].mxu0
      %v6825 = vadd.f32 0.0, %v6824
      %v6826 = vpop.f32.mrb[0].mxu0
      %v6827 = vadd.f32 0.0, %v6826
      %v6828 = vpop.f32.mrb[0].mxu0
      %v6829 = vadd.f32 0.0, %v6828
      %6830 = vdwg.mxu0
      %v6839 = vunpack.c.l.b16 %v6206
      %v6840 = vunpack.c.l.b16 %v6220
      %v6841 = vunpack.c.l.b16 %v6234
      %v6842 = vunpack.c.l.b16 %v6248
      %v6843 = vunpack.c.l.b16 %v6262
      %v6844 = vunpack.c.l.b16 %v6276
      %v6845 = vunpack.c.l.b16 %v6290
      %v6846 = vunpack.c.l.b16 %v6304
      %v6847 = vrot.slane %v6431, 7
      %v6848 = vsel %vm6512, %v6847, %v6839
      %v6849 = vrot.slane %v6432, 6
      %v6850 = vsel %vm6515, %v6849, %v6848
      %v6851 = vrot.slane %v6433, 5
      %v6852 = vsel %vm6518, %v6851, %v6850
      %v6853 = vrot.slane %v6434, 4
      %v6854 = vsel %vm6521, %v6853, %v6852
      %v6855 = vrot.slane %v6435, 3
      %v6856 = vsel %vm6524, %v6855, %v6854
      %v6857 = vrot.slane %v6436, 2
      %v6858 = vsel %vm6527, %v6857, %v6856
      %v6859 = vrot.slane %v6437, 1
      %v6860 = vsel %vm6530, %v6859, %v6858
      %v6861 = vrot.slane %v6439, 7
      %v6862 = vsel %vm6512, %v6861, %v6438
      %v6863 = vrot.slane %v6840, 6
      %v6864 = vsel %vm6515, %v6863, %v6862
      %v6865 = vrot.slane %v6441, 5
      %v6866 = vsel %vm6518, %v6865, %v6864
      %v6867 = vrot.slane %v6442, 4
      %v6868 = vsel %vm6521, %v6867, %v6866
      %v6869 = vrot.slane %v6443, 3
      %v6870 = vsel %vm6524, %v6869, %v6868
      %v6871 = vrot.slane %v6444, 2
      %v6872 = vsel %vm6527, %v6871, %v6870
      %v6873 = vrot.slane %v6445, 1
      %v6874 = vsel %vm6530, %v6873, %v6872
      %v6875 = vrot.slane %v6447, 7
      %v6876 = vsel %vm6512, %v6875, %v6446
      %v6877 = vrot.slane %v6448, 6
      %v6878 = vsel %vm6515, %v6877, %v6876
      %v6879 = vrot.slane %v6449, 5
      %v6880 = vsel %vm6518, %v6879, %v6878
      %v6881 = vrot.slane %v6841, 4
      %v6882 = vsel %vm6521, %v6881, %v6880
      %v6883 = vrot.slane %v6451, 3
      %v6884 = vsel %vm6524, %v6883, %v6882
      %v6885 = vrot.slane %v6452, 2
      %v6886 = vsel %vm6527, %v6885, %v6884
      %v6887 = vrot.slane %v6453, 1
      %v6888 = vsel %vm6530, %v6887, %v6886
      %v6889 = vrot.slane %v6455, 7
      %v6890 = vsel %vm6512, %v6889, %v6454
      %v6891 = vrot.slane %v6456, 6
      %v6892 = vsel %vm6515, %v6891, %v6890
      %v6893 = vrot.slane %v6457, 5
      %v6894 = vsel %vm6518, %v6893, %v6892
      %v6895 = vrot.slane %v6458, 4
      %v6896 = vsel %vm6521, %v6895, %v6894
      %v6897 = vrot.slane %v6459, 3
      %v6898 = vsel %vm6524, %v6897, %v6896
      %v6899 = vrot.slane %v6842, 2
      %v6900 = vsel %vm6527, %v6899, %v6898
      %v6901 = vrot.slane %v6461, 1
      %v6902 = vsel %vm6530, %v6901, %v6900
      %v6903 = vrot.slane %v6463, 7
      %v6904 = vsel %vm6512, %v6903, %v6462
      %v6905 = vrot.slane %v6464, 6
      %v6906 = vsel %vm6515, %v6905, %v6904
      %v6907 = vrot.slane %v6465, 5
      %v6908 = vsel %vm6518, %v6907, %v6906
      %v6909 = vrot.slane %v6466, 4
      %v6910 = vsel %vm6521, %v6909, %v6908
      %v6911 = vrot.slane %v6467, 3
      %v6912 = vsel %vm6524, %v6911, %v6910
      %v6913 = vrot.slane %v6468, 2
      %v6914 = vsel %vm6527, %v6913, %v6912
      %v6915 = vrot.slane %v6469, 1
      %v6916 = vsel %vm6530, %v6915, %v6914
      %v6917 = vrot.slane %v6471, 7
      %v6918 = vsel %vm6512, %v6917, %v6843
      %v6919 = vrot.slane %v6472, 6
      %v6920 = vsel %vm6515, %v6919, %v6918
      %v6921 = vrot.slane %v6473, 5
      %v6922 = vsel %vm6518, %v6921, %v6920
      %v6923 = vrot.slane %v6474, 4
      %v6924 = vsel %vm6521, %v6923, %v6922
      %v6925 = vrot.slane %v6475, 3
      %v6926 = vsel %vm6524, %v6925, %v6924
      %v6927 = vrot.slane %v6476, 2
      %v6928 = vsel %vm6527, %v6927, %v6926
      %v6929 = vrot.slane %v6477, 1
      %v6930 = vsel %vm6530, %v6929, %v6928
      %v6931 = vrot.slane %v6479, 7
      %v6932 = vsel %vm6512, %v6931, %v6478
      %v6933 = vrot.slane %v6844, 6
      %v6934 = vsel %vm6515, %v6933, %v6932
      %v6935 = vrot.slane %v6481, 5
      %v6936 = vsel %vm6518, %v6935, %v6934
      %v6937 = vrot.slane %v6482, 4
      %v6938 = vsel %vm6521, %v6937, %v6936
      %v6939 = vrot.slane %v6483, 3
      %v6940 = vsel %vm6524, %v6939, %v6938
      %v6941 = vrot.slane %v6484, 2
      %v6942 = vsel %vm6527, %v6941, %v6940
      %v6943 = vrot.slane %v6485, 1
      %v6944 = vsel %vm6530, %v6943, %v6942
      %v6945 = vrot.slane %v6487, 7
      %v6946 = vsel %vm6512, %v6945, %v6486
      %v6947 = vrot.slane %v6488, 6
      %v6948 = vsel %vm6515, %v6947, %v6946
      %v6949 = vrot.slane %v6489, 5
      %v6950 = vsel %vm6518, %v6949, %v6948
      %v6951 = vrot.slane %v6845, 4
      %v6952 = vsel %vm6521, %v6951, %v6950
      %v6953 = vrot.slane %v6491, 3
      %v6954 = vsel %vm6524, %v6953, %v6952
      %v6955 = vrot.slane %v6492, 2
      %v6956 = vsel %vm6527, %v6955, %v6954
      %v6957 = vrot.slane %v6493, 1
      %v6958 = vsel %vm6530, %v6957, %v6956
      %v6959 = vrot.slane %v6495, 7
      %v6960 = vsel %vm6512, %v6959, %v6494
      %v6961 = vrot.slane %v6496, 6
      %v6962 = vsel %vm6515, %v6961, %v6960
      %v6963 = vrot.slane %v6497, 5
      %v6964 = vsel %vm6518, %v6963, %v6962
      %v6965 = vrot.slane %v6498, 4
      %v6966 = vsel %vm6521, %v6965, %v6964
      %v6967 = vrot.slane %v6499, 3
      %v6968 = vsel %vm6524, %v6967, %v6966
      %v6969 = vrot.slane %v6846, 2
      %v6970 = vsel %vm6527, %v6969, %v6968
      %v6971 = vrot.slane %v6501, 1
      %v6972 = vsel %vm6530, %v6971, %v6970
      %v6973 = vrot.slane %v6503, 7
      %v6974 = vsel %vm6512, %v6973, %v6502
      %v6975 = vrot.slane %v6504, 6
      %v6976 = vsel %vm6515, %v6975, %v6974
      %v6977 = vrot.slane %v6505, 5
      %v6978 = vsel %vm6518, %v6977, %v6976
      %v6979 = vrot.slane %v6506, 4
      %v6980 = vsel %vm6521, %v6979, %v6978
      %v6981 = vrot.slane %v6507, 3
      %v6982 = vsel %vm6524, %v6981, %v6980
      %v6983 = vrot.slane %v6508, 2
      %v6984 = vsel %vm6527, %v6983, %v6982
      %v6985 = vrot.slane %v6509, 1
      %v6986 = vsel %vm6530, %v6985, %v6984
      %v6987 = vpack.c.b16 %v6874, %v6860
      %v6988 = vpack.c.b16 %v6902, %v6888
      %v6989 = vpack.c.b16 %v6930, %v6916
      %v6990 = vpack.c.b16 %v6958, %v6944
      %v6991 = vpack.c.b16 %v6986, %v6972
      %v7013 = vunpack.c.l.b16 %v6318
      %v7014 = vunpack.c.h.b16 %v6318
      %v7015 = vunpack.c.l.b16 %v6319
      %v7016 = vunpack.c.h.b16 %v6319
      %v7017 = vunpack.c.l.b16 %v6320
      %v7018 = vunpack.c.h.b16 %v6320
      %v7019 = vunpack.c.l.b16 %v6321
      %v7020 = vunpack.c.h.b16 %v6321
      %v7021 = vunpack.c.l.b16 %v6322
      %v7022 = vunpack.c.h.b16 %v6322
      %v7023 = vunpack.c.l.b16 %v6323
      %v7024 = vunpack.c.h.b16 %v6323
      %v7025 = vunpack.c.l.b16 %v6324
      %v7026 = vunpack.c.h.b16 %v6324
      %v7027 = vunpack.c.l.b16 %v6325
      %v7028 = vunpack.c.h.b16 %v6325
      %v7029 = vunpack.c.l.b16 %v6326
      %v7030 = vunpack.c.h.b16 %v6326
      %v7031 = vunpack.c.l.b16 %v6327
      %v7032 = vunpack.c.h.b16 %v6327
      %v7033 = vunpack.c.l.b16 %v6328
      %v7034 = vunpack.c.h.b16 %v6328
      %v7035 = vunpack.c.l.b16 %v6329
      %v7036 = vunpack.c.h.b16 %v6329
      %v7037 = vunpack.c.l.b16 %v6330
      %v7038 = vunpack.c.h.b16 %v6330
      %v7039 = vunpack.c.l.b16 %v6331
      %v7040 = vunpack.c.h.b16 %v6331
      %v7041 = vunpack.c.l.b16 %v6332
      %v7042 = vunpack.c.h.b16 %v6332
      %v7043 = vunpack.c.l.b16 %v6333
      %v7044 = vunpack.c.h.b16 %v6333
      %v7045 = vpack.c.b16 %v7015, %v7013
      %v7046 = vpack.c.b16 %v7016, %v7014
      %v7047 = vpack.c.b16 %v7019, %v7017
      %v7048 = vpack.c.b16 %v7020, %v7018
      %v7049 = vpack.c.b16 %v7023, %v7021
      %v7050 = vpack.c.b16 %v7024, %v7022
      %v7051 = vpack.c.b16 %v7027, %v7025
      %v7052 = vpack.c.b16 %v7028, %v7026
      %v7053 = vpack.c.b16 %v7031, %v7029
      %v7054 = vpack.c.b16 %v7032, %v7030
      %v7055 = vpack.c.b16 %v7035, %v7033
      %v7056 = vpack.c.b16 %v7036, %v7034
      %v7057 = vpack.c.b16 %v7039, %v7037
      %v7058 = vpack.c.b16 %v7040, %v7038
      %v7059 = vpack.c.b16 %v7043, %v7041
      %v7060 = vpack.c.b16 %v7044, %v7042
      %7077 = vmatprep.subr.bf16.mxu0 %v7046
      %7078 = vmatpush1.bf16.msra.mxu0 %v7045
      %7079 = vmatprep.subr.bf16.mxu0 %v7048
      %7080 = vmatpush1.bf16.msra.mxu0 %v7047
      %7081 = vmatprep.subr.bf16.mxu0 %v7050
      %7082 = vmatpush1.bf16.msra.mxu0 %v7049
      %7083 = vmatprep.subr.bf16.mxu0 %v7052
      %7084 = vmatpush1.bf16.msra.mxu0 %v7051
      %7085 = vmatprep.subr.bf16.mxu0 %v7054
      %7086 = vmatpush1.bf16.msra.mxu0 %v7053
      %7087 = vmatprep.subr.bf16.mxu0 %v7056
      %7088 = vmatpush1.bf16.msra.mxu0 %v7055
      %7089 = vmatprep.subr.bf16.mxu0 %v7058
      %7090 = vmatpush1.bf16.msra.mxu0 %v7057
      %7091 = vmatprep.subr.bf16.mxu0 %v7060
      %7092 = vmatpush1.bf16.msra.mxu0 %v7059
      %7093 = vmatprep.subr.bf16.mxu0 0
      %7094 = vmatpush1.bf16.msra.mxu0 0
      %7095 = vmatprep.subr.bf16.mxu0 0
      %7096 = vmatpush1.bf16.msra.mxu0 0
      %7097 = vmatprep.subr.bf16.mxu0 0
      %7098 = vmatpush1.bf16.msra.mxu0 0
      %7099 = vmatprep.subr.bf16.mxu0 0
      %7100 = vmatpush1.bf16.msra.mxu0 0
      %7101 = vmatprep.subr.bf16.mxu0 0
      %7102 = vmatpush1.bf16.msra.mxu0 0
      %7103 = vmatprep.subr.bf16.mxu0 0
      %7104 = vmatpush1.bf16.msra.mxu0 0
      %7105 = vmatprep.subr.bf16.mxu0 0
      %7106 = vmatpush1.bf16.msra.mxu0 0
      %7107 = vmatprep.subr.bf16.mxu0 0
      %7108 = vmatpush1.bf16.msra.mxu0 0
      %7109 = vmatprep.mubr.bf16.mxu0 0
      %7110 = vmatmul.mubr.bf16.gmra.mrb[0].mxu0 %v6987
      %v7111 = vpop.f32.mrb[0].mxu0
      %v7112 = vadd.f32 %v6783, %v7111
      %v7113 = vpop.f32.mrb[0].mxu0
      %v7114 = vadd.f32 %v6785, %v7113
      %v7115 = vpop.f32.mrb[0].mxu0
      %v7116 = vadd.f32 %v6787, %v7115
      %v7117 = vpop.f32.mrb[0].mxu0
      %v7118 = vadd.f32 %v6789, %v7117
      %7119 = vmatprep.mubr.bf16.mxu0 0
      %7120 = vmatmul.mubr.bf16.gmra.mrb[0].mxu0 %v6988
      %v7121 = vpop.f32.mrb[0].mxu0
      %v7122 = vadd.f32 %v6793, %v7121
      %v7123 = vpop.f32.mrb[0].mxu0
      %v7124 = vadd.f32 %v6795, %v7123
      %v7125 = vpop.f32.mrb[0].mxu0
      %v7126 = vadd.f32 %v6797, %v7125
      %v7127 = vpop.f32.mrb[0].mxu0
      %v7128 = vadd.f32 %v6799, %v7127
      %7129 = vmatprep.mubr.bf16.mxu0 0
      %7130 = vmatmul.mubr.bf16.gmra.mrb[0].mxu0 %v6989
      %v7131 = vpop.f32.mrb[0].mxu0
      %v7132 = vadd.f32 %v6803, %v7131
      %v7133 = vpop.f32.mrb[0].mxu0
      %v7134 = vadd.f32 %v6805, %v7133
      %v7135 = vpop.f32.mrb[0].mxu0
      %v7136 = vadd.f32 %v6807, %v7135
      %v7137 = vpop.f32.mrb[0].mxu0
      %v7138 = vadd.f32 %v6809, %v7137
      %7139 = vmatprep.mubr.bf16.mxu0 0
      %7140 = vmatmul.mubr.bf16.gmra.mrb[0].mxu0 %v6990
      %v7141 = vpop.f32.mrb[0].mxu0
      %v7142 = vadd.f32 %v6813, %v7141
      %v7143 = vpop.f32.mrb[0].mxu0
      %v7144 = vadd.f32 %v6815, %v7143
      %v7145 = vpop.f32.mrb[0].mxu0
      %v7146 = vadd.f32 %v6817, %v7145
      %v7147 = vpop.f32.mrb[0].mxu0
      %v7148 = vadd.f32 %v6819, %v7147
      %7149 = vmatprep.mubr.bf16.mxu0 0
      %7150 = vmatmul.mubr.bf16.gmra.mrb[0].mxu0 %v6991
      %v7151 = vpop.f32.mrb[0].mxu0
      %v7152 = vadd.f32 %v6823, %v7151
      %v7153 = vpop.f32.mrb[0].mxu0
      %v7154 = vadd.f32 %v6825, %v7153
      %v7155 = vpop.f32.mrb[0].mxu0
      %v7156 = vadd.f32 %v6827, %v7155
      %v7157 = vpop.f32.mrb[0].mxu0
      %v7158 = vadd.f32 %v6829, %v7157
      %7159 = vdwg.mxu0
      %s7160 = scalar_lea.vmem %s3, 256
      %v7161 = vld [vmem:[%s7160] sm:$0xff]
      %v7162 = vld [vmem:[%s7160 + $0x8] sm:$0xff]
      %v7163 = vld [vmem:[%s7160 + $0x10] sm:$0xff]
      %v7164 = vld [vmem:[%s7160 + $0x18] sm:$0xff]
      %v7165 = vld [vmem:[%s7160 + $0x20] sm:$0xff]
      %v7166 = vld [vmem:[%s7160 + $0x28] sm:$0xff]
      %v7167 = vld [vmem:[%s7160 + $0x30] sm:$0xff]
      %v7168 = vld [vmem:[%s7160 + $0x38] sm:$0xff]
      %v7169 = vld [vmem:[%s7160 + $0x40] sm:$0xff]
      %v7170 = vld [vmem:[%s7160 + $0x48] sm:$0xff]
      %v7171 = vld [vmem:[%s7160 + $0x50] sm:$0xff]
      %v7172 = vld [vmem:[%s7160 + $0x58] sm:$0xff]
      %v7173 = vld [vmem:[%s7160 + $0x60] sm:$0xff]
      %v7174 = vld [vmem:[%s7160 + $0x68] sm:$0xff]
      %v7175 = vld [vmem:[%s7160 + $0x70] sm:$0xff]
      %v7176 = vld [vmem:[%s7160 + $0x78] sm:$0xff]
      %v7185 = vunpack.c.l.b16 %v6217
      %v7186 = vunpack.c.l.b16 %v6231
      %v7187 = vunpack.c.l.b16 %v6245
      %v7188 = vunpack.c.l.b16 %v6259
      %v7189 = vunpack.c.l.b16 %v6273
      %v7190 = vunpack.c.l.b16 %v6287
      %v7191 = vunpack.c.l.b16 %v6301
      %v7192 = vunpack.c.l.b16 %v6315
      %v7193 = vrot.slane %v6433, 7
      %v7194 = vsel %vm6512, %v7193, %v6432
      %v7195 = vrot.slane %v6434, 6
      %v7196 = vsel %vm6515, %v7195, %v7194
      %v7197 = vrot.slane %v6435, 5
      %v7198 = vsel %vm6518, %v7197, %v7196
      %v7199 = vrot.slane %v6436, 4
      %v7200 = vsel %vm6521, %v7199, %v7198
      %v7201 = vrot.slane %v6437, 3
      %v7202 = vsel %vm6524, %v7201, %v7200
      %v7203 = vrot.slane %v6438, 2
      %v7204 = vsel %vm6527, %v7203, %v7202
      %v7205 = vrot.slane %v6439, 1
      %v7206 = vsel %vm6530, %v7205, %v7204
      %v7207 = vrot.slane %v7185, 7
      %v7208 = vsel %vm6512, %v7207, %v6440
      %v7209 = vrot.slane %v6442, 6
      %v7210 = vsel %vm6515, %v7209, %v7208
      %v7211 = vrot.slane %v6443, 5
      %v7212 = vsel %vm6518, %v7211, %v7210
      %v7213 = vrot.slane %v6444, 4
      %v7214 = vsel %vm6521, %v7213, %v7212
      %v7215 = vrot.slane %v6445, 3
      %v7216 = vsel %vm6524, %v7215, %v7214
      %v7217 = vrot.slane %v6446, 2
      %v7218 = vsel %vm6527, %v7217, %v7216
      %v7219 = vrot.slane %v6447, 1
      %v7220 = vsel %vm6530, %v7219, %v7218
      %v7221 = vrot.slane %v6449, 7
      %v7222 = vsel %vm6512, %v7221, %v6448
      %v7223 = vrot.slane %v6450, 6
      %v7224 = vsel %vm6515, %v7223, %v7222
      %v7225 = vrot.slane %v7186, 5
      %v7226 = vsel %vm6518, %v7225, %v7224
      %v7227 = vrot.slane %v6452, 4
      %v7228 = vsel %vm6521, %v7227, %v7226
      %v7229 = vrot.slane %v6453, 3
      %v7230 = vsel %vm6524, %v7229, %v7228
      %v7231 = vrot.slane %v6454, 2
      %v7232 = vsel %vm6527, %v7231, %v7230
      %v7233 = vrot.slane %v6455, 1
      %v7234 = vsel %vm6530, %v7233, %v7232
      %v7235 = vrot.slane %v6457, 7
      %v7236 = vsel %vm6512, %v7235, %v6456
      %v7237 = vrot.slane %v6458, 6
      %v7238 = vsel %vm6515, %v7237, %v7236
      %v7239 = vrot.slane %v6459, 5
      %v7240 = vsel %vm6518, %v7239, %v7238
      %v7241 = vrot.slane %v6460, 4
      %v7242 = vsel %vm6521, %v7241, %v7240
      %v7243 = vrot.slane %v7187, 3
      %v7244 = vsel %vm6524, %v7243, %v7242
      %v7245 = vrot.slane %v6462, 2
      %v7246 = vsel %vm6527, %v7245, %v7244
      %v7247 = vrot.slane %v6463, 1
      %v7248 = vsel %vm6530, %v7247, %v7246
      %v7249 = vrot.slane %v6465, 7
      %v7250 = vsel %vm6512, %v7249, %v6464
      %v7251 = vrot.slane %v6466, 6
      %v7252 = vsel %vm6515, %v7251, %v7250
      %v7253 = vrot.slane %v6467, 5
      %v7254 = vsel %vm6518, %v7253, %v7252
      %v7255 = vrot.slane %v6468, 4
      %v7256 = vsel %vm6521, %v7255, %v7254
      %v7257 = vrot.slane %v6469, 3
      %v7258 = vsel %vm6524, %v7257, %v7256
      %v7259 = vrot.slane %v6470, 2
      %v7260 = vsel %vm6527, %v7259, %v7258
      %v7261 = vrot.slane %v7188, 1
      %v7262 = vsel %vm6530, %v7261, %v7260
      %v7263 = vrot.slane %v6473, 7
      %v7264 = vsel %vm6512, %v7263, %v6472
      %v7265 = vrot.slane %v6474, 6
      %v7266 = vsel %vm6515, %v7265, %v7264
      %v7267 = vrot.slane %v6475, 5
      %v7268 = vsel %vm6518, %v7267, %v7266
      %v7269 = vrot.slane %v6476, 4
      %v7270 = vsel %vm6521, %v7269, %v7268
      %v7271 = vrot.slane %v6477, 3
      %v7272 = vsel %vm6524, %v7271, %v7270
      %v7273 = vrot.slane %v6478, 2
      %v7274 = vsel %vm6527, %v7273, %v7272
      %v7275 = vrot.slane %v6479, 1
      %v7276 = vsel %vm6530, %v7275, %v7274
      %v7277 = vrot.slane %v7189, 7
      %v7278 = vsel %vm6512, %v7277, %v6480
      %v7279 = vrot.slane %v6482, 6
      %v7280 = vsel %vm6515, %v7279, %v7278
      %v7281 = vrot.slane %v6483, 5
      %v7282 = vsel %vm6518, %v7281, %v7280
      %v7283 = vrot.slane %v6484, 4
      %v7284 = vsel %vm6521, %v7283, %v7282
      %v7285 = vrot.slane %v6485, 3
      %v7286 = vsel %vm6524, %v7285, %v7284
      %v7287 = vrot.slane %v6486, 2
      %v7288 = vsel %vm6527, %v7287, %v7286
      %v7289 = vrot.slane %v6487, 1
      %v7290 = vsel %vm6530, %v7289, %v7288
      %v7291 = vrot.slane %v6489, 7
      %v7292 = vsel %vm6512, %v7291, %v6488
      %v7293 = vrot.slane %v6490, 6
      %v7294 = vsel %vm6515, %v7293, %v7292
      %v7295 = vrot.slane %v7190, 5
      %v7296 = vsel %vm6518, %v7295, %v7294
      %v7297 = vrot.slane %v6492, 4
      %v7298 = vsel %vm6521, %v7297, %v7296
      %v7299 = vrot.slane %v6493, 3
      %v7300 = vsel %vm6524, %v7299, %v7298
      %v7301 = vrot.slane %v6494, 2
      %v7302 = vsel %vm6527, %v7301, %v7300
      %v7303 = vrot.slane %v6495, 1
      %v7304 = vsel %vm6530, %v7303, %v7302
      %v7305 = vrot.slane %v6497, 7
      %v7306 = vsel %vm6512, %v7305, %v6496
      %v7307 = vrot.slane %v6498, 6
      %v7308 = vsel %vm6515, %v7307, %v7306
      %v7309 = vrot.slane %v6499, 5
      %v7310 = vsel %vm6518, %v7309, %v7308
      %v7311 = vrot.slane %v6500, 4
      %v7312 = vsel %vm6521, %v7311, %v7310
      %v7313 = vrot.slane %v7191, 3
      %v7314 = vsel %vm6524, %v7313, %v7312
      %v7315 = vrot.slane %v6502, 2
      %v7316 = vsel %vm6527, %v7315, %v7314
      %v7317 = vrot.slane %v6503, 1
      %v7318 = vsel %vm6530, %v7317, %v7316
      %v7319 = vrot.slane %v6505, 7
      %v7320 = vsel %vm6512, %v7319, %v6504
      %v7321 = vrot.slane %v6506, 6
      %v7322 = vsel %vm6515, %v7321, %v7320
      %v7323 = vrot.slane %v6507, 5
      %v7324 = vsel %vm6518, %v7323, %v7322
      %v7325 = vrot.slane %v6508, 4
      %v7326 = vsel %vm6521, %v7325, %v7324
      %v7327 = vrot.slane %v6509, 3
      %v7328 = vsel %vm6524, %v7327, %v7326
      %v7329 = vrot.slane %v6510, 2
      %v7330 = vsel %vm6527, %v7329, %v7328
      %v7331 = vrot.slane %v7192, 1
      %v7332 = vsel %vm6530, %v7331, %v7330
      %v7333 = vpack.c.b16 %v7220, %v7206
      %v7334 = vpack.c.b16 %v7248, %v7234
      %v7335 = vpack.c.b16 %v7276, %v7262
      %v7336 = vpack.c.b16 %v7304, %v7290
      %v7337 = vpack.c.b16 %v7332, %v7318
      %v7359 = vunpack.c.l.b16 %v7161
      %v7360 = vunpack.c.h.b16 %v7161
      %v7361 = vunpack.c.l.b16 %v7162
      %v7362 = vunpack.c.h.b16 %v7162
      %v7363 = vunpack.c.l.b16 %v7163
      %v7364 = vunpack.c.h.b16 %v7163
      %v7365 = vunpack.c.l.b16 %v7164
      %v7366 = vunpack.c.h.b16 %v7164
      %v7367 = vunpack.c.l.b16 %v7165
      %v7368 = vunpack.c.h.b16 %v7165
      %v7369 = vunpack.c.l.b16 %v7166
      %v7370 = vunpack.c.h.b16 %v7166
      %v7371 = vunpack.c.l.b16 %v7167
      %v7372 = vunpack.c.h.b16 %v7167
      %v7373 = vunpack.c.l.b16 %v7168
      %v7374 = vunpack.c.h.b16 %v7168
      %v7375 = vunpack.c.l.b16 %v7169
      %v7376 = vunpack.c.h.b16 %v7169
      %v7377 = vunpack.c.l.b16 %v7170
      %v7378 = vunpack.c.h.b16 %v7170
      %v7379 = vunpack.c.l.b16 %v7171
      %v7380 = vunpack.c.h.b16 %v7171
      %v7381 = vunpack.c.l.b16 %v7172
      %v7382 = vunpack.c.h.b16 %v7172
      %v7383 = vunpack.c.l.b16 %v7173
      %v7384 = vunpack.c.h.b16 %v7173
      %v7385 = vunpack.c.l.b16 %v7174
      %v7386 = vunpack.c.h.b16 %v7174
      %v7387 = vunpack.c.l.b16 %v7175
      %v7388 = vunpack.c.h.b16 %v7175
      %v7389 = vunpack.c.l.b16 %v7176
      %v7390 = vunpack.c.h.b16 %v7176
      %v7391 = vpack.c.b16 %v7361, %v7359
      %v7392 = vpack.c.b16 %v7362, %v7360
      %v7393 = vpack.c.b16 %v7365, %v7363
      %v7394 = vpack.c.b16 %v7366, %v7364
      %v7395 = vpack.c.b16 %v7369, %v7367
      %v7396 = vpack.c.b16 %v7370, %v7368
      %v7397 = vpack.c.b16 %v7373, %v7371
      %v7398 = vpack.c.b16 %v7374, %v7372
      %v7399 = vpack.c.b16 %v7377, %v7375
      %v7400 = vpack.c.b16 %v7378, %v7376
      %v7401 = vpack.c.b16 %v7381, %v7379
      %v7402 = vpack.c.b16 %v7382, %v7380
      %v7403 = vpack.c.b16 %v7385, %v7383
      %v7404 = vpack.c.b16 %v7386, %v7384
      %v7405 = vpack.c.b16 %v7389, %v7387
      %v7406 = vpack.c.b16 %v7390, %v7388
      %7423 = vmatprep.subr.bf16.mxu0 %v7392
      %7424 = vmatpush1.bf16.msra.mxu0 %v7391
      %7425 = vmatprep.subr.bf16.mxu0 %v7394
      %7426 = vmatpush1.bf16.msra.mxu0 %v7393
      %7427 = vmatprep.subr.bf16.mxu0 %v7396
      %7428 = vmatpush1.bf16.msra.mxu0 %v7395
      %7429 = vmatprep.subr.bf16.mxu0 %v7398
      %7430 = vmatpush1.bf16.msra.mxu0 %v7397
      %7431 = vmatprep.subr.bf16.mxu0 %v7400
      %7432 = vmatpush1.bf16.msra.mxu0 %v7399
      %7433 = vmatprep.subr.bf16.mxu0 %v7402
      %7434 = vmatpush1.bf16.msra.mxu0 %v7401
      %7435 = vmatprep.subr.bf16.mxu0 %v7404
      %7436 = vmatpush1.bf16.msra.mxu0 %v7403
      %7437 = vmatprep.subr.bf16.mxu0 %v7406
      %7438 = vmatpush1.bf16.msra.mxu0 %v7405
      %7439 = vmatprep.subr.bf16.mxu0 0
      %7440 = vmatpush1.bf16.msra.mxu0 0
      %7441 = vmatprep.subr.bf16.mxu0 0
      %7442 = vmatpush1.bf16.msra.mxu0 0
      %7443 = vmatprep.subr.bf16.mxu0 0
      %7444 = vmatpush1.bf16.msra.mxu0 0
      %7445 = vmatprep.subr.bf16.mxu0 0
      %7446 = vmatpush1.bf16.msra.mxu0 0
      %7447 = vmatprep.subr.bf16.mxu0 0
      %7448 = vmatpush1.bf16.msra.mxu0 0
      %7449 = vmatprep.subr.bf16.mxu0 0
      %7450 = vmatpush1.bf16.msra.mxu0 0
      %7451 = vmatprep.subr.bf16.mxu0 0
      %7452 = vmatpush1.bf16.msra.mxu0 0
      %7453 = vmatprep.subr.bf16.mxu0 0
      %7454 = vmatpush1.bf16.msra.mxu0 0
      %7455 = vmatprep.mubr.bf16.mxu0 0
      %7456 = vmatmul.mubr.bf16.gmra.mrb[0].mxu0 %v7333
      %v7457 = vpop.f32.mrb[0].mxu0
      %v7458 = vadd.f32 0.0, %v7457
      %v7459 = vpop.f32.mrb[0].mxu0
      %v7460 = vadd.f32 0.0, %v7459
      %v7461 = vpop.f32.mrb[0].mxu0
      %v7462 = vadd.f32 0.0, %v7461
      %v7463 = vpop.f32.mrb[0].mxu0
      %v7464 = vadd.f32 0.0, %v7463
      %7465 = vmatprep.mubr.bf16.mxu0 0
      %7466 = vmatmul.mubr.bf16.gmra.mrb[0].mxu0 %v7334
      %v7467 = vpop.f32.mrb[0].mxu0
      %v7468 = vadd.f32 0.0, %v7467
      %v7469 = vpop.f32.mrb[0].mxu0
      %v7470 = vadd.f32 0.0, %v7469
      %v7471 = vpop.f32.mrb[0].mxu0
      %v7472 = vadd.f32 0.0, %v7471
      %v7473 = vpop.f32.mrb[0].mxu0
      %v7474 = vadd.f32 0.0, %v7473
      %7475 = vmatprep.mubr.bf16.mxu0 0
      %7476 = vmatmul.mubr.bf16.gmra.mrb[0].mxu0 %v7335
      %v7477 = vpop.f32.mrb[0].mxu0
      %v7478 = vadd.f32 0.0, %v7477
      %v7479 = vpop.f32.mrb[0].mxu0
      %v7480 = vadd.f32 0.0, %v7479
      %v7481 = vpop.f32.mrb[0].mxu0
      %v7482 = vadd.f32 0.0, %v7481
      %v7483 = vpop.f32.mrb[0].mxu0
      %v7484 = vadd.f32 0.0, %v7483
      %7485 = vmatprep.mubr.bf16.mxu0 0
      %7486 = vmatmul.mubr.bf16.gmra.mrb[0].mxu0 %v7336
      %v7487 = vpop.f32.mrb[0].mxu0
      %v7488 = vadd.f32 0.0, %v7487
      %v7489 = vpop.f32.mrb[0].mxu0
      %v7490 = vadd.f32 0.0, %v7489
      %v7491 = vpop.f32.mrb[0].mxu0
      %v7492 = vadd.f32 0.0, %v7491
      %v7493 = vpop.f32.mrb[0].mxu0
      %v7494 = vadd.f32 0.0, %v7493
      %7495 = vmatprep.mubr.bf16.mxu0 0
      %7496 = vmatmul.mubr.bf16.gmra.mrb[0].mxu0 %v7337
      %v7497 = vpop.f32.mrb[0].mxu0
      %v7498 = vadd.f32 0.0, %v7497
      %v7499 = vpop.f32.mrb[0].mxu0
      %v7500 = vadd.f32 0.0, %v7499
      %v7501 = vpop.f32.mrb[0].mxu0
      %v7502 = vadd.f32 0.0, %v7501
      %v7503 = vpop.f32.mrb[0].mxu0
      %v7504 = vadd.f32 0.0, %v7503
      %7505 = vdwg.mxu0
      %v7506 = vadd.f32 %v7112, %v7458
      %v7507 = vadd.f32 %v7114, %v7460
      %v7508 = vadd.f32 %v7116, %v7462
      %v7509 = vadd.f32 %v7118, %v7464
      %v7510 = vadd.f32 %v7122, %v7468
      %v7511 = vadd.f32 %v7124, %v7470
      %v7512 = vadd.f32 %v7126, %v7472
      %v7513 = vadd.f32 %v7128, %v7474
      %v7514 = vadd.f32 %v7132, %v7478
      %v7515 = vadd.f32 %v7134, %v7480
      %v7516 = vadd.f32 %v7136, %v7482
      %v7517 = vadd.f32 %v7138, %v7484
      %v7518 = vadd.f32 %v7142, %v7488
      %v7519 = vadd.f32 %v7144, %v7490
      %v7520 = vadd.f32 %v7146, %v7492
      %v7521 = vadd.f32 %v7148, %v7494
      %v7522 = vadd.f32 %v7152, %v7498
      %v7523 = vadd.f32 %v7154, %v7500
      %v7524 = vadd.f32 %v7156, %v7502
      %v7525 = vadd.f32 %v7158, %v7504
      %s7526 = scalar_lea.vmem %s3, 384
      %v7527 = vld [vmem:[%s7526] sm:$0xff]
      %v7528 = vld [vmem:[%s7526 + $0x8] sm:$0xff]
      %v7529 = vld [vmem:[%s7526 + $0x10] sm:$0xff]
      %v7530 = vld [vmem:[%s7526 + $0x18] sm:$0xff]
      %v7531 = vld [vmem:[%s7526 + $0x20] sm:$0xff]
      %v7532 = vld [vmem:[%s7526 + $0x28] sm:$0xff]
      %v7533 = vld [vmem:[%s7526 + $0x30] sm:$0xff]
      %v7534 = vld [vmem:[%s7526 + $0x38] sm:$0xff]
      %v7535 = vld [vmem:[%s7526 + $0x40] sm:$0xff]
      %v7536 = vld [vmem:[%s7526 + $0x48] sm:$0xff]
      %v7537 = vld [vmem:[%s7526 + $0x50] sm:$0xff]
      %v7538 = vld [vmem:[%s7526 + $0x58] sm:$0xff]
      %v7539 = vld [vmem:[%s7526 + $0x60] sm:$0xff]
      %v7540 = vld [vmem:[%s7526 + $0x68] sm:$0xff]
      %v7541 = vld [vmem:[%s7526 + $0x70] sm:$0xff]
      %v7542 = vld [vmem:[%s7526 + $0x78] sm:$0xff]
      %v7551 = vunpack.c.l.b16 %v6218
      %v7552 = vunpack.c.l.b16 %v6232
      %v7553 = vunpack.c.l.b16 %v6246
      %v7554 = vunpack.c.l.b16 %v6260
      %v7555 = vunpack.c.l.b16 %v6274
      %v7556 = vunpack.c.l.b16 %v6288
      %v7557 = vunpack.c.l.b16 %v6302
      %v7558 = vunpack.c.l.b16 %v6316
      %v7559 = vrot.slane %v6434, 7
      %v7560 = vsel %vm6512, %v7559, %v6433
      %v7561 = vrot.slane %v6435, 6
      %v7562 = vsel %vm6515, %v7561, %v7560
      %v7563 = vrot.slane %v6436, 5
      %v7564 = vsel %vm6518, %v7563, %v7562
      %v7565 = vrot.slane %v6437, 4
      %v7566 = vsel %vm6521, %v7565, %v7564
      %v7567 = vrot.slane %v6438, 3
      %v7568 = vsel %vm6524, %v7567, %v7566
      %v7569 = vrot.slane %v6439, 2
      %v7570 = vsel %vm6527, %v7569, %v7568
      %v7571 = vrot.slane %v6440, 1
      %v7572 = vsel %vm6530, %v7571, %v7570
      %v7573 = vrot.slane %v7551, 7
      %v7574 = vsel %vm6512, %v7573, %v7185
      %v7575 = vrot.slane %v6443, 6
      %v7576 = vsel %vm6515, %v7575, %v7574
      %v7577 = vrot.slane %v6444, 5
      %v7578 = vsel %vm6518, %v7577, %v7576
      %v7579 = vrot.slane %v6445, 4
      %v7580 = vsel %vm6521, %v7579, %v7578
      %v7581 = vrot.slane %v6446, 3
      %v7582 = vsel %vm6524, %v7581, %v7580
      %v7583 = vrot.slane %v6447, 2
      %v7584 = vsel %vm6527, %v7583, %v7582
      %v7585 = vrot.slane %v6448, 1
      %v7586 = vsel %vm6530, %v7585, %v7584
      %v7587 = vrot.slane %v6450, 7
      %v7588 = vsel %vm6512, %v7587, %v6449
      %v7589 = vrot.slane %v7186, 6
      %v7590 = vsel %vm6515, %v7589, %v7588
      %v7591 = vrot.slane %v7552, 5
      %v7592 = vsel %vm6518, %v7591, %v7590
      %v7593 = vrot.slane %v6453, 4
      %v7594 = vsel %vm6521, %v7593, %v7592
      %v7595 = vrot.slane %v6454, 3
      %v7596 = vsel %vm6524, %v7595, %v7594
      %v7597 = vrot.slane %v6455, 2
      %v7598 = vsel %vm6527, %v7597, %v7596
      %v7599 = vrot.slane %v6456, 1
      %v7600 = vsel %vm6530, %v7599, %v7598
      %v7601 = vrot.slane %v6458, 7
      %v7602 = vsel %vm6512, %v7601, %v6457
      %v7603 = vrot.slane %v6459, 6
      %v7604 = vsel %vm6515, %v7603, %v7602
      %v7605 = vrot.slane %v6460, 5
      %v7606 = vsel %vm6518, %v7605, %v7604
      %v7607 = vrot.slane %v7187, 4
      %v7608 = vsel %vm6521, %v7607, %v7606
      %v7609 = vrot.slane %v7553, 3
      %v7610 = vsel %vm6524, %v7609, %v7608
      %v7611 = vrot.slane %v6463, 2
      %v7612 = vsel %vm6527, %v7611, %v7610
      %v7613 = vrot.slane %v6464, 1
      %v7614 = vsel %vm6530, %v7613, %v7612
      %v7615 = vrot.slane %v6466, 7
      %v7616 = vsel %vm6512, %v7615, %v6465
      %v7617 = vrot.slane %v6467, 6
      %v7618 = vsel %vm6515, %v7617, %v7616
      %v7619 = vrot.slane %v6468, 5
      %v7620 = vsel %vm6518, %v7619, %v7618
      %v7621 = vrot.slane %v6469, 4
      %v7622 = vsel %vm6521, %v7621, %v7620
      %v7623 = vrot.slane %v6470, 3
      %v7624 = vsel %vm6524, %v7623, %v7622
      %v7625 = vrot.slane %v7188, 2
      %v7626 = vsel %vm6527, %v7625, %v7624
      %v7627 = vrot.slane %v7554, 1
      %v7628 = vsel %vm6530, %v7627, %v7626
      %v7629 = vrot.slane %v6474, 7
      %v7630 = vsel %vm6512, %v7629, %v6473
      %v7631 = vrot.slane %v6475, 6
      %v7632 = vsel %vm6515, %v7631, %v7630
      %v7633 = vrot.slane %v6476, 5
      %v7634 = vsel %vm6518, %v7633, %v7632
      %v7635 = vrot.slane %v6477, 4
      %v7636 = vsel %vm6521, %v7635, %v7634
      %v7637 = vrot.slane %v6478, 3
      %v7638 = vsel %vm6524, %v7637, %v7636
      %v7639 = vrot.slane %v6479, 2
      %v7640 = vsel %vm6527, %v7639, %v7638
      %v7641 = vrot.slane %v6480, 1
      %v7642 = vsel %vm6530, %v7641, %v7640
      %v7643 = vrot.slane %v7555, 7
      %v7644 = vsel %vm6512, %v7643, %v7189
      %v7645 = vrot.slane %v6483, 6
      %v7646 = vsel %vm6515, %v7645, %v7644
      %v7647 = vrot.slane %v6484, 5
      %v7648 = vsel %vm6518, %v7647, %v7646
      %v7649 = vrot.slane %v6485, 4
      %v7650 = vsel %vm6521, %v7649, %v7648
      %v7651 = vrot.slane %v6486, 3
      %v7652 = vsel %vm6524, %v7651, %v7650
      %v7653 = vrot.slane %v6487, 2
      %v7654 = vsel %vm6527, %v7653, %v7652
      %v7655 = vrot.slane %v6488, 1
      %v7656 = vsel %vm6530, %v7655, %v7654
      %v7657 = vrot.slane %v6490, 7
      %v7658 = vsel %vm6512, %v7657, %v6489
      %v7659 = vrot.slane %v7190, 6
      %v7660 = vsel %vm6515, %v7659, %v7658
      %v7661 = vrot.slane %v7556, 5
      %v7662 = vsel %vm6518, %v7661, %v7660
      %v7663 = vrot.slane %v6493, 4
      %v7664 = vsel %vm6521, %v7663, %v7662
      %v7665 = vrot.slane %v6494, 3
      %v7666 = vsel %vm6524, %v7665, %v7664
      %v7667 = vrot.slane %v6495, 2
      %v7668 = vsel %vm6527, %v7667, %v7666
      %v7669 = vrot.slane %v6496, 1
      %v7670 = vsel %vm6530, %v7669, %v7668
      %v7671 = vrot.slane %v6498, 7
      %v7672 = vsel %vm6512, %v7671, %v6497
      %v7673 = vrot.slane %v6499, 6
      %v7674 = vsel %vm6515, %v7673, %v7672
      %v7675 = vrot.slane %v6500, 5
      %v7676 = vsel %vm6518, %v7675, %v7674
      %v7677 = vrot.slane %v7191, 4
      %v7678 = vsel %vm6521, %v7677, %v7676
      %v7679 = vrot.slane %v7557, 3
      %v7680 = vsel %vm6524, %v7679, %v7678
      %v7681 = vrot.slane %v6503, 2
      %v7682 = vsel %vm6527, %v7681, %v7680
      %v7683 = vrot.slane %v6504, 1
      %v7684 = vsel %vm6530, %v7683, %v7682
      %v7685 = vrot.slane %v6506, 7
      %v7686 = vsel %vm6512, %v7685, %v6505
      %v7687 = vrot.slane %v6507, 6
      %v7688 = vsel %vm6515, %v7687, %v7686
      %v7689 = vrot.slane %v6508, 5
      %v7690 = vsel %vm6518, %v7689, %v7688
      %v7691 = vrot.slane %v6509, 4
      %v7692 = vsel %vm6521, %v7691, %v7690
      %v7693 = vrot.slane %v6510, 3
      %v7694 = vsel %vm6524, %v7693, %v7692
      %v7695 = vrot.slane %v7192, 2
      %v7696 = vsel %vm6527, %v7695, %v7694
      %v7697 = vrot.slane %v7558, 1
      %v7698 = vsel %vm6530, %v7697, %v7696
      %v7699 = vpack.c.b16 %v7586, %v7572
      %v7700 = vpack.c.b16 %v7614, %v7600
      %v7701 = vpack.c.b16 %v7642, %v7628
      %v7702 = vpack.c.b16 %v7670, %v7656
      %v7703 = vpack.c.b16 %v7698, %v7684
      %v7725 = vunpack.c.l.b16 %v7527
      %v7726 = vunpack.c.h.b16 %v7527
      %v7727 = vunpack.c.l.b16 %v7528
      %v7728 = vunpack.c.h.b16 %v7528
      %v7729 = vunpack.c.l.b16 %v7529
      %v7730 = vunpack.c.h.b16 %v7529
      %v7731 = vunpack.c.l.b16 %v7530
      %v7732 = vunpack.c.h.b16 %v7530
      %v7733 = vunpack.c.l.b16 %v7531
      %v7734 = vunpack.c.h.b16 %v7531
      %v7735 = vunpack.c.l.b16 %v7532
      %v7736 = vunpack.c.h.b16 %v7532
      %v7737 = vunpack.c.l.b16 %v7533
      %v7738 = vunpack.c.h.b16 %v7533
      %v7739 = vunpack.c.l.b16 %v7534
      %v7740 = vunpack.c.h.b16 %v7534
      %v7741 = vunpack.c.l.b16 %v7535
      %v7742 = vunpack.c.h.b16 %v7535
      %v7743 = vunpack.c.l.b16 %v7536
      %v7744 = vunpack.c.h.b16 %v7536
      %v7745 = vunpack.c.l.b16 %v7537
      %v7746 = vunpack.c.h.b16 %v7537
      %v7747 = vunpack.c.l.b16 %v7538
      %v7748 = vunpack.c.h.b16 %v7538
      %v7749 = vunpack.c.l.b16 %v7539
      %v7750 = vunpack.c.h.b16 %v7539
      %v7751 = vunpack.c.l.b16 %v7540
      %v7752 = vunpack.c.h.b16 %v7540
      %v7753 = vunpack.c.l.b16 %v7541
      %v7754 = vunpack.c.h.b16 %v7541
      %v7755 = vunpack.c.l.b16 %v7542
      %v7756 = vunpack.c.h.b16 %v7542
      %v7757 = vpack.c.b16 %v7727, %v7725
      %v7758 = vpack.c.b16 %v7728, %v7726
      %v7759 = vpack.c.b16 %v7731, %v7729
      %v7760 = vpack.c.b16 %v7732, %v7730
      %v7761 = vpack.c.b16 %v7735, %v7733
      %v7762 = vpack.c.b16 %v7736, %v7734
      %v7763 = vpack.c.b16 %v7739, %v7737
      %v7764 = vpack.c.b16 %v7740, %v7738
      %v7765 = vpack.c.b16 %v7743, %v7741
      %v7766 = vpack.c.b16 %v7744, %v7742
      %v7767 = vpack.c.b16 %v7747, %v7745
      %v7768 = vpack.c.b16 %v7748, %v7746
      %v7769 = vpack.c.b16 %v7751, %v7749
      %v7770 = vpack.c.b16 %v7752, %v7750
      %v7771 = vpack.c.b16 %v7755, %v7753
      %v7772 = vpack.c.b16 %v7756, %v7754
      %7789 = vmatprep.subr.bf16.mxu0 %v7758
      %7790 = vmatpush1.bf16.msra.mxu0 %v7757
      %7791 = vmatprep.subr.bf16.mxu0 %v7760
      %7792 = vmatpush1.bf16.msra.mxu0 %v7759
      %7793 = vmatprep.subr.bf16.mxu0 %v7762
      %7794 = vmatpush1.bf16.msra.mxu0 %v7761
      %7795 = vmatprep.subr.bf16.mxu0 %v7764
      %7796 = vmatpush1.bf16.msra.mxu0 %v7763
      %7797 = vmatprep.subr.bf16.mxu0 %v7766
      %7798 = vmatpush1.bf16.msra.mxu0 %v7765
      %7799 = vmatprep.subr.bf16.mxu0 %v7768
      %7800 = vmatpush1.bf16.msra.mxu0 %v7767
      %7801 = vmatprep.subr.bf16.mxu0 %v7770
      %7802 = vmatpush1.bf16.msra.mxu0 %v7769
      %7803 = vmatprep.subr.bf16.mxu0 %v7772
      %7804 = vmatpush1.bf16.msra.mxu0 %v7771
      %7805 = vmatprep.subr.bf16.mxu0 0
      %7806 = vmatpush1.bf16.msra.mxu0 0
      %7807 = vmatprep.subr.bf16.mxu0 0
      %7808 = vmatpush1.bf16.msra.mxu0 0
      %7809 = vmatprep.subr.bf16.mxu0 0
      %7810 = vmatpush1.bf16.msra.mxu0 0
      %7811 = vmatprep.subr.bf16.mxu0 0
      %7812 = vmatpush1.bf16.msra.mxu0 0
      %7813 = vmatprep.subr.bf16.mxu0 0
      %7814 = vmatpush1.bf16.msra.mxu0 0
      %7815 = vmatprep.subr.bf16.mxu0 0
      %7816 = vmatpush1.bf16.msra.mxu0 0
      %7817 = vmatprep.subr.bf16.mxu0 0
      %7818 = vmatpush1.bf16.msra.mxu0 0
      %7819 = vmatprep.subr.bf16.mxu0 0
      %7820 = vmatpush1.bf16.msra.mxu0 0
      %7821 = vmatprep.mubr.bf16.mxu0 0
      %7822 = vmatmul.mubr.bf16.gmra.mrb[0].mxu0 %v7699
      %v7823 = vpop.f32.mrb[0].mxu0
      %v7824 = vadd.f32 0.0, %v7823
      %v7825 = vpop.f32.mrb[0].mxu0
      %v7826 = vadd.f32 0.0, %v7825
      %v7827 = vpop.f32.mrb[0].mxu0
      %v7828 = vadd.f32 0.0, %v7827
      %v7829 = vpop.f32.mrb[0].mxu0
      %v7830 = vadd.f32 0.0, %v7829
      %7831 = vmatprep.mubr.bf16.mxu0 0
      %7832 = vmatmul.mubr.bf16.gmra.mrb[0].mxu0 %v7700
      %v7833 = vpop.f32.mrb[0].mxu0
      %v7834 = vadd.f32 0.0, %v7833
      %v7835 = vpop.f32.mrb[0].mxu0
      %v7836 = vadd.f32 0.0, %v7835
      %v7837 = vpop.f32.mrb[0].mxu0
      %v7838 = vadd.f32 0.0, %v7837
      %v7839 = vpop.f32.mrb[0].mxu0
      %v7840 = vadd.f32 0.0, %v7839
      %7841 = vmatprep.mubr.bf16.mxu0 0
      %7842 = vmatmul.mubr.bf16.gmra.mrb[0].mxu0 %v7701
      %v7843 = vpop.f32.mrb[0].mxu0
      %v7844 = vadd.f32 0.0, %v7843
      %v7845 = vpop.f32.mrb[0].mxu0
      %v7846 = vadd.f32 0.0, %v7845
      %v7847 = vpop.f32.mrb[0].mxu0
      %v7848 = vadd.f32 0.0, %v7847
      %v7849 = vpop.f32.mrb[0].mxu0
      %v7850 = vadd.f32 0.0, %v7849
      %7851 = vmatprep.mubr.bf16.mxu0 0
      %7852 = vmatmul.mubr.bf16.gmra.mrb[0].mxu0 %v7702
      %v7853 = vpop.f32.mrb[0].mxu0
      %v7854 = vadd.f32 0.0, %v7853
      %v7855 = vpop.f32.mrb[0].mxu0
      %v7856 = vadd.f32 0.0, %v7855
      %v7857 = vpop.f32.mrb[0].mxu0
      %v7858 = vadd.f32 0.0, %v7857
      %v7859 = vpop.f32.mrb[0].mxu0
      %v7860 = vadd.f32 0.0, %v7859
      %7861 = vmatprep.mubr.bf16.mxu0 0
      %7862 = vmatmul.mubr.bf16.gmra.mrb[0].mxu0 %v7703
      %v7863 = vpop.f32.mrb[0].mxu0
      %v7864 = vadd.f32 0.0, %v7863
      %v7865 = vpop.f32.mrb[0].mxu0
      %v7866 = vadd.f32 0.0, %v7865
      %v7867 = vpop.f32.mrb[0].mxu0
      %v7868 = vadd.f32 0.0, %v7867
      %v7869 = vpop.f32.mrb[0].mxu0
      %v7870 = vadd.f32 0.0, %v7869
      %7871 = vdwg.mxu0
      %v7872 = vadd.f32 %v7506, %v7824
      %v7873 = vadd.f32 %v7507, %v7826
      %v7874 = vadd.f32 %v7508, %v7828
      %v7875 = vadd.f32 %v7509, %v7830
      %v7876 = vadd.f32 %v7510, %v7834
      %v7877 = vadd.f32 %v7511, %v7836
      %v7878 = vadd.f32 %v7512, %v7838
      %v7879 = vadd.f32 %v7513, %v7840
      %v7880 = vadd.f32 %v7514, %v7844
      %v7881 = vadd.f32 %v7515, %v7846
      %v7882 = vadd.f32 %v7516, %v7848
      %v7883 = vadd.f32 %v7517, %v7850
      %v7884 = vadd.f32 %v7518, %v7854
      %v7885 = vadd.f32 %v7519, %v7856
      %v7886 = vadd.f32 %v7520, %v7858
      %v7887 = vadd.f32 %v7521, %v7860
      %v7888 = vadd.f32 %v7522, %v7864
      %v7889 = vadd.f32 %v7523, %v7866
      %v7890 = vadd.f32 %v7524, %v7868
      %v7891 = vadd.f32 %v7525, %v7870
      %s7892 = scalar_lea.vmem %s3, 512
      %v7893 = vld [vmem:[%s7892] sm:$0xff]
      %v7894 = vld [vmem:[%s7892 + $0x8] sm:$0xff]
      %v7895 = vld [vmem:[%s7892 + $0x10] sm:$0xff]
      %v7896 = vld [vmem:[%s7892 + $0x18] sm:$0xff]
      %v7897 = vld [vmem:[%s7892 + $0x20] sm:$0xff]
      %v7898 = vld [vmem:[%s7892 + $0x28] sm:$0xff]
      %v7899 = vld [vmem:[%s7892 + $0x30] sm:$0xff]
      %v7900 = vld [vmem:[%s7892 + $0x38] sm:$0xff]
      %v7901 = vld [vmem:[%s7892 + $0x40] sm:$0xff]
      %v7902 = vld [vmem:[%s7892 + $0x48] sm:$0xff]
      %v7903 = vld [vmem:[%s7892 + $0x50] sm:$0xff]
      %v7904 = vld [vmem:[%s7892 + $0x58] sm:$0xff]
      %v7905 = vld [vmem:[%s7892 + $0x60] sm:$0xff]
      %v7906 = vld [vmem:[%s7892 + $0x68] sm:$0xff]
      %v7907 = vld [vmem:[%s7892 + $0x70] sm:$0xff]
      %v7908 = vld [vmem:[%s7892 + $0x78] sm:$0xff]
      %v7917 = vunpack.c.l.b16 %v6219
      %v7918 = vunpack.c.l.b16 %v6233
      %v7919 = vunpack.c.l.b16 %v6247
      %v7920 = vunpack.c.l.b16 %v6261
      %v7921 = vunpack.c.l.b16 %v6275
      %v7922 = vunpack.c.l.b16 %v6289
      %v7923 = vunpack.c.l.b16 %v6303
      %v7924 = vunpack.c.l.b16 %v6317
      %v7925 = vrot.slane %v6435, 7
      %v7926 = vsel %vm6512, %v7925, %v6434
      %v7927 = vrot.slane %v6436, 6
      %v7928 = vsel %vm6515, %v7927, %v7926
      %v7929 = vrot.slane %v6437, 5
      %v7930 = vsel %vm6518, %v7929, %v7928
      %v7931 = vrot.slane %v6438, 4
      %v7932 = vsel %vm6521, %v7931, %v7930
      %v7933 = vrot.slane %v6439, 3
      %v7934 = vsel %vm6524, %v7933, %v7932
      %v7935 = vrot.slane %v6440, 2
      %v7936 = vsel %vm6527, %v7935, %v7934
      %v7937 = vrot.slane %v7185, 1
      %v7938 = vsel %vm6530, %v7937, %v7936
      %v7939 = vrot.slane %v7917, 7
      %v7940 = vsel %vm6512, %v7939, %v7551
      %v7941 = vrot.slane %v6444, 6
      %v7942 = vsel %vm6515, %v7941, %v7940
      %v7943 = vrot.slane %v6445, 5
      %v7944 = vsel %vm6518, %v7943, %v7942
      %v7945 = vrot.slane %v6446, 4
      %v7946 = vsel %vm6521, %v7945, %v7944
      %v7947 = vrot.slane %v6447, 3
      %v7948 = vsel %vm6524, %v7947, %v7946
      %v7949 = vrot.slane %v6448, 2
      %v7950 = vsel %vm6527, %v7949, %v7948
      %v7951 = vrot.slane %v6449, 1
      %v7952 = vsel %vm6530, %v7951, %v7950
      %v7953 = vrot.slane %v7186, 7
      %v7954 = vsel %vm6512, %v7953, %v6450
      %v7955 = vrot.slane %v7552, 6
      %v7956 = vsel %vm6515, %v7955, %v7954
      %v7957 = vrot.slane %v7918, 5
      %v7958 = vsel %vm6518, %v7957, %v7956
      %v7959 = vrot.slane %v6454, 4
      %v7960 = vsel %vm6521, %v7959, %v7958
      %v7961 = vrot.slane %v6455, 3
      %v7962 = vsel %vm6524, %v7961, %v7960
      %v7963 = vrot.slane %v6456, 2
      %v7964 = vsel %vm6527, %v7963, %v7962
      %v7965 = vrot.slane %v6457, 1
      %v7966 = vsel %vm6530, %v7965, %v7964
      %v7967 = vrot.slane %v6459, 7
      %v7968 = vsel %vm6512, %v7967, %v6458
      %v7969 = vrot.slane %v6460, 6
      %v7970 = vsel %vm6515, %v7969, %v7968
      %v7971 = vrot.slane %v7187, 5
      %v7972 = vsel %vm6518, %v7971, %v7970
      %v7973 = vrot.slane %v7553, 4
      %v7974 = vsel %vm6521, %v7973, %v7972
      %v7975 = vrot.slane %v7919, 3
      %v7976 = vsel %vm6524, %v7975, %v7974
      %v7977 = vrot.slane %v6464, 2
      %v7978 = vsel %vm6527, %v7977, %v7976
      %v7979 = vrot.slane %v6465, 1
      %v7980 = vsel %vm6530, %v7979, %v7978
      %v7981 = vrot.slane %v6467, 7
      %v7982 = vsel %vm6512, %v7981, %v6466
      %v7983 = vrot.slane %v6468, 6
      %v7984 = vsel %vm6515, %v7983, %v7982
      %v7985 = vrot.slane %v6469, 5
      %v7986 = vsel %vm6518, %v7985, %v7984
      %v7987 = vrot.slane %v6470, 4
      %v7988 = vsel %vm6521, %v7987, %v7986
      %v7989 = vrot.slane %v7188, 3
      %v7990 = vsel %vm6524, %v7989, %v7988
      %v7991 = vrot.slane %v7554, 2
      %v7992 = vsel %vm6527, %v7991, %v7990
      %v7993 = vrot.slane %v7920, 1
      %v7994 = vsel %vm6530, %v7993, %v7992
      %v7995 = vrot.slane %v6475, 7
      %v7996 = vsel %vm6512, %v7995, %v6474
      %v7997 = vrot.slane %v6476, 6
      %v7998 = vsel %vm6515, %v7997, %v7996
      %v7999 = vrot.slane %v6477, 5
      %v8000 = vsel %vm6518, %v7999, %v7998
      %v8001 = vrot.slane %v6478, 4
      %v8002 = vsel %vm6521, %v8001, %v8000
      %v8003 = vrot.slane %v6479, 3
      %v8004 = vsel %vm6524, %v8003, %v8002
      %v8005 = vrot.slane %v6480, 2
      %v8006 = vsel %vm6527, %v8005, %v8004
      %v8007 = vrot.slane %v7189, 1
      %v8008 = vsel %vm6530, %v8007, %v8006
      %v8009 = vrot.slane %v7921, 7
      %v8010 = vsel %vm6512, %v8009, %v7555
      %v8011 = vrot.slane %v6484, 6
      %v8012 = vsel %vm6515, %v8011, %v8010
      %v8013 = vrot.slane %v6485, 5
      %v8014 = vsel %vm6518, %v8013, %v8012
      %v8015 = vrot.slane %v6486, 4
      %v8016 = vsel %vm6521, %v8015, %v8014
      %v8017 = vrot.slane %v6487, 3
      %v8018 = vsel %vm6524, %v8017, %v8016
      %v8019 = vrot.slane %v6488, 2
      %v8020 = vsel %vm6527, %v8019, %v8018
      %v8021 = vrot.slane %v6489, 1
      %v8022 = vsel %vm6530, %v8021, %v8020
      %v8023 = vrot.slane %v7190, 7
      %v8024 = vsel %vm6512, %v8023, %v6490
      %v8025 = vrot.slane %v7556, 6
      %v8026 = vsel %vm6515, %v8025, %v8024
      %v8027 = vrot.slane %v7922, 5
      %v8028 = vsel %vm6518, %v8027, %v8026
      %v8029 = vrot.slane %v6494, 4
      %v8030 = vsel %vm6521, %v8029, %v8028
      %v8031 = vrot.slane %v6495, 3
      %v8032 = vsel %vm6524, %v8031, %v8030
      %v8033 = vrot.slane %v6496, 2
      %v8034 = vsel %vm6527, %v8033, %v8032
      %v8035 = vrot.slane %v6497, 1
      %v8036 = vsel %vm6530, %v8035, %v8034
      %v8037 = vrot.slane %v6499, 7
      %v8038 = vsel %vm6512, %v8037, %v6498
      %v8039 = vrot.slane %v6500, 6
      %v8040 = vsel %vm6515, %v8039, %v8038
      %v8041 = vrot.slane %v7191, 5
      %v8042 = vsel %vm6518, %v8041, %v8040
      %v8043 = vrot.slane %v7557, 4
      %v8044 = vsel %vm6521, %v8043, %v8042
      %v8045 = vrot.slane %v7923, 3
      %v8046 = vsel %vm6524, %v8045, %v8044
      %v8047 = vrot.slane %v6504, 2
      %v8048 = vsel %vm6527, %v8047, %v8046
      %v8049 = vrot.slane %v6505, 1
      %v8050 = vsel %vm6530, %v8049, %v8048
      %v8051 = vrot.slane %v6507, 7
      %v8052 = vsel %vm6512, %v8051, %v6506
      %v8053 = vrot.slane %v6508, 6
      %v8054 = vsel %vm6515, %v8053, %v8052
      %v8055 = vrot.slane %v6509, 5
      %v8056 = vsel %vm6518, %v8055, %v8054
      %v8057 = vrot.slane %v6510, 4
      %v8058 = vsel %vm6521, %v8057, %v8056
      %v8059 = vrot.slane %v7192, 3
      %v8060 = vsel %vm6524, %v8059, %v8058
      %v8061 = vrot.slane %v7558, 2
      %v8062 = vsel %vm6527, %v8061, %v8060
      %v8063 = vrot.slane %v7924, 1
      %v8064 = vsel %vm6530, %v8063, %v8062
      %v8065 = vpack.c.b16 %v7952, %v7938
      %v8066 = vpack.c.b16 %v7980, %v7966
      %v8067 = vpack.c.b16 %v8008, %v7994
      %v8068 = vpack.c.b16 %v8036, %v8022
      %v8069 = vpack.c.b16 %v8064, %v8050
      %v8091 = vunpack.c.l.b16 %v7893
      %v8092 = vunpack.c.h.b16 %v7893
      %v8093 = vunpack.c.l.b16 %v7894
      %v8094 = vunpack.c.h.b16 %v7894
      %v8095 = vunpack.c.l.b16 %v7895
      %v8096 = vunpack.c.h.b16 %v7895
      %v8097 = vunpack.c.l.b16 %v7896
      %v8098 = vunpack.c.h.b16 %v7896
      %v8099 = vunpack.c.l.b16 %v7897
      %v8100 = vunpack.c.h.b16 %v7897
      %v8101 = vunpack.c.l.b16 %v7898
      %v8102 = vunpack.c.h.b16 %v7898
      %v8103 = vunpack.c.l.b16 %v7899
      %v8104 = vunpack.c.h.b16 %v7899
      %v8105 = vunpack.c.l.b16 %v7900
      %v8106 = vunpack.c.h.b16 %v7900
      %v8107 = vunpack.c.l.b16 %v7901
      %v8108 = vunpack.c.h.b16 %v7901
      %v8109 = vunpack.c.l.b16 %v7902
      %v8110 = vunpack.c.h.b16 %v7902
      %v8111 = vunpack.c.l.b16 %v7903
      %v8112 = vunpack.c.h.b16 %v7903
      %v8113 = vunpack.c.l.b16 %v7904
      %v8114 = vunpack.c.h.b16 %v7904
      %v8115 = vunpack.c.l.b16 %v7905
      %v8116 = vunpack.c.h.b16 %v7905
      %v8117 = vunpack.c.l.b16 %v7906
      %v8118 = vunpack.c.h.b16 %v7906
      %v8119 = vunpack.c.l.b16 %v7907
      %v8120 = vunpack.c.h.b16 %v7907
      %v8121 = vunpack.c.l.b16 %v7908
      %v8122 = vunpack.c.h.b16 %v7908
      %v8123 = vpack.c.b16 %v8093, %v8091
      %v8124 = vpack.c.b16 %v8094, %v8092
      %v8125 = vpack.c.b16 %v8097, %v8095
      %v8126 = vpack.c.b16 %v8098, %v8096
      %v8127 = vpack.c.b16 %v8101, %v8099
      %v8128 = vpack.c.b16 %v8102, %v8100
      %v8129 = vpack.c.b16 %v8105, %v8103
      %v8130 = vpack.c.b16 %v8106, %v8104
      %v8131 = vpack.c.b16 %v8109, %v8107
      %v8132 = vpack.c.b16 %v8110, %v8108
      %v8133 = vpack.c.b16 %v8113, %v8111
      %v8134 = vpack.c.b16 %v8114, %v8112
      %v8135 = vpack.c.b16 %v8117, %v8115
      %v8136 = vpack.c.b16 %v8118, %v8116
      %v8137 = vpack.c.b16 %v8121, %v8119
      %v8138 = vpack.c.b16 %v8122, %v8120
      %8155 = vmatprep.subr.bf16.mxu0 %v8124
      %8156 = vmatpush1.bf16.msra.mxu0 %v8123
      %8157 = vmatprep.subr.bf16.mxu0 %v8126
      %8158 = vmatpush1.bf16.msra.mxu0 %v8125
      %8159 = vmatprep.subr.bf16.mxu0 %v8128
      %8160 = vmatpush1.bf16.msra.mxu0 %v8127
      %8161 = vmatprep.subr.bf16.mxu0 %v8130
      %8162 = vmatpush1.bf16.msra.mxu0 %v8129
      %8163 = vmatprep.subr.bf16.mxu0 %v8132
      %8164 = vmatpush1.bf16.msra.mxu0 %v8131
      %8165 = vmatprep.subr.bf16.mxu0 %v8134
      %8166 = vmatpush1.bf16.msra.mxu0 %v8133
      %8167 = vmatprep.subr.bf16.mxu0 %v8136
      %8168 = vmatpush1.bf16.msra.mxu0 %v8135
      %8169 = vmatprep.subr.bf16.mxu0 %v8138
      %8170 = vmatpush1.bf16.msra.mxu0 %v8137
      %8171 = vmatprep.subr.bf16.mxu0 0
      %8172 = vmatpush1.bf16.msra.mxu0 0
      %8173 = vmatprep.subr.bf16.mxu0 0
      %8174 = vmatpush1.bf16.msra.mxu0 0
      %8175 = vmatprep.subr.bf16.mxu0 0
      %8176 = vmatpush1.bf16.msra.mxu0 0
      %8177 = vmatprep.subr.bf16.mxu0 0
      %8178 = vmatpush1.bf16.msra.mxu0 0
      %8179 = vmatprep.subr.bf16.mxu0 0
      %8180 = vmatpush1.bf16.msra.mxu0 0
      %8181 = vmatprep.subr.bf16.mxu0 0
      %8182 = vmatpush1.bf16.msra.mxu0 0
      %8183 = vmatprep.subr.bf16.mxu0 0
      %8184 = vmatpush1.bf16.msra.mxu0 0
      %8185 = vmatprep.subr.bf16.mxu0 0
      %8186 = vmatpush1.bf16.msra.mxu0 0
      %8187 = vmatprep.mubr.bf16.mxu0 0
      %8188 = vmatmul.mubr.bf16.gmra.mrb[0].mxu0 %v8065
      %v8189 = vpop.f32.mrb[0].mxu0
      %v8190 = vadd.f32 0.0, %v8189
      %v8191 = vpop.f32.mrb[0].mxu0
      %v8192 = vadd.f32 0.0, %v8191
      %v8193 = vpop.f32.mrb[0].mxu0
      %v8194 = vadd.f32 0.0, %v8193
      %v8195 = vpop.f32.mrb[0].mxu0
      %v8196 = vadd.f32 0.0, %v8195
      %8197 = vmatprep.mubr.bf16.mxu0 0
      %8198 = vmatmul.mubr.bf16.gmra.mrb[0].mxu0 %v8066
      %v8199 = vpop.f32.mrb[0].mxu0
      %v8200 = vadd.f32 0.0, %v8199
      %v8201 = vpop.f32.mrb[0].mxu0
      %v8202 = vadd.f32 0.0, %v8201
      %v8203 = vpop.f32.mrb[0].mxu0
      %v8204 = vadd.f32 0.0, %v8203
      %v8205 = vpop.f32.mrb[0].mxu0
      %v8206 = vadd.f32 0.0, %v8205
      %8207 = vmatprep.mubr.bf16.mxu0 0
      %8208 = vmatmul.mubr.bf16.gmra.mrb[0].mxu0 %v8067
      %v8209 = vpop.f32.mrb[0].mxu0
      %v8210 = vadd.f32 0.0, %v8209
      %v8211 = vpop.f32.mrb[0].mxu0
      %v8212 = vadd.f32 0.0, %v8211
      %v8213 = vpop.f32.mrb[0].mxu0
      %v8214 = vadd.f32 0.0, %v8213
      %v8215 = vpop.f32.mrb[0].mxu0
      %v8216 = vadd.f32 0.0, %v8215
      %8217 = vmatprep.mubr.bf16.mxu0 0
      %8218 = vmatmul.mubr.bf16.gmra.mrb[0].mxu0 %v8068
      %v8219 = vpop.f32.mrb[0].mxu0
      %v8220 = vadd.f32 0.0, %v8219
      %v8221 = vpop.f32.mrb[0].mxu0
      %v8222 = vadd.f32 0.0, %v8221
      %v8223 = vpop.f32.mrb[0].mxu0
      %v8224 = vadd.f32 0.0, %v8223
      %v8225 = vpop.f32.mrb[0].mxu0
      %v8226 = vadd.f32 0.0, %v8225
      %8227 = vmatprep.mubr.bf16.mxu0 0
      %8228 = vmatmul.mubr.bf16.gmra.mrb[0].mxu0 %v8069
      %v8229 = vpop.f32.mrb[0].mxu0
      %v8230 = vadd.f32 0.0, %v8229
      %v8231 = vpop.f32.mrb[0].mxu0
      %v8232 = vadd.f32 0.0, %v8231
      %v8233 = vpop.f32.mrb[0].mxu0
      %v8234 = vadd.f32 0.0, %v8233
      %v8235 = vpop.f32.mrb[0].mxu0
      %v8236 = vadd.f32 0.0, %v8235
      %8237 = vdwg.mxu0
      %v8238 = vadd.f32 %v7872, %v8190
      %v8239 = vadd.f32 %v7873, %v8192
      %v8240 = vadd.f32 %v7874, %v8194
      %v8241 = vadd.f32 %v7875, %v8196
      %v8242 = vadd.f32 %v7876, %v8200
      %v8243 = vadd.f32 %v7877, %v8202
      %v8244 = vadd.f32 %v7878, %v8204
      %v8245 = vadd.f32 %v7879, %v8206
      %v8246 = vadd.f32 %v7880, %v8210
      %v8247 = vadd.f32 %v7881, %v8212
      %v8248 = vadd.f32 %v7882, %v8214
      %v8249 = vadd.f32 %v7883, %v8216
      %v8250 = vadd.f32 %v7884, %v8220
      %v8251 = vadd.f32 %v7885, %v8222
      %v8252 = vadd.f32 %v7886, %v8224
      %v8253 = vadd.f32 %v7887, %v8226
      %v8254 = vadd.f32 %v7888, %v8230
      %v8255 = vadd.f32 %v7889, %v8232
      %v8256 = vadd.f32 %v7890, %v8234
      %v8257 = vadd.f32 %v7891, %v8236
      %v8258 = vmax.f32 %v8238, %v8239
      %v8259 = vmax.f32 %v8240, %v8241
      %v8260 = vmax.f32 %v8242, %v8243
      %v8261 = vmax.f32 %v8244, %v8245
      %v8262 = vmax.f32 %v8246, %v8247
      %v8263 = vmax.f32 %v8248, %v8249
      %v8264 = vmax.f32 %v8250, %v8251
      %v8265 = vmax.f32 %v8252, %v8253
      %v8266 = vmax.f32 %v8254, %v8255
      %v8267 = vmax.f32 %v8256, %v8257
      %v8278 = vcombine.high %v8258, %v8258
      %v8280 = vunpack.c.l.s4 1983009808
      %v8281 = vunpack.c.0.s8 %v8280
      %v8282 = vlaneseq
      %v8283 = vshrl.u32 %v8282, 7
      %v8284 = vsub.s32 %v8281, %v8283
      %v8285 = vrot.slane %v8258, %v8284
      %v8287 = vunpack.c.l.s4 1983009808
      %v8288 = vunpack.c.0.s8 %v8287
      %v8289 = vlaneseq
      %v8290 = vshrl.u32 %v8289, 7
      %v8291 = vsub.s32 %v8288, %v8290
      %v8292 = vrot.slane %v8278, %v8291
      %v8293 = vcombine.high %v8285, %v8285
      %v8294 = vcombine.high %v8292, %v8292
      %v8295 = vcombine.high %v8259, %v8259
      %v8297 = vunpack.c.l.s4 1983009808
      %v8298 = vunpack.c.0.s8 %v8297
      %v8299 = vlaneseq
      %v8300 = vshrl.u32 %v8299, 7
      %v8301 = vsub.s32 %v8298, %v8300
      %v8302 = vrot.slane %v8259, %v8301
      %v8304 = vunpack.c.l.s4 1983009808
      %v8305 = vunpack.c.0.s8 %v8304
      %v8306 = vlaneseq
      %v8307 = vshrl.u32 %v8306, 7
      %v8308 = vsub.s32 %v8305, %v8307
      %v8309 = vrot.slane %v8295, %v8308
      %v8310 = vcombine.high %v8302, %v8302
      %v8311 = vcombine.high %v8309, %v8309
      %v8312 = vcombine.high %v8260, %v8260
      %v8314 = vunpack.c.l.s4 1983009808
      %v8315 = vunpack.c.0.s8 %v8314
      %v8316 = vlaneseq
      %v8317 = vshrl.u32 %v8316, 7
      %v8318 = vsub.s32 %v8315, %v8317
      %v8319 = vrot.slane %v8260, %v8318
      %v8321 = vunpack.c.l.s4 1983009808
      %v8322 = vunpack.c.0.s8 %v8321
      %v8323 = vlaneseq
      %v8324 = vshrl.u32 %v8323, 7
      %v8325 = vsub.s32 %v8322, %v8324
      %v8326 = vrot.slane %v8312, %v8325
      %v8327 = vcombine.high %v8319, %v8319
      %v8328 = vcombine.high %v8326, %v8326
      %v8329 = vcombine.high %v8261, %v8261
      %v8331 = vunpack.c.l.s4 1983009808
      %v8332 = vunpack.c.0.s8 %v8331
      %v8333 = vlaneseq
      %v8334 = vshrl.u32 %v8333, 7
      %v8335 = vsub.s32 %v8332, %v8334
      %v8336 = vrot.slane %v8261, %v8335
      %v8338 = vunpack.c.l.s4 1983009808
      %v8339 = vunpack.c.0.s8 %v8338
      %v8340 = vlaneseq
      %v8341 = vshrl.u32 %v8340, 7
      %v8342 = vsub.s32 %v8339, %v8341
      %v8343 = vrot.slane %v8329, %v8342
      %v8344 = vcombine.high %v8336, %v8336
      %v8345 = vcombine.high %v8343, %v8343
      %v8346 = vcombine.high %v8262, %v8262
      %v8348 = vunpack.c.l.s4 1983009808
      %v8349 = vunpack.c.0.s8 %v8348
      %v8350 = vlaneseq
      %v8351 = vshrl.u32 %v8350, 7
      %v8352 = vsub.s32 %v8349, %v8351
      %v8353 = vrot.slane %v8262, %v8352
      %v8355 = vunpack.c.l.s4 1983009808
      %v8356 = vunpack.c.0.s8 %v8355
      %v8357 = vlaneseq
      %v8358 = vshrl.u32 %v8357, 7
      %v8359 = vsub.s32 %v8356, %v8358
      %v8360 = vrot.slane %v8346, %v8359
      %v8361 = vcombine.high %v8353, %v8353
      %v8362 = vcombine.high %v8360, %v8360
      %v8363 = vcombine.high %v8263, %v8263
      %v8365 = vunpack.c.l.s4 1983009808
      %v8366 = vunpack.c.0.s8 %v8365
      %v8367 = vlaneseq
      %v8368 = vshrl.u32 %v8367, 7
      %v8369 = vsub.s32 %v8366, %v8368
      %v8370 = vrot.slane %v8263, %v8369
      %v8372 = vunpack.c.l.s4 1983009808
      %v8373 = vunpack.c.0.s8 %v8372
      %v8374 = vlaneseq
      %v8375 = vshrl.u32 %v8374, 7
      %v8376 = vsub.s32 %v8373, %v8375
      %v8377 = vrot.slane %v8363, %v8376
      %v8378 = vcombine.high %v8370, %v8370
      %v8379 = vcombine.high %v8377, %v8377
      %v8380 = vcombine.high %v8264, %v8264
      %v8382 = vunpack.c.l.s4 1983009808
      %v8383 = vunpack.c.0.s8 %v8382
      %v8384 = vlaneseq
      %v8385 = vshrl.u32 %v8384, 7
      %v8386 = vsub.s32 %v8383, %v8385
      %v8387 = vrot.slane %v8264, %v8386
      %v8389 = vunpack.c.l.s4 1983009808
      %v8390 = vunpack.c.0.s8 %v8389
      %v8391 = vlaneseq
      %v8392 = vshrl.u32 %v8391, 7
      %v8393 = vsub.s32 %v8390, %v8392
      %v8394 = vrot.slane %v8380, %v8393
      %v8395 = vcombine.high %v8387, %v8387
      %v8396 = vcombine.high %v8394, %v8394
      %v8397 = vcombine.high %v8265, %v8265
      %v8399 = vunpack.c.l.s4 1983009808
      %v8400 = vunpack.c.0.s8 %v8399
      %v8401 = vlaneseq
      %v8402 = vshrl.u32 %v8401, 7
      %v8403 = vsub.s32 %v8400, %v8402
      %v8404 = vrot.slane %v8265, %v8403
      %v8406 = vunpack.c.l.s4 1983009808
      %v8407 = vunpack.c.0.s8 %v8406
      %v8408 = vlaneseq
      %v8409 = vshrl.u32 %v8408, 7
      %v8410 = vsub.s32 %v8407, %v8409
      %v8411 = vrot.slane %v8397, %v8410
      %v8412 = vcombine.high %v8404, %v8404
      %v8413 = vcombine.high %v8411, %v8411
      %v8414 = vcombine.high %v8266, %v8266
      %v8416 = vunpack.c.l.s4 1983009808
      %v8417 = vunpack.c.0.s8 %v8416
      %v8418 = vlaneseq
      %v8419 = vshrl.u32 %v8418, 7
      %v8420 = vsub.s32 %v8417, %v8419
      %v8421 = vrot.slane %v8266, %v8420
      %v8423 = vunpack.c.l.s4 1983009808
      %v8424 = vunpack.c.0.s8 %v8423
      %v8425 = vlaneseq
      %v8426 = vshrl.u32 %v8425, 7
      %v8427 = vsub.s32 %v8424, %v8426
      %v8428 = vrot.slane %v8414, %v8427
      %v8429 = vcombine.high %v8421, %v8421
      %v8430 = vcombine.high %v8428, %v8428
      %v8431 = vcombine.high %v8267, %v8267
      %v8433 = vunpack.c.l.s4 1983009808
      %v8434 = vunpack.c.0.s8 %v8433
      %v8435 = vlaneseq
      %v8436 = vshrl.u32 %v8435, 7
      %v8437 = vsub.s32 %v8434, %v8436
      %v8438 = vrot.slane %v8267, %v8437
      %v8440 = vunpack.c.l.s4 1983009808
      %v8441 = vunpack.c.0.s8 %v8440
      %v8442 = vlaneseq
      %v8443 = vshrl.u32 %v8442, 7
      %v8444 = vsub.s32 %v8441, %v8443
      %v8445 = vrot.slane %v8431, %v8444
      %v8446 = vcombine.high %v8438, %v8438
      %v8447 = vcombine.high %v8445, %v8445
      %v8488 = vsel %vm5190, %v8285, -inf
      %v8489 = vrot.slane %v8488, 4
      %v8490 = vmax.f32 %v8488, %v8489
      %v8491 = vrot.slane %v8490, 2
      %v8492 = vmax.f32 %v8490, %v8491
      %v8493 = vrot.slane %v8492, 1
      %v8494 = vmax.f32 %v8492, %v8493
      %v8495 = vsel %vm5190, %v8293, -inf
      %v8496 = vrot.slane %v8495, 4
      %v8497 = vmax.f32 %v8495, %v8496
      %v8498 = vrot.slane %v8497, 2
      %v8499 = vmax.f32 %v8497, %v8498
      %v8500 = vrot.slane %v8499, 1
      %v8501 = vmax.f32 %v8499, %v8500
      %v8502 = vsel %vm5190, %v8292, -inf
      %v8503 = vrot.slane %v8502, 4
      %v8504 = vmax.f32 %v8502, %v8503
      %v8505 = vrot.slane %v8504, 2
      %v8506 = vmax.f32 %v8504, %v8505
      %v8507 = vrot.slane %v8506, 1
      %v8508 = vmax.f32 %v8506, %v8507
      %v8509 = vsel %vm5190, %v8294, -inf
      %v8510 = vrot.slane %v8509, 4
      %v8511 = vmax.f32 %v8509, %v8510
      %v8512 = vrot.slane %v8511, 2
      %v8513 = vmax.f32 %v8511, %v8512
      %v8514 = vrot.slane %v8513, 1
      %v8515 = vmax.f32 %v8513, %v8514
      %v8516 = vsel %vm5190, %v8302, -inf
      %v8517 = vrot.slane %v8516, 4
      %v8518 = vmax.f32 %v8516, %v8517
      %v8519 = vrot.slane %v8518, 2
      %v8520 = vmax.f32 %v8518, %v8519
      %v8521 = vrot.slane %v8520, 1
      %v8522 = vmax.f32 %v8520, %v8521
      %v8523 = vsel %vm5190, %v8310, -inf
      %v8524 = vrot.slane %v8523, 4
      %v8525 = vmax.f32 %v8523, %v8524
      %v8526 = vrot.slane %v8525, 2
      %v8527 = vmax.f32 %v8525, %v8526
      %v8528 = vrot.slane %v8527, 1
      %v8529 = vmax.f32 %v8527, %v8528
      %v8530 = vsel %vm5190, %v8309, -inf
      %v8531 = vrot.slane %v8530, 4
      %v8532 = vmax.f32 %v8530, %v8531
      %v8533 = vrot.slane %v8532, 2
      %v8534 = vmax.f32 %v8532, %v8533
      %v8535 = vrot.slane %v8534, 1
      %v8536 = vmax.f32 %v8534, %v8535
      %v8537 = vsel %vm5190, %v8311, -inf
      %v8538 = vrot.slane %v8537, 4
      %v8539 = vmax.f32 %v8537, %v8538
      %v8540 = vrot.slane %v8539, 2
      %v8541 = vmax.f32 %v8539, %v8540
      %v8542 = vrot.slane %v8541, 1
      %v8543 = vmax.f32 %v8541, %v8542
      %v8544 = vsel %vm5190, %v8319, -inf
      %v8545 = vrot.slane %v8544, 4
      %v8546 = vmax.f32 %v8544, %v8545
      %v8547 = vrot.slane %v8546, 2
      %v8548 = vmax.f32 %v8546, %v8547
      %v8549 = vrot.slane %v8548, 1
      %v8550 = vmax.f32 %v8548, %v8549
      %v8551 = vsel %vm5190, %v8327, -inf
      %v8552 = vrot.slane %v8551, 4
      %v8553 = vmax.f32 %v8551, %v8552
      %v8554 = vrot.slane %v8553, 2
      %v8555 = vmax.f32 %v8553, %v8554
      %v8556 = vrot.slane %v8555, 1
      %v8557 = vmax.f32 %v8555, %v8556
      %v8558 = vsel %vm5190, %v8326, -inf
      %v8559 = vrot.slane %v8558, 4
      %v8560 = vmax.f32 %v8558, %v8559
      %v8561 = vrot.slane %v8560, 2
      %v8562 = vmax.f32 %v8560, %v8561
      %v8563 = vrot.slane %v8562, 1
      %v8564 = vmax.f32 %v8562, %v8563
      %v8565 = vsel %vm5190, %v8328, -inf
      %v8566 = vrot.slane %v8565, 4
      %v8567 = vmax.f32 %v8565, %v8566
      %v8568 = vrot.slane %v8567, 2
      %v8569 = vmax.f32 %v8567, %v8568
      %v8570 = vrot.slane %v8569, 1
      %v8571 = vmax.f32 %v8569, %v8570
      %v8572 = vsel %vm5190, %v8336, -inf
      %v8573 = vrot.slane %v8572, 4
      %v8574 = vmax.f32 %v8572, %v8573
      %v8575 = vrot.slane %v8574, 2
      %v8576 = vmax.f32 %v8574, %v8575
      %v8577 = vrot.slane %v8576, 1
      %v8578 = vmax.f32 %v8576, %v8577
      %v8579 = vsel %vm5190, %v8344, -inf
      %v8580 = vrot.slane %v8579, 4
      %v8581 = vmax.f32 %v8579, %v8580
      %v8582 = vrot.slane %v8581, 2
      %v8583 = vmax.f32 %v8581, %v8582
      %v8584 = vrot.slane %v8583, 1
      %v8585 = vmax.f32 %v8583, %v8584
      %v8586 = vsel %vm5190, %v8343, -inf
      %v8587 = vrot.slane %v8586, 4
      %v8588 = vmax.f32 %v8586, %v8587
      %v8589 = vrot.slane %v8588, 2
      %v8590 = vmax.f32 %v8588, %v8589
      %v8591 = vrot.slane %v8590, 1
      %v8592 = vmax.f32 %v8590, %v8591
      %v8593 = vsel %vm5190, %v8345, -inf
      %v8594 = vrot.slane %v8593, 4
      %v8595 = vmax.f32 %v8593, %v8594
      %v8596 = vrot.slane %v8595, 2
      %v8597 = vmax.f32 %v8595, %v8596
      %v8598 = vrot.slane %v8597, 1
      %v8599 = vmax.f32 %v8597, %v8598
      %v8600 = vsel %vm5190, %v8353, -inf
      %v8601 = vrot.slane %v8600, 4
      %v8602 = vmax.f32 %v8600, %v8601
      %v8603 = vrot.slane %v8602, 2
      %v8604 = vmax.f32 %v8602, %v8603
      %v8605 = vrot.slane %v8604, 1
      %v8606 = vmax.f32 %v8604, %v8605
      %v8607 = vsel %vm5190, %v8361, -inf
      %v8608 = vrot.slane %v8607, 4
      %v8609 = vmax.f32 %v8607, %v8608
      %v8610 = vrot.slane %v8609, 2
      %v8611 = vmax.f32 %v8609, %v8610
      %v8612 = vrot.slane %v8611, 1
      %v8613 = vmax.f32 %v8611, %v8612
      %v8614 = vsel %vm5190, %v8360, -inf
      %v8615 = vrot.slane %v8614, 4
      %v8616 = vmax.f32 %v8614, %v8615
      %v8617 = vrot.slane %v8616, 2
      %v8618 = vmax.f32 %v8616, %v8617
      %v8619 = vrot.slane %v8618, 1
      %v8620 = vmax.f32 %v8618, %v8619
      %v8621 = vsel %vm5190, %v8362, -inf
      %v8622 = vrot.slane %v8621, 4
      %v8623 = vmax.f32 %v8621, %v8622
      %v8624 = vrot.slane %v8623, 2
      %v8625 = vmax.f32 %v8623, %v8624
      %v8626 = vrot.slane %v8625, 1
      %v8627 = vmax.f32 %v8625, %v8626
      %v8628 = vsel %vm5190, %v8370, -inf
      %v8629 = vrot.slane %v8628, 4
      %v8630 = vmax.f32 %v8628, %v8629
      %v8631 = vrot.slane %v8630, 2
      %v8632 = vmax.f32 %v8630, %v8631
      %v8633 = vrot.slane %v8632, 1
      %v8634 = vmax.f32 %v8632, %v8633
      %v8635 = vsel %vm5190, %v8378, -inf
      %v8636 = vrot.slane %v8635, 4
      %v8637 = vmax.f32 %v8635, %v8636
      %v8638 = vrot.slane %v8637, 2
      %v8639 = vmax.f32 %v8637, %v8638
      %v8640 = vrot.slane %v8639, 1
      %v8641 = vmax.f32 %v8639, %v8640
      %v8642 = vsel %vm5190, %v8377, -inf
      %v8643 = vrot.slane %v8642, 4
      %v8644 = vmax.f32 %v8642, %v8643
      %v8645 = vrot.slane %v8644, 2
      %v8646 = vmax.f32 %v8644, %v8645
      %v8647 = vrot.slane %v8646, 1
      %v8648 = vmax.f32 %v8646, %v8647
      %v8649 = vsel %vm5190, %v8379, -inf
      %v8650 = vrot.slane %v8649, 4
      %v8651 = vmax.f32 %v8649, %v8650
      %v8652 = vrot.slane %v8651, 2
      %v8653 = vmax.f32 %v8651, %v8652
      %v8654 = vrot.slane %v8653, 1
      %v8655 = vmax.f32 %v8653, %v8654
      %v8656 = vsel %vm5190, %v8387, -inf
      %v8657 = vrot.slane %v8656, 4
      %v8658 = vmax.f32 %v8656, %v8657
      %v8659 = vrot.slane %v8658, 2
      %v8660 = vmax.f32 %v8658, %v8659
      %v8661 = vrot.slane %v8660, 1
      %v8662 = vmax.f32 %v8660, %v8661
      %v8663 = vsel %vm5190, %v8395, -inf
      %v8664 = vrot.slane %v8663, 4
      %v8665 = vmax.f32 %v8663, %v8664
      %v8666 = vrot.slane %v8665, 2
      %v8667 = vmax.f32 %v8665, %v8666
      %v8668 = vrot.slane %v8667, 1
      %v8669 = vmax.f32 %v8667, %v8668
      %v8670 = vsel %vm5190, %v8394, -inf
      %v8671 = vrot.slane %v8670, 4
      %v8672 = vmax.f32 %v8670, %v8671
      %v8673 = vrot.slane %v8672, 2
      %v8674 = vmax.f32 %v8672, %v8673
      %v8675 = vrot.slane %v8674, 1
      %v8676 = vmax.f32 %v8674, %v8675
      %v8677 = vsel %vm5190, %v8396, -inf
      %v8678 = vrot.slane %v8677, 4
      %v8679 = vmax.f32 %v8677, %v8678
      %v8680 = vrot.slane %v8679, 2
      %v8681 = vmax.f32 %v8679, %v8680
      %v8682 = vrot.slane %v8681, 1
      %v8683 = vmax.f32 %v8681, %v8682
      %v8684 = vsel %vm5190, %v8404, -inf
      %v8685 = vrot.slane %v8684, 4
      %v8686 = vmax.f32 %v8684, %v8685
      %v8687 = vrot.slane %v8686, 2
      %v8688 = vmax.f32 %v8686, %v8687
      %v8689 = vrot.slane %v8688, 1
      %v8690 = vmax.f32 %v8688, %v8689
      %v8691 = vsel %vm5190, %v8412, -inf
      %v8692 = vrot.slane %v8691, 4
      %v8693 = vmax.f32 %v8691, %v8692
      %v8694 = vrot.slane %v8693, 2
      %v8695 = vmax.f32 %v8693, %v8694
      %v8696 = vrot.slane %v8695, 1
      %v8697 = vmax.f32 %v8695, %v8696
      %v8698 = vsel %vm5190, %v8411, -inf
      %v8699 = vrot.slane %v8698, 4
      %v8700 = vmax.f32 %v8698, %v8699
      %v8701 = vrot.slane %v8700, 2
      %v8702 = vmax.f32 %v8700, %v8701
      %v8703 = vrot.slane %v8702, 1
      %v8704 = vmax.f32 %v8702, %v8703
      %v8705 = vsel %vm5190, %v8413, -inf
      %v8706 = vrot.slane %v8705, 4
      %v8707 = vmax.f32 %v8705, %v8706
      %v8708 = vrot.slane %v8707, 2
      %v8709 = vmax.f32 %v8707, %v8708
      %v8710 = vrot.slane %v8709, 1
      %v8711 = vmax.f32 %v8709, %v8710
      %v8712 = vsel %vm5190, %v8421, -inf
      %v8713 = vrot.slane %v8712, 4
      %v8714 = vmax.f32 %v8712, %v8713
      %v8715 = vrot.slane %v8714, 2
      %v8716 = vmax.f32 %v8714, %v8715
      %v8717 = vrot.slane %v8716, 1
      %v8718 = vmax.f32 %v8716, %v8717
      %v8719 = vsel %vm5190, %v8429, -inf
      %v8720 = vrot.slane %v8719, 4
      %v8721 = vmax.f32 %v8719, %v8720
      %v8722 = vrot.slane %v8721, 2
      %v8723 = vmax.f32 %v8721, %v8722
      %v8724 = vrot.slane %v8723, 1
      %v8725 = vmax.f32 %v8723, %v8724
      %v8726 = vsel %vm5190, %v8428, -inf
      %v8727 = vrot.slane %v8726, 4
      %v8728 = vmax.f32 %v8726, %v8727
      %v8729 = vrot.slane %v8728, 2
      %v8730 = vmax.f32 %v8728, %v8729
      %v8731 = vrot.slane %v8730, 1
      %v8732 = vmax.f32 %v8730, %v8731
      %v8733 = vsel %vm5190, %v8430, -inf
      %v8734 = vrot.slane %v8733, 4
      %v8735 = vmax.f32 %v8733, %v8734
      %v8736 = vrot.slane %v8735, 2
      %v8737 = vmax.f32 %v8735, %v8736
      %v8738 = vrot.slane %v8737, 1
      %v8739 = vmax.f32 %v8737, %v8738
      %v8740 = vsel %vm5190, %v8438, -inf
      %v8741 = vrot.slane %v8740, 4
      %v8742 = vmax.f32 %v8740, %v8741
      %v8743 = vrot.slane %v8742, 2
      %v8744 = vmax.f32 %v8742, %v8743
      %v8745 = vrot.slane %v8744, 1
      %v8746 = vmax.f32 %v8744, %v8745
      %v8747 = vsel %vm5190, %v8446, -inf
      %v8748 = vrot.slane %v8747, 4
      %v8749 = vmax.f32 %v8747, %v8748
      %v8750 = vrot.slane %v8749, 2
      %v8751 = vmax.f32 %v8749, %v8750
      %v8752 = vrot.slane %v8751, 1
      %v8753 = vmax.f32 %v8751, %v8752
      %v8754 = vsel %vm5190, %v8445, -inf
      %v8755 = vrot.slane %v8754, 4
      %v8756 = vmax.f32 %v8754, %v8755
      %v8757 = vrot.slane %v8756, 2
      %v8758 = vmax.f32 %v8756, %v8757
      %v8759 = vrot.slane %v8758, 1
      %v8760 = vmax.f32 %v8758, %v8759
      %v8761 = vsel %vm5190, %v8447, -inf
      %v8762 = vrot.slane %v8761, 4
      %v8763 = vmax.f32 %v8761, %v8762
      %v8764 = vrot.slane %v8763, 2
      %v8765 = vmax.f32 %v8763, %v8764
      %v8766 = vrot.slane %v8765, 1
      %v8767 = vmax.f32 %v8765, %v8766
      %v8768 = vld [vmem:[%s4] sm:$0x1]
      %v8770 = vlaneseq
      %v8771 = vshrl.u32 %v8770, 7
      %v8772 = vsub.s32 0, %v8771
      %v8773 = vrot.slane %v8768, %v8772
      %v8775 = vadd.f32 %v8494, %v8773
      %v8776 = vadd.f32 %v8501, %v8773
      %v8777 = vadd.f32 %v8508, %v8773
      %v8778 = vadd.f32 %v8515, %v8773
      %v8779 = vadd.f32 %v8522, %v8773
      %v8780 = vadd.f32 %v8529, %v8773
      %v8781 = vadd.f32 %v8536, %v8773
      %v8782 = vadd.f32 %v8543, %v8773
      %v8783 = vadd.f32 %v8550, %v8773
      %v8784 = vadd.f32 %v8557, %v8773
      %v8785 = vadd.f32 %v8564, %v8773
      %v8786 = vadd.f32 %v8571, %v8773
      %v8787 = vadd.f32 %v8578, %v8773
      %v8788 = vadd.f32 %v8585, %v8773
      %v8789 = vadd.f32 %v8592, %v8773
      %v8790 = vadd.f32 %v8599, %v8773
      %v8791 = vadd.f32 %v8606, %v8773
      %v8792 = vadd.f32 %v8613, %v8773
      %v8793 = vadd.f32 %v8620, %v8773
      %v8794 = vadd.f32 %v8627, %v8773
      %v8795 = vadd.f32 %v8634, %v8773
      %v8796 = vadd.f32 %v8641, %v8773
      %v8797 = vadd.f32 %v8648, %v8773
      %v8798 = vadd.f32 %v8655, %v8773
      %v8799 = vadd.f32 %v8662, %v8773
      %v8800 = vadd.f32 %v8669, %v8773
      %v8801 = vadd.f32 %v8676, %v8773
      %v8802 = vadd.f32 %v8683, %v8773
      %v8803 = vadd.f32 %v8690, %v8773
      %v8804 = vadd.f32 %v8697, %v8773
      %v8805 = vadd.f32 %v8704, %v8773
      %v8806 = vadd.f32 %v8711, %v8773
      %v8807 = vadd.f32 %v8718, %v8773
      %v8808 = vadd.f32 %v8725, %v8773
      %v8809 = vadd.f32 %v8732, %v8773
      %v8810 = vadd.f32 %v8739, %v8773
      %v8811 = vadd.f32 %v8746, %v8773
      %v8812 = vadd.f32 %v8753, %v8773
      %v8813 = vadd.f32 %v8760, %v8773
      %v8814 = vadd.f32 %v8767, %v8773
      %v8815 = vmax.f32 %v8775, 0.0
      %v8816 = vmax.f32 %v8776, 0.0
      %v8817 = vmax.f32 %v8777, 0.0
      %v8818 = vmax.f32 %v8778, 0.0
      %v8819 = vmax.f32 %v8779, 0.0
      %v8820 = vmax.f32 %v8780, 0.0
      %v8821 = vmax.f32 %v8781, 0.0
      %v8822 = vmax.f32 %v8782, 0.0
      %v8823 = vmax.f32 %v8783, 0.0
      %v8824 = vmax.f32 %v8784, 0.0
      %v8825 = vmax.f32 %v8785, 0.0
      %v8826 = vmax.f32 %v8786, 0.0
      %v8827 = vmax.f32 %v8787, 0.0
      %v8828 = vmax.f32 %v8788, 0.0
      %v8829 = vmax.f32 %v8789, 0.0
      %v8830 = vmax.f32 %v8790, 0.0
      %v8831 = vmax.f32 %v8791, 0.0
      %v8832 = vmax.f32 %v8792, 0.0
      %v8833 = vmax.f32 %v8793, 0.0
      %v8834 = vmax.f32 %v8794, 0.0
      %v8835 = vmax.f32 %v8795, 0.0
      %v8836 = vmax.f32 %v8796, 0.0
      %v8837 = vmax.f32 %v8797, 0.0
      %v8838 = vmax.f32 %v8798, 0.0
      %v8839 = vmax.f32 %v8799, 0.0
      %v8840 = vmax.f32 %v8800, 0.0
      %v8841 = vmax.f32 %v8801, 0.0
      %v8842 = vmax.f32 %v8802, 0.0
      %v8843 = vmax.f32 %v8803, 0.0
      %v8844 = vmax.f32 %v8804, 0.0
      %v8845 = vmax.f32 %v8805, 0.0
      %v8846 = vmax.f32 %v8806, 0.0
      %v8847 = vmax.f32 %v8807, 0.0
      %v8848 = vmax.f32 %v8808, 0.0
      %v8849 = vmax.f32 %v8809, 0.0
      %v8850 = vmax.f32 %v8810, 0.0
      %v8851 = vmax.f32 %v8811, 0.0
      %v8852 = vmax.f32 %v8812, 0.0
      %v8853 = vmax.f32 %v8813, 0.0
      %v8854 = vmax.f32 %v8814, 0.0
      %v8855 = vpack.c.bf16 %v8815, %v8815
      %v8856 = vpack.c.bf16 %v8816, %v8816
      %v8857 = vpack.c.bf16 %v8817, %v8817
      %v8858 = vpack.c.bf16 %v8818, %v8818
      %v8859 = vpack.c.bf16 %v8819, %v8819
      %v8860 = vpack.c.bf16 %v8820, %v8820
      %v8861 = vpack.c.bf16 %v8821, %v8821
      %v8862 = vpack.c.bf16 %v8822, %v8822
      %v8863 = vpack.c.bf16 %v8823, %v8823
      %v8864 = vpack.c.bf16 %v8824, %v8824
      %v8865 = vpack.c.bf16 %v8825, %v8825
      %v8866 = vpack.c.bf16 %v8826, %v8826
      %v8867 = vpack.c.bf16 %v8827, %v8827
      %v8868 = vpack.c.bf16 %v8828, %v8828
      %v8869 = vpack.c.bf16 %v8829, %v8829
      %v8870 = vpack.c.bf16 %v8830, %v8830
      %v8871 = vpack.c.bf16 %v8831, %v8831
      %v8872 = vpack.c.bf16 %v8832, %v8832
      %v8873 = vpack.c.bf16 %v8833, %v8833
      %v8874 = vpack.c.bf16 %v8834, %v8834
      %v8875 = vpack.c.bf16 %v8835, %v8835
      %v8876 = vpack.c.bf16 %v8836, %v8836
      %v8877 = vpack.c.bf16 %v8837, %v8837
      %v8878 = vpack.c.bf16 %v8838, %v8838
      %v8879 = vpack.c.bf16 %v8839, %v8839
      %v8880 = vpack.c.bf16 %v8840, %v8840
      %v8881 = vpack.c.bf16 %v8841, %v8841
      %v8882 = vpack.c.bf16 %v8842, %v8842
      %v8883 = vpack.c.bf16 %v8843, %v8843
      %v8884 = vpack.c.bf16 %v8844, %v8844
      %v8885 = vpack.c.bf16 %v8845, %v8845
      %v8886 = vpack.c.bf16 %v8846, %v8846
      %v8887 = vpack.c.bf16 %v8847, %v8847
      %v8888 = vpack.c.bf16 %v8848, %v8848
      %v8889 = vpack.c.bf16 %v8849, %v8849
      %v8890 = vpack.c.bf16 %v8850, %v8850
      %v8891 = vpack.c.bf16 %v8851, %v8851
      %v8892 = vpack.c.bf16 %v8852, %v8852
      %v8893 = vpack.c.bf16 %v8853, %v8853
      %v8894 = vpack.c.bf16 %v8854, %v8854
      %v8895 = vld [vmem:[%s5] sm:$0xf]
      %v8896 = vld [vmem:[%s5 + $0x4] sm:$0xf]
      %v8897 = vld [vmem:[%s5 + $0x8] sm:$0xf]
      %v8898 = vld [vmem:[%s5 + $0xc] sm:$0xf]
      %v8899 = vld [vmem:[%s5 + $0x10] sm:$0xf]
      %v8900 = vld [vmem:[%s5 + $0x14] sm:$0xf]
      %v8901 = vld [vmem:[%s5 + $0x18] sm:$0xf]
      %v8902 = vld [vmem:[%s5 + $0x1c] sm:$0xf]
      %v8903 = vld [vmem:[%s5 + $0x20] sm:$0xf]
      %v8904 = vld [vmem:[%s5 + $0x24] sm:$0xf]
      %v8905 = vld [vmem:[%s5 + $0x28] sm:$0xf]
      %v8906 = vld [vmem:[%s5 + $0x2c] sm:$0xf]
      %v8907 = vld [vmem:[%s5 + $0x30] sm:$0xf]
      %v8908 = vld [vmem:[%s5 + $0x34] sm:$0xf]
      %v8909 = vld [vmem:[%s5 + $0x38] sm:$0xf]
      %v8910 = vld [vmem:[%s5 + $0x3c] sm:$0xf]
      %s8911 = scalar_lea.vmem %s5, 64
      %v8912 = vld [vmem:[%s8911] sm:$0xf]
      %v8913 = vld [vmem:[%s8911 + $0x4] sm:$0xf]
      %v8914 = vld [vmem:[%s8911 + $0x8] sm:$0xf]
      %v8915 = vld [vmem:[%s8911 + $0xc] sm:$0xf]
      %v8916 = vld [vmem:[%s8911 + $0x10] sm:$0xf]
      %v8917 = vld [vmem:[%s8911 + $0x14] sm:$0xf]
      %v8918 = vld [vmem:[%s8911 + $0x18] sm:$0xf]
      %v8919 = vld [vmem:[%s8911 + $0x1c] sm:$0xf]
      %v8920 = vld [vmem:[%s8911 + $0x20] sm:$0xf]
      %v8921 = vld [vmem:[%s8911 + $0x24] sm:$0xf]
      %v8922 = vld [vmem:[%s8911 + $0x28] sm:$0xf]
      %v8923 = vld [vmem:[%s8911 + $0x2c] sm:$0xf]
      %v8924 = vld [vmem:[%s8911 + $0x30] sm:$0xf]
      %v8925 = vld [vmem:[%s8911 + $0x34] sm:$0xf]
      %v8926 = vld [vmem:[%s8911 + $0x38] sm:$0xf]
      %v8927 = vld [vmem:[%s8911 + $0x3c] sm:$0xf]
      %v8936 = vunpack.c.l.b16 %v8856
      %v8937 = vunpack.c.l.b16 %v8861
      %v8938 = vunpack.c.l.b16 %v8866
      %v8939 = vunpack.c.l.b16 %v8871
      %v8940 = vunpack.c.l.b16 %v8876
      %v8941 = vunpack.c.l.b16 %v8881
      %v8942 = vunpack.c.l.b16 %v8886
      %v8943 = vunpack.c.l.b16 %v8891
      %v8944 = vrot.slane %v8937, 7
      %v8945 = vsel %vm6512, %v8944, %v8936
      %v8946 = vrot.slane %v8938, 6
      %v8947 = vsel %vm6515, %v8946, %v8945
      %v8948 = vrot.slane %v8939, 5
      %v8949 = vsel %vm6518, %v8948, %v8947
      %v8950 = vrot.slane %v8940, 4
      %v8951 = vsel %vm6521, %v8950, %v8949
      %v8952 = vrot.slane %v8941, 3
      %v8953 = vsel %vm6524, %v8952, %v8951
      %v8954 = vrot.slane %v8942, 2
      %v8955 = vsel %vm6527, %v8954, %v8953
      %v8956 = vrot.slane %v8943, 1
      %v8957 = vsel %vm6530, %v8956, %v8955
      %v8958 = vpack.c.b16 %v8957, %v8957
      %v8976 = vunpack.c.l.b16 %v8912
      %v8977 = vunpack.c.l.b16 %v8913
      %v8978 = vunpack.c.l.b16 %v8914
      %v8979 = vunpack.c.l.b16 %v8915
      %v8980 = vunpack.c.l.b16 %v8916
      %v8981 = vunpack.c.l.b16 %v8917
      %v8982 = vunpack.c.l.b16 %v8918
      %v8983 = vunpack.c.l.b16 %v8919
      %v8984 = vunpack.c.l.b16 %v8920
      %v8985 = vunpack.c.l.b16 %v8921
      %v8986 = vunpack.c.l.b16 %v8922
      %v8987 = vunpack.c.l.b16 %v8923
      %v8988 = vunpack.c.l.b16 %v8924
      %v8989 = vunpack.c.l.b16 %v8925
      %v8990 = vunpack.c.l.b16 %v8926
      %v8991 = vunpack.c.l.b16 %v8927
      %v8992 = vpack.c.b16 %v8977, %v8976
      %v8993 = vpack.c.b16 %v8979, %v8978
      %v8994 = vpack.c.b16 %v8981, %v8980
      %v8995 = vpack.c.b16 %v8983, %v8982
      %v8996 = vpack.c.b16 %v8985, %v8984
      %v8997 = vpack.c.b16 %v8987, %v8986
      %v8998 = vpack.c.b16 %v8989, %v8988
      %v8999 = vpack.c.b16 %v8991, %v8990
      %9008 = vmatprep.subr.bf16.mxu0 0
      %9009 = vmatpush1.bf16.msra.mxu0 %v8992
      %9010 = vmatprep.subr.bf16.mxu0 0
      %9011 = vmatpush1.bf16.msra.mxu0 %v8993
      %9012 = vmatprep.subr.bf16.mxu0 0
      %9013 = vmatpush1.bf16.msra.mxu0 %v8994
      %9014 = vmatprep.subr.bf16.mxu0 0
      %9015 = vmatpush1.bf16.msra.mxu0 %v8995
      %9016 = vmatprep.subr.bf16.mxu0 0
      %9017 = vmatpush1.bf16.msra.mxu0 %v8996
      %9018 = vmatprep.subr.bf16.mxu0 0
      %9019 = vmatpush1.bf16.msra.mxu0 %v8997
      %9020 = vmatprep.subr.bf16.mxu0 0
      %9021 = vmatpush1.bf16.msra.mxu0 %v8998
      %9022 = vmatprep.subr.bf16.mxu0 0
      %9023 = vmatpush1.bf16.msra.mxu0 %v8999
      %9024 = vmatprep.subr.bf16.mxu0 0
      %9025 = vmatpush1.bf16.msra.mxu0 0
      %9026 = vmatprep.subr.bf16.mxu0 0
      %9027 = vmatpush1.bf16.msra.mxu0 0
      %9028 = vmatprep.subr.bf16.mxu0 0
      %9029 = vmatpush1.bf16.msra.mxu0 0
      %9030 = vmatprep.subr.bf16.mxu0 0
      %9031 = vmatpush1.bf16.msra.mxu0 0
      %9032 = vmatprep.subr.bf16.mxu0 0
      %9033 = vmatpush1.bf16.msra.mxu0 0
      %9034 = vmatprep.subr.bf16.mxu0 0
      %9035 = vmatpush1.bf16.msra.mxu0 0
      %9036 = vmatprep.subr.bf16.mxu0 0
      %9037 = vmatpush1.bf16.msra.mxu0 0
      %9038 = vmatprep.subr.bf16.mxu0 0
      %9039 = vmatpush1.bf16.msra.mxu0 0
      %9040 = vmatprep.mubr.bf16.mxu0 0
      %9041 = vmatmul.mubr.bf16.gmra.mrb[0].mxu0 %v8958
      %v9042 = vpop.f32.mrb[0].mxu0
      %v9043 = vadd.f32 0.0, %v9042
      %v9044 = vpop.f32.mrb[0].mxu0
      %v9045 = vpop.f32.mrb[0].mxu0
      %v9046 = vpop.f32.mrb[0].mxu0
      %9047 = vdwg.mxu0
      %v9056 = vunpack.c.l.b16 %v8855
      %v9057 = vunpack.c.l.b16 %v8860
      %v9058 = vunpack.c.l.b16 %v8865
      %v9059 = vunpack.c.l.b16 %v8870
      %v9060 = vunpack.c.l.b16 %v8875
      %v9061 = vunpack.c.l.b16 %v8880
      %v9062 = vunpack.c.l.b16 %v8885
      %v9063 = vunpack.c.l.b16 %v8890
      %v9064 = vrot.slane %v9057, 7
      %v9065 = vsel %vm6512, %v9064, %v9056
      %v9066 = vrot.slane %v9058, 6
      %v9067 = vsel %vm6515, %v9066, %v9065
      %v9068 = vrot.slane %v9059, 5
      %v9069 = vsel %vm6518, %v9068, %v9067
      %v9070 = vrot.slane %v9060, 4
      %v9071 = vsel %vm6521, %v9070, %v9069
      %v9072 = vrot.slane %v9061, 3
      %v9073 = vsel %vm6524, %v9072, %v9071
      %v9074 = vrot.slane %v9062, 2
      %v9075 = vsel %vm6527, %v9074, %v9073
      %v9076 = vrot.slane %v9063, 1
      %v9077 = vsel %vm6530, %v9076, %v9075
      %v9078 = vpack.c.b16 %v9077, %v9077
      %v9096 = vunpack.c.l.b16 %v8895
      %v9097 = vunpack.c.l.b16 %v8896
      %v9098 = vunpack.c.l.b16 %v8897
      %v9099 = vunpack.c.l.b16 %v8898
      %v9100 = vunpack.c.l.b16 %v8899
      %v9101 = vunpack.c.l.b16 %v8900
      %v9102 = vunpack.c.l.b16 %v8901
      %v9103 = vunpack.c.l.b16 %v8902
      %v9104 = vunpack.c.l.b16 %v8903
      %v9105 = vunpack.c.l.b16 %v8904
      %v9106 = vunpack.c.l.b16 %v8905
      %v9107 = vunpack.c.l.b16 %v8906
      %v9108 = vunpack.c.l.b16 %v8907
      %v9109 = vunpack.c.l.b16 %v8908
      %v9110 = vunpack.c.l.b16 %v8909
      %v9111 = vunpack.c.l.b16 %v8910
      %v9112 = vpack.c.b16 %v9097, %v9096
      %v9113 = vpack.c.b16 %v9099, %v9098
      %v9114 = vpack.c.b16 %v9101, %v9100
      %v9115 = vpack.c.b16 %v9103, %v9102
      %v9116 = vpack.c.b16 %v9105, %v9104
      %v9117 = vpack.c.b16 %v9107, %v9106
      %v9118 = vpack.c.b16 %v9109, %v9108
      %v9119 = vpack.c.b16 %v9111, %v9110
      %9128 = vmatprep.subr.bf16.mxu0 0
      %9129 = vmatpush1.bf16.msra.mxu0 %v9112
      %9130 = vmatprep.subr.bf16.mxu0 0
      %9131 = vmatpush1.bf16.msra.mxu0 %v9113
      %9132 = vmatprep.subr.bf16.mxu0 0
      %9133 = vmatpush1.bf16.msra.mxu0 %v9114
      %9134 = vmatprep.subr.bf16.mxu0 0
      %9135 = vmatpush1.bf16.msra.mxu0 %v9115
      %9136 = vmatprep.subr.bf16.mxu0 0
      %9137 = vmatpush1.bf16.msra.mxu0 %v9116
      %9138 = vmatprep.subr.bf16.mxu0 0
      %9139 = vmatpush1.bf16.msra.mxu0 %v9117
      %9140 = vmatprep.subr.bf16.mxu0 0
      %9141 = vmatpush1.bf16.msra.mxu0 %v9118
      %9142 = vmatprep.subr.bf16.mxu0 0
      %9143 = vmatpush1.bf16.msra.mxu0 %v9119
      %9144 = vmatprep.subr.bf16.mxu0 0
      %9145 = vmatpush1.bf16.msra.mxu0 0
      %9146 = vmatprep.subr.bf16.mxu0 0
      %9147 = vmatpush1.bf16.msra.mxu0 0
      %9148 = vmatprep.subr.bf16.mxu0 0
      %9149 = vmatpush1.bf16.msra.mxu0 0
      %9150 = vmatprep.subr.bf16.mxu0 0
      %9151 = vmatpush1.bf16.msra.mxu0 0
      %9152 = vmatprep.subr.bf16.mxu0 0
      %9153 = vmatpush1.bf16.msra.mxu0 0
      %9154 = vmatprep.subr.bf16.mxu0 0
      %9155 = vmatpush1.bf16.msra.mxu0 0
      %9156 = vmatprep.subr.bf16.mxu0 0
      %9157 = vmatpush1.bf16.msra.mxu0 0
      %9158 = vmatprep.subr.bf16.mxu0 0
      %9159 = vmatpush1.bf16.msra.mxu0 0
      %9160 = vmatprep.mubr.bf16.mxu0 0
      %9161 = vmatmul.mubr.bf16.gmra.mrb[0].mxu0 %v9078
      %v9162 = vpop.f32.mrb[0].mxu0
      %v9163 = vadd.f32 %v9043, %v9162
      %v9164 = vpop.f32.mrb[0].mxu0
      %v9165 = vpop.f32.mrb[0].mxu0
      %v9166 = vpop.f32.mrb[0].mxu0
      %9167 = vdwg.mxu0
      %s9168 = scalar_lea.vmem %s5, 128
      %v9169 = vld [vmem:[%s9168] sm:$0xf]
      %v9170 = vld [vmem:[%s9168 + $0x4] sm:$0xf]
      %v9171 = vld [vmem:[%s9168 + $0x8] sm:$0xf]
      %v9172 = vld [vmem:[%s9168 + $0xc] sm:$0xf]
      %v9173 = vld [vmem:[%s9168 + $0x10] sm:$0xf]
      %v9174 = vld [vmem:[%s9168 + $0x14] sm:$0xf]
      %v9175 = vld [vmem:[%s9168 + $0x18] sm:$0xf]
      %v9176 = vld [vmem:[%s9168 + $0x1c] sm:$0xf]
      %v9177 = vld [vmem:[%s9168 + $0x20] sm:$0xf]
      %v9178 = vld [vmem:[%s9168 + $0x24] sm:$0xf]
      %v9179 = vld [vmem:[%s9168 + $0x28] sm:$0xf]
      %v9180 = vld [vmem:[%s9168 + $0x2c] sm:$0xf]
      %v9181 = vld [vmem:[%s9168 + $0x30] sm:$0xf]
      %v9182 = vld [vmem:[%s9168 + $0x34] sm:$0xf]
      %v9183 = vld [vmem:[%s9168 + $0x38] sm:$0xf]
      %v9184 = vld [vmem:[%s9168 + $0x3c] sm:$0xf]
      %v9193 = vunpack.c.l.b16 %v8857
      %v9194 = vunpack.c.l.b16 %v8862
      %v9195 = vunpack.c.l.b16 %v8867
      %v9196 = vunpack.c.l.b16 %v8872
      %v9197 = vunpack.c.l.b16 %v8877
      %v9198 = vunpack.c.l.b16 %v8882
      %v9199 = vunpack.c.l.b16 %v8887
      %v9200 = vunpack.c.l.b16 %v8892
      %v9201 = vrot.slane %v9194, 7
      %v9202 = vsel %vm6512, %v9201, %v9193
      %v9203 = vrot.slane %v9195, 6
      %v9204 = vsel %vm6515, %v9203, %v9202
      %v9205 = vrot.slane %v9196, 5
      %v9206 = vsel %vm6518, %v9205, %v9204
      %v9207 = vrot.slane %v9197, 4
      %v9208 = vsel %vm6521, %v9207, %v9206
      %v9209 = vrot.slane %v9198, 3
      %v9210 = vsel %vm6524, %v9209, %v9208
      %v9211 = vrot.slane %v9199, 2
      %v9212 = vsel %vm6527, %v9211, %v9210
      %v9213 = vrot.slane %v9200, 1
      %v9214 = vsel %vm6530, %v9213, %v9212
      %v9215 = vpack.c.b16 %v9214, %v9214
      %v9233 = vunpack.c.l.b16 %v9169
      %v9234 = vunpack.c.l.b16 %v9170
      %v9235 = vunpack.c.l.b16 %v9171
      %v9236 = vunpack.c.l.b16 %v9172
      %v9237 = vunpack.c.l.b16 %v9173
      %v9238 = vunpack.c.l.b16 %v9174
      %v9239 = vunpack.c.l.b16 %v9175
      %v9240 = vunpack.c.l.b16 %v9176
      %v9241 = vunpack.c.l.b16 %v9177
      %v9242 = vunpack.c.l.b16 %v9178
      %v9243 = vunpack.c.l.b16 %v9179
      %v9244 = vunpack.c.l.b16 %v9180
      %v9245 = vunpack.c.l.b16 %v9181
      %v9246 = vunpack.c.l.b16 %v9182
      %v9247 = vunpack.c.l.b16 %v9183
      %v9248 = vunpack.c.l.b16 %v9184
      %v9249 = vpack.c.b16 %v9234, %v9233
      %v9250 = vpack.c.b16 %v9236, %v9235
      %v9251 = vpack.c.b16 %v9238, %v9237
      %v9252 = vpack.c.b16 %v9240, %v9239
      %v9253 = vpack.c.b16 %v9242, %v9241
      %v9254 = vpack.c.b16 %v9244, %v9243
      %v9255 = vpack.c.b16 %v9246, %v9245
      %v9256 = vpack.c.b16 %v9248, %v9247
      %9265 = vmatprep.subr.bf16.mxu0 0
      %9266 = vmatpush1.bf16.msra.mxu0 %v9249
      %9267 = vmatprep.subr.bf16.mxu0 0
      %9268 = vmatpush1.bf16.msra.mxu0 %v9250
      %9269 = vmatprep.subr.bf16.mxu0 0
      %9270 = vmatpush1.bf16.msra.mxu0 %v9251
      %9271 = vmatprep.subr.bf16.mxu0 0
      %9272 = vmatpush1.bf16.msra.mxu0 %v9252
      %9273 = vmatprep.subr.bf16.mxu0 0
      %9274 = vmatpush1.bf16.msra.mxu0 %v9253
      %9275 = vmatprep.subr.bf16.mxu0 0
      %9276 = vmatpush1.bf16.msra.mxu0 %v9254
      %9277 = vmatprep.subr.bf16.mxu0 0
      %9278 = vmatpush1.bf16.msra.mxu0 %v9255
      %9279 = vmatprep.subr.bf16.mxu0 0
      %9280 = vmatpush1.bf16.msra.mxu0 %v9256
      %9281 = vmatprep.subr.bf16.mxu0 0
      %9282 = vmatpush1.bf16.msra.mxu0 0
      %9283 = vmatprep.subr.bf16.mxu0 0
      %9284 = vmatpush1.bf16.msra.mxu0 0
      %9285 = vmatprep.subr.bf16.mxu0 0
      %9286 = vmatpush1.bf16.msra.mxu0 0
      %9287 = vmatprep.subr.bf16.mxu0 0
      %9288 = vmatpush1.bf16.msra.mxu0 0
      %9289 = vmatprep.subr.bf16.mxu0 0
      %9290 = vmatpush1.bf16.msra.mxu0 0
      %9291 = vmatprep.subr.bf16.mxu0 0
      %9292 = vmatpush1.bf16.msra.mxu0 0
      %9293 = vmatprep.subr.bf16.mxu0 0
      %9294 = vmatpush1.bf16.msra.mxu0 0
      %9295 = vmatprep.subr.bf16.mxu0 0
      %9296 = vmatpush1.bf16.msra.mxu0 0
      %9297 = vmatprep.mubr.bf16.mxu0 0
      %9298 = vmatmul.mubr.bf16.gmra.mrb[0].mxu0 %v9215
      %v9299 = vpop.f32.mrb[0].mxu0
      %v9300 = vadd.f32 0.0, %v9299
      %v9301 = vpop.f32.mrb[0].mxu0
      %v9302 = vpop.f32.mrb[0].mxu0
      %v9303 = vpop.f32.mrb[0].mxu0
      %9304 = vdwg.mxu0
      %v9305 = vadd.f32 %v9163, %v9300
      %s9306 = scalar_lea.vmem %s5, 192
      %v9307 = vld [vmem:[%s9306] sm:$0xf]
      %v9308 = vld [vmem:[%s9306 + $0x4] sm:$0xf]
      %v9309 = vld [vmem:[%s9306 + $0x8] sm:$0xf]
      %v9310 = vld [vmem:[%s9306 + $0xc] sm:$0xf]
      %v9311 = vld [vmem:[%s9306 + $0x10] sm:$0xf]
      %v9312 = vld [vmem:[%s9306 + $0x14] sm:$0xf]
      %v9313 = vld [vmem:[%s9306 + $0x18] sm:$0xf]
      %v9314 = vld [vmem:[%s9306 + $0x1c] sm:$0xf]
      %v9315 = vld [vmem:[%s9306 + $0x20] sm:$0xf]
      %v9316 = vld [vmem:[%s9306 + $0x24] sm:$0xf]
      %v9317 = vld [vmem:[%s9306 + $0x28] sm:$0xf]
      %v9318 = vld [vmem:[%s9306 + $0x2c] sm:$0xf]
      %v9319 = vld [vmem:[%s9306 + $0x30] sm:$0xf]
      %v9320 = vld [vmem:[%s9306 + $0x34] sm:$0xf]
      %v9321 = vld [vmem:[%s9306 + $0x38] sm:$0xf]
      %v9322 = vld [vmem:[%s9306 + $0x3c] sm:$0xf]
      %v9331 = vunpack.c.l.b16 %v8858
      %v9332 = vunpack.c.l.b16 %v8863
      %v9333 = vunpack.c.l.b16 %v8868
      %v9334 = vunpack.c.l.b16 %v8873
      %v9335 = vunpack.c.l.b16 %v8878
      %v9336 = vunpack.c.l.b16 %v8883
      %v9337 = vunpack.c.l.b16 %v8888
      %v9338 = vunpack.c.l.b16 %v8893
      %v9339 = vrot.slane %v9332, 7
      %v9340 = vsel %vm6512, %v9339, %v9331
      %v9341 = vrot.slane %v9333, 6
      %v9342 = vsel %vm6515, %v9341, %v9340
      %v9343 = vrot.slane %v9334, 5
      %v9344 = vsel %vm6518, %v9343, %v9342
      %v9345 = vrot.slane %v9335, 4
      %v9346 = vsel %vm6521, %v9345, %v9344
      %v9347 = vrot.slane %v9336, 3
      %v9348 = vsel %vm6524, %v9347, %v9346
      %v9349 = vrot.slane %v9337, 2
      %v9350 = vsel %vm6527, %v9349, %v9348
      %v9351 = vrot.slane %v9338, 1
      %v9352 = vsel %vm6530, %v9351, %v9350
      %v9353 = vpack.c.b16 %v9352, %v9352
      %v9371 = vunpack.c.l.b16 %v9307
      %v9372 = vunpack.c.l.b16 %v9308
      %v9373 = vunpack.c.l.b16 %v9309
      %v9374 = vunpack.c.l.b16 %v9310
      %v9375 = vunpack.c.l.b16 %v9311
      %v9376 = vunpack.c.l.b16 %v9312
      %v9377 = vunpack.c.l.b16 %v9313
      %v9378 = vunpack.c.l.b16 %v9314
      %v9379 = vunpack.c.l.b16 %v9315
      %v9380 = vunpack.c.l.b16 %v9316
      %v9381 = vunpack.c.l.b16 %v9317
      %v9382 = vunpack.c.l.b16 %v9318
      %v9383 = vunpack.c.l.b16 %v9319
      %v9384 = vunpack.c.l.b16 %v9320
      %v9385 = vunpack.c.l.b16 %v9321
      %v9386 = vunpack.c.l.b16 %v9322
      %v9387 = vpack.c.b16 %v9372, %v9371
      %v9388 = vpack.c.b16 %v9374, %v9373
      %v9389 = vpack.c.b16 %v9376, %v9375
      %v9390 = vpack.c.b16 %v9378, %v9377
      %v9391 = vpack.c.b16 %v9380, %v9379
      %v9392 = vpack.c.b16 %v9382, %v9381
      %v9393 = vpack.c.b16 %v9384, %v9383
      %v9394 = vpack.c.b16 %v9386, %v9385
      %9403 = vmatprep.subr.bf16.mxu0 0
      %9404 = vmatpush1.bf16.msra.mxu0 %v9387
      %9405 = vmatprep.subr.bf16.mxu0 0
      %9406 = vmatpush1.bf16.msra.mxu0 %v9388
      %9407 = vmatprep.subr.bf16.mxu0 0
      %9408 = vmatpush1.bf16.msra.mxu0 %v9389
      %9409 = vmatprep.subr.bf16.mxu0 0
      %9410 = vmatpush1.bf16.msra.mxu0 %v9390
      %9411 = vmatprep.subr.bf16.mxu0 0
      %9412 = vmatpush1.bf16.msra.mxu0 %v9391
      %9413 = vmatprep.subr.bf16.mxu0 0
      %9414 = vmatpush1.bf16.msra.mxu0 %v9392
      %9415 = vmatprep.subr.bf16.mxu0 0
      %9416 = vmatpush1.bf16.msra.mxu0 %v9393
      %9417 = vmatprep.subr.bf16.mxu0 0
      %9418 = vmatpush1.bf16.msra.mxu0 %v9394
      %9419 = vmatprep.subr.bf16.mxu0 0
      %9420 = vmatpush1.bf16.msra.mxu0 0
      %9421 = vmatprep.subr.bf16.mxu0 0
      %9422 = vmatpush1.bf16.msra.mxu0 0
      %9423 = vmatprep.subr.bf16.mxu0 0
      %9424 = vmatpush1.bf16.msra.mxu0 0
      %9425 = vmatprep.subr.bf16.mxu0 0
      %9426 = vmatpush1.bf16.msra.mxu0 0
      %9427 = vmatprep.subr.bf16.mxu0 0
      %9428 = vmatpush1.bf16.msra.mxu0 0
      %9429 = vmatprep.subr.bf16.mxu0 0
      %9430 = vmatpush1.bf16.msra.mxu0 0
      %9431 = vmatprep.subr.bf16.mxu0 0
      %9432 = vmatpush1.bf16.msra.mxu0 0
      %9433 = vmatprep.subr.bf16.mxu0 0
      %9434 = vmatpush1.bf16.msra.mxu0 0
      %9435 = vmatprep.mubr.bf16.mxu0 0
      %9436 = vmatmul.mubr.bf16.gmra.mrb[0].mxu0 %v9353
      %v9437 = vpop.f32.mrb[0].mxu0
      %v9438 = vadd.f32 0.0, %v9437
      %v9439 = vpop.f32.mrb[0].mxu0
      %v9440 = vpop.f32.mrb[0].mxu0
      %v9441 = vpop.f32.mrb[0].mxu0
      %9442 = vdwg.mxu0
      %v9443 = vadd.f32 %v9305, %v9438
      %s9444 = scalar_lea.vmem %s5, 256
      %v9445 = vld [vmem:[%s9444] sm:$0xf]
      %v9446 = vld [vmem:[%s9444 + $0x4] sm:$0xf]
      %v9447 = vld [vmem:[%s9444 + $0x8] sm:$0xf]
      %v9448 = vld [vmem:[%s9444 + $0xc] sm:$0xf]
      %v9449 = vld [vmem:[%s9444 + $0x10] sm:$0xf]
      %v9450 = vld [vmem:[%s9444 + $0x14] sm:$0xf]
      %v9451 = vld [vmem:[%s9444 + $0x18] sm:$0xf]
      %v9452 = vld [vmem:[%s9444 + $0x1c] sm:$0xf]
      %v9453 = vld [vmem:[%s9444 + $0x20] sm:$0xf]
      %v9454 = vld [vmem:[%s9444 + $0x24] sm:$0xf]
      %v9455 = vld [vmem:[%s9444 + $0x28] sm:$0xf]
      %v9456 = vld [vmem:[%s9444 + $0x2c] sm:$0xf]
      %v9457 = vld [vmem:[%s9444 + $0x30] sm:$0xf]
      %v9458 = vld [vmem:[%s9444 + $0x34] sm:$0xf]
      %v9459 = vld [vmem:[%s9444 + $0x38] sm:$0xf]
      %v9460 = vld [vmem:[%s9444 + $0x3c] sm:$0xf]
      %v9469 = vunpack.c.l.b16 %v8859
      %v9470 = vunpack.c.l.b16 %v8864
      %v9471 = vunpack.c.l.b16 %v8869
      %v9472 = vunpack.c.l.b16 %v8874
      %v9473 = vunpack.c.l.b16 %v8879
      %v9474 = vunpack.c.l.b16 %v8884
      %v9475 = vunpack.c.l.b16 %v8889
      %v9476 = vunpack.c.l.b16 %v8894
      %v9477 = vrot.slane %v9470, 7
      %v9478 = vsel %vm6512, %v9477, %v9469
      %v9479 = vrot.slane %v9471, 6
      %v9480 = vsel %vm6515, %v9479, %v9478
      %v9481 = vrot.slane %v9472, 5
      %v9482 = vsel %vm6518, %v9481, %v9480
      %v9483 = vrot.slane %v9473, 4
      %v9484 = vsel %vm6521, %v9483, %v9482
      %v9485 = vrot.slane %v9474, 3
      %v9486 = vsel %vm6524, %v9485, %v9484
      %v9487 = vrot.slane %v9475, 2
      %v9488 = vsel %vm6527, %v9487, %v9486
      %v9489 = vrot.slane %v9476, 1
      %v9490 = vsel %vm6530, %v9489, %v9488
      %v9491 = vpack.c.b16 %v9490, %v9490
      %v9509 = vunpack.c.l.b16 %v9445
      %v9510 = vunpack.c.l.b16 %v9446
      %v9511 = vunpack.c.l.b16 %v9447
      %v9512 = vunpack.c.l.b16 %v9448
      %v9513 = vunpack.c.l.b16 %v9449
      %v9514 = vunpack.c.l.b16 %v9450
      %v9515 = vunpack.c.l.b16 %v9451
      %v9516 = vunpack.c.l.b16 %v9452
      %v9517 = vunpack.c.l.b16 %v9453
      %v9518 = vunpack.c.l.b16 %v9454
      %v9519 = vunpack.c.l.b16 %v9455
      %v9520 = vunpack.c.l.b16 %v9456
      %v9521 = vunpack.c.l.b16 %v9457
      %v9522 = vunpack.c.l.b16 %v9458
      %v9523 = vunpack.c.l.b16 %v9459
      %v9524 = vunpack.c.l.b16 %v9460
      %v9525 = vpack.c.b16 %v9510, %v9509
      %v9526 = vpack.c.b16 %v9512, %v9511
      %v9527 = vpack.c.b16 %v9514, %v9513
      %v9528 = vpack.c.b16 %v9516, %v9515
      %v9529 = vpack.c.b16 %v9518, %v9517
      %v9530 = vpack.c.b16 %v9520, %v9519
      %v9531 = vpack.c.b16 %v9522, %v9521
      %v9532 = vpack.c.b16 %v9524, %v9523
      %9541 = vmatprep.subr.bf16.mxu0 0
      %9542 = vmatpush1.bf16.msra.mxu0 %v9525
      %9543 = vmatprep.subr.bf16.mxu0 0
      %9544 = vmatpush1.bf16.msra.mxu0 %v9526
      %9545 = vmatprep.subr.bf16.mxu0 0
      %9546 = vmatpush1.bf16.msra.mxu0 %v9527
      %9547 = vmatprep.subr.bf16.mxu0 0
      %9548 = vmatpush1.bf16.msra.mxu0 %v9528
      %9549 = vmatprep.subr.bf16.mxu0 0
      %9550 = vmatpush1.bf16.msra.mxu0 %v9529
      %9551 = vmatprep.subr.bf16.mxu0 0
      %9552 = vmatpush1.bf16.msra.mxu0 %v9530
      %9553 = vmatprep.subr.bf16.mxu0 0
      %9554 = vmatpush1.bf16.msra.mxu0 %v9531
      %9555 = vmatprep.subr.bf16.mxu0 0
      %9556 = vmatpush1.bf16.msra.mxu0 %v9532
      %9557 = vmatprep.subr.bf16.mxu0 0
      %9558 = vmatpush1.bf16.msra.mxu0 0
      %9559 = vmatprep.subr.bf16.mxu0 0
      %9560 = vmatpush1.bf16.msra.mxu0 0
      %9561 = vmatprep.subr.bf16.mxu0 0
      %9562 = vmatpush1.bf16.msra.mxu0 0
      %9563 = vmatprep.subr.bf16.mxu0 0
      %9564 = vmatpush1.bf16.msra.mxu0 0
      %9565 = vmatprep.subr.bf16.mxu0 0
      %9566 = vmatpush1.bf16.msra.mxu0 0
      %9567 = vmatprep.subr.bf16.mxu0 0
      %9568 = vmatpush1.bf16.msra.mxu0 0
      %9569 = vmatprep.subr.bf16.mxu0 0
      %9570 = vmatpush1.bf16.msra.mxu0 0
      %9571 = vmatprep.subr.bf16.mxu0 0
      %9572 = vmatpush1.bf16.msra.mxu0 0
      %9573 = vmatprep.mubr.bf16.mxu0 0
      %9574 = vmatmul.mubr.bf16.gmra.mrb[0].mxu0 %v9491
      %v9575 = vpop.f32.mrb[0].mxu0
      %v9576 = vadd.f32 0.0, %v9575
      %v9577 = vpop.f32.mrb[0].mxu0
      %v9578 = vpop.f32.mrb[0].mxu0
      %v9579 = vpop.f32.mrb[0].mxu0
      %9580 = vdwg.mxu0
      %v9581 = vadd.f32 %v9443, %v9576
      %v9582 = vld [vmem:[%s6] sm:$0x1]
      %v9584 = vlaneseq
      %v9585 = vshrl.u32 %v9584, 7
      %v9586 = vsub.s32 0, %v9585
      %v9587 = vrot.slane %v9582, %v9586
      %v9589 = vadd.f32 %v9581, %v9587
      %v9590 = vmax.f32 %v9589, 0.0
      %v9591 = vpack.c.bf16 %v9590, %v9590
      %v9592 = vld [vmem:[%s7] sm:$0xf]
      %v9593 = vld [vmem:[%s7 + $0x4] sm:$0xf]
      %v9594 = vld [vmem:[%s7 + $0x8] sm:$0xf]
      %v9595 = vld [vmem:[%s7 + $0xc] sm:$0xf]
      %v9596 = vld [vmem:[%s7 + $0x10] sm:$0xf]
      %v9597 = vld [vmem:[%s7 + $0x14] sm:$0xf]
      %v9598 = vld [vmem:[%s7 + $0x18] sm:$0xf]
      %v9599 = vld [vmem:[%s7 + $0x1c] sm:$0xf]
      %v9600 = vld [vmem:[%s7 + $0x20] sm:$0xf]
      %v9601 = vld [vmem:[%s7 + $0x24] sm:$0xf]
      %v9602 = vld [vmem:[%s7 + $0x28] sm:$0xf]
      %v9603 = vld [vmem:[%s7 + $0x2c] sm:$0xf]
      %v9604 = vld [vmem:[%s7 + $0x30] sm:$0xf]
      %v9605 = vld [vmem:[%s7 + $0x34] sm:$0xf]
      %v9606 = vld [vmem:[%s7 + $0x38] sm:$0xf]
      %v9607 = vld [vmem:[%s8] sm:$0x1]
      %v9609 = vlaneseq
      %v9610 = vshrl.u32 %v9609, 7
      %v9611 = vsub.s32 0, %v9610
      %v9612 = vrot.slane %v9607, %v9611
      %v9629 = vunpack.c.l.b16 %v9592
      %v9630 = vunpack.c.l.b16 %v9593
      %v9631 = vunpack.c.l.b16 %v9594
      %v9632 = vunpack.c.l.b16 %v9595
      %v9633 = vunpack.c.l.b16 %v9596
      %v9634 = vunpack.c.l.b16 %v9597
      %v9635 = vunpack.c.l.b16 %v9598
      %v9636 = vunpack.c.l.b16 %v9599
      %v9637 = vunpack.c.l.b16 %v9600
      %v9638 = vunpack.c.l.b16 %v9601
      %v9639 = vunpack.c.l.b16 %v9602
      %v9640 = vunpack.c.l.b16 %v9603
      %v9641 = vunpack.c.l.b16 %v9604
      %v9642 = vunpack.c.l.b16 %v9605
      %v9643 = vunpack.c.l.b16 %v9606
      %v9644 = vpack.c.b16 %v9630, %v9629
      %v9645 = vpack.c.b16 %v9632, %v9631
      %v9646 = vpack.c.b16 %v9634, %v9633
      %v9647 = vpack.c.b16 %v9636, %v9635
      %v9648 = vpack.c.b16 %v9638, %v9637
      %v9649 = vpack.c.b16 %v9640, %v9639
      %v9650 = vpack.c.b16 %v9642, %v9641
      %v9651 = vpack.c.b16 %v9643, %v9643
      %vm9659 = vcmask 982016
      %v9661 = vsel %vm9659, %v9591, 0
      %vm9663 = vcmask 1043456
      %v9665 = vsel %vm9663, %v9651, 0
      %9667 = vmatprep.subr.bf16.mxu0 0
      %9668 = vmatpush1.bf16.msra.mxu0 %v9644
      %9669 = vmatprep.subr.bf16.mxu0 0
      %9670 = vmatpush1.bf16.msra.mxu0 %v9645
      %9671 = vmatprep.subr.bf16.mxu0 0
      %9672 = vmatpush1.bf16.msra.mxu0 %v9646
      %9673 = vmatprep.subr.bf16.mxu0 0
      %9674 = vmatpush1.bf16.msra.mxu0 %v9647
      %9675 = vmatprep.subr.bf16.mxu0 0
      %9676 = vmatpush1.bf16.msra.mxu0 %v9648
      %9677 = vmatprep.subr.bf16.mxu0 0
      %9678 = vmatpush1.bf16.msra.mxu0 %v9649
      %9679 = vmatprep.subr.bf16.mxu0 0
      %9680 = vmatpush1.bf16.msra.mxu0 %v9650
      %9681 = vmatprep.subr.bf16.mxu0 0
      %9682 = vmatpush1.bf16.msra.mxu0 %v9665
      %9683 = vmatprep.subr.bf16.mxu0 0
      %9684 = vmatpush1.bf16.msra.mxu0 0
      %9685 = vmatprep.subr.bf16.mxu0 0
      %9686 = vmatpush1.bf16.msra.mxu0 0
      %9687 = vmatprep.subr.bf16.mxu0 0
      %9688 = vmatpush1.bf16.msra.mxu0 0
      %9689 = vmatprep.subr.bf16.mxu0 0
      %9690 = vmatpush1.bf16.msra.mxu0 0
      %9691 = vmatprep.subr.bf16.mxu0 0
      %9692 = vmatpush1.bf16.msra.mxu0 0
      %9693 = vmatprep.subr.bf16.mxu0 0
      %9694 = vmatpush1.bf16.msra.mxu0 0
      %9695 = vmatprep.subr.bf16.mxu0 0
      %9696 = vmatpush1.bf16.msra.mxu0 0
      %9697 = vmatprep.subr.bf16.mxu0 0
      %9698 = vmatpush1.bf16.msra.mxu0 0
      %9699 = vmatprep.mubr.bf16.mxu0 0
      %9700 = vmatmul.mubr.bf16.gmra.mrb[0].mxu0 %v9661
      %v9701 = vpop.f32.mrb[0].mxu0
      %v9702 = vadd.f32 %v9612, %v9701
      %v9703 = vpop.f32.mrb[0].mxu0
      %v9704 = vpop.f32.mrb[0].mxu0
      %v9705 = vpop.f32.mrb[0].mxu0
      %9706 = vdwg.mxu0
      %v9707 = vmax.f32 %v9702, 0.0
      %v9708 = vpack.c.bf16 %v9707, %v9707
      %v9709 = vld [vmem:[%s9] sm:$0xf]
      %v9710 = vld [vmem:[%s9 + $0x4] sm:$0xf]
      %v9711 = vld [vmem:[%s9 + $0x8] sm:$0xf]
      %v9712 = vld [vmem:[%s9 + $0xc] sm:$0xf]
      %v9713 = vld [vmem:[%s9 + $0x10] sm:$0xf]
      %v9714 = vld [vmem:[%s9 + $0x14] sm:$0xf]
      %v9715 = vld [vmem:[%s9 + $0x18] sm:$0xf]
      %v9716 = vld [vmem:[%s9 + $0x1c] sm:$0xf]
      %v9717 = vld [vmem:[%s9 + $0x20] sm:$0xf]
      %v9718 = vld [vmem:[%s9 + $0x24] sm:$0xf]
      %v9719 = vld [vmem:[%s9 + $0x28] sm:$0x3]
      %v9720 = vld [vmem:[%s10] sm:$0x1]
      %v9722 = vlaneseq
      %v9723 = vshrl.u32 %v9722, 7
      %v9724 = vsub.s32 0, %v9723
      %v9725 = vrot.slane %v9720, %v9724
      %v9738 = vunpack.c.l.b16 %v9709
      %v9739 = vunpack.c.l.b16 %v9710
      %v9740 = vunpack.c.l.b16 %v9711
      %v9741 = vunpack.c.l.b16 %v9712
      %v9742 = vunpack.c.l.b16 %v9713
      %v9743 = vunpack.c.l.b16 %v9714
      %v9744 = vunpack.c.l.b16 %v9715
      %v9745 = vunpack.c.l.b16 %v9716
      %v9746 = vunpack.c.l.b16 %v9717
      %v9747 = vunpack.c.l.b16 %v9718
      %v9748 = vunpack.c.l.b16 %v9719
      %v9749 = vpack.c.b16 %v9739, %v9738
      %v9750 = vpack.c.b16 %v9741, %v9740
      %v9751 = vpack.c.b16 %v9743, %v9742
      %v9752 = vpack.c.b16 %v9745, %v9744
      %v9753 = vpack.c.b16 %v9747, %v9746
      %v9754 = vpack.c.b16 %v9748, %v9748
      %vm9760 = vcmask 687104
      %v9762 = vsel %vm9760, %v9708, 0
      %v9765 = vsel %vm5190, %v9754, 0
      %9767 = vmatprep.subr.bf16.mxu0 0
      %9768 = vmatpush1.bf16.msra.mxu0 %v9749
      %9769 = vmatprep.subr.bf16.mxu0 0
      %9770 = vmatpush1.bf16.msra.mxu0 %v9750
      %9771 = vmatprep.subr.bf16.mxu0 0
      %9772 = vmatpush1.bf16.msra.mxu0 %v9751
      %9773 = vmatprep.subr.bf16.mxu0 0
      %9774 = vmatpush1.bf16.msra.mxu0 %v9752
      %9775 = vmatprep.subr.bf16.mxu0 0
      %9776 = vmatpush1.bf16.msra.mxu0 %v9753
      %9777 = vmatprep.subr.bf16.mxu0 0
      %9778 = vmatpush1.bf16.msra.mxu0 %v9765
      %9779 = vmatprep.subr.bf16.mxu0 0
      %9780 = vmatpush1.bf16.msra.mxu0 0
      %9781 = vmatprep.subr.bf16.mxu0 0
      %9782 = vmatpush1.bf16.msra.mxu0 0
      %9783 = vmatprep.subr.bf16.mxu0 0
      %9784 = vmatpush1.bf16.msra.mxu0 0
      %9785 = vmatprep.subr.bf16.mxu0 0
      %9786 = vmatpush1.bf16.msra.mxu0 0
      %9787 = vmatprep.subr.bf16.mxu0 0
      %9788 = vmatpush1.bf16.msra.mxu0 0
      %9789 = vmatprep.subr.bf16.mxu0 0
      %9790 = vmatpush1.bf16.msra.mxu0 0
      %9791 = vmatprep.subr.bf16.mxu0 0
      %9792 = vmatpush1.bf16.msra.mxu0 0
      %9793 = vmatprep.subr.bf16.mxu0 0
      %9794 = vmatpush1.bf16.msra.mxu0 0
      %9795 = vmatprep.subr.bf16.mxu0 0
      %9796 = vmatpush1.bf16.msra.mxu0 0
      %9797 = vmatprep.subr.bf16.mxu0 0
      %9798 = vmatpush1.bf16.msra.mxu0 0
      %9799 = vmatprep.mubr.bf16.mxu0 0
      %9800 = vmatmul.mubr.bf16.gmra.mrb[0].mxu0 %v9762
      %v9801 = vpop.f32.mrb[0].mxu0
      %v9802 = vadd.f32 %v9725, %v9801
      %v9803 = vpop.f32.mrb[0].mxu0
      %v9804 = vpop.f32.mrb[0].mxu0
      %v9805 = vpop.f32.mrb[0].mxu0
      %9806 = vdwg.mxu0
      %vm9807 = vcmask 80896
      %9808 = vst.msk [vmem:[%s389] sm:$0xff] %vm9807, %v9802
      %p9809 = scmp.lt.s32.totalorder %s22, 1
      %s9810 = scalar_select %p9809, %s22, 1
      %s9811 = smul.addr %s9810, 8
      %s9812 = scalar_lea.vmem %s11, %s9811
      // Predicated region
      $region65: #{net_forward.1} parent=63 // pred_check
        %p9813 = pneg %p276
      $region66: #{net_forward.1} parent=63 // pred_check_branch
        %9815 = sbr.rel (%p9813) target = $region68
      $region67: #{net_forward.1} parent=63 // pred_region
        _
      $region68: #{net_forward.1} parent=63 // pred_fallthru
        _
    $region64: #{net_forward.1} parent=5 // pred_fallthru
      _
    %p9816 = scmp.le.s32.totalorder 2, %s17
    // Predicated region
    $region69: #{net_forward.1} parent=5 // pred_check
      %p9817 = pneg %p9816
    $region70: #{net_forward.1} parent=5 // pred_check_branch
      %9819 = sbr.rel (%p9817) target = $region72
    $region71: #{net_forward.1} parent=5 // pred_region
      %s9820 = ssub.s32 %s17, 2
      // Predicated region
      $region73: #{net_forward.1} parent=71 // pred_check
        %p9821 = pneg %p282
      $region74: #{net_forward.1} parent=71 // pred_check_branch
        %9823 = sbr.rel (%p9821) target = $region76
      $region75: #{net_forward.1} parent=71 // pred_region
        %p9824 = scmp.lt.s32.totalorder %s23, 1
        %s9825 = scalar_select %p9824, %s23, 1
        %s9826 = smul.addr %s9825, 8
        %s9827 = scalar_lea.vmem %s11, %s9826
      $region76: #{net_forward.1} parent=71 // pred_fallthru
        _
    $region72: #{net_forward.1} parent=5 // pred_fallthru
      _
  $region6: #{net_forward.1} parent=0 // loop_footer
    %s21 = sadd.s32 1, %s17
  $region7: #{net_forward.1} parent=0 // loop_footer_branch
    %16 = sbr.rel target = $region3
  $region8: #{net_forward.1} parent=0 // loop_exit
    _

</llo_original>
